<compile_context>
chip_gen: v7x
topology: tpu7x:2x2x1
jax: 0.10.0
libtpu: 0.0.40
codegen_flags: <defaults>
</compile_context>

<pallas_src>
import functools

import jax
import jax.numpy as jnp
from jax.experimental import pallas as pl
from jax.experimental.pallas import tpu as pltpu

NUM_BLOCKS = 5  # ABlock3x3 = 5 ResConvBlocks (spec)


# ----------------------------------------------------------------------------
# Fused kernel: whole ABlock3x3 forward for a slab of B images, acts as (C, B*HW)
# ----------------------------------------------------------------------------
def ablock_kernel(x_ref, masks_ref, w3x_ref, w3d_ref, b3_ref, a3_ref,
                  w1_ref, b1_ref, a1_ref, w2_ref, b2_ref, o_ref, *, W):
    """
    x_ref    : (In_D, L)       L = B*H*W; channels on sublanes, pixels on lanes
    masks_ref: (9, 1, L)       0/1 validity mask per 3x3 tap, tiled per image
    w3x_ref  : (9, D, In_D)    first 3x3 conv, per-tap layout (small Cin)
    w3d_ref  : (M, D, 9*D)     all other 3x3 convs, taps fused into K = 9*D
    b3_ref   : (15, D, 1)      3x3 conv biases   (f32)
    a3_ref   : (15, D, 1)      3x3 PReLU alphas  (f32)
    w1_ref   : (3, S, D)       head 1x1 conv, split along the 3 concat chunks
    b1_ref   : (S, 1)          a1_ref: (S, 1)
    w2_ref   : (Out_D, S)      b2_ref: (Out_D, 1)
    o_ref    : (Out_D, L)
    """
    f32 = jnp.float32
    mxu = w3d_ref.dtype                       # bf16 (v6e/v7x perf path) or f32
    L = x_ref.shape[-1]
    depth = b3_ref.shape[1]
    nb = b3_ref.shape[0] // 3

    # Hoisted once: the 8 non-center tap masks (center tap needs no roll/mask).
    masks = [masks_ref[k] if k != 4 else None for k in range(9)]

    def tap(src, k):
        """Rolled + masked tap k of src (C, L) -> (C, L), f32."""
        oy, ox = k // 3 - 1, k % 3 - 1
        if oy == 0 and ox == 0:
            return src
        shift = (-(oy * W + ox)) % L          # XLU lane roll; wrap lands on masked lanes
        return pltpu.roll(src, shift=shift, axis=1) * masks[k]

    def build_taps(src):
        """Stack all 9 taps -> (9*C, L) in MXU dtype (tap-major, channel-minor)."""
        return jnp.concatenate([tap(src, k) for k in range(9)], axis=0).astype(mxu)

    def prelu(acc, ci):
        acc = acc + b3_ref[ci]                # (D, 1) lane-broadcast bias
        return jnp.where(acc >= 0, acc, a3_ref[ci] * acc)

    # ---- Block 1 -------------------------------------------------------------
    x = x_ref[...].astype(f32)
    # First conv: Cin = In_D is small (and may be sublane-misaligned) -> per-tap dots.
    acc = jnp.zeros((depth, L), f32)
    for k in range(9):
        acc = acc + jnp.dot(w3x_ref[k], tap(x, k).astype(mxu),
                            preferred_element_type=f32)
    a = prelu(acc, 0)
    ta = build_taps(a)
    b = prelu(jnp.dot(w3d_ref[0], ta, preferred_element_type=f32), 1)
    tb = build_taps(b)
    c = prelu(jnp.dot(w3d_ref[1], tb, preferred_element_type=f32), 2)

    # ---- Blocks 2..nb: torch.cat replaced by split-weight accumulation -------
    for blk in range(1, nb):
        base = 2 + (blk - 1) * 5
        ci = 3 * blk
        tc = build_taps(c)
        acc = (jnp.dot(w3d_ref[base + 0], ta, preferred_element_type=f32)
               + jnp.dot(w3d_ref[base + 1], tb, preferred_element_type=f32)
               + jnp.dot(w3d_ref[base + 2], tc, preferred_element_type=f32))
        a = prelu(acc, ci)
        ta = build_taps(a)
        b = prelu(jnp.dot(w3d_ref[base + 3], ta, preferred_element_type=f32), ci + 1)
        tb = build_taps(b)
        c = prelu(jnp.dot(w3d_ref[base + 4], tb, preferred_element_type=f32), ci + 2)

    # ---- Head: 1x1 conv + PReLU + 1x1 conv (concat -> 3 accumulated dots) ----
    h = (jnp.dot(w1_ref[0], a.astype(mxu), preferred_element_type=f32)
         + jnp.dot(w1_ref[1], b.astype(mxu), preferred_element_type=f32)
         + jnp.dot(w1_ref[2], c.astype(mxu), preferred_element_type=f32)
         + b1_ref[...])
    h = jnp.where(h >= 0, h, a1_ref[...] * h)
    y = jnp.dot(w2_ref[...], h.astype(mxu), preferred_element_type=f32) + b2_ref[...]
    o_ref[...] = y.astype(o_ref.dtype)


# ----------------------------------------------------------------------------
# Host-side helpers: tap masks, weight packing, forward wrapper
# ----------------------------------------------------------------------------
def _tap_masks(H, W):
    """(9, 1, H*W) float 0/1 masks: mask[k, 0, y*W+x] = 1 iff (y+dy-1, x+dx-1) in image."""
    yy, xx = jnp.meshgrid(jnp.arange(H), jnp.arange(W), indexing="ij")
    yy = yy.reshape(1, H * W)
    xx = xx.reshape(1, H * W)
    ms = []
    for dy in range(3):
        for dx in range(3):
            oy, ox = dy - 1, dx - 1
            m = ((yy + oy >= 0) & (yy + oy < H) & (xx + ox >= 0) & (xx + ox < W))
            ms.append(m.astype(jnp.float32))
    return jnp.stack(ms, axis=0)


def pack_params(params, mxu_dtype=jnp.bfloat16):
    """Pack PyTorch-layout params into the kernel's resident arrays.

    3x3 weights with Cin == Depth are packed tap-major as (Depth, 9*Depth) so one conv is a
    single big-K MXU dot; conv-a weights of blocks 2..5 (Cin = 3*Depth) are split into their
    three Depth chunks (concat -> accumulation), as is the head's w1.  MXU operands are stored
    in `mxu_dtype` (bf16 on v6e/v7x); biases / PReLU alphas stay f32 for the VPU.
    """
    blocks = params["blocks"]
    depth = int(blocks[0]["a"][0].shape[0])

    def pack_fused(w):   # (Cout, Cin, 3, 3) -> (Cout, 9*Cin), tap-major / cin-minor
        co, ci = int(w.shape[0]), int(w.shape[1])
        return jnp.transpose(w, (0, 2, 3, 1)).reshape(co, 9 * ci)

    # First conv (Cin = In_D): per-tap layout (9, Cout, Cin).
    wa0 = blocks[0]["a"][0]
    w3x = jnp.transpose(wa0, (2, 3, 0, 1)).reshape(9, depth, int(wa0.shape[1]))

    mats, b3_list, a3_list = [], [], []

    def add_ba(conv):
        _, bias, alpha = conv
        b3_list.append(bias.reshape(depth, 1))
        a3_list.append(alpha.reshape(depth, 1))

    add_ba(blocks[0]["a"])
    mats.append(pack_fused(blocks[0]["b"][0])); add_ba(blocks[0]["b"])
    mats.append(pack_fused(blocks[0]["c"][0])); add_ba(blocks[0]["c"])
    for blk in blocks[1:]:
        wa = blk["a"][0]                                   # (Depth, 3*Depth, 3, 3)
        for j in range(3):                                 # concat -> 3 Depth chunks
            mats.append(pack_fused(wa[:, j * depth:(j + 1) * depth]))
        add_ba(blk["a"])
        mats.append(pack_fused(blk["b"][0])); add_ba(blk["b"])
        mats.append(pack_fused(blk["c"][0])); add_ba(blk["c"])

    w3d = jnp.stack(mats, axis=0).astype(mxu_dtype)        # (2 + 5*(nb-1), D, 9*D)
    b3 = jnp.stack(b3_list, axis=0).astype(jnp.float32)    # (3*nb, D, 1)
    a3 = jnp.stack(a3_list, axis=0).astype(jnp.float32)

    w1_, b1_, a1_ = params["head1"]
    w2_, b2_ = params["head2"]
    sub, out_d = int(w1_.shape[0]), int(w2_.shape[0])
    w1 = w1_.reshape(sub, 3, depth).transpose(1, 0, 2).astype(mxu_dtype)   # (3, S, D)
    w2 = w2_.reshape(out_d, sub).astype(mxu_dtype)
    return dict(w3x=w3x.astype(mxu_dtype), w3d=w3d, b3=b3, a3=a3,
                w1=w1, b1=b1_.reshape(sub, 1).astype(jnp.float32),
                a1=a1_.reshape(sub, 1).astype(jnp.float32),
                w2=w2, b2=b2_.reshape(out_d, 1).astype(jnp.float32))


def _choose_images_per_step(N, max_b=8):
    """Largest divisor of N (capped) that still leaves >= 2 grid steps (both v7x TCs busy)."""
    for cand in range(min(N, max_b), 0, -1):
        if N % cand == 0 and (N // cand) >= min(2, N):
            return cand
    return 1


def ablock3x3_forward(x_nchw, packed, *, images_per_step=None):
    """x_nchw: (N, In_D, H, W) NCHW -> (N, Out_D, H, W).  Single fused pallas_call."""
    N, In_D, H, W = x_nchw.shape
    HW = H * W
    w3x, w3d = packed["w3x"], packed["w3d"]
    b3, a3 = packed["b3"], packed["a3"]
    w1, b1, a1 = packed["w1"], packed["b1"], packed["a1"]
    w2, b2 = packed["w2"], packed["b2"]
    depth = b3.shape[1]
    sub = w1.shape[1]
    out_d = w2.shape[0]

    B = images_per_step or _choose_images_per_step(N)
    assert N % B == 0
    grid_len = N // B
    L = B * HW                                   # lanes per grid step

    # Tap masks tiled per image so lane rolls never leak pixels between images.
    masks = jnp.tile(_tap_masks(H, W), (1, 1, B))            # (9, 1, L)

    # Channels-on-sublane / pixels-on-lane slab (layout plumbing done once outside the kernel).
    x = jnp.transpose(x_nchw, (1, 0, 2, 3)).reshape(In_D, N * HW)

    kernel = functools.partial(ablock_kernel, W=W)

    def full(arr):  # whole-array, grid-invariant spec (weights stay resident)
        nd = arr.ndim
        return pl.BlockSpec(arr.shape, lambda n, _nd=nd: (0,) * _nd)

    flops = 2 * N * HW * (depth * 9 * In_D
                          + int(w3d.shape[0]) * depth * 9 * depth
                          + 3 * sub * depth + out_d * sub)
    weight_bytes = sum(int(a.size) * a.dtype.itemsize
                       for a in (w3x, w3d, b3, a3, w1, b1, a1, w2, b2))
    bytes_accessed = (int(x.size) * x.dtype.itemsize + N * HW * out_d * 4
                      + int(masks.size) * 4 + weight_bytes)

    out = pl.pallas_call(
        kernel,
        out_shape=jax.ShapeDtypeStruct((out_d, N * HW), x_nchw.dtype),
        grid=(grid_len,),
        in_specs=[
            pl.BlockSpec((In_D, L), lambda n: (0, n)),
            full(masks), full(w3x), full(w3d), full(b3), full(a3),
            full(w1), full(b1), full(a1), full(w2), full(b2),
        ],
        out_specs=pl.BlockSpec((out_d, L), lambda n: (0, n)),
        compiler_params=pltpu.CompilerParams(
            dimension_semantics=("parallel",),          # batch axis feeds both v7x TCs
            vmem_limit_bytes=32 * 1024 * 1024),
        cost_estimate=pl.CostEstimate(flops=flops, transcendentals=0,
                                      bytes_accessed=bytes_accessed),
    )(x, masks, w3x, w3d, b3, a3, w1, b1, a1, w2, b2)

    return out.reshape(out_d, N, H, W).transpose(1, 0, 2, 3)


# ----------------------------------------------------------------------------
# Parameter init (PyTorch Conv2d default ranges; PReLU alpha = 0.25 per channel)
# ----------------------------------------------------------------------------
def _conv_params(key, cout, cin, k):
    kw_key, kb_key = jax.random.split(key)
    bound = 1.0 / float((cin * k * k) ** 0.5)
    w = jax.random.uniform(kw_key, (cout, cin, k, k),
                           minval=-bound, maxval=bound, dtype=jnp.float32)
    b = jax.random.uniform(kb_key, (cout,),
                           minval=-bound, maxval=bound, dtype=jnp.float32)
    return w, b


def init_ablock_params(key, In_D, Out_D, Depth=64, SubDepth=256):
    keys = jax.random.split(key, NUM_BLOCKS * 3 + 2)
    blocks, in_d, ki = [], In_D, 0
    for _ in range(NUM_BLOCKS):
        wa, ba = _conv_params(keys[ki + 0], Depth, in_d, 3)
        wb, bb = _conv_params(keys[ki + 1], Depth, Depth, 3)
        wc, bc = _conv_params(keys[ki + 2], Depth, Depth, 3)
        alpha = jnp.full((Depth,), 0.25, jnp.float32)
        blocks.append({"a": (wa, ba, alpha), "b": (wb, bb, alpha), "c": (wc, bc, alpha)})
        ki += 3
        in_d = Depth * 3
    w1, b1 = _conv_params(keys[ki], SubDepth, Depth * 3, 1)
    a1 = jnp.full((SubDepth,), 0.25, jnp.float32)
    w2, b2 = _conv_params(keys[ki + 1], Out_D, SubDepth, 1)
    return {"blocks": blocks, "head1": (w1, b1, a1), "head2": (w2, b2)}


# ----------------------------------------------------------------------------
# Pure-JAX reference (same math as the PyTorch module), used for validation
# ----------------------------------------------------------------------------
def ablock3x3_reference(x, params):
    dn = ("NCHW", "OIHW", "NCHW")

    def conv(x, w, b, pad):
        y = jax.lax.conv_general_dilated(
            x, w, (1, 1), ((pad, pad), (pad, pad)), dimension_numbers=dn,
            precision=jax.lax.Precision.HIGHEST)
        return y + b.reshape(1, -1, 1, 1)

    def prelu(y, alpha):
        return jnp.where(y >= 0, y, alpha.reshape(1, -1, 1, 1) * y)

    def cba(x, wba):
        w, b, alpha = wba
        return prelu(conv(x, w, b, 1), alpha)

    cur = x
    for blk in params["blocks"]:
        a = cba(cur, blk["a"])
        b = cba(a, blk["b"])
        c = cba(b, blk["c"])
        cur = jnp.concatenate([a, b, c], axis=1)
    w1, b1, a1 = params["head1"]
    h = prelu(conv(cur, w1, b1, 0), a1)
    w2, b2 = params["head2"]
    return conv(h, w2, b2, 0)


# ----------------------------------------------------------------------------
if __name__ == "__main__":
    key = jax.random.PRNGKey(0)
    k_x, k_p = jax.random.split(key)

    # Small shapes consistent with the module: In_D=4, Out_D=4, Depth=8, SubDepth=16.
    In_D, Out_D, Depth, SubDepth = 4, 4, 8, 16
    N, H, W = 4, 16, 16   # 4 images -> 2 images per grid step x 2 grid steps

    x = jax.random.normal(k_x, (N, In_D, H, W), dtype=jnp.float32)  # NCHW
    params = init_ablock_params(k_p, In_D, Out_D, Depth, SubDepth)
    ref = ablock3x3_reference(x, params)

    # f32 MXU operands: strict numerical check of the fused-tap / split-weight math.
    packed_f32 = pack_params(params, mxu_dtype=jnp.float32)
    out_f32 = jax.jit(lambda xx: ablock3x3_forward(xx, packed_f32))(x)
    jax.block_until_ready(out_f32)
    assert out_f32.shape == (N, Out_D, H, W), out_f32.shape
    assert bool(jnp.all(jnp.isfinite(out_f32)))
    err_f32 = float(jnp.max(jnp.abs(out_f32 - ref)))
    assert bool(jnp.allclose(out_f32, ref, atol=1e-2, rtol=1e-2)), err_f32

    # bf16 MXU operands (the v6e/v7x perf path): looser tolerance vs f32 HIGHEST reference.
    packed_bf16 = pack_params(params, mxu_dtype=jnp.bfloat16)
    out_bf16 = jax.jit(lambda xx: ablock3x3_forward(xx, packed_bf16))(x)
    jax.block_until_ready(out_bf16)
    assert out_bf16.shape == (N, Out_D, H, W), out_bf16.shape
    assert bool(jnp.all(jnp.isfinite(out_bf16)))
    err_bf16 = float(jnp.max(jnp.abs(out_bf16 - ref)))
    assert bool(jnp.allclose(out_bf16, ref, atol=5e-2, rtol=5e-2)), err_bf16

    print("KERNEL_OK")
</pallas_src>

<mosaic_0001>
module attributes {stable_mosaic.version = 11 : i64} {
  func.func @ablock_kernel(%arg0: i32, %arg1: memref<4x512xf32, #tpu.memory_space<vmem>>, %arg2: memref<9x1x512xf32, #tpu.memory_space<vmem>>, %arg3: memref<9x8x4xf32, #tpu.memory_space<vmem>>, %arg4: memref<22x8x72xf32, #tpu.memory_space<vmem>>, %arg5: memref<15x8x1xf32, #tpu.memory_space<vmem>>, %arg6: memref<15x8x1xf32, #tpu.memory_space<vmem>>, %arg7: memref<3x16x8xf32, #tpu.memory_space<vmem>>, %arg8: memref<16x1xf32, #tpu.memory_space<vmem>>, %arg9: memref<16x1xf32, #tpu.memory_space<vmem>>, %arg10: memref<4x16xf32, #tpu.memory_space<vmem>>, %arg11: memref<4x1xf32, #tpu.memory_space<vmem>>, %arg12: memref<4x512xf32, #tpu.memory_space<vmem>>) attributes {dimension_semantics = [#tpu.dimension_semantics<parallel>], iteration_bounds = array<i64: 2>, scalar_prefetch = 0 : i64, scratch_operands = 0 : i64, tpu.core_type = #tpu.core_type<tc>, window_params = [{transform_indices = @transform_0, window_bounds = array<i64: 4, 512>}, {pipeline_mode = #tpu.pipeline_mode<synchronous>, transform_indices = @transform_1, window_bounds = array<i64: 9, 1, 512>}, {pipeline_mode = #tpu.pipeline_mode<synchronous>, transform_indices = @transform_2, window_bounds = array<i64: 9, 8, 4>}, {pipeline_mode = #tpu.pipeline_mode<synchronous>, transform_indices = @transform_3, window_bounds = array<i64: 22, 8, 72>}, {pipeline_mode = #tpu.pipeline_mode<synchronous>, transform_indices = @transform_4, window_bounds = array<i64: 15, 8, 1>}, {pipeline_mode = #tpu.pipeline_mode<synchronous>, transform_indices = @transform_5, window_bounds = array<i64: 15, 8, 1>}, {pipeline_mode = #tpu.pipeline_mode<synchronous>, transform_indices = @transform_6, window_bounds = array<i64: 3, 16, 8>}, {pipeline_mode = #tpu.pipeline_mode<synchronous>, transform_indices = @transform_7, window_bounds = array<i64: 16, 1>}, {pipeline_mode = #tpu.pipeline_mode<synchronous>, transform_indices = @transform_8, window_bounds = array<i64: 16, 1>}, {pipeline_mode = #tpu.pipeline_mode<synchronous>, transform_indices = @transform_9, window_bounds = array<i64: 4, 16>}, {pipeline_mode = #tpu.pipeline_mode<synchronous>, transform_indices = @transform_10, window_bounds = array<i64: 4, 1>}, {transform_indices = @transform_11, window_bounds = array<i64: 4, 512>}]} {
    %c0 = arith.constant 0 : index
    %c0_0 = arith.constant 0 : index
    %c0_1 = arith.constant 0 : index
    %0 = vector.load %arg2[%c0, %c0_0, %c0_1] : memref<9x1x512xf32, #tpu.memory_space<vmem>>, vector<1x1x512xf32>
    %1 = vector.shape_cast %0 : vector<1x1x512xf32> to vector<1x512xf32>
    %c1 = arith.constant 1 : index
    %c0_2 = arith.constant 0 : index
    %c0_3 = arith.constant 0 : index
    %2 = vector.load %arg2[%c1, %c0_2, %c0_3] : memref<9x1x512xf32, #tpu.memory_space<vmem>>, vector<1x1x512xf32>
    %3 = vector.shape_cast %2 : vector<1x1x512xf32> to vector<1x512xf32>
    %c2 = arith.constant 2 : index
    %c0_4 = arith.constant 0 : index
    %c0_5 = arith.constant 0 : index
    %4 = vector.load %arg2[%c2, %c0_4, %c0_5] : memref<9x1x512xf32, #tpu.memory_space<vmem>>, vector<1x1x512xf32>
    %5 = vector.shape_cast %4 : vector<1x1x512xf32> to vector<1x512xf32>
    %c3 = arith.constant 3 : index
    %c0_6 = arith.constant 0 : index
    %c0_7 = arith.constant 0 : index
    %6 = vector.load %arg2[%c3, %c0_6, %c0_7] : memref<9x1x512xf32, #tpu.memory_space<vmem>>, vector<1x1x512xf32>
    %7 = vector.shape_cast %6 : vector<1x1x512xf32> to vector<1x512xf32>
    %c5 = arith.constant 5 : index
    %c0_8 = arith.constant 0 : index
    %c0_9 = arith.constant 0 : index
    %8 = vector.load %arg2[%c5, %c0_8, %c0_9] : memref<9x1x512xf32, #tpu.memory_space<vmem>>, vector<1x1x512xf32>
    %9 = vector.shape_cast %8 : vector<1x1x512xf32> to vector<1x512xf32>
    %c6 = arith.constant 6 : index
    %c0_10 = arith.constant 0 : index
    %c0_11 = arith.constant 0 : index
    %10 = vector.load %arg2[%c6, %c0_10, %c0_11] : memref<9x1x512xf32, #tpu.memory_space<vmem>>, vector<1x1x512xf32>
    %11 = vector.shape_cast %10 : vector<1x1x512xf32> to vector<1x512xf32>
    %c7 = arith.constant 7 : index
    %c0_12 = arith.constant 0 : index
    %c0_13 = arith.constant 0 : index
    %12 = vector.load %arg2[%c7, %c0_12, %c0_13] : memref<9x1x512xf32, #tpu.memory_space<vmem>>, vector<1x1x512xf32>
    %13 = vector.shape_cast %12 : vector<1x1x512xf32> to vector<1x512xf32>
    %c8 = arith.constant 8 : index
    %c0_14 = arith.constant 0 : index
    %c0_15 = arith.constant 0 : index
    %14 = vector.load %arg2[%c8, %c0_14, %c0_15] : memref<9x1x512xf32, #tpu.memory_space<vmem>>, vector<1x1x512xf32>
    %15 = vector.shape_cast %14 : vector<1x1x512xf32> to vector<1x512xf32>
    %c0_16 = arith.constant 0 : index
    %c0_17 = arith.constant 0 : index
    %16 = vector.load %arg1[%c0_16, %c0_17] : memref<4x512xf32, #tpu.memory_space<vmem>>, vector<4x512xf32>
    %cst = arith.constant 0.000000e+00 : f32
    %17 = vector.broadcast %cst : f32 to vector<8x512xf32>
    %c0_18 = arith.constant 0 : index
    %c0_19 = arith.constant 0 : index
    %c0_20 = arith.constant 0 : index
    %18 = vector.load %arg3[%c0_18, %c0_19, %c0_20] : memref<9x8x4xf32, #tpu.memory_space<vmem>>, vector<1x8x4xf32>
    %19 = vector.shape_cast %18 : vector<1x8x4xf32> to vector<8x4xf32>
    %c17_i32 = arith.constant 17 : i32
    %20 = tpu.dynamic_rotate %16 by %c17_i32 dim 1 : vector<4x512xf32>, i32 -> vector<4x512xf32>
    %21 = vector.broadcast %1 : vector<1x512xf32> to vector<4x512xf32>
    %22 = arith.mulf %20, %21 : vector<4x512xf32>
    %cst_21 = arith.constant dense<0.000000e+00> : vector<8x512xf32>
    %23 = tpu.matmul %19, %22, %cst_21 {dimension_numbers = #tpu.dot_dimension_numbers<[1], [0], [0], [1], [0, 0, 1, 1], [], []>} : vector<8x4xf32>, vector<4x512xf32>, vector<8x512xf32> -> vector<8x512xf32>
    %24 = arith.addf %17, %23 : vector<8x512xf32>
    %c1_22 = arith.constant 1 : index
    %c0_23 = arith.constant 0 : index
    %c0_24 = arith.constant 0 : index
    %25 = vector.load %arg3[%c1_22, %c0_23, %c0_24] : memref<9x8x4xf32, #tpu.memory_space<vmem>>, vector<1x8x4xf32>
    %26 = vector.shape_cast %25 : vector<1x8x4xf32> to vector<8x4xf32>
    %c16_i32 = arith.constant 16 : i32
    %27 = tpu.dynamic_rotate %16 by %c16_i32 dim 1 : vector<4x512xf32>, i32 -> vector<4x512xf32>
    %28 = vector.broadcast %3 : vector<1x512xf32> to vector<4x512xf32>
    %29 = arith.mulf %27, %28 : vector<4x512xf32>
    %cst_25 = arith.constant dense<0.000000e+00> : vector<8x512xf32>
    %30 = tpu.matmul %26, %29, %cst_25 {dimension_numbers = #tpu.dot_dimension_numbers<[1], [0], [0], [1], [0, 0, 1, 1], [], []>} : vector<8x4xf32>, vector<4x512xf32>, vector<8x512xf32> -> vector<8x512xf32>
    %31 = arith.addf %24, %30 : vector<8x512xf32>
    %c2_26 = arith.constant 2 : index
    %c0_27 = arith.constant 0 : index
    %c0_28 = arith.constant 0 : index
    %32 = vector.load %arg3[%c2_26, %c0_27, %c0_28] : memref<9x8x4xf32, #tpu.memory_space<vmem>>, vector<1x8x4xf32>
    %33 = vector.shape_cast %32 : vector<1x8x4xf32> to vector<8x4xf32>
    %c15_i32 = arith.constant 15 : i32
    %34 = tpu.dynamic_rotate %16 by %c15_i32 dim 1 : vector<4x512xf32>, i32 -> vector<4x512xf32>
    %35 = vector.broadcast %5 : vector<1x512xf32> to vector<4x512xf32>
    %36 = arith.mulf %34, %35 : vector<4x512xf32>
    %cst_29 = arith.constant dense<0.000000e+00> : vector<8x512xf32>
    %37 = tpu.matmul %33, %36, %cst_29 {dimension_numbers = #tpu.dot_dimension_numbers<[1], [0], [0], [1], [0, 0, 1, 1], [], []>} : vector<8x4xf32>, vector<4x512xf32>, vector<8x512xf32> -> vector<8x512xf32>
    %38 = arith.addf %31, %37 : vector<8x512xf32>
    %c3_30 = arith.constant 3 : index
    %c0_31 = arith.constant 0 : index
    %c0_32 = arith.constant 0 : index
    %39 = vector.load %arg3[%c3_30, %c0_31, %c0_32] : memref<9x8x4xf32, #tpu.memory_space<vmem>>, vector<1x8x4xf32>
    %40 = vector.shape_cast %39 : vector<1x8x4xf32> to vector<8x4xf32>
    %c1_i32 = arith.constant 1 : i32
    %41 = tpu.dynamic_rotate %16 by %c1_i32 dim 1 : vector<4x512xf32>, i32 -> vector<4x512xf32>
    %42 = vector.broadcast %7 : vector<1x512xf32> to vector<4x512xf32>
    %43 = arith.mulf %41, %42 : vector<4x512xf32>
    %cst_33 = arith.constant dense<0.000000e+00> : vector<8x512xf32>
    %44 = tpu.matmul %40, %43, %cst_33 {dimension_numbers = #tpu.dot_dimension_numbers<[1], [0], [0], [1], [0, 0, 1, 1], [], []>} : vector<8x4xf32>, vector<4x512xf32>, vector<8x512xf32> -> vector<8x512xf32>
    %45 = arith.addf %38, %44 : vector<8x512xf32>
    %c4 = arith.constant 4 : index
    %c0_34 = arith.constant 0 : index
    %c0_35 = arith.constant 0 : index
    %46 = vector.load %arg3[%c4, %c0_34, %c0_35] : memref<9x8x4xf32, #tpu.memory_space<vmem>>, vector<1x8x4xf32>
    %47 = vector.shape_cast %46 : vector<1x8x4xf32> to vector<8x4xf32>
    %cst_36 = arith.constant dense<0.000000e+00> : vector<8x512xf32>
    %48 = tpu.matmul %47, %16, %cst_36 {dimension_numbers = #tpu.dot_dimension_numbers<[1], [0], [0], [1], [0, 0, 1, 1], [], []>} : vector<8x4xf32>, vector<4x512xf32>, vector<8x512xf32> -> vector<8x512xf32>
    %49 = arith.addf %45, %48 : vector<8x512xf32>
    %c5_37 = arith.constant 5 : index
    %c0_38 = arith.constant 0 : index
    %c0_39 = arith.constant 0 : index
    %50 = vector.load %arg3[%c5_37, %c0_38, %c0_39] : memref<9x8x4xf32, #tpu.memory_space<vmem>>, vector<1x8x4xf32>
    %51 = vector.shape_cast %50 : vector<1x8x4xf32> to vector<8x4xf32>
    %c511_i32 = arith.constant 511 : i32
    %52 = tpu.dynamic_rotate %16 by %c511_i32 dim 1 : vector<4x512xf32>, i32 -> vector<4x512xf32>
    %53 = vector.broadcast %9 : vector<1x512xf32> to vector<4x512xf32>
    %54 = arith.mulf %52, %53 : vector<4x512xf32>
    %cst_40 = arith.constant dense<0.000000e+00> : vector<8x512xf32>
    %55 = tpu.matmul %51, %54, %cst_40 {dimension_numbers = #tpu.dot_dimension_numbers<[1], [0], [0], [1], [0, 0, 1, 1], [], []>} : vector<8x4xf32>, vector<4x512xf32>, vector<8x512xf32> -> vector<8x512xf32>
    %56 = arith.addf %49, %55 : vector<8x512xf32>
    %c6_41 = arith.constant 6 : index
    %c0_42 = arith.constant 0 : index
    %c0_43 = arith.constant 0 : index
    %57 = vector.load %arg3[%c6_41, %c0_42, %c0_43] : memref<9x8x4xf32, #tpu.memory_space<vmem>>, vector<1x8x4xf32>
    %58 = vector.shape_cast %57 : vector<1x8x4xf32> to vector<8x4xf32>
    %c497_i32 = arith.constant 497 : i32
    %59 = tpu.dynamic_rotate %16 by %c497_i32 dim 1 : vector<4x512xf32>, i32 -> vector<4x512xf32>
    %60 = vector.broadcast %11 : vector<1x512xf32> to vector<4x512xf32>
    %61 = arith.mulf %59, %60 : vector<4x512xf32>
    %cst_44 = arith.constant dense<0.000000e+00> : vector<8x512xf32>
    %62 = tpu.matmul %58, %61, %cst_44 {dimension_numbers = #tpu.dot_dimension_numbers<[1], [0], [0], [1], [0, 0, 1, 1], [], []>} : vector<8x4xf32>, vector<4x512xf32>, vector<8x512xf32> -> vector<8x512xf32>
    %63 = arith.addf %56, %62 : vector<8x512xf32>
    %c7_45 = arith.constant 7 : index
    %c0_46 = arith.constant 0 : index
    %c0_47 = arith.constant 0 : index
    %64 = vector.load %arg3[%c7_45, %c0_46, %c0_47] : memref<9x8x4xf32, #tpu.memory_space<vmem>>, vector<1x8x4xf32>
    %65 = vector.shape_cast %64 : vector<1x8x4xf32> to vector<8x4xf32>
    %c496_i32 = arith.constant 496 : i32
    %66 = tpu.dynamic_rotate %16 by %c496_i32 dim 1 : vector<4x512xf32>, i32 -> vector<4x512xf32>
    %67 = vector.broadcast %13 : vector<1x512xf32> to vector<4x512xf32>
    %68 = arith.mulf %66, %67 : vector<4x512xf32>
    %cst_48 = arith.constant dense<0.000000e+00> : vector<8x512xf32>
    %69 = tpu.matmul %65, %68, %cst_48 {dimension_numbers = #tpu.dot_dimension_numbers<[1], [0], [0], [1], [0, 0, 1, 1], [], []>} : vector<8x4xf32>, vector<4x512xf32>, vector<8x512xf32> -> vector<8x512xf32>
    %70 = arith.addf %63, %69 : vector<8x512xf32>
    %c8_49 = arith.constant 8 : index
    %c0_50 = arith.constant 0 : index
    %c0_51 = arith.constant 0 : index
    %71 = vector.load %arg3[%c8_49, %c0_50, %c0_51] : memref<9x8x4xf32, #tpu.memory_space<vmem>>, vector<1x8x4xf32>
    %72 = vector.shape_cast %71 : vector<1x8x4xf32> to vector<8x4xf32>
    %c495_i32 = arith.constant 495 : i32
    %73 = tpu.dynamic_rotate %16 by %c495_i32 dim 1 : vector<4x512xf32>, i32 -> vector<4x512xf32>
    %74 = vector.broadcast %15 : vector<1x512xf32> to vector<4x512xf32>
    %75 = arith.mulf %73, %74 : vector<4x512xf32>
    %cst_52 = arith.constant dense<0.000000e+00> : vector<8x512xf32>
    %76 = tpu.matmul %72, %75, %cst_52 {dimension_numbers = #tpu.dot_dimension_numbers<[1], [0], [0], [1], [0, 0, 1, 1], [], []>} : vector<8x4xf32>, vector<4x512xf32>, vector<8x512xf32> -> vector<8x512xf32>
    %77 = arith.addf %70, %76 : vector<8x512xf32>
    %c0_53 = arith.constant 0 : index
    %c0_54 = arith.constant 0 : index
    %c0_55 = arith.constant 0 : index
    %78 = vector.load %arg5[%c0_53, %c0_54, %c0_55] : memref<15x8x1xf32, #tpu.memory_space<vmem>>, vector<1x8x1xf32>
    %79 = vector.shape_cast %78 : vector<1x8x1xf32> to vector<8x1xf32>
    %80 = vector.broadcast %79 : vector<8x1xf32> to vector<8x512xf32>
    %81 = arith.addf %77, %80 : vector<8x512xf32>
    %cst_56 = arith.constant 0.000000e+00 : f32
    %82 = vector.broadcast %cst_56 : f32 to vector<8x512xf32>
    %83 = arith.cmpf oge, %81, %82 : vector<8x512xf32>
    %c0_57 = arith.constant 0 : index
    %c0_58 = arith.constant 0 : index
    %c0_59 = arith.constant 0 : index
    %84 = vector.load %arg6[%c0_57, %c0_58, %c0_59] : memref<15x8x1xf32, #tpu.memory_space<vmem>>, vector<1x8x1xf32>
    %85 = vector.shape_cast %84 : vector<1x8x1xf32> to vector<8x1xf32>
    %86 = vector.broadcast %85 : vector<8x1xf32> to vector<8x512xf32>
    %87 = arith.mulf %86, %81 : vector<8x512xf32>
    %88 = arith.select %83, %81, %87 : vector<8x512xi1>, vector<8x512xf32>
    %c17_i32_60 = arith.constant 17 : i32
    %89 = tpu.dynamic_rotate %88 by %c17_i32_60 dim 1 : vector<8x512xf32>, i32 -> vector<8x512xf32>
    %90 = vector.broadcast %1 : vector<1x512xf32> to vector<8x512xf32>
    %91 = arith.mulf %89, %90 : vector<8x512xf32>
    %c16_i32_61 = arith.constant 16 : i32
    %92 = tpu.dynamic_rotate %88 by %c16_i32_61 dim 1 : vector<8x512xf32>, i32 -> vector<8x512xf32>
    %93 = vector.broadcast %3 : vector<1x512xf32> to vector<8x512xf32>
    %94 = arith.mulf %92, %93 : vector<8x512xf32>
    %c15_i32_62 = arith.constant 15 : i32
    %95 = tpu.dynamic_rotate %88 by %c15_i32_62 dim 1 : vector<8x512xf32>, i32 -> vector<8x512xf32>
    %96 = vector.broadcast %5 : vector<1x512xf32> to vector<8x512xf32>
    %97 = arith.mulf %95, %96 : vector<8x512xf32>
    %c1_i32_63 = arith.constant 1 : i32
    %98 = tpu.dynamic_rotate %88 by %c1_i32_63 dim 1 : vector<8x512xf32>, i32 -> vector<8x512xf32>
    %99 = vector.broadcast %7 : vector<1x512xf32> to vector<8x512xf32>
    %100 = arith.mulf %98, %99 : vector<8x512xf32>
    %c511_i32_64 = arith.constant 511 : i32
    %101 = tpu.dynamic_rotate %88 by %c511_i32_64 dim 1 : vector<8x512xf32>, i32 -> vector<8x512xf32>
    %102 = vector.broadcast %9 : vector<1x512xf32> to vector<8x512xf32>
    %103 = arith.mulf %101, %102 : vector<8x512xf32>
    %c497_i32_65 = arith.constant 497 : i32
    %104 = tpu.dynamic_rotate %88 by %c497_i32_65 dim 1 : vector<8x512xf32>, i32 -> vector<8x512xf32>
    %105 = vector.broadcast %11 : vector<1x512xf32> to vector<8x512xf32>
    %106 = arith.mulf %104, %105 : vector<8x512xf32>
    %c496_i32_66 = arith.constant 496 : i32
    %107 = tpu.dynamic_rotate %88 by %c496_i32_66 dim 1 : vector<8x512xf32>, i32 -> vector<8x512xf32>
    %108 = vector.broadcast %13 : vector<1x512xf32> to vector<8x512xf32>
    %109 = arith.mulf %107, %108 : vector<8x512xf32>
    %c495_i32_67 = arith.constant 495 : i32
    %110 = tpu.dynamic_rotate %88 by %c495_i32_67 dim 1 : vector<8x512xf32>, i32 -> vector<8x512xf32>
    %111 = vector.broadcast %15 : vector<1x512xf32> to vector<8x512xf32>
    %112 = arith.mulf %110, %111 : vector<8x512xf32>
    %113 = tpu.concatenate %91, %94, %97, %100, %88, %103, %106, %109, %112 in 0 : vector<8x512xf32>, vector<8x512xf32>, vector<8x512xf32>, vector<8x512xf32>, vector<8x512xf32>, vector<8x512xf32>, vector<8x512xf32>, vector<8x512xf32>, vector<8x512xf32> -> vector<72x512xf32>
    %c0_68 = arith.constant 0 : index
    %c0_69 = arith.constant 0 : index
    %c0_70 = arith.constant 0 : index
    %114 = vector.load %arg4[%c0_68, %c0_69, %c0_70] : memref<22x8x72xf32, #tpu.memory_space<vmem>>, vector<1x8x72xf32>
    %115 = vector.shape_cast %114 : vector<1x8x72xf32> to vector<8x72xf32>
    %cst_71 = arith.constant dense<0.000000e+00> : vector<8x512xf32>
    %116 = tpu.matmul %115, %113, %cst_71 {dimension_numbers = #tpu.dot_dimension_numbers<[1], [0], [0], [1], [0, 0, 1, 1], [], []>} : vector<8x72xf32>, vector<72x512xf32>, vector<8x512xf32> -> vector<8x512xf32>
    %c1_72 = arith.constant 1 : index
    %c0_73 = arith.constant 0 : index
    %c0_74 = arith.constant 0 : index
    %117 = vector.load %arg5[%c1_72, %c0_73, %c0_74] : memref<15x8x1xf32, #tpu.memory_space<vmem>>, vector<1x8x1xf32>
    %118 = vector.shape_cast %117 : vector<1x8x1xf32> to vector<8x1xf32>
    %119 = vector.broadcast %118 : vector<8x1xf32> to vector<8x512xf32>
    %120 = arith.addf %116, %119 : vector<8x512xf32>
    %cst_75 = arith.constant 0.000000e+00 : f32
    %121 = vector.broadcast %cst_75 : f32 to vector<8x512xf32>
    %122 = arith.cmpf oge, %120, %121 : vector<8x512xf32>
    %c1_76 = arith.constant 1 : index
    %c0_77 = arith.constant 0 : index
    %c0_78 = arith.constant 0 : index
    %123 = vector.load %arg6[%c1_76, %c0_77, %c0_78] : memref<15x8x1xf32, #tpu.memory_space<vmem>>, vector<1x8x1xf32>
    %124 = vector.shape_cast %123 : vector<1x8x1xf32> to vector<8x1xf32>
    %125 = vector.broadcast %124 : vector<8x1xf32> to vector<8x512xf32>
    %126 = arith.mulf %125, %120 : vector<8x512xf32>
    %127 = arith.select %122, %120, %126 : vector<8x512xi1>, vector<8x512xf32>
    %c17_i32_79 = arith.constant 17 : i32
    %128 = tpu.dynamic_rotate %127 by %c17_i32_79 dim 1 : vector<8x512xf32>, i32 -> vector<8x512xf32>
    %129 = vector.broadcast %1 : vector<1x512xf32> to vector<8x512xf32>
    %130 = arith.mulf %128, %129 : vector<8x512xf32>
    %c16_i32_80 = arith.constant 16 : i32
    %131 = tpu.dynamic_rotate %127 by %c16_i32_80 dim 1 : vector<8x512xf32>, i32 -> vector<8x512xf32>
    %132 = vector.broadcast %3 : vector<1x512xf32> to vector<8x512xf32>
    %133 = arith.mulf %131, %132 : vector<8x512xf32>
    %c15_i32_81 = arith.constant 15 : i32
    %134 = tpu.dynamic_rotate %127 by %c15_i32_81 dim 1 : vector<8x512xf32>, i32 -> vector<8x512xf32>
    %135 = vector.broadcast %5 : vector<1x512xf32> to vector<8x512xf32>
    %136 = arith.mulf %134, %135 : vector<8x512xf32>
    %c1_i32_82 = arith.constant 1 : i32
    %137 = tpu.dynamic_rotate %127 by %c1_i32_82 dim 1 : vector<8x512xf32>, i32 -> vector<8x512xf32>
    %138 = vector.broadcast %7 : vector<1x512xf32> to vector<8x512xf32>
    %139 = arith.mulf %137, %138 : vector<8x512xf32>
    %c511_i32_83 = arith.constant 511 : i32
    %140 = tpu.dynamic_rotate %127 by %c511_i32_83 dim 1 : vector<8x512xf32>, i32 -> vector<8x512xf32>
    %141 = vector.broadcast %9 : vector<1x512xf32> to vector<8x512xf32>
    %142 = arith.mulf %140, %141 : vector<8x512xf32>
    %c497_i32_84 = arith.constant 497 : i32
    %143 = tpu.dynamic_rotate %127 by %c497_i32_84 dim 1 : vector<8x512xf32>, i32 -> vector<8x512xf32>
    %144 = vector.broadcast %11 : vector<1x512xf32> to vector<8x512xf32>
    %145 = arith.mulf %143, %144 : vector<8x512xf32>
    %c496_i32_85 = arith.constant 496 : i32
    %146 = tpu.dynamic_rotate %127 by %c496_i32_85 dim 1 : vector<8x512xf32>, i32 -> vector<8x512xf32>
    %147 = vector.broadcast %13 : vector<1x512xf32> to vector<8x512xf32>
    %148 = arith.mulf %146, %147 : vector<8x512xf32>
    %c495_i32_86 = arith.constant 495 : i32
    %149 = tpu.dynamic_rotate %127 by %c495_i32_86 dim 1 : vector<8x512xf32>, i32 -> vector<8x512xf32>
    %150 = vector.broadcast %15 : vector<1x512xf32> to vector<8x512xf32>
    %151 = arith.mulf %149, %150 : vector<8x512xf32>
    %152 = tpu.concatenate %130, %133, %136, %139, %127, %142, %145, %148, %151 in 0 : vector<8x512xf32>, vector<8x512xf32>, vector<8x512xf32>, vector<8x512xf32>, vector<8x512xf32>, vector<8x512xf32>, vector<8x512xf32>, vector<8x512xf32>, vector<8x512xf32> -> vector<72x512xf32>
    %c1_87 = arith.constant 1 : index
    %c0_88 = arith.constant 0 : index
    %c0_89 = arith.constant 0 : index
    %153 = vector.load %arg4[%c1_87, %c0_88, %c0_89] : memref<22x8x72xf32, #tpu.memory_space<vmem>>, vector<1x8x72xf32>
    %154 = vector.shape_cast %153 : vector<1x8x72xf32> to vector<8x72xf32>
    %cst_90 = arith.constant dense<0.000000e+00> : vector<8x512xf32>
    %155 = tpu.matmul %154, %152, %cst_90 {dimension_numbers = #tpu.dot_dimension_numbers<[1], [0], [0], [1], [0, 0, 1, 1], [], []>} : vector<8x72xf32>, vector<72x512xf32>, vector<8x512xf32> -> vector<8x512xf32>
    %c2_91 = arith.constant 2 : index
    %c0_92 = arith.constant 0 : index
    %c0_93 = arith.constant 0 : index
    %156 = vector.load %arg5[%c2_91, %c0_92, %c0_93] : memref<15x8x1xf32, #tpu.memory_space<vmem>>, vector<1x8x1xf32>
    %157 = vector.shape_cast %156 : vector<1x8x1xf32> to vector<8x1xf32>
    %158 = vector.broadcast %157 : vector<8x1xf32> to vector<8x512xf32>
    %159 = arith.addf %155, %158 : vector<8x512xf32>
    %cst_94 = arith.constant 0.000000e+00 : f32
    %160 = vector.broadcast %cst_94 : f32 to vector<8x512xf32>
    %161 = arith.cmpf oge, %159, %160 : vector<8x512xf32>
    %c2_95 = arith.constant 2 : index
    %c0_96 = arith.constant 0 : index
    %c0_97 = arith.constant 0 : index
    %162 = vector.load %arg6[%c2_95, %c0_96, %c0_97] : memref<15x8x1xf32, #tpu.memory_space<vmem>>, vector<1x8x1xf32>
    %163 = vector.shape_cast %162 : vector<1x8x1xf32> to vector<8x1xf32>
    %164 = vector.broadcast %163 : vector<8x1xf32> to vector<8x512xf32>
    %165 = arith.mulf %164, %159 : vector<8x512xf32>
    %166 = arith.select %161, %159, %165 : vector<8x512xi1>, vector<8x512xf32>
    %c17_i32_98 = arith.constant 17 : i32
    %167 = tpu.dynamic_rotate %166 by %c17_i32_98 dim 1 : vector<8x512xf32>, i32 -> vector<8x512xf32>
    %168 = vector.broadcast %1 : vector<1x512xf32> to vector<8x512xf32>
    %169 = arith.mulf %167, %168 : vector<8x512xf32>
    %c16_i32_99 = arith.constant 16 : i32
    %170 = tpu.dynamic_rotate %166 by %c16_i32_99 dim 1 : vector<8x512xf32>, i32 -> vector<8x512xf32>
    %171 = vector.broadcast %3 : vector<1x512xf32> to vector<8x512xf32>
    %172 = arith.mulf %170, %171 : vector<8x512xf32>
    %c15_i32_100 = arith.constant 15 : i32
    %173 = tpu.dynamic_rotate %166 by %c15_i32_100 dim 1 : vector<8x512xf32>, i32 -> vector<8x512xf32>
    %174 = vector.broadcast %5 : vector<1x512xf32> to vector<8x512xf32>
    %175 = arith.mulf %173, %174 : vector<8x512xf32>
    %c1_i32_101 = arith.constant 1 : i32
    %176 = tpu.dynamic_rotate %166 by %c1_i32_101 dim 1 : vector<8x512xf32>, i32 -> vector<8x512xf32>
    %177 = vector.broadcast %7 : vector<1x512xf32> to vector<8x512xf32>
    %178 = arith.mulf %176, %177 : vector<8x512xf32>
    %c511_i32_102 = arith.constant 511 : i32
    %179 = tpu.dynamic_rotate %166 by %c511_i32_102 dim 1 : vector<8x512xf32>, i32 -> vector<8x512xf32>
    %180 = vector.broadcast %9 : vector<1x512xf32> to vector<8x512xf32>
    %181 = arith.mulf %179, %180 : vector<8x512xf32>
    %c497_i32_103 = arith.constant 497 : i32
    %182 = tpu.dynamic_rotate %166 by %c497_i32_103 dim 1 : vector<8x512xf32>, i32 -> vector<8x512xf32>
    %183 = vector.broadcast %11 : vector<1x512xf32> to vector<8x512xf32>
    %184 = arith.mulf %182, %183 : vector<8x512xf32>
    %c496_i32_104 = arith.constant 496 : i32
    %185 = tpu.dynamic_rotate %166 by %c496_i32_104 dim 1 : vector<8x512xf32>, i32 -> vector<8x512xf32>
    %186 = vector.broadcast %13 : vector<1x512xf32> to vector<8x512xf32>
    %187 = arith.mulf %185, %186 : vector<8x512xf32>
    %c495_i32_105 = arith.constant 495 : i32
    %188 = tpu.dynamic_rotate %166 by %c495_i32_105 dim 1 : vector<8x512xf32>, i32 -> vector<8x512xf32>
    %189 = vector.broadcast %15 : vector<1x512xf32> to vector<8x512xf32>
    %190 = arith.mulf %188, %189 : vector<8x512xf32>
    %191 = tpu.concatenate %169, %172, %175, %178, %166, %181, %184, %187, %190 in 0 : vector<8x512xf32>, vector<8x512xf32>, vector<8x512xf32>, vector<8x512xf32>, vector<8x512xf32>, vector<8x512xf32>, vector<8x512xf32>, vector<8x512xf32>, vector<8x512xf32> -> vector<72x512xf32>
    %c2_106 = arith.constant 2 : index
    %c0_107 = arith.constant 0 : index
    %c0_108 = arith.constant 0 : index
    %192 = vector.load %arg4[%c2_106, %c0_107, %c0_108] : memref<22x8x72xf32, #tpu.memory_space<vmem>>, vector<1x8x72xf32>
    %193 = vector.shape_cast %192 : vector<1x8x72xf32> to vector<8x72xf32>
    %cst_109 = arith.constant dense<0.000000e+00> : vector<8x512xf32>
    %194 = tpu.matmul %193, %113, %cst_109 {dimension_numbers = #tpu.dot_dimension_numbers<[1], [0], [0], [1], [0, 0, 1, 1], [], []>} : vector<8x72xf32>, vector<72x512xf32>, vector<8x512xf32> -> vector<8x512xf32>
    %c3_110 = arith.constant 3 : index
    %c0_111 = arith.constant 0 : index
    %c0_112 = arith.constant 0 : index
    %195 = vector.load %arg4[%c3_110, %c0_111, %c0_112] : memref<22x8x72xf32, #tpu.memory_space<vmem>>, vector<1x8x72xf32>
    %196 = vector.shape_cast %195 : vector<1x8x72xf32> to vector<8x72xf32>
    %cst_113 = arith.constant dense<0.000000e+00> : vector<8x512xf32>
    %197 = tpu.matmul %196, %152, %cst_113 {dimension_numbers = #tpu.dot_dimension_numbers<[1], [0], [0], [1], [0, 0, 1, 1], [], []>} : vector<8x72xf32>, vector<72x512xf32>, vector<8x512xf32> -> vector<8x512xf32>
    %198 = arith.addf %194, %197 : vector<8x512xf32>
    %c4_114 = arith.constant 4 : index
    %c0_115 = arith.constant 0 : index
    %c0_116 = arith.constant 0 : index
    %199 = vector.load %arg4[%c4_114, %c0_115, %c0_116] : memref<22x8x72xf32, #tpu.memory_space<vmem>>, vector<1x8x72xf32>
    %200 = vector.shape_cast %199 : vector<1x8x72xf32> to vector<8x72xf32>
    %cst_117 = arith.constant dense<0.000000e+00> : vector<8x512xf32>
    %201 = tpu.matmul %200, %191, %cst_117 {dimension_numbers = #tpu.dot_dimension_numbers<[1], [0], [0], [1], [0, 0, 1, 1], [], []>} : vector<8x72xf32>, vector<72x512xf32>, vector<8x512xf32> -> vector<8x512xf32>
    %202 = arith.addf %198, %201 : vector<8x512xf32>
    %c3_118 = arith.constant 3 : index
    %c0_119 = arith.constant 0 : index
    %c0_120 = arith.constant 0 : index
    %203 = vector.load %arg5[%c3_118, %c0_119, %c0_120] : memref<15x8x1xf32, #tpu.memory_space<vmem>>, vector<1x8x1xf32>
    %204 = vector.shape_cast %203 : vector<1x8x1xf32> to vector<8x1xf32>
    %205 = vector.broadcast %204 : vector<8x1xf32> to vector<8x512xf32>
    %206 = arith.addf %202, %205 : vector<8x512xf32>
    %cst_121 = arith.constant 0.000000e+00 : f32
    %207 = vector.broadcast %cst_121 : f32 to vector<8x512xf32>
    %208 = arith.cmpf oge, %206, %207 : vector<8x512xf32>
    %c3_122 = arith.constant 3 : index
    %c0_123 = arith.constant 0 : index
    %c0_124 = arith.constant 0 : index
    %209 = vector.load %arg6[%c3_122, %c0_123, %c0_124] : memref<15x8x1xf32, #tpu.memory_space<vmem>>, vector<1x8x1xf32>
    %210 = vector.shape_cast %209 : vector<1x8x1xf32> to vector<8x1xf32>
    %211 = vector.broadcast %210 : vector<8x1xf32> to vector<8x512xf32>
    %212 = arith.mulf %211, %206 : vector<8x512xf32>
    %213 = arith.select %208, %206, %212 : vector<8x512xi1>, vector<8x512xf32>
    %c17_i32_125 = arith.constant 17 : i32
    %214 = tpu.dynamic_rotate %213 by %c17_i32_125 dim 1 : vector<8x512xf32>, i32 -> vector<8x512xf32>
    %215 = vector.broadcast %1 : vector<1x512xf32> to vector<8x512xf32>
    %216 = arith.mulf %214, %215 : vector<8x512xf32>
    %c16_i32_126 = arith.constant 16 : i32
    %217 = tpu.dynamic_rotate %213 by %c16_i32_126 dim 1 : vector<8x512xf32>, i32 -> vector<8x512xf32>
    %218 = vector.broadcast %3 : vector<1x512xf32> to vector<8x512xf32>
    %219 = arith.mulf %217, %218 : vector<8x512xf32>
    %c15_i32_127 = arith.constant 15 : i32
    %220 = tpu.dynamic_rotate %213 by %c15_i32_127 dim 1 : vector<8x512xf32>, i32 -> vector<8x512xf32>
    %221 = vector.broadcast %5 : vector<1x512xf32> to vector<8x512xf32>
    %222 = arith.mulf %220, %221 : vector<8x512xf32>
    %c1_i32_128 = arith.constant 1 : i32
    %223 = tpu.dynamic_rotate %213 by %c1_i32_128 dim 1 : vector<8x512xf32>, i32 -> vector<8x512xf32>
    %224 = vector.broadcast %7 : vector<1x512xf32> to vector<8x512xf32>
    %225 = arith.mulf %223, %224 : vector<8x512xf32>
    %c511_i32_129 = arith.constant 511 : i32
    %226 = tpu.dynamic_rotate %213 by %c511_i32_129 dim 1 : vector<8x512xf32>, i32 -> vector<8x512xf32>
    %227 = vector.broadcast %9 : vector<1x512xf32> to vector<8x512xf32>
    %228 = arith.mulf %226, %227 : vector<8x512xf32>
    %c497_i32_130 = arith.constant 497 : i32
    %229 = tpu.dynamic_rotate %213 by %c497_i32_130 dim 1 : vector<8x512xf32>, i32 -> vector<8x512xf32>
    %230 = vector.broadcast %11 : vector<1x512xf32> to vector<8x512xf32>
    %231 = arith.mulf %229, %230 : vector<8x512xf32>
    %c496_i32_131 = arith.constant 496 : i32
    %232 = tpu.dynamic_rotate %213 by %c496_i32_131 dim 1 : vector<8x512xf32>, i32 -> vector<8x512xf32>
    %233 = vector.broadcast %13 : vector<1x512xf32> to vector<8x512xf32>
    %234 = arith.mulf %232, %233 : vector<8x512xf32>
    %c495_i32_132 = arith.constant 495 : i32
    %235 = tpu.dynamic_rotate %213 by %c495_i32_132 dim 1 : vector<8x512xf32>, i32 -> vector<8x512xf32>
    %236 = vector.broadcast %15 : vector<1x512xf32> to vector<8x512xf32>
    %237 = arith.mulf %235, %236 : vector<8x512xf32>
    %238 = tpu.concatenate %216, %219, %222, %225, %213, %228, %231, %234, %237 in 0 : vector<8x512xf32>, vector<8x512xf32>, vector<8x512xf32>, vector<8x512xf32>, vector<8x512xf32>, vector<8x512xf32>, vector<8x512xf32>, vector<8x512xf32>, vector<8x512xf32> -> vector<72x512xf32>
    %c5_133 = arith.constant 5 : index
    %c0_134 = arith.constant 0 : index
    %c0_135 = arith.constant 0 : index
    %239 = vector.load %arg4[%c5_133, %c0_134, %c0_135] : memref<22x8x72xf32, #tpu.memory_space<vmem>>, vector<1x8x72xf32>
    %240 = vector.shape_cast %239 : vector<1x8x72xf32> to vector<8x72xf32>
    %cst_136 = arith.constant dense<0.000000e+00> : vector<8x512xf32>
    %241 = tpu.matmul %240, %238, %cst_136 {dimension_numbers = #tpu.dot_dimension_numbers<[1], [0], [0], [1], [0, 0, 1, 1], [], []>} : vector<8x72xf32>, vector<72x512xf32>, vector<8x512xf32> -> vector<8x512xf32>
    %c4_137 = arith.constant 4 : index
    %c0_138 = arith.constant 0 : index
    %c0_139 = arith.constant 0 : index
    %242 = vector.load %arg5[%c4_137, %c0_138, %c0_139] : memref<15x8x1xf32, #tpu.memory_space<vmem>>, vector<1x8x1xf32>
    %243 = vector.shape_cast %242 : vector<1x8x1xf32> to vector<8x1xf32>
    %244 = vector.broadcast %243 : vector<8x1xf32> to vector<8x512xf32>
    %245 = arith.addf %241, %244 : vector<8x512xf32>
    %cst_140 = arith.constant 0.000000e+00 : f32
    %246 = vector.broadcast %cst_140 : f32 to vector<8x512xf32>
    %247 = arith.cmpf oge, %245, %246 : vector<8x512xf32>
    %c4_141 = arith.constant 4 : index
    %c0_142 = arith.constant 0 : index
    %c0_143 = arith.constant 0 : index
    %248 = vector.load %arg6[%c4_141, %c0_142, %c0_143] : memref<15x8x1xf32, #tpu.memory_space<vmem>>, vector<1x8x1xf32>
    %249 = vector.shape_cast %248 : vector<1x8x1xf32> to vector<8x1xf32>
    %250 = vector.broadcast %249 : vector<8x1xf32> to vector<8x512xf32>
    %251 = arith.mulf %250, %245 : vector<8x512xf32>
    %252 = arith.select %247, %245, %251 : vector<8x512xi1>, vector<8x512xf32>
    %c17_i32_144 = arith.constant 17 : i32
    %253 = tpu.dynamic_rotate %252 by %c17_i32_144 dim 1 : vector<8x512xf32>, i32 -> vector<8x512xf32>
    %254 = vector.broadcast %1 : vector<1x512xf32> to vector<8x512xf32>
    %255 = arith.mulf %253, %254 : vector<8x512xf32>
    %c16_i32_145 = arith.constant 16 : i32
    %256 = tpu.dynamic_rotate %252 by %c16_i32_145 dim 1 : vector<8x512xf32>, i32 -> vector<8x512xf32>
    %257 = vector.broadcast %3 : vector<1x512xf32> to vector<8x512xf32>
    %258 = arith.mulf %256, %257 : vector<8x512xf32>
    %c15_i32_146 = arith.constant 15 : i32
    %259 = tpu.dynamic_rotate %252 by %c15_i32_146 dim 1 : vector<8x512xf32>, i32 -> vector<8x512xf32>
    %260 = vector.broadcast %5 : vector<1x512xf32> to vector<8x512xf32>
    %261 = arith.mulf %259, %260 : vector<8x512xf32>
    %c1_i32_147 = arith.constant 1 : i32
    %262 = tpu.dynamic_rotate %252 by %c1_i32_147 dim 1 : vector<8x512xf32>, i32 -> vector<8x512xf32>
    %263 = vector.broadcast %7 : vector<1x512xf32> to vector<8x512xf32>
    %264 = arith.mulf %262, %263 : vector<8x512xf32>
    %c511_i32_148 = arith.constant 511 : i32
    %265 = tpu.dynamic_rotate %252 by %c511_i32_148 dim 1 : vector<8x512xf32>, i32 -> vector<8x512xf32>
    %266 = vector.broadcast %9 : vector<1x512xf32> to vector<8x512xf32>
    %267 = arith.mulf %265, %266 : vector<8x512xf32>
    %c497_i32_149 = arith.constant 497 : i32
    %268 = tpu.dynamic_rotate %252 by %c497_i32_149 dim 1 : vector<8x512xf32>, i32 -> vector<8x512xf32>
    %269 = vector.broadcast %11 : vector<1x512xf32> to vector<8x512xf32>
    %270 = arith.mulf %268, %269 : vector<8x512xf32>
    %c496_i32_150 = arith.constant 496 : i32
    %271 = tpu.dynamic_rotate %252 by %c496_i32_150 dim 1 : vector<8x512xf32>, i32 -> vector<8x512xf32>
    %272 = vector.broadcast %13 : vector<1x512xf32> to vector<8x512xf32>
    %273 = arith.mulf %271, %272 : vector<8x512xf32>
    %c495_i32_151 = arith.constant 495 : i32
    %274 = tpu.dynamic_rotate %252 by %c495_i32_151 dim 1 : vector<8x512xf32>, i32 -> vector<8x512xf32>
    %275 = vector.broadcast %15 : vector<1x512xf32> to vector<8x512xf32>
    %276 = arith.mulf %274, %275 : vector<8x512xf32>
    %277 = tpu.concatenate %255, %258, %261, %264, %252, %267, %270, %273, %276 in 0 : vector<8x512xf32>, vector<8x512xf32>, vector<8x512xf32>, vector<8x512xf32>, vector<8x512xf32>, vector<8x512xf32>, vector<8x512xf32>, vector<8x512xf32>, vector<8x512xf32> -> vector<72x512xf32>
    %c6_152 = arith.constant 6 : index
    %c0_153 = arith.constant 0 : index
    %c0_154 = arith.constant 0 : index
    %278 = vector.load %arg4[%c6_152, %c0_153, %c0_154] : memref<22x8x72xf32, #tpu.memory_space<vmem>>, vector<1x8x72xf32>
    %279 = vector.shape_cast %278 : vector<1x8x72xf32> to vector<8x72xf32>
    %cst_155 = arith.constant dense<0.000000e+00> : vector<8x512xf32>
    %280 = tpu.matmul %279, %277, %cst_155 {dimension_numbers = #tpu.dot_dimension_numbers<[1], [0], [0], [1], [0, 0, 1, 1], [], []>} : vector<8x72xf32>, vector<72x512xf32>, vector<8x512xf32> -> vector<8x512xf32>
    %c5_156 = arith.constant 5 : index
    %c0_157 = arith.constant 0 : index
    %c0_158 = arith.constant 0 : index
    %281 = vector.load %arg5[%c5_156, %c0_157, %c0_158] : memref<15x8x1xf32, #tpu.memory_space<vmem>>, vector<1x8x1xf32>
    %282 = vector.shape_cast %281 : vector<1x8x1xf32> to vector<8x1xf32>
    %283 = vector.broadcast %282 : vector<8x1xf32> to vector<8x512xf32>
    %284 = arith.addf %280, %283 : vector<8x512xf32>
    %cst_159 = arith.constant 0.000000e+00 : f32
    %285 = vector.broadcast %cst_159 : f32 to vector<8x512xf32>
    %286 = arith.cmpf oge, %284, %285 : vector<8x512xf32>
    %c5_160 = arith.constant 5 : index
    %c0_161 = arith.constant 0 : index
    %c0_162 = arith.constant 0 : index
    %287 = vector.load %arg6[%c5_160, %c0_161, %c0_162] : memref<15x8x1xf32, #tpu.memory_space<vmem>>, vector<1x8x1xf32>
    %288 = vector.shape_cast %287 : vector<1x8x1xf32> to vector<8x1xf32>
    %289 = vector.broadcast %288 : vector<8x1xf32> to vector<8x512xf32>
    %290 = arith.mulf %289, %284 : vector<8x512xf32>
    %291 = arith.select %286, %284, %290 : vector<8x512xi1>, vector<8x512xf32>
    %c17_i32_163 = arith.constant 17 : i32
    %292 = tpu.dynamic_rotate %291 by %c17_i32_163 dim 1 : vector<8x512xf32>, i32 -> vector<8x512xf32>
    %293 = vector.broadcast %1 : vector<1x512xf32> to vector<8x512xf32>
    %294 = arith.mulf %292, %293 : vector<8x512xf32>
    %c16_i32_164 = arith.constant 16 : i32
    %295 = tpu.dynamic_rotate %291 by %c16_i32_164 dim 1 : vector<8x512xf32>, i32 -> vector<8x512xf32>
    %296 = vector.broadcast %3 : vector<1x512xf32> to vector<8x512xf32>
    %297 = arith.mulf %295, %296 : vector<8x512xf32>
    %c15_i32_165 = arith.constant 15 : i32
    %298 = tpu.dynamic_rotate %291 by %c15_i32_165 dim 1 : vector<8x512xf32>, i32 -> vector<8x512xf32>
    %299 = vector.broadcast %5 : vector<1x512xf32> to vector<8x512xf32>
    %300 = arith.mulf %298, %299 : vector<8x512xf32>
    %c1_i32_166 = arith.constant 1 : i32
    %301 = tpu.dynamic_rotate %291 by %c1_i32_166 dim 1 : vector<8x512xf32>, i32 -> vector<8x512xf32>
    %302 = vector.broadcast %7 : vector<1x512xf32> to vector<8x512xf32>
    %303 = arith.mulf %301, %302 : vector<8x512xf32>
    %c511_i32_167 = arith.constant 511 : i32
    %304 = tpu.dynamic_rotate %291 by %c511_i32_167 dim 1 : vector<8x512xf32>, i32 -> vector<8x512xf32>
    %305 = vector.broadcast %9 : vector<1x512xf32> to vector<8x512xf32>
    %306 = arith.mulf %304, %305 : vector<8x512xf32>
    %c497_i32_168 = arith.constant 497 : i32
    %307 = tpu.dynamic_rotate %291 by %c497_i32_168 dim 1 : vector<8x512xf32>, i32 -> vector<8x512xf32>
    %308 = vector.broadcast %11 : vector<1x512xf32> to vector<8x512xf32>
    %309 = arith.mulf %307, %308 : vector<8x512xf32>
    %c496_i32_169 = arith.constant 496 : i32
    %310 = tpu.dynamic_rotate %291 by %c496_i32_169 dim 1 : vector<8x512xf32>, i32 -> vector<8x512xf32>
    %311 = vector.broadcast %13 : vector<1x512xf32> to vector<8x512xf32>
    %312 = arith.mulf %310, %311 : vector<8x512xf32>
    %c495_i32_170 = arith.constant 495 : i32
    %313 = tpu.dynamic_rotate %291 by %c495_i32_170 dim 1 : vector<8x512xf32>, i32 -> vector<8x512xf32>
    %314 = vector.broadcast %15 : vector<1x512xf32> to vector<8x512xf32>
    %315 = arith.mulf %313, %314 : vector<8x512xf32>
    %316 = tpu.concatenate %294, %297, %300, %303, %291, %306, %309, %312, %315 in 0 : vector<8x512xf32>, vector<8x512xf32>, vector<8x512xf32>, vector<8x512xf32>, vector<8x512xf32>, vector<8x512xf32>, vector<8x512xf32>, vector<8x512xf32>, vector<8x512xf32> -> vector<72x512xf32>
    %c7_171 = arith.constant 7 : index
    %c0_172 = arith.constant 0 : index
    %c0_173 = arith.constant 0 : index
    %317 = vector.load %arg4[%c7_171, %c0_172, %c0_173] : memref<22x8x72xf32, #tpu.memory_space<vmem>>, vector<1x8x72xf32>
    %318 = vector.shape_cast %317 : vector<1x8x72xf32> to vector<8x72xf32>
    %cst_174 = arith.constant dense<0.000000e+00> : vector<8x512xf32>
    %319 = tpu.matmul %318, %238, %cst_174 {dimension_numbers = #tpu.dot_dimension_numbers<[1], [0], [0], [1], [0, 0, 1, 1], [], []>} : vector<8x72xf32>, vector<72x512xf32>, vector<8x512xf32> -> vector<8x512xf32>
    %c8_175 = arith.constant 8 : index
    %c0_176 = arith.constant 0 : index
    %c0_177 = arith.constant 0 : index
    %320 = vector.load %arg4[%c8_175, %c0_176, %c0_177] : memref<22x8x72xf32, #tpu.memory_space<vmem>>, vector<1x8x72xf32>
    %321 = vector.shape_cast %320 : vector<1x8x72xf32> to vector<8x72xf32>
    %cst_178 = arith.constant dense<0.000000e+00> : vector<8x512xf32>
    %322 = tpu.matmul %321, %277, %cst_178 {dimension_numbers = #tpu.dot_dimension_numbers<[1], [0], [0], [1], [0, 0, 1, 1], [], []>} : vector<8x72xf32>, vector<72x512xf32>, vector<8x512xf32> -> vector<8x512xf32>
    %323 = arith.addf %319, %322 : vector<8x512xf32>
    %c9 = arith.constant 9 : index
    %c0_179 = arith.constant 0 : index
    %c0_180 = arith.constant 0 : index
    %324 = vector.load %arg4[%c9, %c0_179, %c0_180] : memref<22x8x72xf32, #tpu.memory_space<vmem>>, vector<1x8x72xf32>
    %325 = vector.shape_cast %324 : vector<1x8x72xf32> to vector<8x72xf32>
    %cst_181 = arith.constant dense<0.000000e+00> : vector<8x512xf32>
    %326 = tpu.matmul %325, %316, %cst_181 {dimension_numbers = #tpu.dot_dimension_numbers<[1], [0], [0], [1], [0, 0, 1, 1], [], []>} : vector<8x72xf32>, vector<72x512xf32>, vector<8x512xf32> -> vector<8x512xf32>
    %327 = arith.addf %323, %326 : vector<8x512xf32>
    %c6_182 = arith.constant 6 : index
    %c0_183 = arith.constant 0 : index
    %c0_184 = arith.constant 0 : index
    %328 = vector.load %arg5[%c6_182, %c0_183, %c0_184] : memref<15x8x1xf32, #tpu.memory_space<vmem>>, vector<1x8x1xf32>
    %329 = vector.shape_cast %328 : vector<1x8x1xf32> to vector<8x1xf32>
    %330 = vector.broadcast %329 : vector<8x1xf32> to vector<8x512xf32>
    %331 = arith.addf %327, %330 : vector<8x512xf32>
    %cst_185 = arith.constant 0.000000e+00 : f32
    %332 = vector.broadcast %cst_185 : f32 to vector<8x512xf32>
    %333 = arith.cmpf oge, %331, %332 : vector<8x512xf32>
    %c6_186 = arith.constant 6 : index
    %c0_187 = arith.constant 0 : index
    %c0_188 = arith.constant 0 : index
    %334 = vector.load %arg6[%c6_186, %c0_187, %c0_188] : memref<15x8x1xf32, #tpu.memory_space<vmem>>, vector<1x8x1xf32>
    %335 = vector.shape_cast %334 : vector<1x8x1xf32> to vector<8x1xf32>
    %336 = vector.broadcast %335 : vector<8x1xf32> to vector<8x512xf32>
    %337 = arith.mulf %336, %331 : vector<8x512xf32>
    %338 = arith.select %333, %331, %337 : vector<8x512xi1>, vector<8x512xf32>
    %c17_i32_189 = arith.constant 17 : i32
    %339 = tpu.dynamic_rotate %338 by %c17_i32_189 dim 1 : vector<8x512xf32>, i32 -> vector<8x512xf32>
    %340 = vector.broadcast %1 : vector<1x512xf32> to vector<8x512xf32>
    %341 = arith.mulf %339, %340 : vector<8x512xf32>
    %c16_i32_190 = arith.constant 16 : i32
    %342 = tpu.dynamic_rotate %338 by %c16_i32_190 dim 1 : vector<8x512xf32>, i32 -> vector<8x512xf32>
    %343 = vector.broadcast %3 : vector<1x512xf32> to vector<8x512xf32>
    %344 = arith.mulf %342, %343 : vector<8x512xf32>
    %c15_i32_191 = arith.constant 15 : i32
    %345 = tpu.dynamic_rotate %338 by %c15_i32_191 dim 1 : vector<8x512xf32>, i32 -> vector<8x512xf32>
    %346 = vector.broadcast %5 : vector<1x512xf32> to vector<8x512xf32>
    %347 = arith.mulf %345, %346 : vector<8x512xf32>
    %c1_i32_192 = arith.constant 1 : i32
    %348 = tpu.dynamic_rotate %338 by %c1_i32_192 dim 1 : vector<8x512xf32>, i32 -> vector<8x512xf32>
    %349 = vector.broadcast %7 : vector<1x512xf32> to vector<8x512xf32>
    %350 = arith.mulf %348, %349 : vector<8x512xf32>
    %c511_i32_193 = arith.constant 511 : i32
    %351 = tpu.dynamic_rotate %338 by %c511_i32_193 dim 1 : vector<8x512xf32>, i32 -> vector<8x512xf32>
    %352 = vector.broadcast %9 : vector<1x512xf32> to vector<8x512xf32>
    %353 = arith.mulf %351, %352 : vector<8x512xf32>
    %c497_i32_194 = arith.constant 497 : i32
    %354 = tpu.dynamic_rotate %338 by %c497_i32_194 dim 1 : vector<8x512xf32>, i32 -> vector<8x512xf32>
    %355 = vector.broadcast %11 : vector<1x512xf32> to vector<8x512xf32>
    %356 = arith.mulf %354, %355 : vector<8x512xf32>
    %c496_i32_195 = arith.constant 496 : i32
    %357 = tpu.dynamic_rotate %338 by %c496_i32_195 dim 1 : vector<8x512xf32>, i32 -> vector<8x512xf32>
    %358 = vector.broadcast %13 : vector<1x512xf32> to vector<8x512xf32>
    %359 = arith.mulf %357, %358 : vector<8x512xf32>
    %c495_i32_196 = arith.constant 495 : i32
    %360 = tpu.dynamic_rotate %338 by %c495_i32_196 dim 1 : vector<8x512xf32>, i32 -> vector<8x512xf32>
    %361 = vector.broadcast %15 : vector<1x512xf32> to vector<8x512xf32>
    %362 = arith.mulf %360, %361 : vector<8x512xf32>
    %363 = tpu.concatenate %341, %344, %347, %350, %338, %353, %356, %359, %362 in 0 : vector<8x512xf32>, vector<8x512xf32>, vector<8x512xf32>, vector<8x512xf32>, vector<8x512xf32>, vector<8x512xf32>, vector<8x512xf32>, vector<8x512xf32>, vector<8x512xf32> -> vector<72x512xf32>
    %c10 = arith.constant 10 : index
    %c0_197 = arith.constant 0 : index
    %c0_198 = arith.constant 0 : index
    %364 = vector.load %arg4[%c10, %c0_197, %c0_198] : memref<22x8x72xf32, #tpu.memory_space<vmem>>, vector<1x8x72xf32>
    %365 = vector.shape_cast %364 : vector<1x8x72xf32> to vector<8x72xf32>
    %cst_199 = arith.constant dense<0.000000e+00> : vector<8x512xf32>
    %366 = tpu.matmul %365, %363, %cst_199 {dimension_numbers = #tpu.dot_dimension_numbers<[1], [0], [0], [1], [0, 0, 1, 1], [], []>} : vector<8x72xf32>, vector<72x512xf32>, vector<8x512xf32> -> vector<8x512xf32>
    %c7_200 = arith.constant 7 : index
    %c0_201 = arith.constant 0 : index
    %c0_202 = arith.constant 0 : index
    %367 = vector.load %arg5[%c7_200, %c0_201, %c0_202] : memref<15x8x1xf32, #tpu.memory_space<vmem>>, vector<1x8x1xf32>
    %368 = vector.shape_cast %367 : vector<1x8x1xf32> to vector<8x1xf32>
    %369 = vector.broadcast %368 : vector<8x1xf32> to vector<8x512xf32>
    %370 = arith.addf %366, %369 : vector<8x512xf32>
    %cst_203 = arith.constant 0.000000e+00 : f32
    %371 = vector.broadcast %cst_203 : f32 to vector<8x512xf32>
    %372 = arith.cmpf oge, %370, %371 : vector<8x512xf32>
    %c7_204 = arith.constant 7 : index
    %c0_205 = arith.constant 0 : index
    %c0_206 = arith.constant 0 : index
    %373 = vector.load %arg6[%c7_204, %c0_205, %c0_206] : memref<15x8x1xf32, #tpu.memory_space<vmem>>, vector<1x8x1xf32>
    %374 = vector.shape_cast %373 : vector<1x8x1xf32> to vector<8x1xf32>
    %375 = vector.broadcast %374 : vector<8x1xf32> to vector<8x512xf32>
    %376 = arith.mulf %375, %370 : vector<8x512xf32>
    %377 = arith.select %372, %370, %376 : vector<8x512xi1>, vector<8x512xf32>
    %c17_i32_207 = arith.constant 17 : i32
    %378 = tpu.dynamic_rotate %377 by %c17_i32_207 dim 1 : vector<8x512xf32>, i32 -> vector<8x512xf32>
    %379 = vector.broadcast %1 : vector<1x512xf32> to vector<8x512xf32>
    %380 = arith.mulf %378, %379 : vector<8x512xf32>
    %c16_i32_208 = arith.constant 16 : i32
    %381 = tpu.dynamic_rotate %377 by %c16_i32_208 dim 1 : vector<8x512xf32>, i32 -> vector<8x512xf32>
    %382 = vector.broadcast %3 : vector<1x512xf32> to vector<8x512xf32>
    %383 = arith.mulf %381, %382 : vector<8x512xf32>
    %c15_i32_209 = arith.constant 15 : i32
    %384 = tpu.dynamic_rotate %377 by %c15_i32_209 dim 1 : vector<8x512xf32>, i32 -> vector<8x512xf32>
    %385 = vector.broadcast %5 : vector<1x512xf32> to vector<8x512xf32>
    %386 = arith.mulf %384, %385 : vector<8x512xf32>
    %c1_i32_210 = arith.constant 1 : i32
    %387 = tpu.dynamic_rotate %377 by %c1_i32_210 dim 1 : vector<8x512xf32>, i32 -> vector<8x512xf32>
    %388 = vector.broadcast %7 : vector<1x512xf32> to vector<8x512xf32>
    %389 = arith.mulf %387, %388 : vector<8x512xf32>
    %c511_i32_211 = arith.constant 511 : i32
    %390 = tpu.dynamic_rotate %377 by %c511_i32_211 dim 1 : vector<8x512xf32>, i32 -> vector<8x512xf32>
    %391 = vector.broadcast %9 : vector<1x512xf32> to vector<8x512xf32>
    %392 = arith.mulf %390, %391 : vector<8x512xf32>
    %c497_i32_212 = arith.constant 497 : i32
    %393 = tpu.dynamic_rotate %377 by %c497_i32_212 dim 1 : vector<8x512xf32>, i32 -> vector<8x512xf32>
    %394 = vector.broadcast %11 : vector<1x512xf32> to vector<8x512xf32>
    %395 = arith.mulf %393, %394 : vector<8x512xf32>
    %c496_i32_213 = arith.constant 496 : i32
    %396 = tpu.dynamic_rotate %377 by %c496_i32_213 dim 1 : vector<8x512xf32>, i32 -> vector<8x512xf32>
    %397 = vector.broadcast %13 : vector<1x512xf32> to vector<8x512xf32>
    %398 = arith.mulf %396, %397 : vector<8x512xf32>
    %c495_i32_214 = arith.constant 495 : i32
    %399 = tpu.dynamic_rotate %377 by %c495_i32_214 dim 1 : vector<8x512xf32>, i32 -> vector<8x512xf32>
    %400 = vector.broadcast %15 : vector<1x512xf32> to vector<8x512xf32>
    %401 = arith.mulf %399, %400 : vector<8x512xf32>
    %402 = tpu.concatenate %380, %383, %386, %389, %377, %392, %395, %398, %401 in 0 : vector<8x512xf32>, vector<8x512xf32>, vector<8x512xf32>, vector<8x512xf32>, vector<8x512xf32>, vector<8x512xf32>, vector<8x512xf32>, vector<8x512xf32>, vector<8x512xf32> -> vector<72x512xf32>
    %c11 = arith.constant 11 : index
    %c0_215 = arith.constant 0 : index
    %c0_216 = arith.constant 0 : index
    %403 = vector.load %arg4[%c11, %c0_215, %c0_216] : memref<22x8x72xf32, #tpu.memory_space<vmem>>, vector<1x8x72xf32>
    %404 = vector.shape_cast %403 : vector<1x8x72xf32> to vector<8x72xf32>
    %cst_217 = arith.constant dense<0.000000e+00> : vector<8x512xf32>
    %405 = tpu.matmul %404, %402, %cst_217 {dimension_numbers = #tpu.dot_dimension_numbers<[1], [0], [0], [1], [0, 0, 1, 1], [], []>} : vector<8x72xf32>, vector<72x512xf32>, vector<8x512xf32> -> vector<8x512xf32>
    %c8_218 = arith.constant 8 : index
    %c0_219 = arith.constant 0 : index
    %c0_220 = arith.constant 0 : index
    %406 = vector.load %arg5[%c8_218, %c0_219, %c0_220] : memref<15x8x1xf32, #tpu.memory_space<vmem>>, vector<1x8x1xf32>
    %407 = vector.shape_cast %406 : vector<1x8x1xf32> to vector<8x1xf32>
    %408 = vector.broadcast %407 : vector<8x1xf32> to vector<8x512xf32>
    %409 = arith.addf %405, %408 : vector<8x512xf32>
    %cst_221 = arith.constant 0.000000e+00 : f32
    %410 = vector.broadcast %cst_221 : f32 to vector<8x512xf32>
    %411 = arith.cmpf oge, %409, %410 : vector<8x512xf32>
    %c8_222 = arith.constant 8 : index
    %c0_223 = arith.constant 0 : index
    %c0_224 = arith.constant 0 : index
    %412 = vector.load %arg6[%c8_222, %c0_223, %c0_224] : memref<15x8x1xf32, #tpu.memory_space<vmem>>, vector<1x8x1xf32>
    %413 = vector.shape_cast %412 : vector<1x8x1xf32> to vector<8x1xf32>
    %414 = vector.broadcast %413 : vector<8x1xf32> to vector<8x512xf32>
    %415 = arith.mulf %414, %409 : vector<8x512xf32>
    %416 = arith.select %411, %409, %415 : vector<8x512xi1>, vector<8x512xf32>
    %c17_i32_225 = arith.constant 17 : i32
    %417 = tpu.dynamic_rotate %416 by %c17_i32_225 dim 1 : vector<8x512xf32>, i32 -> vector<8x512xf32>
    %418 = vector.broadcast %1 : vector<1x512xf32> to vector<8x512xf32>
    %419 = arith.mulf %417, %418 : vector<8x512xf32>
    %c16_i32_226 = arith.constant 16 : i32
    %420 = tpu.dynamic_rotate %416 by %c16_i32_226 dim 1 : vector<8x512xf32>, i32 -> vector<8x512xf32>
    %421 = vector.broadcast %3 : vector<1x512xf32> to vector<8x512xf32>
    %422 = arith.mulf %420, %421 : vector<8x512xf32>
    %c15_i32_227 = arith.constant 15 : i32
    %423 = tpu.dynamic_rotate %416 by %c15_i32_227 dim 1 : vector<8x512xf32>, i32 -> vector<8x512xf32>
    %424 = vector.broadcast %5 : vector<1x512xf32> to vector<8x512xf32>
    %425 = arith.mulf %423, %424 : vector<8x512xf32>
    %c1_i32_228 = arith.constant 1 : i32
    %426 = tpu.dynamic_rotate %416 by %c1_i32_228 dim 1 : vector<8x512xf32>, i32 -> vector<8x512xf32>
    %427 = vector.broadcast %7 : vector<1x512xf32> to vector<8x512xf32>
    %428 = arith.mulf %426, %427 : vector<8x512xf32>
    %c511_i32_229 = arith.constant 511 : i32
    %429 = tpu.dynamic_rotate %416 by %c511_i32_229 dim 1 : vector<8x512xf32>, i32 -> vector<8x512xf32>
    %430 = vector.broadcast %9 : vector<1x512xf32> to vector<8x512xf32>
    %431 = arith.mulf %429, %430 : vector<8x512xf32>
    %c497_i32_230 = arith.constant 497 : i32
    %432 = tpu.dynamic_rotate %416 by %c497_i32_230 dim 1 : vector<8x512xf32>, i32 -> vector<8x512xf32>
    %433 = vector.broadcast %11 : vector<1x512xf32> to vector<8x512xf32>
    %434 = arith.mulf %432, %433 : vector<8x512xf32>
    %c496_i32_231 = arith.constant 496 : i32
    %435 = tpu.dynamic_rotate %416 by %c496_i32_231 dim 1 : vector<8x512xf32>, i32 -> vector<8x512xf32>
    %436 = vector.broadcast %13 : vector<1x512xf32> to vector<8x512xf32>
    %437 = arith.mulf %435, %436 : vector<8x512xf32>
    %c495_i32_232 = arith.constant 495 : i32
    %438 = tpu.dynamic_rotate %416 by %c495_i32_232 dim 1 : vector<8x512xf32>, i32 -> vector<8x512xf32>
    %439 = vector.broadcast %15 : vector<1x512xf32> to vector<8x512xf32>
    %440 = arith.mulf %438, %439 : vector<8x512xf32>
    %441 = tpu.concatenate %419, %422, %425, %428, %416, %431, %434, %437, %440 in 0 : vector<8x512xf32>, vector<8x512xf32>, vector<8x512xf32>, vector<8x512xf32>, vector<8x512xf32>, vector<8x512xf32>, vector<8x512xf32>, vector<8x512xf32>, vector<8x512xf32> -> vector<72x512xf32>
    %c12 = arith.constant 12 : index
    %c0_233 = arith.constant 0 : index
    %c0_234 = arith.constant 0 : index
    %442 = vector.load %arg4[%c12, %c0_233, %c0_234] : memref<22x8x72xf32, #tpu.memory_space<vmem>>, vector<1x8x72xf32>
    %443 = vector.shape_cast %442 : vector<1x8x72xf32> to vector<8x72xf32>
    %cst_235 = arith.constant dense<0.000000e+00> : vector<8x512xf32>
    %444 = tpu.matmul %443, %363, %cst_235 {dimension_numbers = #tpu.dot_dimension_numbers<[1], [0], [0], [1], [0, 0, 1, 1], [], []>} : vector<8x72xf32>, vector<72x512xf32>, vector<8x512xf32> -> vector<8x512xf32>
    %c13 = arith.constant 13 : index
    %c0_236 = arith.constant 0 : index
    %c0_237 = arith.constant 0 : index
    %445 = vector.load %arg4[%c13, %c0_236, %c0_237] : memref<22x8x72xf32, #tpu.memory_space<vmem>>, vector<1x8x72xf32>
    %446 = vector.shape_cast %445 : vector<1x8x72xf32> to vector<8x72xf32>
    %cst_238 = arith.constant dense<0.000000e+00> : vector<8x512xf32>
    %447 = tpu.matmul %446, %402, %cst_238 {dimension_numbers = #tpu.dot_dimension_numbers<[1], [0], [0], [1], [0, 0, 1, 1], [], []>} : vector<8x72xf32>, vector<72x512xf32>, vector<8x512xf32> -> vector<8x512xf32>
    %448 = arith.addf %444, %447 : vector<8x512xf32>
    %c14 = arith.constant 14 : index
    %c0_239 = arith.constant 0 : index
    %c0_240 = arith.constant 0 : index
    %449 = vector.load %arg4[%c14, %c0_239, %c0_240] : memref<22x8x72xf32, #tpu.memory_space<vmem>>, vector<1x8x72xf32>
    %450 = vector.shape_cast %449 : vector<1x8x72xf32> to vector<8x72xf32>
    %cst_241 = arith.constant dense<0.000000e+00> : vector<8x512xf32>
    %451 = tpu.matmul %450, %441, %cst_241 {dimension_numbers = #tpu.dot_dimension_numbers<[1], [0], [0], [1], [0, 0, 1, 1], [], []>} : vector<8x72xf32>, vector<72x512xf32>, vector<8x512xf32> -> vector<8x512xf32>
    %452 = arith.addf %448, %451 : vector<8x512xf32>
    %c9_242 = arith.constant 9 : index
    %c0_243 = arith.constant 0 : index
    %c0_244 = arith.constant 0 : index
    %453 = vector.load %arg5[%c9_242, %c0_243, %c0_244] : memref<15x8x1xf32, #tpu.memory_space<vmem>>, vector<1x8x1xf32>
    %454 = vector.shape_cast %453 : vector<1x8x1xf32> to vector<8x1xf32>
    %455 = vector.broadcast %454 : vector<8x1xf32> to vector<8x512xf32>
    %456 = arith.addf %452, %455 : vector<8x512xf32>
    %cst_245 = arith.constant 0.000000e+00 : f32
    %457 = vector.broadcast %cst_245 : f32 to vector<8x512xf32>
    %458 = arith.cmpf oge, %456, %457 : vector<8x512xf32>
    %c9_246 = arith.constant 9 : index
    %c0_247 = arith.constant 0 : index
    %c0_248 = arith.constant 0 : index
    %459 = vector.load %arg6[%c9_246, %c0_247, %c0_248] : memref<15x8x1xf32, #tpu.memory_space<vmem>>, vector<1x8x1xf32>
    %460 = vector.shape_cast %459 : vector<1x8x1xf32> to vector<8x1xf32>
    %461 = vector.broadcast %460 : vector<8x1xf32> to vector<8x512xf32>
    %462 = arith.mulf %461, %456 : vector<8x512xf32>
    %463 = arith.select %458, %456, %462 : vector<8x512xi1>, vector<8x512xf32>
    %c17_i32_249 = arith.constant 17 : i32
    %464 = tpu.dynamic_rotate %463 by %c17_i32_249 dim 1 : vector<8x512xf32>, i32 -> vector<8x512xf32>
    %465 = vector.broadcast %1 : vector<1x512xf32> to vector<8x512xf32>
    %466 = arith.mulf %464, %465 : vector<8x512xf32>
    %c16_i32_250 = arith.constant 16 : i32
    %467 = tpu.dynamic_rotate %463 by %c16_i32_250 dim 1 : vector<8x512xf32>, i32 -> vector<8x512xf32>
    %468 = vector.broadcast %3 : vector<1x512xf32> to vector<8x512xf32>
    %469 = arith.mulf %467, %468 : vector<8x512xf32>
    %c15_i32_251 = arith.constant 15 : i32
    %470 = tpu.dynamic_rotate %463 by %c15_i32_251 dim 1 : vector<8x512xf32>, i32 -> vector<8x512xf32>
    %471 = vector.broadcast %5 : vector<1x512xf32> to vector<8x512xf32>
    %472 = arith.mulf %470, %471 : vector<8x512xf32>
    %c1_i32_252 = arith.constant 1 : i32
    %473 = tpu.dynamic_rotate %463 by %c1_i32_252 dim 1 : vector<8x512xf32>, i32 -> vector<8x512xf32>
    %474 = vector.broadcast %7 : vector<1x512xf32> to vector<8x512xf32>
    %475 = arith.mulf %473, %474 : vector<8x512xf32>
    %c511_i32_253 = arith.constant 511 : i32
    %476 = tpu.dynamic_rotate %463 by %c511_i32_253 dim 1 : vector<8x512xf32>, i32 -> vector<8x512xf32>
    %477 = vector.broadcast %9 : vector<1x512xf32> to vector<8x512xf32>
    %478 = arith.mulf %476, %477 : vector<8x512xf32>
    %c497_i32_254 = arith.constant 497 : i32
    %479 = tpu.dynamic_rotate %463 by %c497_i32_254 dim 1 : vector<8x512xf32>, i32 -> vector<8x512xf32>
    %480 = vector.broadcast %11 : vector<1x512xf32> to vector<8x512xf32>
    %481 = arith.mulf %479, %480 : vector<8x512xf32>
    %c496_i32_255 = arith.constant 496 : i32
    %482 = tpu.dynamic_rotate %463 by %c496_i32_255 dim 1 : vector<8x512xf32>, i32 -> vector<8x512xf32>
    %483 = vector.broadcast %13 : vector<1x512xf32> to vector<8x512xf32>
    %484 = arith.mulf %482, %483 : vector<8x512xf32>
    %c495_i32_256 = arith.constant 495 : i32
    %485 = tpu.dynamic_rotate %463 by %c495_i32_256 dim 1 : vector<8x512xf32>, i32 -> vector<8x512xf32>
    %486 = vector.broadcast %15 : vector<1x512xf32> to vector<8x512xf32>
    %487 = arith.mulf %485, %486 : vector<8x512xf32>
    %488 = tpu.concatenate %466, %469, %472, %475, %463, %478, %481, %484, %487 in 0 : vector<8x512xf32>, vector<8x512xf32>, vector<8x512xf32>, vector<8x512xf32>, vector<8x512xf32>, vector<8x512xf32>, vector<8x512xf32>, vector<8x512xf32>, vector<8x512xf32> -> vector<72x512xf32>
    %c15 = arith.constant 15 : index
    %c0_257 = arith.constant 0 : index
    %c0_258 = arith.constant 0 : index
    %489 = vector.load %arg4[%c15, %c0_257, %c0_258] : memref<22x8x72xf32, #tpu.memory_space<vmem>>, vector<1x8x72xf32>
    %490 = vector.shape_cast %489 : vector<1x8x72xf32> to vector<8x72xf32>
    %cst_259 = arith.constant dense<0.000000e+00> : vector<8x512xf32>
    %491 = tpu.matmul %490, %488, %cst_259 {dimension_numbers = #tpu.dot_dimension_numbers<[1], [0], [0], [1], [0, 0, 1, 1], [], []>} : vector<8x72xf32>, vector<72x512xf32>, vector<8x512xf32> -> vector<8x512xf32>
    %c10_260 = arith.constant 10 : index
    %c0_261 = arith.constant 0 : index
    %c0_262 = arith.constant 0 : index
    %492 = vector.load %arg5[%c10_260, %c0_261, %c0_262] : memref<15x8x1xf32, #tpu.memory_space<vmem>>, vector<1x8x1xf32>
    %493 = vector.shape_cast %492 : vector<1x8x1xf32> to vector<8x1xf32>
    %494 = vector.broadcast %493 : vector<8x1xf32> to vector<8x512xf32>
    %495 = arith.addf %491, %494 : vector<8x512xf32>
    %cst_263 = arith.constant 0.000000e+00 : f32
    %496 = vector.broadcast %cst_263 : f32 to vector<8x512xf32>
    %497 = arith.cmpf oge, %495, %496 : vector<8x512xf32>
    %c10_264 = arith.constant 10 : index
    %c0_265 = arith.constant 0 : index
    %c0_266 = arith.constant 0 : index
    %498 = vector.load %arg6[%c10_264, %c0_265, %c0_266] : memref<15x8x1xf32, #tpu.memory_space<vmem>>, vector<1x8x1xf32>
    %499 = vector.shape_cast %498 : vector<1x8x1xf32> to vector<8x1xf32>
    %500 = vector.broadcast %499 : vector<8x1xf32> to vector<8x512xf32>
    %501 = arith.mulf %500, %495 : vector<8x512xf32>
    %502 = arith.select %497, %495, %501 : vector<8x512xi1>, vector<8x512xf32>
    %c17_i32_267 = arith.constant 17 : i32
    %503 = tpu.dynamic_rotate %502 by %c17_i32_267 dim 1 : vector<8x512xf32>, i32 -> vector<8x512xf32>
    %504 = vector.broadcast %1 : vector<1x512xf32> to vector<8x512xf32>
    %505 = arith.mulf %503, %504 : vector<8x512xf32>
    %c16_i32_268 = arith.constant 16 : i32
    %506 = tpu.dynamic_rotate %502 by %c16_i32_268 dim 1 : vector<8x512xf32>, i32 -> vector<8x512xf32>
    %507 = vector.broadcast %3 : vector<1x512xf32> to vector<8x512xf32>
    %508 = arith.mulf %506, %507 : vector<8x512xf32>
    %c15_i32_269 = arith.constant 15 : i32
    %509 = tpu.dynamic_rotate %502 by %c15_i32_269 dim 1 : vector<8x512xf32>, i32 -> vector<8x512xf32>
    %510 = vector.broadcast %5 : vector<1x512xf32> to vector<8x512xf32>
    %511 = arith.mulf %509, %510 : vector<8x512xf32>
    %c1_i32_270 = arith.constant 1 : i32
    %512 = tpu.dynamic_rotate %502 by %c1_i32_270 dim 1 : vector<8x512xf32>, i32 -> vector<8x512xf32>
    %513 = vector.broadcast %7 : vector<1x512xf32> to vector<8x512xf32>
    %514 = arith.mulf %512, %513 : vector<8x512xf32>
    %c511_i32_271 = arith.constant 511 : i32
    %515 = tpu.dynamic_rotate %502 by %c511_i32_271 dim 1 : vector<8x512xf32>, i32 -> vector<8x512xf32>
    %516 = vector.broadcast %9 : vector<1x512xf32> to vector<8x512xf32>
    %517 = arith.mulf %515, %516 : vector<8x512xf32>
    %c497_i32_272 = arith.constant 497 : i32
    %518 = tpu.dynamic_rotate %502 by %c497_i32_272 dim 1 : vector<8x512xf32>, i32 -> vector<8x512xf32>
    %519 = vector.broadcast %11 : vector<1x512xf32> to vector<8x512xf32>
    %520 = arith.mulf %518, %519 : vector<8x512xf32>
    %c496_i32_273 = arith.constant 496 : i32
    %521 = tpu.dynamic_rotate %502 by %c496_i32_273 dim 1 : vector<8x512xf32>, i32 -> vector<8x512xf32>
    %522 = vector.broadcast %13 : vector<1x512xf32> to vector<8x512xf32>
    %523 = arith.mulf %521, %522 : vector<8x512xf32>
    %c495_i32_274 = arith.constant 495 : i32
    %524 = tpu.dynamic_rotate %502 by %c495_i32_274 dim 1 : vector<8x512xf32>, i32 -> vector<8x512xf32>
    %525 = vector.broadcast %15 : vector<1x512xf32> to vector<8x512xf32>
    %526 = arith.mulf %524, %525 : vector<8x512xf32>
    %527 = tpu.concatenate %505, %508, %511, %514, %502, %517, %520, %523, %526 in 0 : vector<8x512xf32>, vector<8x512xf32>, vector<8x512xf32>, vector<8x512xf32>, vector<8x512xf32>, vector<8x512xf32>, vector<8x512xf32>, vector<8x512xf32>, vector<8x512xf32> -> vector<72x512xf32>
    %c16 = arith.constant 16 : index
    %c0_275 = arith.constant 0 : index
    %c0_276 = arith.constant 0 : index
    %528 = vector.load %arg4[%c16, %c0_275, %c0_276] : memref<22x8x72xf32, #tpu.memory_space<vmem>>, vector<1x8x72xf32>
    %529 = vector.shape_cast %528 : vector<1x8x72xf32> to vector<8x72xf32>
    %cst_277 = arith.constant dense<0.000000e+00> : vector<8x512xf32>
    %530 = tpu.matmul %529, %527, %cst_277 {dimension_numbers = #tpu.dot_dimension_numbers<[1], [0], [0], [1], [0, 0, 1, 1], [], []>} : vector<8x72xf32>, vector<72x512xf32>, vector<8x512xf32> -> vector<8x512xf32>
    %c11_278 = arith.constant 11 : index
    %c0_279 = arith.constant 0 : index
    %c0_280 = arith.constant 0 : index
    %531 = vector.load %arg5[%c11_278, %c0_279, %c0_280] : memref<15x8x1xf32, #tpu.memory_space<vmem>>, vector<1x8x1xf32>
    %532 = vector.shape_cast %531 : vector<1x8x1xf32> to vector<8x1xf32>
    %533 = vector.broadcast %532 : vector<8x1xf32> to vector<8x512xf32>
    %534 = arith.addf %530, %533 : vector<8x512xf32>
    %cst_281 = arith.constant 0.000000e+00 : f32
    %535 = vector.broadcast %cst_281 : f32 to vector<8x512xf32>
    %536 = arith.cmpf oge, %534, %535 : vector<8x512xf32>
    %c11_282 = arith.constant 11 : index
    %c0_283 = arith.constant 0 : index
    %c0_284 = arith.constant 0 : index
    %537 = vector.load %arg6[%c11_282, %c0_283, %c0_284] : memref<15x8x1xf32, #tpu.memory_space<vmem>>, vector<1x8x1xf32>
    %538 = vector.shape_cast %537 : vector<1x8x1xf32> to vector<8x1xf32>
    %539 = vector.broadcast %538 : vector<8x1xf32> to vector<8x512xf32>
    %540 = arith.mulf %539, %534 : vector<8x512xf32>
    %541 = arith.select %536, %534, %540 : vector<8x512xi1>, vector<8x512xf32>
    %c17_i32_285 = arith.constant 17 : i32
    %542 = tpu.dynamic_rotate %541 by %c17_i32_285 dim 1 : vector<8x512xf32>, i32 -> vector<8x512xf32>
    %543 = vector.broadcast %1 : vector<1x512xf32> to vector<8x512xf32>
    %544 = arith.mulf %542, %543 : vector<8x512xf32>
    %c16_i32_286 = arith.constant 16 : i32
    %545 = tpu.dynamic_rotate %541 by %c16_i32_286 dim 1 : vector<8x512xf32>, i32 -> vector<8x512xf32>
    %546 = vector.broadcast %3 : vector<1x512xf32> to vector<8x512xf32>
    %547 = arith.mulf %545, %546 : vector<8x512xf32>
    %c15_i32_287 = arith.constant 15 : i32
    %548 = tpu.dynamic_rotate %541 by %c15_i32_287 dim 1 : vector<8x512xf32>, i32 -> vector<8x512xf32>
    %549 = vector.broadcast %5 : vector<1x512xf32> to vector<8x512xf32>
    %550 = arith.mulf %548, %549 : vector<8x512xf32>
    %c1_i32_288 = arith.constant 1 : i32
    %551 = tpu.dynamic_rotate %541 by %c1_i32_288 dim 1 : vector<8x512xf32>, i32 -> vector<8x512xf32>
    %552 = vector.broadcast %7 : vector<1x512xf32> to vector<8x512xf32>
    %553 = arith.mulf %551, %552 : vector<8x512xf32>
    %c511_i32_289 = arith.constant 511 : i32
    %554 = tpu.dynamic_rotate %541 by %c511_i32_289 dim 1 : vector<8x512xf32>, i32 -> vector<8x512xf32>
    %555 = vector.broadcast %9 : vector<1x512xf32> to vector<8x512xf32>
    %556 = arith.mulf %554, %555 : vector<8x512xf32>
    %c497_i32_290 = arith.constant 497 : i32
    %557 = tpu.dynamic_rotate %541 by %c497_i32_290 dim 1 : vector<8x512xf32>, i32 -> vector<8x512xf32>
    %558 = vector.broadcast %11 : vector<1x512xf32> to vector<8x512xf32>
    %559 = arith.mulf %557, %558 : vector<8x512xf32>
    %c496_i32_291 = arith.constant 496 : i32
    %560 = tpu.dynamic_rotate %541 by %c496_i32_291 dim 1 : vector<8x512xf32>, i32 -> vector<8x512xf32>
    %561 = vector.broadcast %13 : vector<1x512xf32> to vector<8x512xf32>
    %562 = arith.mulf %560, %561 : vector<8x512xf32>
    %c495_i32_292 = arith.constant 495 : i32
    %563 = tpu.dynamic_rotate %541 by %c495_i32_292 dim 1 : vector<8x512xf32>, i32 -> vector<8x512xf32>
    %564 = vector.broadcast %15 : vector<1x512xf32> to vector<8x512xf32>
    %565 = arith.mulf %563, %564 : vector<8x512xf32>
    %566 = tpu.concatenate %544, %547, %550, %553, %541, %556, %559, %562, %565 in 0 : vector<8x512xf32>, vector<8x512xf32>, vector<8x512xf32>, vector<8x512xf32>, vector<8x512xf32>, vector<8x512xf32>, vector<8x512xf32>, vector<8x512xf32>, vector<8x512xf32> -> vector<72x512xf32>
    %c17 = arith.constant 17 : index
    %c0_293 = arith.constant 0 : index
    %c0_294 = arith.constant 0 : index
    %567 = vector.load %arg4[%c17, %c0_293, %c0_294] : memref<22x8x72xf32, #tpu.memory_space<vmem>>, vector<1x8x72xf32>
    %568 = vector.shape_cast %567 : vector<1x8x72xf32> to vector<8x72xf32>
    %cst_295 = arith.constant dense<0.000000e+00> : vector<8x512xf32>
    %569 = tpu.matmul %568, %488, %cst_295 {dimension_numbers = #tpu.dot_dimension_numbers<[1], [0], [0], [1], [0, 0, 1, 1], [], []>} : vector<8x72xf32>, vector<72x512xf32>, vector<8x512xf32> -> vector<8x512xf32>
    %c18 = arith.constant 18 : index
    %c0_296 = arith.constant 0 : index
    %c0_297 = arith.constant 0 : index
    %570 = vector.load %arg4[%c18, %c0_296, %c0_297] : memref<22x8x72xf32, #tpu.memory_space<vmem>>, vector<1x8x72xf32>
    %571 = vector.shape_cast %570 : vector<1x8x72xf32> to vector<8x72xf32>
    %cst_298 = arith.constant dense<0.000000e+00> : vector<8x512xf32>
    %572 = tpu.matmul %571, %527, %cst_298 {dimension_numbers = #tpu.dot_dimension_numbers<[1], [0], [0], [1], [0, 0, 1, 1], [], []>} : vector<8x72xf32>, vector<72x512xf32>, vector<8x512xf32> -> vector<8x512xf32>
    %573 = arith.addf %569, %572 : vector<8x512xf32>
    %c19 = arith.constant 19 : index
    %c0_299 = arith.constant 0 : index
    %c0_300 = arith.constant 0 : index
    %574 = vector.load %arg4[%c19, %c0_299, %c0_300] : memref<22x8x72xf32, #tpu.memory_space<vmem>>, vector<1x8x72xf32>
    %575 = vector.shape_cast %574 : vector<1x8x72xf32> to vector<8x72xf32>
    %cst_301 = arith.constant dense<0.000000e+00> : vector<8x512xf32>
    %576 = tpu.matmul %575, %566, %cst_301 {dimension_numbers = #tpu.dot_dimension_numbers<[1], [0], [0], [1], [0, 0, 1, 1], [], []>} : vector<8x72xf32>, vector<72x512xf32>, vector<8x512xf32> -> vector<8x512xf32>
    %577 = arith.addf %573, %576 : vector<8x512xf32>
    %c12_302 = arith.constant 12 : index
    %c0_303 = arith.constant 0 : index
    %c0_304 = arith.constant 0 : index
    %578 = vector.load %arg5[%c12_302, %c0_303, %c0_304] : memref<15x8x1xf32, #tpu.memory_space<vmem>>, vector<1x8x1xf32>
    %579 = vector.shape_cast %578 : vector<1x8x1xf32> to vector<8x1xf32>
    %580 = vector.broadcast %579 : vector<8x1xf32> to vector<8x512xf32>
    %581 = arith.addf %577, %580 : vector<8x512xf32>
    %cst_305 = arith.constant 0.000000e+00 : f32
    %582 = vector.broadcast %cst_305 : f32 to vector<8x512xf32>
    %583 = arith.cmpf oge, %581, %582 : vector<8x512xf32>
    %c12_306 = arith.constant 12 : index
    %c0_307 = arith.constant 0 : index
    %c0_308 = arith.constant 0 : index
    %584 = vector.load %arg6[%c12_306, %c0_307, %c0_308] : memref<15x8x1xf32, #tpu.memory_space<vmem>>, vector<1x8x1xf32>
    %585 = vector.shape_cast %584 : vector<1x8x1xf32> to vector<8x1xf32>
    %586 = vector.broadcast %585 : vector<8x1xf32> to vector<8x512xf32>
    %587 = arith.mulf %586, %581 : vector<8x512xf32>
    %588 = arith.select %583, %581, %587 : vector<8x512xi1>, vector<8x512xf32>
    %c17_i32_309 = arith.constant 17 : i32
    %589 = tpu.dynamic_rotate %588 by %c17_i32_309 dim 1 : vector<8x512xf32>, i32 -> vector<8x512xf32>
    %590 = vector.broadcast %1 : vector<1x512xf32> to vector<8x512xf32>
    %591 = arith.mulf %589, %590 : vector<8x512xf32>
    %c16_i32_310 = arith.constant 16 : i32
    %592 = tpu.dynamic_rotate %588 by %c16_i32_310 dim 1 : vector<8x512xf32>, i32 -> vector<8x512xf32>
    %593 = vector.broadcast %3 : vector<1x512xf32> to vector<8x512xf32>
    %594 = arith.mulf %592, %593 : vector<8x512xf32>
    %c15_i32_311 = arith.constant 15 : i32
    %595 = tpu.dynamic_rotate %588 by %c15_i32_311 dim 1 : vector<8x512xf32>, i32 -> vector<8x512xf32>
    %596 = vector.broadcast %5 : vector<1x512xf32> to vector<8x512xf32>
    %597 = arith.mulf %595, %596 : vector<8x512xf32>
    %c1_i32_312 = arith.constant 1 : i32
    %598 = tpu.dynamic_rotate %588 by %c1_i32_312 dim 1 : vector<8x512xf32>, i32 -> vector<8x512xf32>
    %599 = vector.broadcast %7 : vector<1x512xf32> to vector<8x512xf32>
    %600 = arith.mulf %598, %599 : vector<8x512xf32>
    %c511_i32_313 = arith.constant 511 : i32
    %601 = tpu.dynamic_rotate %588 by %c511_i32_313 dim 1 : vector<8x512xf32>, i32 -> vector<8x512xf32>
    %602 = vector.broadcast %9 : vector<1x512xf32> to vector<8x512xf32>
    %603 = arith.mulf %601, %602 : vector<8x512xf32>
    %c497_i32_314 = arith.constant 497 : i32
    %604 = tpu.dynamic_rotate %588 by %c497_i32_314 dim 1 : vector<8x512xf32>, i32 -> vector<8x512xf32>
    %605 = vector.broadcast %11 : vector<1x512xf32> to vector<8x512xf32>
    %606 = arith.mulf %604, %605 : vector<8x512xf32>
    %c496_i32_315 = arith.constant 496 : i32
    %607 = tpu.dynamic_rotate %588 by %c496_i32_315 dim 1 : vector<8x512xf32>, i32 -> vector<8x512xf32>
    %608 = vector.broadcast %13 : vector<1x512xf32> to vector<8x512xf32>
    %609 = arith.mulf %607, %608 : vector<8x512xf32>
    %c495_i32_316 = arith.constant 495 : i32
    %610 = tpu.dynamic_rotate %588 by %c495_i32_316 dim 1 : vector<8x512xf32>, i32 -> vector<8x512xf32>
    %611 = vector.broadcast %15 : vector<1x512xf32> to vector<8x512xf32>
    %612 = arith.mulf %610, %611 : vector<8x512xf32>
    %613 = tpu.concatenate %591, %594, %597, %600, %588, %603, %606, %609, %612 in 0 : vector<8x512xf32>, vector<8x512xf32>, vector<8x512xf32>, vector<8x512xf32>, vector<8x512xf32>, vector<8x512xf32>, vector<8x512xf32>, vector<8x512xf32>, vector<8x512xf32> -> vector<72x512xf32>
    %c20 = arith.constant 20 : index
    %c0_317 = arith.constant 0 : index
    %c0_318 = arith.constant 0 : index
    %614 = vector.load %arg4[%c20, %c0_317, %c0_318] : memref<22x8x72xf32, #tpu.memory_space<vmem>>, vector<1x8x72xf32>
    %615 = vector.shape_cast %614 : vector<1x8x72xf32> to vector<8x72xf32>
    %cst_319 = arith.constant dense<0.000000e+00> : vector<8x512xf32>
    %616 = tpu.matmul %615, %613, %cst_319 {dimension_numbers = #tpu.dot_dimension_numbers<[1], [0], [0], [1], [0, 0, 1, 1], [], []>} : vector<8x72xf32>, vector<72x512xf32>, vector<8x512xf32> -> vector<8x512xf32>
    %c13_320 = arith.constant 13 : index
    %c0_321 = arith.constant 0 : index
    %c0_322 = arith.constant 0 : index
    %617 = vector.load %arg5[%c13_320, %c0_321, %c0_322] : memref<15x8x1xf32, #tpu.memory_space<vmem>>, vector<1x8x1xf32>
    %618 = vector.shape_cast %617 : vector<1x8x1xf32> to vector<8x1xf32>
    %619 = vector.broadcast %618 : vector<8x1xf32> to vector<8x512xf32>
    %620 = arith.addf %616, %619 : vector<8x512xf32>
    %cst_323 = arith.constant 0.000000e+00 : f32
    %621 = vector.broadcast %cst_323 : f32 to vector<8x512xf32>
    %622 = arith.cmpf oge, %620, %621 : vector<8x512xf32>
    %c13_324 = arith.constant 13 : index
    %c0_325 = arith.constant 0 : index
    %c0_326 = arith.constant 0 : index
    %623 = vector.load %arg6[%c13_324, %c0_325, %c0_326] : memref<15x8x1xf32, #tpu.memory_space<vmem>>, vector<1x8x1xf32>
    %624 = vector.shape_cast %623 : vector<1x8x1xf32> to vector<8x1xf32>
    %625 = vector.broadcast %624 : vector<8x1xf32> to vector<8x512xf32>
    %626 = arith.mulf %625, %620 : vector<8x512xf32>
    %627 = arith.select %622, %620, %626 : vector<8x512xi1>, vector<8x512xf32>
    %c17_i32_327 = arith.constant 17 : i32
    %628 = tpu.dynamic_rotate %627 by %c17_i32_327 dim 1 : vector<8x512xf32>, i32 -> vector<8x512xf32>
    %629 = vector.broadcast %1 : vector<1x512xf32> to vector<8x512xf32>
    %630 = arith.mulf %628, %629 : vector<8x512xf32>
    %c16_i32_328 = arith.constant 16 : i32
    %631 = tpu.dynamic_rotate %627 by %c16_i32_328 dim 1 : vector<8x512xf32>, i32 -> vector<8x512xf32>
    %632 = vector.broadcast %3 : vector<1x512xf32> to vector<8x512xf32>
    %633 = arith.mulf %631, %632 : vector<8x512xf32>
    %c15_i32_329 = arith.constant 15 : i32
    %634 = tpu.dynamic_rotate %627 by %c15_i32_329 dim 1 : vector<8x512xf32>, i32 -> vector<8x512xf32>
    %635 = vector.broadcast %5 : vector<1x512xf32> to vector<8x512xf32>
    %636 = arith.mulf %634, %635 : vector<8x512xf32>
    %c1_i32_330 = arith.constant 1 : i32
    %637 = tpu.dynamic_rotate %627 by %c1_i32_330 dim 1 : vector<8x512xf32>, i32 -> vector<8x512xf32>
    %638 = vector.broadcast %7 : vector<1x512xf32> to vector<8x512xf32>
    %639 = arith.mulf %637, %638 : vector<8x512xf32>
    %c511_i32_331 = arith.constant 511 : i32
    %640 = tpu.dynamic_rotate %627 by %c511_i32_331 dim 1 : vector<8x512xf32>, i32 -> vector<8x512xf32>
    %641 = vector.broadcast %9 : vector<1x512xf32> to vector<8x512xf32>
    %642 = arith.mulf %640, %641 : vector<8x512xf32>
    %c497_i32_332 = arith.constant 497 : i32
    %643 = tpu.dynamic_rotate %627 by %c497_i32_332 dim 1 : vector<8x512xf32>, i32 -> vector<8x512xf32>
    %644 = vector.broadcast %11 : vector<1x512xf32> to vector<8x512xf32>
    %645 = arith.mulf %643, %644 : vector<8x512xf32>
    %c496_i32_333 = arith.constant 496 : i32
    %646 = tpu.dynamic_rotate %627 by %c496_i32_333 dim 1 : vector<8x512xf32>, i32 -> vector<8x512xf32>
    %647 = vector.broadcast %13 : vector<1x512xf32> to vector<8x512xf32>
    %648 = arith.mulf %646, %647 : vector<8x512xf32>
    %c495_i32_334 = arith.constant 495 : i32
    %649 = tpu.dynamic_rotate %627 by %c495_i32_334 dim 1 : vector<8x512xf32>, i32 -> vector<8x512xf32>
    %650 = vector.broadcast %15 : vector<1x512xf32> to vector<8x512xf32>
    %651 = arith.mulf %649, %650 : vector<8x512xf32>
    %652 = tpu.concatenate %630, %633, %636, %639, %627, %642, %645, %648, %651 in 0 : vector<8x512xf32>, vector<8x512xf32>, vector<8x512xf32>, vector<8x512xf32>, vector<8x512xf32>, vector<8x512xf32>, vector<8x512xf32>, vector<8x512xf32>, vector<8x512xf32> -> vector<72x512xf32>
    %c21 = arith.constant 21 : index
    %c0_335 = arith.constant 0 : index
    %c0_336 = arith.constant 0 : index
    %653 = vector.load %arg4[%c21, %c0_335, %c0_336] : memref<22x8x72xf32, #tpu.memory_space<vmem>>, vector<1x8x72xf32>
    %654 = vector.shape_cast %653 : vector<1x8x72xf32> to vector<8x72xf32>
    %cst_337 = arith.constant dense<0.000000e+00> : vector<8x512xf32>
    %655 = tpu.matmul %654, %652, %cst_337 {dimension_numbers = #tpu.dot_dimension_numbers<[1], [0], [0], [1], [0, 0, 1, 1], [], []>} : vector<8x72xf32>, vector<72x512xf32>, vector<8x512xf32> -> vector<8x512xf32>
    %c14_338 = arith.constant 14 : index
    %c0_339 = arith.constant 0 : index
    %c0_340 = arith.constant 0 : index
    %656 = vector.load %arg5[%c14_338, %c0_339, %c0_340] : memref<15x8x1xf32, #tpu.memory_space<vmem>>, vector<1x8x1xf32>
    %657 = vector.shape_cast %656 : vector<1x8x1xf32> to vector<8x1xf32>
    %658 = vector.broadcast %657 : vector<8x1xf32> to vector<8x512xf32>
    %659 = arith.addf %655, %658 : vector<8x512xf32>
    %cst_341 = arith.constant 0.000000e+00 : f32
    %660 = vector.broadcast %cst_341 : f32 to vector<8x512xf32>
    %661 = arith.cmpf oge, %659, %660 : vector<8x512xf32>
    %c14_342 = arith.constant 14 : index
    %c0_343 = arith.constant 0 : index
    %c0_344 = arith.constant 0 : index
    %662 = vector.load %arg6[%c14_342, %c0_343, %c0_344] : memref<15x8x1xf32, #tpu.memory_space<vmem>>, vector<1x8x1xf32>
    %663 = vector.shape_cast %662 : vector<1x8x1xf32> to vector<8x1xf32>
    %664 = vector.broadcast %663 : vector<8x1xf32> to vector<8x512xf32>
    %665 = arith.mulf %664, %659 : vector<8x512xf32>
    %666 = arith.select %661, %659, %665 : vector<8x512xi1>, vector<8x512xf32>
    %c0_345 = arith.constant 0 : index
    %c0_346 = arith.constant 0 : index
    %c0_347 = arith.constant 0 : index
    %667 = vector.load %arg7[%c0_345, %c0_346, %c0_347] : memref<3x16x8xf32, #tpu.memory_space<vmem>>, vector<1x16x8xf32>
    %668 = vector.shape_cast %667 : vector<1x16x8xf32> to vector<16x8xf32>
    %cst_348 = arith.constant dense<0.000000e+00> : vector<16x512xf32>
    %669 = tpu.matmul %668, %588, %cst_348 {dimension_numbers = #tpu.dot_dimension_numbers<[1], [0], [0], [1], [0, 0, 1, 1], [], []>} : vector<16x8xf32>, vector<8x512xf32>, vector<16x512xf32> -> vector<16x512xf32>
    %c1_349 = arith.constant 1 : index
    %c0_350 = arith.constant 0 : index
    %c0_351 = arith.constant 0 : index
    %670 = vector.load %arg7[%c1_349, %c0_350, %c0_351] : memref<3x16x8xf32, #tpu.memory_space<vmem>>, vector<1x16x8xf32>
    %671 = vector.shape_cast %670 : vector<1x16x8xf32> to vector<16x8xf32>
    %cst_352 = arith.constant dense<0.000000e+00> : vector<16x512xf32>
    %672 = tpu.matmul %671, %627, %cst_352 {dimension_numbers = #tpu.dot_dimension_numbers<[1], [0], [0], [1], [0, 0, 1, 1], [], []>} : vector<16x8xf32>, vector<8x512xf32>, vector<16x512xf32> -> vector<16x512xf32>
    %673 = arith.addf %669, %672 : vector<16x512xf32>
    %c2_353 = arith.constant 2 : index
    %c0_354 = arith.constant 0 : index
    %c0_355 = arith.constant 0 : index
    %674 = vector.load %arg7[%c2_353, %c0_354, %c0_355] : memref<3x16x8xf32, #tpu.memory_space<vmem>>, vector<1x16x8xf32>
    %675 = vector.shape_cast %674 : vector<1x16x8xf32> to vector<16x8xf32>
    %cst_356 = arith.constant dense<0.000000e+00> : vector<16x512xf32>
    %676 = tpu.matmul %675, %666, %cst_356 {dimension_numbers = #tpu.dot_dimension_numbers<[1], [0], [0], [1], [0, 0, 1, 1], [], []>} : vector<16x8xf32>, vector<8x512xf32>, vector<16x512xf32> -> vector<16x512xf32>
    %677 = arith.addf %673, %676 : vector<16x512xf32>
    %c0_357 = arith.constant 0 : index
    %c0_358 = arith.constant 0 : index
    %678 = vector.load %arg8[%c0_357, %c0_358] : memref<16x1xf32, #tpu.memory_space<vmem>>, vector<16x1xf32>
    %679 = vector.broadcast %678 : vector<16x1xf32> to vector<16x512xf32>
    %680 = arith.addf %677, %679 : vector<16x512xf32>
    %cst_359 = arith.constant 0.000000e+00 : f32
    %681 = vector.broadcast %cst_359 : f32 to vector<16x512xf32>
    %682 = arith.cmpf oge, %680, %681 : vector<16x512xf32>
    %c0_360 = arith.constant 0 : index
    %c0_361 = arith.constant 0 : index
    %683 = vector.load %arg9[%c0_360, %c0_361] : memref<16x1xf32, #tpu.memory_space<vmem>>, vector<16x1xf32>
    %684 = vector.broadcast %683 : vector<16x1xf32> to vector<16x512xf32>
    %685 = arith.mulf %684, %680 : vector<16x512xf32>
    %686 = arith.select %682, %680, %685 : vector<16x512xi1>, vector<16x512xf32>
    %c0_362 = arith.constant 0 : index
    %c0_363 = arith.constant 0 : index
    %687 = vector.load %arg10[%c0_362, %c0_363] : memref<4x16xf32, #tpu.memory_space<vmem>>, vector<4x16xf32>
    %cst_364 = arith.constant dense<0.000000e+00> : vector<4x512xf32>
    %688 = tpu.matmul %687, %686, %cst_364 {dimension_numbers = #tpu.dot_dimension_numbers<[1], [0], [0], [1], [0, 0, 1, 1], [], []>} : vector<4x16xf32>, vector<16x512xf32>, vector<4x512xf32> -> vector<4x512xf32>
    %c0_365 = arith.constant 0 : index
    %c0_366 = arith.constant 0 : index
    %689 = vector.load %arg11[%c0_365, %c0_366] : memref<4x1xf32, #tpu.memory_space<vmem>>, vector<4x1xf32>
    %690 = vector.broadcast %689 : vector<4x1xf32> to vector<4x512xf32>
    %691 = arith.addf %688, %690 : vector<4x512xf32>
    %c0_367 = arith.constant 0 : index
    %c0_368 = arith.constant 0 : index
    %692 = vector.load %arg12[%c0_367, %c0_368] : memref<4x512xf32, #tpu.memory_space<vmem>>, vector<4x512xf32>
    tpu.vector_store %arg12[%c0_367, %c0_368], %691 {strides = array<i32>} : memref<4x512xf32, #tpu.memory_space<vmem>>, vector<4x512xf32>,
    return
  }
  func.func @transform_0(%arg0: i32) -> (i32, i32) {
    %c0_i32 = arith.constant 0 : i32
    %c0_i32_0 = arith.constant 0 : i32
    return %c0_i32, %arg0 : i32, i32
  }
  func.func @transform_1(%arg0: i32) -> (i32, i32, i32) {
    %c0_i32 = arith.constant 0 : i32
    %c0_i32_0 = arith.constant 0 : i32
    %c0_i32_1 = arith.constant 0 : i32
    %c0_i32_2 = arith.constant 0 : i32
    return %c0_i32, %c0_i32_0, %c0_i32_1 : i32, i32, i32
  }
  func.func @transform_2(%arg0: i32) -> (i32, i32, i32) {
    %c0_i32 = arith.constant 0 : i32
    %c0_i32_0 = arith.constant 0 : i32
    %c0_i32_1 = arith.constant 0 : i32
    %c0_i32_2 = arith.constant 0 : i32
    return %c0_i32, %c0_i32_0, %c0_i32_1 : i32, i32, i32
  }
  func.func @transform_3(%arg0: i32) -> (i32, i32, i32) {
    %c0_i32 = arith.constant 0 : i32
    %c0_i32_0 = arith.constant 0 : i32
    %c0_i32_1 = arith.constant 0 : i32
    %c0_i32_2 = arith.constant 0 : i32
    return %c0_i32, %c0_i32_0, %c0_i32_1 : i32, i32, i32
  }
  func.func @transform_4(%arg0: i32) -> (i32, i32, i32) {
    %c0_i32 = arith.constant 0 : i32
    %c0_i32_0 = arith.constant 0 : i32
    %c0_i32_1 = arith.constant 0 : i32
    %c0_i32_2 = arith.constant 0 : i32
    return %c0_i32, %c0_i32_0, %c0_i32_1 : i32, i32, i32
  }
  func.func @transform_5(%arg0: i32) -> (i32, i32, i32) {
    %c0_i32 = arith.constant 0 : i32
    %c0_i32_0 = arith.constant 0 : i32
    %c0_i32_1 = arith.constant 0 : i32
    %c0_i32_2 = arith.constant 0 : i32
    return %c0_i32, %c0_i32_0, %c0_i32_1 : i32, i32, i32
  }
  func.func @transform_6(%arg0: i32) -> (i32, i32, i32) {
    %c0_i32 = arith.constant 0 : i32
    %c0_i32_0 = arith.constant 0 : i32
    %c0_i32_1 = arith.constant 0 : i32
    %c0_i32_2 = arith.constant 0 : i32
    return %c0_i32, %c0_i32_0, %c0_i32_1 : i32, i32, i32
  }
  func.func @transform_7(%arg0: i32) -> (i32, i32) {
    %c0_i32 = arith.constant 0 : i32
    %c0_i32_0 = arith.constant 0 : i32
    %c0_i32_1 = arith.constant 0 : i32
    return %c0_i32, %c0_i32_0 : i32, i32
  }
  func.func @transform_8(%arg0: i32) -> (i32, i32) {
    %c0_i32 = arith.constant 0 : i32
    %c0_i32_0 = arith.constant 0 : i32
    %c0_i32_1 = arith.constant 0 : i32
    return %c0_i32, %c0_i32_0 : i32, i32
  }
  func.func @transform_9(%arg0: i32) -> (i32, i32) {
    %c0_i32 = arith.constant 0 : i32
    %c0_i32_0 = arith.constant 0 : i32
    %c0_i32_1 = arith.constant 0 : i32
    return %c0_i32, %c0_i32_0 : i32, i32
  }
  func.func @transform_10(%arg0: i32) -> (i32, i32) {
    %c0_i32 = arith.constant 0 : i32
    %c0_i32_0 = arith.constant 0 : i32
    %c0_i32_1 = arith.constant 0 : i32
    return %c0_i32, %c0_i32_0 : i32, i32
  }
  func.func @transform_11(%arg0: i32) -> (i32, i32) {
    %c0_i32 = arith.constant 0 : i32
    %c0_i32_0 = arith.constant 0 : i32
    return %c0_i32, %arg0 : i32, i32
  }
}

</mosaic_0001>

<llo_original>
// kernel: _lambda_.1
$region0: #{_lambda_.1}
  #allocation0 [shape = 'u32[]', space=smem, size = 0x4, offset = 0x4, fixed_abs, tag = 'smem constant byte address 0x4 - core index']
  #allocation1 [shape = 'u32[144,128]{1,0:T(1,128)}', space=vmem, size = 0x12000, scoped, tag = 'internal scratch']
  %s0 = inlined_call_operand.vmem [shape: f32[4,1024], index: 0, kind: input, shape index: {}]
  %s1 = inlined_call_operand.vmem [shape: f32[9,1,512], index: 1, kind: input, shape index: {}]
  %s2 = inlined_call_operand.vmem [shape: f32[9,8,4], index: 2, kind: input, shape index: {}]
  %s3 = inlined_call_operand.vmem [shape: f32[22,8,72], index: 3, kind: input, shape index: {}]
  %s4 = inlined_call_operand.vmem [shape: f32[15,8,1], index: 4, kind: input, shape index: {}]
  %s5 = inlined_call_operand.vmem [shape: f32[15,8,1], index: 5, kind: input, shape index: {}]
  %s6 = inlined_call_operand.vmem [shape: f32[3,16,8], index: 6, kind: input, shape index: {}]
  %s7 = inlined_call_operand.vmem [shape: f32[16,1], index: 7, kind: input, shape index: {}]
  %s8 = inlined_call_operand.vmem [shape: f32[16,1], index: 8, kind: input, shape index: {}]
  %s9 = inlined_call_operand.vmem [shape: f32[4,16], index: 9, kind: input, shape index: {}]
  %s10 = inlined_call_operand.vmem [shape: f32[4,1], index: 10, kind: input, shape index: {}]
  %s11 = inlined_call_operand.vmem [shape: f32[4,1024], index: 11, kind: output, shape index: {}]
  %s12 = sld [smem:[#allocation0]]
  $region77: #{_lambda_.1} parent=0
    _
  %s14 = ssub.s32 1, %s12
  %s15 = scalar_select 0, %s14, %s12
  loop: start=0, step=1, limit=4
  $region2: #{_lambda_.1} parent=0 // loop_pre_header
    _
  $region3: #{_lambda_.1} parent=0 // loop_header
    %s17 = sphi 0, %s21
    %p18 = scmp.ge.s32.totalorder %s17, 4
    %s27 = sphi 0, %s29
    %s30 = sphi 0, %s27
    %s31 = sphi 0, %s30
    %s47 = sphi 0, %s31
    %s51 = sphi 0, %s51
    %s53 = sphi 0, %s51
    %s54 = sphi 0, %s53
    %s68 = sphi 0, %s54
    %s72 = sphi 0, %s72
    %s74 = sphi 0, %s72
    %s75 = sphi 0, %s74
    %s89 = sphi 0, %s75
    %s93 = sphi 0, %s93
    %s95 = sphi 0, %s93
    %s96 = sphi 0, %s95
    %s110 = sphi 0, %s96
    %s114 = sphi 0, %s114
    %s116 = sphi 0, %s114
    %s117 = sphi 0, %s116
    %s131 = sphi 0, %s117
    %s135 = sphi 0, %s135
    %s137 = sphi 0, %s135
    %s138 = sphi 0, %s137
    %s152 = sphi 0, %s138
    %s156 = sphi 0, %s156
    %s158 = sphi 0, %s156
    %s159 = sphi 0, %s158
    %s173 = sphi 0, %s159
    %s177 = sphi 0, %s177
    %s179 = sphi 0, %s177
    %s180 = sphi 0, %s179
    %s194 = sphi 0, %s180
    %s198 = sphi 0, %s198
    %s200 = sphi 0, %s198
    %s201 = sphi 0, %s200
    %s215 = sphi 0, %s201
    %s219 = sphi 0, %s219
    %s221 = sphi 0, %s219
    %s222 = sphi 0, %s221
    %s236 = sphi 0, %s222
    %s240 = sphi 0, %s240
    %s242 = sphi 0, %s240
    %s243 = sphi 0, %s242
    %s257 = sphi 0, %s243
    %s263 = sphi 0, %s265
    %s266 = sphi 0, %s263
    %s267 = sphi 0, %s266
    %s283 = sphi 0, %s267
  $region4: #{_lambda_.1} parent=0 // loop_header_branch
    %20 = sbr.rel (%p18) target = $region8
  $region5: #{_lambda_.1} parent=0 // loop_body
    %s22 = ssub.s32 %s17, 1
    %s23 = ssub.s32 %s17, 2
    %s24 = sadd.s32 %s17, 1
    %s25 = ssub.s32 %s17, %s24
    %p26 = scmp.eq.s32.totalorder %s25, 0
    %s28 = sadd.s32 %s27, 1
    %s29 = scalar_select %p26, %s27, %s28
    %p32 = pneg %p26
    %p33 = scmp.eq.s32.totalorder %s17, 1
    %p34 = por %p32, %p33
    %p35 = scmp.ne.s32.totalorder %s27, %s30
    %p36 = scmp.eq.s32.totalorder %s17, 0
    %p37 = por %p35, %p36
    %p38 = scmp.ne.s32.totalorder %s27, %s30
    %p39 = scmp.eq.s32.totalorder %s22, 1
    %p40 = por %p38, %p39
    %p41 = scmp.ne.s32.totalorder %s30, %s31
    %p42 = scmp.eq.s32.totalorder %s22, 0
    %p43 = por %p41, %p42
    %p44 = scmp.ne.s32.totalorder %s30, %s31
    %p45 = scmp.eq.s32.totalorder %s23, 1
    %p46 = por %p44, %p45
    %p48 = scmp.ne.s32.totalorder %s31, %s47
    %p49 = scmp.eq.s32.totalorder %s23, 0
    %p50 = por %p48, %p49
    %s52 = sadd.s32 %s51, 1
    %p55 = scmp.eq.s32.totalorder %s17, 1
    %p56 = scmp.ne.s32.totalorder %s51, %s53
    %p57 = scmp.eq.s32.totalorder %s17, 0
    %p58 = por %p56, %p57
    %p59 = scmp.ne.s32.totalorder %s51, %s53
    %p60 = scmp.eq.s32.totalorder %s22, 1
    %p61 = por %p59, %p60
    %p62 = scmp.ne.s32.totalorder %s53, %s54
    %p63 = scmp.eq.s32.totalorder %s22, 0
    %p64 = por %p62, %p63
    %p65 = scmp.ne.s32.totalorder %s53, %s54
    %p66 = scmp.eq.s32.totalorder %s23, 1
    %p67 = por %p65, %p66
    %p69 = scmp.ne.s32.totalorder %s54, %s68
    %p70 = scmp.eq.s32.totalorder %s23, 0
    %p71 = por %p69, %p70
    %s73 = sadd.s32 %s72, 1
    %p76 = scmp.eq.s32.totalorder %s17, 1
    %p77 = scmp.ne.s32.totalorder %s72, %s74
    %p78 = scmp.eq.s32.totalorder %s17, 0
    %p79 = por %p77, %p78
    %p80 = scmp.ne.s32.totalorder %s72, %s74
    %p81 = scmp.eq.s32.totalorder %s22, 1
    %p82 = por %p80, %p81
    %p83 = scmp.ne.s32.totalorder %s74, %s75
    %p84 = scmp.eq.s32.totalorder %s22, 0
    %p85 = por %p83, %p84
    %p86 = scmp.ne.s32.totalorder %s74, %s75
    %p87 = scmp.eq.s32.totalorder %s23, 1
    %p88 = por %p86, %p87
    %p90 = scmp.ne.s32.totalorder %s75, %s89
    %p91 = scmp.eq.s32.totalorder %s23, 0
    %p92 = por %p90, %p91
    %s94 = sadd.s32 %s93, 1
    %p97 = scmp.eq.s32.totalorder %s17, 1
    %p98 = scmp.ne.s32.totalorder %s93, %s95
    %p99 = scmp.eq.s32.totalorder %s17, 0
    %p100 = por %p98, %p99
    %p101 = scmp.ne.s32.totalorder %s93, %s95
    %p102 = scmp.eq.s32.totalorder %s22, 1
    %p103 = por %p101, %p102
    %p104 = scmp.ne.s32.totalorder %s95, %s96
    %p105 = scmp.eq.s32.totalorder %s22, 0
    %p106 = por %p104, %p105
    %p107 = scmp.ne.s32.totalorder %s95, %s96
    %p108 = scmp.eq.s32.totalorder %s23, 1
    %p109 = por %p107, %p108
    %p111 = scmp.ne.s32.totalorder %s96, %s110
    %p112 = scmp.eq.s32.totalorder %s23, 0
    %p113 = por %p111, %p112
    %s115 = sadd.s32 %s114, 1
    %p118 = scmp.eq.s32.totalorder %s17, 1
    %p119 = scmp.ne.s32.totalorder %s114, %s116
    %p120 = scmp.eq.s32.totalorder %s17, 0
    %p121 = por %p119, %p120
    %p122 = scmp.ne.s32.totalorder %s114, %s116
    %p123 = scmp.eq.s32.totalorder %s22, 1
    %p124 = por %p122, %p123
    %p125 = scmp.ne.s32.totalorder %s116, %s117
    %p126 = scmp.eq.s32.totalorder %s22, 0
    %p127 = por %p125, %p126
    %p128 = scmp.ne.s32.totalorder %s116, %s117
    %p129 = scmp.eq.s32.totalorder %s23, 1
    %p130 = por %p128, %p129
    %p132 = scmp.ne.s32.totalorder %s117, %s131
    %p133 = scmp.eq.s32.totalorder %s23, 0
    %p134 = por %p132, %p133
    %s136 = sadd.s32 %s135, 1
    %p139 = scmp.eq.s32.totalorder %s17, 1
    %p140 = scmp.ne.s32.totalorder %s135, %s137
    %p141 = scmp.eq.s32.totalorder %s17, 0
    %p142 = por %p140, %p141
    %p143 = scmp.ne.s32.totalorder %s135, %s137
    %p144 = scmp.eq.s32.totalorder %s22, 1
    %p145 = por %p143, %p144
    %p146 = scmp.ne.s32.totalorder %s137, %s138
    %p147 = scmp.eq.s32.totalorder %s22, 0
    %p148 = por %p146, %p147
    %p149 = scmp.ne.s32.totalorder %s137, %s138
    %p150 = scmp.eq.s32.totalorder %s23, 1
    %p151 = por %p149, %p150
    %p153 = scmp.ne.s32.totalorder %s138, %s152
    %p154 = scmp.eq.s32.totalorder %s23, 0
    %p155 = por %p153, %p154
    %s157 = sadd.s32 %s156, 1
    %p160 = scmp.eq.s32.totalorder %s17, 1
    %p161 = scmp.ne.s32.totalorder %s156, %s158
    %p162 = scmp.eq.s32.totalorder %s17, 0
    %p163 = por %p161, %p162
    %p164 = scmp.ne.s32.totalorder %s156, %s158
    %p165 = scmp.eq.s32.totalorder %s22, 1
    %p166 = por %p164, %p165
    %p167 = scmp.ne.s32.totalorder %s158, %s159
    %p168 = scmp.eq.s32.totalorder %s22, 0
    %p169 = por %p167, %p168
    %p170 = scmp.ne.s32.totalorder %s158, %s159
    %p171 = scmp.eq.s32.totalorder %s23, 1
    %p172 = por %p170, %p171
    %p174 = scmp.ne.s32.totalorder %s159, %s173
    %p175 = scmp.eq.s32.totalorder %s23, 0
    %p176 = por %p174, %p175
    %s178 = sadd.s32 %s177, 1
    %p181 = scmp.eq.s32.totalorder %s17, 1
    %p182 = scmp.ne.s32.totalorder %s177, %s179
    %p183 = scmp.eq.s32.totalorder %s17, 0
    %p184 = por %p182, %p183
    %p185 = scmp.ne.s32.totalorder %s177, %s179
    %p186 = scmp.eq.s32.totalorder %s22, 1
    %p187 = por %p185, %p186
    %p188 = scmp.ne.s32.totalorder %s179, %s180
    %p189 = scmp.eq.s32.totalorder %s22, 0
    %p190 = por %p188, %p189
    %p191 = scmp.ne.s32.totalorder %s179, %s180
    %p192 = scmp.eq.s32.totalorder %s23, 1
    %p193 = por %p191, %p192
    %p195 = scmp.ne.s32.totalorder %s180, %s194
    %p196 = scmp.eq.s32.totalorder %s23, 0
    %p197 = por %p195, %p196
    %s199 = sadd.s32 %s198, 1
    %p202 = scmp.eq.s32.totalorder %s17, 1
    %p203 = scmp.ne.s32.totalorder %s198, %s200
    %p204 = scmp.eq.s32.totalorder %s17, 0
    %p205 = por %p203, %p204
    %p206 = scmp.ne.s32.totalorder %s198, %s200
    %p207 = scmp.eq.s32.totalorder %s22, 1
    %p208 = por %p206, %p207
    %p209 = scmp.ne.s32.totalorder %s200, %s201
    %p210 = scmp.eq.s32.totalorder %s22, 0
    %p211 = por %p209, %p210
    %p212 = scmp.ne.s32.totalorder %s200, %s201
    %p213 = scmp.eq.s32.totalorder %s23, 1
    %p214 = por %p212, %p213
    %p216 = scmp.ne.s32.totalorder %s201, %s215
    %p217 = scmp.eq.s32.totalorder %s23, 0
    %p218 = por %p216, %p217
    %s220 = sadd.s32 %s219, 1
    %p223 = scmp.eq.s32.totalorder %s17, 1
    %p224 = scmp.ne.s32.totalorder %s219, %s221
    %p225 = scmp.eq.s32.totalorder %s17, 0
    %p226 = por %p224, %p225
    %p227 = scmp.ne.s32.totalorder %s219, %s221
    %p228 = scmp.eq.s32.totalorder %s22, 1
    %p229 = por %p227, %p228
    %p230 = scmp.ne.s32.totalorder %s221, %s222
    %p231 = scmp.eq.s32.totalorder %s22, 0
    %p232 = por %p230, %p231
    %p233 = scmp.ne.s32.totalorder %s221, %s222
    %p234 = scmp.eq.s32.totalorder %s23, 1
    %p235 = por %p233, %p234
    %p237 = scmp.ne.s32.totalorder %s222, %s236
    %p238 = scmp.eq.s32.totalorder %s23, 0
    %p239 = por %p237, %p238
    %s241 = sadd.s32 %s240, 1
    %p244 = scmp.eq.s32.totalorder %s17, 1
    %p245 = scmp.ne.s32.totalorder %s240, %s242
    %p246 = scmp.eq.s32.totalorder %s17, 0
    %p247 = por %p245, %p246
    %p248 = scmp.ne.s32.totalorder %s240, %s242
    %p249 = scmp.eq.s32.totalorder %s22, 1
    %p250 = por %p248, %p249
    %p251 = scmp.ne.s32.totalorder %s242, %s243
    %p252 = scmp.eq.s32.totalorder %s22, 0
    %p253 = por %p251, %p252
    %p254 = scmp.ne.s32.totalorder %s242, %s243
    %p255 = scmp.eq.s32.totalorder %s23, 1
    %p256 = por %p254, %p255
    %p258 = scmp.ne.s32.totalorder %s243, %s257
    %p259 = scmp.eq.s32.totalorder %s23, 0
    %p260 = por %p258, %p259
    %s261 = ssub.s32 %s17, %s24
    %p262 = scmp.eq.s32.totalorder %s261, 0
    %s264 = sadd.s32 %s263, 1
    %s265 = scalar_select %p262, %s263, %s264
    %p268 = pneg %p262
    %p269 = scmp.eq.s32.totalorder %s17, 1
    %p270 = por %p268, %p269
    %p271 = scmp.ne.s32.totalorder %s263, %s266
    %p272 = scmp.eq.s32.totalorder %s17, 0
    %p273 = por %p271, %p272
    %p274 = scmp.ne.s32.totalorder %s263, %s266
    %p275 = scmp.eq.s32.totalorder %s22, 1
    %p276 = por %p274, %p275
    %p277 = scmp.ne.s32.totalorder %s266, %s267
    %p278 = scmp.eq.s32.totalorder %s22, 0
    %p279 = por %p277, %p278
    %p280 = scmp.ne.s32.totalorder %s266, %s267
    %p281 = scmp.eq.s32.totalorder %s23, 1
    %p282 = por %p280, %p281
    %p284 = scmp.ne.s32.totalorder %s267, %s283
    %p285 = scmp.eq.s32.totalorder %s23, 0
    %p286 = por %p284, %p285
    %p287 = scmp.le.s32.totalorder 1, %s17
    %p288 = scmp.lt.s32.totalorder %s17, 3
    %p289 = pnand %p287, %p288
    %p290 = pneg %p289
    // Predicated region
    $region9: #{_lambda_.1} parent=5 // pred_check
      _
    $region10: #{_lambda_.1} parent=5 // pred_check_branch
      %292 = sbr.rel (%p289) target = $region12
    $region11: #{_lambda_.1} parent=5 // pred_region
      %s293 = ssub.s32 %s17, 1
      // Predicated region
      $region13: #{_lambda_.1} parent=11 // pred_check
        %p294 = pneg %p64
      $region14: #{_lambda_.1} parent=11 // pred_check_branch
        %296 = sbr.rel (%p294) target = $region16
      $region15: #{_lambda_.1} parent=11 // pred_region
        _
      $region16: #{_lambda_.1} parent=11 // pred_fallthru
        _
      // Predicated region
      $region17: #{_lambda_.1} parent=11 // pred_check
        %p297 = pneg %p85
      $region18: #{_lambda_.1} parent=11 // pred_check_branch
        %299 = sbr.rel (%p297) target = $region20
      $region19: #{_lambda_.1} parent=11 // pred_region
        _
      $region20: #{_lambda_.1} parent=11 // pred_fallthru
        _
      // Predicated region
      $region21: #{_lambda_.1} parent=11 // pred_check
        %p300 = pneg %p106
      $region22: #{_lambda_.1} parent=11 // pred_check_branch
        %302 = sbr.rel (%p300) target = $region24
      $region23: #{_lambda_.1} parent=11 // pred_region
        _
      $region24: #{_lambda_.1} parent=11 // pred_fallthru
        _
      // Predicated region
      $region25: #{_lambda_.1} parent=11 // pred_check
        %p303 = pneg %p127
      $region26: #{_lambda_.1} parent=11 // pred_check_branch
        %305 = sbr.rel (%p303) target = $region28
      $region27: #{_lambda_.1} parent=11 // pred_region
        _
      $region28: #{_lambda_.1} parent=11 // pred_fallthru
        _
      // Predicated region
      $region29: #{_lambda_.1} parent=11 // pred_check
        %p306 = pneg %p148
      $region30: #{_lambda_.1} parent=11 // pred_check_branch
        %308 = sbr.rel (%p306) target = $region32
      $region31: #{_lambda_.1} parent=11 // pred_region
        _
      $region32: #{_lambda_.1} parent=11 // pred_fallthru
        _
      // Predicated region
      $region33: #{_lambda_.1} parent=11 // pred_check
        %p309 = pneg %p169
      $region34: #{_lambda_.1} parent=11 // pred_check_branch
        %311 = sbr.rel (%p309) target = $region36
      $region35: #{_lambda_.1} parent=11 // pred_region
        _
      $region36: #{_lambda_.1} parent=11 // pred_fallthru
        _
      // Predicated region
      $region37: #{_lambda_.1} parent=11 // pred_check
        %p312 = pneg %p190
      $region38: #{_lambda_.1} parent=11 // pred_check_branch
        %314 = sbr.rel (%p312) target = $region40
      $region39: #{_lambda_.1} parent=11 // pred_region
        _
      $region40: #{_lambda_.1} parent=11 // pred_fallthru
        _
      // Predicated region
      $region41: #{_lambda_.1} parent=11 // pred_check
        %p315 = pneg %p211
      $region42: #{_lambda_.1} parent=11 // pred_check_branch
        %317 = sbr.rel (%p315) target = $region44
      $region43: #{_lambda_.1} parent=11 // pred_region
        _
      $region44: #{_lambda_.1} parent=11 // pred_fallthru
        _
      // Predicated region
      $region45: #{_lambda_.1} parent=11 // pred_check
        %p318 = pneg %p232
      $region46: #{_lambda_.1} parent=11 // pred_check_branch
        %320 = sbr.rel (%p318) target = $region48
      $region47: #{_lambda_.1} parent=11 // pred_region
        _
      $region48: #{_lambda_.1} parent=11 // pred_fallthru
        _
      // Predicated region
      $region49: #{_lambda_.1} parent=11 // pred_check
        %p321 = pneg %p253
      $region50: #{_lambda_.1} parent=11 // pred_check_branch
        %323 = sbr.rel (%p321) target = $region52
      $region51: #{_lambda_.1} parent=11 // pred_region
        _
      $region52: #{_lambda_.1} parent=11 // pred_fallthru
        _
    $region12: #{_lambda_.1} parent=5 // pred_fallthru
      _
    %p324 = scmp.lt.s32.totalorder %s17, 2
    // Predicated region
    $region53: #{_lambda_.1} parent=5 // pred_check
      %p325 = pneg %p324
    $region54: #{_lambda_.1} parent=5 // pred_check_branch
      %327 = sbr.rel (%p325) target = $region56
    $region55: #{_lambda_.1} parent=5 // pred_region
      // Predicated region
      $region57: #{_lambda_.1} parent=55 // pred_check
        %p328 = pneg %p37
      $region58: #{_lambda_.1} parent=55 // pred_check_branch
        %330 = sbr.rel (%p328) target = $region60
      $region59: #{_lambda_.1} parent=55 // pred_region
        %s331 = smul.u32 4, %s17
        %p332 = scmp.lt.s32.totalorder %s331, 7
        %s333 = scalar_select %p332, %s331, 7
        %s334 = smul.addr %s333, 4
        %s335 = scalar_lea.vmem %s0, %s334
        %s336 = smul.u32 4, %s17
      $region60: #{_lambda_.1} parent=55 // pred_fallthru
        _
    $region56: #{_lambda_.1} parent=5 // pred_fallthru
      _
    %p337 = scmp.le.s32.totalorder 1, %s17
    %p338 = scmp.lt.s32.totalorder %s17, 3
    %p339 = pnand %p337, %p338
    %p340 = pneg %p339
    // Predicated region
    $region61: #{_lambda_.1} parent=5 // pred_check
      _
    $region62: #{_lambda_.1} parent=5 // pred_check_branch
      %342 = sbr.rel (%p339) target = $region64
    $region63: #{_lambda_.1} parent=5 // pred_region
      %s343 = ssub.s32 %s17, 1
      %s344 = smul.u32 4, %s22
      %p345 = scmp.lt.s32.totalorder %s344, 7
      %s346 = scalar_select %p345, %s344, 7
      %s347 = smul.addr %s346, 4
      %s348 = scalar_lea.vmem %s0, %s347
      %p349 = pneg %p43
      %p350 = pneg %p40
      %p351 = pneg %p64
      %p352 = pneg %p61
      %p353 = pneg %p85
      %p354 = pneg %p82
      %p355 = pneg %p106
      %p356 = pneg %p103
      %p357 = pneg %p127
      %p358 = pneg %p124
      %p359 = pneg %p148
      %p360 = pneg %p145
      %p361 = pneg %p169
      %p362 = pneg %p166
      %p363 = pneg %p190
      %p364 = pneg %p187
      %p365 = pneg %p211
      %p366 = pneg %p208
      %p367 = pneg %p232
      %p368 = pneg %p229
      %p369 = pneg %p253
      %p370 = pneg %p250
      %p371 = pneg %p279
      %p372 = pneg %p276
      %s373 = smul.u32 4, %s22
      %p374 = scmp.lt.s32.totalorder %s373, 7
      %s375 = scalar_select %p374, %s373, 7
      %s376 = smul.addr %s375, 4
      %s377 = scalar_lea.vmem %s11, %s376
      %s378 = smul.u32 4, %s22
      %p379 = scmp.lt.s32.totalorder %s378, 7
      %s380 = scalar_select %p379, %s378, 7
      %s381 = smul.addr %s380, 4
      %s382 = scalar_lea.vmem %s0, %s381
      %s383 = smul.u32 4, %s22
      %s384 = smul.u32 4, %s22
      %p385 = scmp.lt.s32.totalorder %s384, 7
      %s386 = scalar_select %p385, %s384, 7
      %s387 = smul.addr %s386, 4
      %s388 = scalar_lea.vmem %s11, %s387
      %s389 = smul.u32 4, %s22
      %v390 = vld [vmem:[%s1] sm:$0xf]
      %s391 = scalar_lea.vmem %s1, 4
      %v392 = vld [vmem:[%s391] sm:$0xf]
      %s393 = scalar_lea.vmem %s1, 8
      %v394 = vld [vmem:[%s393] sm:$0xf]
      %s395 = scalar_lea.vmem %s1, 12
      %v396 = vld [vmem:[%s395] sm:$0xf]
      %s397 = scalar_lea.vmem %s1, 20
      %v398 = vld [vmem:[%s397] sm:$0xf]
      %s399 = scalar_lea.vmem %s1, 24
      %v400 = vld [vmem:[%s399] sm:$0xf]
      %s401 = scalar_lea.vmem %s1, 28
      %v402 = vld [vmem:[%s401] sm:$0xf]
      %s403 = scalar_lea.vmem %s1, 32
      %v404 = vld [vmem:[%s403] sm:$0xf]
      %v405 = vld [vmem:[%s382] sm:$0xff]
      %v406 = vld [vmem:[%s382 + $0x8] sm:$0xff]
      %v407 = vld [vmem:[%s2] sm:$0xff]
      %v410 = vcombine.high %v405, %v405
      %v411 = vcombine.high %v406, %v406
      %414 = vrot.lane.b32.xlu0 %v405, 17
      %v415 = vpop.permute.xlu0 %414
      %416 = vrot.lane.b32.xlu0 %v410, 17
      %v417 = vpop.permute.xlu0 %416
      %418 = vrot.lane.b32.xlu0 %v406, 17
      %v419 = vpop.permute.xlu0 %418
      %420 = vrot.lane.b32.xlu0 %v411, 17
      %v421 = vpop.permute.xlu0 %420
      %v422 = vlaneseq
      %v423 = vand.u32 %v422, 127
      %vm424 = vcmp.lt.s32.totalorder %v423, 17
      %v425 = vsel %vm424, %v419, %v421
      %v426 = vsel %vm424, %v417, %v419
      %v427 = vsel %vm424, %v415, %v417
      %v428 = vsel %vm424, %v421, %v415
      %v430 = vlaneseq
      %v431 = vshrl.u32 %v430, 7
      %v432 = vsub.s32 0, %v431
      %v433 = vrot.slane %v390, %v432
      %v434 = vlaneseq
      %v435 = vshrl.u32 %v434, 7
      %v436 = vsub.s32 1, %v435
      %v437 = vrot.slane %v390, %v436
      %v438 = vlaneseq
      %v439 = vshrl.u32 %v438, 7
      %v440 = vsub.s32 2, %v439
      %v441 = vrot.slane %v390, %v440
      %v442 = vlaneseq
      %v443 = vshrl.u32 %v442, 7
      %v444 = vsub.s32 3, %v443
      %v445 = vrot.slane %v390, %v444
      %v450 = vmul.f32 %v428, %v433
      %v451 = vmul.f32 %v427, %v437
      %v452 = vmul.f32 %v426, %v441
      %v453 = vmul.f32 %v425, %v445
      %s454 = scalar_lea.vmem %s2, 8
      %v455 = vld [vmem:[%s454] sm:$0xff]
      %456 = vrot.lane.b32.xlu0 %v405, 16
      %v457 = vpop.permute.xlu0 %456
      %458 = vrot.lane.b32.xlu0 %v410, 16
      %v459 = vpop.permute.xlu0 %458
      %460 = vrot.lane.b32.xlu0 %v406, 16
      %v461 = vpop.permute.xlu0 %460
      %462 = vrot.lane.b32.xlu0 %v411, 16
      %v463 = vpop.permute.xlu0 %462
      %vm464 = vcmp.lt.s32.totalorder %v423, 16
      %v465 = vsel %vm464, %v461, %v463
      %v466 = vsel %vm464, %v459, %v461
      %v467 = vsel %vm464, %v457, %v459
      %v468 = vsel %vm464, %v463, %v457
      %v470 = vlaneseq
      %v471 = vshrl.u32 %v470, 7
      %v472 = vsub.s32 0, %v471
      %v473 = vrot.slane %v392, %v472
      %v474 = vlaneseq
      %v475 = vshrl.u32 %v474, 7
      %v476 = vsub.s32 1, %v475
      %v477 = vrot.slane %v392, %v476
      %v478 = vlaneseq
      %v479 = vshrl.u32 %v478, 7
      %v480 = vsub.s32 2, %v479
      %v481 = vrot.slane %v392, %v480
      %v482 = vlaneseq
      %v483 = vshrl.u32 %v482, 7
      %v484 = vsub.s32 3, %v483
      %v485 = vrot.slane %v392, %v484
      %v490 = vmul.f32 %v468, %v473
      %v491 = vmul.f32 %v467, %v477
      %v492 = vmul.f32 %v466, %v481
      %v493 = vmul.f32 %v465, %v485
      %vm494 = vcmask 31744
      %v496 = vsel %vm494, %v455, 0
      %vm498 = vcmask 1043456
      %v500 = vsel %vm498, %v490, 0
      %v503 = vsel %vm498, %v491, 0
      %v506 = vsel %vm498, %v492, 0
      %v509 = vsel %vm498, %v493, 0
      %511 = vmatprep.subr.mxu0 %v503
      %512 = vmatpush1.msra.mxu0 %v500
      %513 = vmatprep.subr.mxu0 0.0
      %514 = vmatpush1.msra.mxu0 0.0
      %515 = vmatprep.subr.mxu0 0.0
      %516 = vmatpush1.msra.mxu0 0.0
      %517 = vmatprep.subr.mxu0 0.0
      %518 = vmatpush1.msra.mxu0 0.0
      %519 = vmatprep.subr.mxu0 0.0
      %520 = vmatpush1.msra.mxu0 0.0
      %521 = vmatprep.subr.mxu0 0.0
      %522 = vmatpush1.msra.mxu0 0.0
      %523 = vmatprep.subr.mxu0 0.0
      %524 = vmatpush1.msra.mxu0 0.0
      %525 = vmatprep.subr.mxu0 0.0
      %526 = vmatpush1.msra.mxu0 0.0
      %527 = vmatprep.subr.mxu0 0.0
      %528 = vmatpush1.msra.mxu0 0.0
      %529 = vmatprep.subr.mxu0 0.0
      %530 = vmatpush1.msra.mxu0 0.0
      %531 = vmatprep.subr.mxu0 0.0
      %532 = vmatpush1.msra.mxu0 0.0
      %533 = vmatprep.subr.mxu0 0.0
      %534 = vmatpush1.msra.mxu0 0.0
      %535 = vmatprep.subr.mxu0 0.0
      %536 = vmatpush1.msra.mxu0 0.0
      %537 = vmatprep.subr.mxu0 0.0
      %538 = vmatpush1.msra.mxu0 0.0
      %539 = vmatprep.subr.mxu0 0.0
      %540 = vmatpush1.msra.mxu0 0.0
      %541 = vmatprep.subr.mxu0 0.0
      %542 = vmatpush1.msra.mxu0 0.0
      %543 = vmatprep.subr.mxu0 0.0
      %544 = vmatpush1.msra.mxu0 0.0
      %545 = vmatprep.subr.mxu0 0.0
      %546 = vmatpush1.msra.mxu0 0.0
      %547 = vmatprep.subr.mxu0 0.0
      %548 = vmatpush1.msra.mxu0 0.0
      %549 = vmatprep.subr.mxu0 0.0
      %550 = vmatpush1.msra.mxu0 0.0
      %551 = vmatprep.subr.mxu0 0.0
      %552 = vmatpush1.msra.mxu0 0.0
      %553 = vmatprep.subr.mxu0 0.0
      %554 = vmatpush1.msra.mxu0 0.0
      %555 = vmatprep.subr.mxu0 0.0
      %556 = vmatpush1.msra.mxu0 0.0
      %557 = vmatprep.subr.mxu0 0.0
      %558 = vmatpush1.msra.mxu0 0.0
      %559 = vmatprep.subr.mxu0 0.0
      %560 = vmatpush1.msra.mxu0 0.0
      %561 = vmatprep.subr.mxu0 0.0
      %562 = vmatpush1.msra.mxu0 0.0
      %563 = vmatprep.subr.mxu0 0.0
      %564 = vmatpush1.msra.mxu0 0.0
      %565 = vmatprep.subr.mxu0 0.0
      %566 = vmatpush1.msra.mxu0 0.0
      %567 = vmatprep.subr.mxu0 0.0
      %568 = vmatpush1.msra.mxu0 0.0
      %569 = vmatprep.subr.mxu0 0.0
      %570 = vmatpush1.msra.mxu0 0.0
      %571 = vmatprep.subr.mxu0 0.0
      %572 = vmatpush1.msra.mxu0 0.0
      %573 = vmatprep.subr.mxu0 0.0
      %574 = vmatpush1.msra.mxu0 0.0
      %575 = vmatprep.mubr.f32.mxu0 0.0
      %576 = vmatmul.mubr.f32.gmra.mrb[0].mxu0 %v496
      %v577 = vpop.f32.mrb[0].mxu0
      %v578 = vadd.f32 0.0, %v577
      %v579 = vpop.f32.mrb[0].mxu0
      %v580 = vadd.f32 0.0, %v579
      %581 = vdwg.mxu0
      %582 = vmatprep.subr.mxu0 %v509
      %583 = vmatpush1.msra.mxu0 %v506
      %584 = vmatprep.subr.mxu0 0.0
      %585 = vmatpush1.msra.mxu0 0.0
      %586 = vmatprep.subr.mxu0 0.0
      %587 = vmatpush1.msra.mxu0 0.0
      %588 = vmatprep.subr.mxu0 0.0
      %589 = vmatpush1.msra.mxu0 0.0
      %590 = vmatprep.subr.mxu0 0.0
      %591 = vmatpush1.msra.mxu0 0.0
      %592 = vmatprep.subr.mxu0 0.0
      %593 = vmatpush1.msra.mxu0 0.0
      %594 = vmatprep.subr.mxu0 0.0
      %595 = vmatpush1.msra.mxu0 0.0
      %596 = vmatprep.subr.mxu0 0.0
      %597 = vmatpush1.msra.mxu0 0.0
      %598 = vmatprep.subr.mxu0 0.0
      %599 = vmatpush1.msra.mxu0 0.0
      %600 = vmatprep.subr.mxu0 0.0
      %601 = vmatpush1.msra.mxu0 0.0
      %602 = vmatprep.subr.mxu0 0.0
      %603 = vmatpush1.msra.mxu0 0.0
      %604 = vmatprep.subr.mxu0 0.0
      %605 = vmatpush1.msra.mxu0 0.0
      %606 = vmatprep.subr.mxu0 0.0
      %607 = vmatpush1.msra.mxu0 0.0
      %608 = vmatprep.subr.mxu0 0.0
      %609 = vmatpush1.msra.mxu0 0.0
      %610 = vmatprep.subr.mxu0 0.0
      %611 = vmatpush1.msra.mxu0 0.0
      %612 = vmatprep.subr.mxu0 0.0
      %613 = vmatpush1.msra.mxu0 0.0
      %614 = vmatprep.subr.mxu0 0.0
      %615 = vmatpush1.msra.mxu0 0.0
      %616 = vmatprep.subr.mxu0 0.0
      %617 = vmatpush1.msra.mxu0 0.0
      %618 = vmatprep.subr.mxu0 0.0
      %619 = vmatpush1.msra.mxu0 0.0
      %620 = vmatprep.subr.mxu0 0.0
      %621 = vmatpush1.msra.mxu0 0.0
      %622 = vmatprep.subr.mxu0 0.0
      %623 = vmatpush1.msra.mxu0 0.0
      %624 = vmatprep.subr.mxu0 0.0
      %625 = vmatpush1.msra.mxu0 0.0
      %626 = vmatprep.subr.mxu0 0.0
      %627 = vmatpush1.msra.mxu0 0.0
      %628 = vmatprep.subr.mxu0 0.0
      %629 = vmatpush1.msra.mxu0 0.0
      %630 = vmatprep.subr.mxu0 0.0
      %631 = vmatpush1.msra.mxu0 0.0
      %632 = vmatprep.subr.mxu0 0.0
      %633 = vmatpush1.msra.mxu0 0.0
      %634 = vmatprep.subr.mxu0 0.0
      %635 = vmatpush1.msra.mxu0 0.0
      %636 = vmatprep.subr.mxu0 0.0
      %637 = vmatpush1.msra.mxu0 0.0
      %638 = vmatprep.subr.mxu0 0.0
      %639 = vmatpush1.msra.mxu0 0.0
      %640 = vmatprep.subr.mxu0 0.0
      %641 = vmatpush1.msra.mxu0 0.0
      %642 = vmatprep.subr.mxu0 0.0
      %643 = vmatpush1.msra.mxu0 0.0
      %644 = vmatprep.subr.mxu0 0.0
      %645 = vmatpush1.msra.mxu0 0.0
      %646 = vmatprep.mubr.f32.mxu0 0.0
      %647 = vmatmul.mubr.f32.gmra.mrb[0].mxu0 %v496
      %v648 = vpop.f32.mrb[0].mxu0
      %v649 = vadd.f32 0.0, %v648
      %v650 = vpop.f32.mrb[0].mxu0
      %v651 = vadd.f32 0.0, %v650
      %652 = vdwg.mxu0
      %v654 = vsel %vm494, %v407, 0
      %v657 = vsel %vm498, %v450, 0
      %v660 = vsel %vm498, %v451, 0
      %v663 = vsel %vm498, %v452, 0
      %v666 = vsel %vm498, %v453, 0
      %668 = vmatprep.subr.mxu0 %v660
      %669 = vmatpush1.msra.mxu0 %v657
      %670 = vmatprep.subr.mxu0 0.0
      %671 = vmatpush1.msra.mxu0 0.0
      %672 = vmatprep.subr.mxu0 0.0
      %673 = vmatpush1.msra.mxu0 0.0
      %674 = vmatprep.subr.mxu0 0.0
      %675 = vmatpush1.msra.mxu0 0.0
      %676 = vmatprep.subr.mxu0 0.0
      %677 = vmatpush1.msra.mxu0 0.0
      %678 = vmatprep.subr.mxu0 0.0
      %679 = vmatpush1.msra.mxu0 0.0
      %680 = vmatprep.subr.mxu0 0.0
      %681 = vmatpush1.msra.mxu0 0.0
      %682 = vmatprep.subr.mxu0 0.0
      %683 = vmatpush1.msra.mxu0 0.0
      %684 = vmatprep.subr.mxu0 0.0
      %685 = vmatpush1.msra.mxu0 0.0
      %686 = vmatprep.subr.mxu0 0.0
      %687 = vmatpush1.msra.mxu0 0.0
      %688 = vmatprep.subr.mxu0 0.0
      %689 = vmatpush1.msra.mxu0 0.0
      %690 = vmatprep.subr.mxu0 0.0
      %691 = vmatpush1.msra.mxu0 0.0
      %692 = vmatprep.subr.mxu0 0.0
      %693 = vmatpush1.msra.mxu0 0.0
      %694 = vmatprep.subr.mxu0 0.0
      %695 = vmatpush1.msra.mxu0 0.0
      %696 = vmatprep.subr.mxu0 0.0
      %697 = vmatpush1.msra.mxu0 0.0
      %698 = vmatprep.subr.mxu0 0.0
      %699 = vmatpush1.msra.mxu0 0.0
      %700 = vmatprep.subr.mxu0 0.0
      %701 = vmatpush1.msra.mxu0 0.0
      %702 = vmatprep.subr.mxu0 0.0
      %703 = vmatpush1.msra.mxu0 0.0
      %704 = vmatprep.subr.mxu0 0.0
      %705 = vmatpush1.msra.mxu0 0.0
      %706 = vmatprep.subr.mxu0 0.0
      %707 = vmatpush1.msra.mxu0 0.0
      %708 = vmatprep.subr.mxu0 0.0
      %709 = vmatpush1.msra.mxu0 0.0
      %710 = vmatprep.subr.mxu0 0.0
      %711 = vmatpush1.msra.mxu0 0.0
      %712 = vmatprep.subr.mxu0 0.0
      %713 = vmatpush1.msra.mxu0 0.0
      %714 = vmatprep.subr.mxu0 0.0
      %715 = vmatpush1.msra.mxu0 0.0
      %716 = vmatprep.subr.mxu0 0.0
      %717 = vmatpush1.msra.mxu0 0.0
      %718 = vmatprep.subr.mxu0 0.0
      %719 = vmatpush1.msra.mxu0 0.0
      %720 = vmatprep.subr.mxu0 0.0
      %721 = vmatpush1.msra.mxu0 0.0
      %722 = vmatprep.subr.mxu0 0.0
      %723 = vmatpush1.msra.mxu0 0.0
      %724 = vmatprep.subr.mxu0 0.0
      %725 = vmatpush1.msra.mxu0 0.0
      %726 = vmatprep.subr.mxu0 0.0
      %727 = vmatpush1.msra.mxu0 0.0
      %728 = vmatprep.subr.mxu0 0.0
      %729 = vmatpush1.msra.mxu0 0.0
      %730 = vmatprep.subr.mxu0 0.0
      %731 = vmatpush1.msra.mxu0 0.0
      %732 = vmatprep.mubr.f32.mxu0 0.0
      %733 = vmatmul.mubr.f32.gmra.mrb[0].mxu0 %v654
      %v734 = vpop.f32.mrb[0].mxu0
      %v735 = vadd.f32 %v578, %v734
      %v736 = vpop.f32.mrb[0].mxu0
      %v737 = vadd.f32 %v580, %v736
      %738 = vdwg.mxu0
      %739 = vmatprep.subr.mxu0 %v666
      %740 = vmatpush1.msra.mxu0 %v663
      %741 = vmatprep.subr.mxu0 0.0
      %742 = vmatpush1.msra.mxu0 0.0
      %743 = vmatprep.subr.mxu0 0.0
      %744 = vmatpush1.msra.mxu0 0.0
      %745 = vmatprep.subr.mxu0 0.0
      %746 = vmatpush1.msra.mxu0 0.0
      %747 = vmatprep.subr.mxu0 0.0
      %748 = vmatpush1.msra.mxu0 0.0
      %749 = vmatprep.subr.mxu0 0.0
      %750 = vmatpush1.msra.mxu0 0.0
      %751 = vmatprep.subr.mxu0 0.0
      %752 = vmatpush1.msra.mxu0 0.0
      %753 = vmatprep.subr.mxu0 0.0
      %754 = vmatpush1.msra.mxu0 0.0
      %755 = vmatprep.subr.mxu0 0.0
      %756 = vmatpush1.msra.mxu0 0.0
      %757 = vmatprep.subr.mxu0 0.0
      %758 = vmatpush1.msra.mxu0 0.0
      %759 = vmatprep.subr.mxu0 0.0
      %760 = vmatpush1.msra.mxu0 0.0
      %761 = vmatprep.subr.mxu0 0.0
      %762 = vmatpush1.msra.mxu0 0.0
      %763 = vmatprep.subr.mxu0 0.0
      %764 = vmatpush1.msra.mxu0 0.0
      %765 = vmatprep.subr.mxu0 0.0
      %766 = vmatpush1.msra.mxu0 0.0
      %767 = vmatprep.subr.mxu0 0.0
      %768 = vmatpush1.msra.mxu0 0.0
      %769 = vmatprep.subr.mxu0 0.0
      %770 = vmatpush1.msra.mxu0 0.0
      %771 = vmatprep.subr.mxu0 0.0
      %772 = vmatpush1.msra.mxu0 0.0
      %773 = vmatprep.subr.mxu0 0.0
      %774 = vmatpush1.msra.mxu0 0.0
      %775 = vmatprep.subr.mxu0 0.0
      %776 = vmatpush1.msra.mxu0 0.0
      %777 = vmatprep.subr.mxu0 0.0
      %778 = vmatpush1.msra.mxu0 0.0
      %779 = vmatprep.subr.mxu0 0.0
      %780 = vmatpush1.msra.mxu0 0.0
      %781 = vmatprep.subr.mxu0 0.0
      %782 = vmatpush1.msra.mxu0 0.0
      %783 = vmatprep.subr.mxu0 0.0
      %784 = vmatpush1.msra.mxu0 0.0
      %785 = vmatprep.subr.mxu0 0.0
      %786 = vmatpush1.msra.mxu0 0.0
      %787 = vmatprep.subr.mxu0 0.0
      %788 = vmatpush1.msra.mxu0 0.0
      %789 = vmatprep.subr.mxu0 0.0
      %790 = vmatpush1.msra.mxu0 0.0
      %791 = vmatprep.subr.mxu0 0.0
      %792 = vmatpush1.msra.mxu0 0.0
      %793 = vmatprep.subr.mxu0 0.0
      %794 = vmatpush1.msra.mxu0 0.0
      %795 = vmatprep.subr.mxu0 0.0
      %796 = vmatpush1.msra.mxu0 0.0
      %797 = vmatprep.subr.mxu0 0.0
      %798 = vmatpush1.msra.mxu0 0.0
      %799 = vmatprep.subr.mxu0 0.0
      %800 = vmatpush1.msra.mxu0 0.0
      %801 = vmatprep.subr.mxu0 0.0
      %802 = vmatpush1.msra.mxu0 0.0
      %803 = vmatprep.mubr.f32.mxu0 0.0
      %804 = vmatmul.mubr.f32.gmra.mrb[0].mxu0 %v654
      %v805 = vpop.f32.mrb[0].mxu0
      %v806 = vadd.f32 %v649, %v805
      %v807 = vpop.f32.mrb[0].mxu0
      %v808 = vadd.f32 %v651, %v807
      %809 = vdwg.mxu0
      %s810 = scalar_lea.vmem %s2, 16
      %v811 = vld [vmem:[%s810] sm:$0xff]
      %812 = vrot.lane.b32.xlu0 %v405, 15
      %v813 = vpop.permute.xlu0 %812
      %814 = vrot.lane.b32.xlu0 %v410, 15
      %v815 = vpop.permute.xlu0 %814
      %816 = vrot.lane.b32.xlu0 %v406, 15
      %v817 = vpop.permute.xlu0 %816
      %818 = vrot.lane.b32.xlu0 %v411, 15
      %v819 = vpop.permute.xlu0 %818
      %vm820 = vcmp.lt.s32.totalorder %v423, 15
      %v821 = vsel %vm820, %v817, %v819
      %v822 = vsel %vm820, %v815, %v817
      %v823 = vsel %vm820, %v813, %v815
      %v824 = vsel %vm820, %v819, %v813
      %v826 = vlaneseq
      %v827 = vshrl.u32 %v826, 7
      %v828 = vsub.s32 0, %v827
      %v829 = vrot.slane %v394, %v828
      %v830 = vlaneseq
      %v831 = vshrl.u32 %v830, 7
      %v832 = vsub.s32 1, %v831
      %v833 = vrot.slane %v394, %v832
      %v834 = vlaneseq
      %v835 = vshrl.u32 %v834, 7
      %v836 = vsub.s32 2, %v835
      %v837 = vrot.slane %v394, %v836
      %v838 = vlaneseq
      %v839 = vshrl.u32 %v838, 7
      %v840 = vsub.s32 3, %v839
      %v841 = vrot.slane %v394, %v840
      %v846 = vmul.f32 %v824, %v829
      %v847 = vmul.f32 %v823, %v833
      %v848 = vmul.f32 %v822, %v837
      %v849 = vmul.f32 %v821, %v841
      %v851 = vsel %vm494, %v811, 0
      %v854 = vsel %vm498, %v846, 0
      %v857 = vsel %vm498, %v847, 0
      %v860 = vsel %vm498, %v848, 0
      %v863 = vsel %vm498, %v849, 0
      %865 = vmatprep.subr.mxu0 %v857
      %866 = vmatpush1.msra.mxu0 %v854
      %867 = vmatprep.subr.mxu0 0.0
      %868 = vmatpush1.msra.mxu0 0.0
      %869 = vmatprep.subr.mxu0 0.0
      %870 = vmatpush1.msra.mxu0 0.0
      %871 = vmatprep.subr.mxu0 0.0
      %872 = vmatpush1.msra.mxu0 0.0
      %873 = vmatprep.subr.mxu0 0.0
      %874 = vmatpush1.msra.mxu0 0.0
      %875 = vmatprep.subr.mxu0 0.0
      %876 = vmatpush1.msra.mxu0 0.0
      %877 = vmatprep.subr.mxu0 0.0
      %878 = vmatpush1.msra.mxu0 0.0
      %879 = vmatprep.subr.mxu0 0.0
      %880 = vmatpush1.msra.mxu0 0.0
      %881 = vmatprep.subr.mxu0 0.0
      %882 = vmatpush1.msra.mxu0 0.0
      %883 = vmatprep.subr.mxu0 0.0
      %884 = vmatpush1.msra.mxu0 0.0
      %885 = vmatprep.subr.mxu0 0.0
      %886 = vmatpush1.msra.mxu0 0.0
      %887 = vmatprep.subr.mxu0 0.0
      %888 = vmatpush1.msra.mxu0 0.0
      %889 = vmatprep.subr.mxu0 0.0
      %890 = vmatpush1.msra.mxu0 0.0
      %891 = vmatprep.subr.mxu0 0.0
      %892 = vmatpush1.msra.mxu0 0.0
      %893 = vmatprep.subr.mxu0 0.0
      %894 = vmatpush1.msra.mxu0 0.0
      %895 = vmatprep.subr.mxu0 0.0
      %896 = vmatpush1.msra.mxu0 0.0
      %897 = vmatprep.subr.mxu0 0.0
      %898 = vmatpush1.msra.mxu0 0.0
      %899 = vmatprep.subr.mxu0 0.0
      %900 = vmatpush1.msra.mxu0 0.0
      %901 = vmatprep.subr.mxu0 0.0
      %902 = vmatpush1.msra.mxu0 0.0
      %903 = vmatprep.subr.mxu0 0.0
      %904 = vmatpush1.msra.mxu0 0.0
      %905 = vmatprep.subr.mxu0 0.0
      %906 = vmatpush1.msra.mxu0 0.0
      %907 = vmatprep.subr.mxu0 0.0
      %908 = vmatpush1.msra.mxu0 0.0
      %909 = vmatprep.subr.mxu0 0.0
      %910 = vmatpush1.msra.mxu0 0.0
      %911 = vmatprep.subr.mxu0 0.0
      %912 = vmatpush1.msra.mxu0 0.0
      %913 = vmatprep.subr.mxu0 0.0
      %914 = vmatpush1.msra.mxu0 0.0
      %915 = vmatprep.subr.mxu0 0.0
      %916 = vmatpush1.msra.mxu0 0.0
      %917 = vmatprep.subr.mxu0 0.0
      %918 = vmatpush1.msra.mxu0 0.0
      %919 = vmatprep.subr.mxu0 0.0
      %920 = vmatpush1.msra.mxu0 0.0
      %921 = vmatprep.subr.mxu0 0.0
      %922 = vmatpush1.msra.mxu0 0.0
      %923 = vmatprep.subr.mxu0 0.0
      %924 = vmatpush1.msra.mxu0 0.0
      %925 = vmatprep.subr.mxu0 0.0
      %926 = vmatpush1.msra.mxu0 0.0
      %927 = vmatprep.subr.mxu0 0.0
      %928 = vmatpush1.msra.mxu0 0.0
      %929 = vmatprep.mubr.f32.mxu0 0.0
      %930 = vmatmul.mubr.f32.gmra.mrb[0].mxu0 %v851
      %v931 = vpop.f32.mrb[0].mxu0
      %v932 = vadd.f32 0.0, %v931
      %v933 = vpop.f32.mrb[0].mxu0
      %v934 = vadd.f32 0.0, %v933
      %935 = vdwg.mxu0
      %936 = vmatprep.subr.mxu0 %v863
      %937 = vmatpush1.msra.mxu0 %v860
      %938 = vmatprep.subr.mxu0 0.0
      %939 = vmatpush1.msra.mxu0 0.0
      %940 = vmatprep.subr.mxu0 0.0
      %941 = vmatpush1.msra.mxu0 0.0
      %942 = vmatprep.subr.mxu0 0.0
      %943 = vmatpush1.msra.mxu0 0.0
      %944 = vmatprep.subr.mxu0 0.0
      %945 = vmatpush1.msra.mxu0 0.0
      %946 = vmatprep.subr.mxu0 0.0
      %947 = vmatpush1.msra.mxu0 0.0
      %948 = vmatprep.subr.mxu0 0.0
      %949 = vmatpush1.msra.mxu0 0.0
      %950 = vmatprep.subr.mxu0 0.0
      %951 = vmatpush1.msra.mxu0 0.0
      %952 = vmatprep.subr.mxu0 0.0
      %953 = vmatpush1.msra.mxu0 0.0
      %954 = vmatprep.subr.mxu0 0.0
      %955 = vmatpush1.msra.mxu0 0.0
      %956 = vmatprep.subr.mxu0 0.0
      %957 = vmatpush1.msra.mxu0 0.0
      %958 = vmatprep.subr.mxu0 0.0
      %959 = vmatpush1.msra.mxu0 0.0
      %960 = vmatprep.subr.mxu0 0.0
      %961 = vmatpush1.msra.mxu0 0.0
      %962 = vmatprep.subr.mxu0 0.0
      %963 = vmatpush1.msra.mxu0 0.0
      %964 = vmatprep.subr.mxu0 0.0
      %965 = vmatpush1.msra.mxu0 0.0
      %966 = vmatprep.subr.mxu0 0.0
      %967 = vmatpush1.msra.mxu0 0.0
      %968 = vmatprep.subr.mxu0 0.0
      %969 = vmatpush1.msra.mxu0 0.0
      %970 = vmatprep.subr.mxu0 0.0
      %971 = vmatpush1.msra.mxu0 0.0
      %972 = vmatprep.subr.mxu0 0.0
      %973 = vmatpush1.msra.mxu0 0.0
      %974 = vmatprep.subr.mxu0 0.0
      %975 = vmatpush1.msra.mxu0 0.0
      %976 = vmatprep.subr.mxu0 0.0
      %977 = vmatpush1.msra.mxu0 0.0
      %978 = vmatprep.subr.mxu0 0.0
      %979 = vmatpush1.msra.mxu0 0.0
      %980 = vmatprep.subr.mxu0 0.0
      %981 = vmatpush1.msra.mxu0 0.0
      %982 = vmatprep.subr.mxu0 0.0
      %983 = vmatpush1.msra.mxu0 0.0
      %984 = vmatprep.subr.mxu0 0.0
      %985 = vmatpush1.msra.mxu0 0.0
      %986 = vmatprep.subr.mxu0 0.0
      %987 = vmatpush1.msra.mxu0 0.0
      %988 = vmatprep.subr.mxu0 0.0
      %989 = vmatpush1.msra.mxu0 0.0
      %990 = vmatprep.subr.mxu0 0.0
      %991 = vmatpush1.msra.mxu0 0.0
      %992 = vmatprep.subr.mxu0 0.0
      %993 = vmatpush1.msra.mxu0 0.0
      %994 = vmatprep.subr.mxu0 0.0
      %995 = vmatpush1.msra.mxu0 0.0
      %996 = vmatprep.subr.mxu0 0.0
      %997 = vmatpush1.msra.mxu0 0.0
      %998 = vmatprep.subr.mxu0 0.0
      %999 = vmatpush1.msra.mxu0 0.0
      %1000 = vmatprep.mubr.f32.mxu0 0.0
      %1001 = vmatmul.mubr.f32.gmra.mrb[0].mxu0 %v851
      %v1002 = vpop.f32.mrb[0].mxu0
      %v1003 = vadd.f32 0.0, %v1002
      %v1004 = vpop.f32.mrb[0].mxu0
      %v1005 = vadd.f32 0.0, %v1004
      %1006 = vdwg.mxu0
      %v1007 = vadd.f32 %v735, %v932
      %v1008 = vadd.f32 %v737, %v934
      %v1009 = vadd.f32 %v806, %v1003
      %v1010 = vadd.f32 %v808, %v1005
      %s1011 = scalar_lea.vmem %s2, 24
      %v1012 = vld [vmem:[%s1011] sm:$0xff]
      %1013 = vrot.lane.b32.xlu0 %v405, 1
      %v1014 = vpop.permute.xlu0 %1013
      %1015 = vrot.lane.b32.xlu0 %v410, 1
      %v1016 = vpop.permute.xlu0 %1015
      %1017 = vrot.lane.b32.xlu0 %v406, 1
      %v1018 = vpop.permute.xlu0 %1017
      %1019 = vrot.lane.b32.xlu0 %v411, 1
      %v1020 = vpop.permute.xlu0 %1019
      %vm1021 = vcmp.lt.s32.totalorder %v423, 1
      %v1022 = vsel %vm1021, %v1018, %v1020
      %v1023 = vsel %vm1021, %v1016, %v1018
      %v1024 = vsel %vm1021, %v1014, %v1016
      %v1025 = vsel %vm1021, %v1020, %v1014
      %v1027 = vlaneseq
      %v1028 = vshrl.u32 %v1027, 7
      %v1029 = vsub.s32 0, %v1028
      %v1030 = vrot.slane %v396, %v1029
      %v1031 = vlaneseq
      %v1032 = vshrl.u32 %v1031, 7
      %v1033 = vsub.s32 1, %v1032
      %v1034 = vrot.slane %v396, %v1033
      %v1035 = vlaneseq
      %v1036 = vshrl.u32 %v1035, 7
      %v1037 = vsub.s32 2, %v1036
      %v1038 = vrot.slane %v396, %v1037
      %v1039 = vlaneseq
      %v1040 = vshrl.u32 %v1039, 7
      %v1041 = vsub.s32 3, %v1040
      %v1042 = vrot.slane %v396, %v1041
      %v1047 = vmul.f32 %v1025, %v1030
      %v1048 = vmul.f32 %v1024, %v1034
      %v1049 = vmul.f32 %v1023, %v1038
      %v1050 = vmul.f32 %v1022, %v1042
      %v1052 = vsel %vm494, %v1012, 0
      %v1055 = vsel %vm498, %v1047, 0
      %v1058 = vsel %vm498, %v1048, 0
      %v1061 = vsel %vm498, %v1049, 0
      %v1064 = vsel %vm498, %v1050, 0
      %1066 = vmatprep.subr.mxu0 %v1058
      %1067 = vmatpush1.msra.mxu0 %v1055
      %1068 = vmatprep.subr.mxu0 0.0
      %1069 = vmatpush1.msra.mxu0 0.0
      %1070 = vmatprep.subr.mxu0 0.0
      %1071 = vmatpush1.msra.mxu0 0.0
      %1072 = vmatprep.subr.mxu0 0.0
      %1073 = vmatpush1.msra.mxu0 0.0
      %1074 = vmatprep.subr.mxu0 0.0
      %1075 = vmatpush1.msra.mxu0 0.0
      %1076 = vmatprep.subr.mxu0 0.0
      %1077 = vmatpush1.msra.mxu0 0.0
      %1078 = vmatprep.subr.mxu0 0.0
      %1079 = vmatpush1.msra.mxu0 0.0
      %1080 = vmatprep.subr.mxu0 0.0
      %1081 = vmatpush1.msra.mxu0 0.0
      %1082 = vmatprep.subr.mxu0 0.0
      %1083 = vmatpush1.msra.mxu0 0.0
      %1084 = vmatprep.subr.mxu0 0.0
      %1085 = vmatpush1.msra.mxu0 0.0
      %1086 = vmatprep.subr.mxu0 0.0
      %1087 = vmatpush1.msra.mxu0 0.0
      %1088 = vmatprep.subr.mxu0 0.0
      %1089 = vmatpush1.msra.mxu0 0.0
      %1090 = vmatprep.subr.mxu0 0.0
      %1091 = vmatpush1.msra.mxu0 0.0
      %1092 = vmatprep.subr.mxu0 0.0
      %1093 = vmatpush1.msra.mxu0 0.0
      %1094 = vmatprep.subr.mxu0 0.0
      %1095 = vmatpush1.msra.mxu0 0.0
      %1096 = vmatprep.subr.mxu0 0.0
      %1097 = vmatpush1.msra.mxu0 0.0
      %1098 = vmatprep.subr.mxu0 0.0
      %1099 = vmatpush1.msra.mxu0 0.0
      %1100 = vmatprep.subr.mxu0 0.0
      %1101 = vmatpush1.msra.mxu0 0.0
      %1102 = vmatprep.subr.mxu0 0.0
      %1103 = vmatpush1.msra.mxu0 0.0
      %1104 = vmatprep.subr.mxu0 0.0
      %1105 = vmatpush1.msra.mxu0 0.0
      %1106 = vmatprep.subr.mxu0 0.0
      %1107 = vmatpush1.msra.mxu0 0.0
      %1108 = vmatprep.subr.mxu0 0.0
      %1109 = vmatpush1.msra.mxu0 0.0
      %1110 = vmatprep.subr.mxu0 0.0
      %1111 = vmatpush1.msra.mxu0 0.0
      %1112 = vmatprep.subr.mxu0 0.0
      %1113 = vmatpush1.msra.mxu0 0.0
      %1114 = vmatprep.subr.mxu0 0.0
      %1115 = vmatpush1.msra.mxu0 0.0
      %1116 = vmatprep.subr.mxu0 0.0
      %1117 = vmatpush1.msra.mxu0 0.0
      %1118 = vmatprep.subr.mxu0 0.0
      %1119 = vmatpush1.msra.mxu0 0.0
      %1120 = vmatprep.subr.mxu0 0.0
      %1121 = vmatpush1.msra.mxu0 0.0
      %1122 = vmatprep.subr.mxu0 0.0
      %1123 = vmatpush1.msra.mxu0 0.0
      %1124 = vmatprep.subr.mxu0 0.0
      %1125 = vmatpush1.msra.mxu0 0.0
      %1126 = vmatprep.subr.mxu0 0.0
      %1127 = vmatpush1.msra.mxu0 0.0
      %1128 = vmatprep.subr.mxu0 0.0
      %1129 = vmatpush1.msra.mxu0 0.0
      %1130 = vmatprep.mubr.f32.mxu0 0.0
      %1131 = vmatmul.mubr.f32.gmra.mrb[0].mxu0 %v1052
      %v1132 = vpop.f32.mrb[0].mxu0
      %v1133 = vadd.f32 0.0, %v1132
      %v1134 = vpop.f32.mrb[0].mxu0
      %v1135 = vadd.f32 0.0, %v1134
      %1136 = vdwg.mxu0
      %1137 = vmatprep.subr.mxu0 %v1064
      %1138 = vmatpush1.msra.mxu0 %v1061
      %1139 = vmatprep.subr.mxu0 0.0
      %1140 = vmatpush1.msra.mxu0 0.0
      %1141 = vmatprep.subr.mxu0 0.0
      %1142 = vmatpush1.msra.mxu0 0.0
      %1143 = vmatprep.subr.mxu0 0.0
      %1144 = vmatpush1.msra.mxu0 0.0
      %1145 = vmatprep.subr.mxu0 0.0
      %1146 = vmatpush1.msra.mxu0 0.0
      %1147 = vmatprep.subr.mxu0 0.0
      %1148 = vmatpush1.msra.mxu0 0.0
      %1149 = vmatprep.subr.mxu0 0.0
      %1150 = vmatpush1.msra.mxu0 0.0
      %1151 = vmatprep.subr.mxu0 0.0
      %1152 = vmatpush1.msra.mxu0 0.0
      %1153 = vmatprep.subr.mxu0 0.0
      %1154 = vmatpush1.msra.mxu0 0.0
      %1155 = vmatprep.subr.mxu0 0.0
      %1156 = vmatpush1.msra.mxu0 0.0
      %1157 = vmatprep.subr.mxu0 0.0
      %1158 = vmatpush1.msra.mxu0 0.0
      %1159 = vmatprep.subr.mxu0 0.0
      %1160 = vmatpush1.msra.mxu0 0.0
      %1161 = vmatprep.subr.mxu0 0.0
      %1162 = vmatpush1.msra.mxu0 0.0
      %1163 = vmatprep.subr.mxu0 0.0
      %1164 = vmatpush1.msra.mxu0 0.0
      %1165 = vmatprep.subr.mxu0 0.0
      %1166 = vmatpush1.msra.mxu0 0.0
      %1167 = vmatprep.subr.mxu0 0.0
      %1168 = vmatpush1.msra.mxu0 0.0
      %1169 = vmatprep.subr.mxu0 0.0
      %1170 = vmatpush1.msra.mxu0 0.0
      %1171 = vmatprep.subr.mxu0 0.0
      %1172 = vmatpush1.msra.mxu0 0.0
      %1173 = vmatprep.subr.mxu0 0.0
      %1174 = vmatpush1.msra.mxu0 0.0
      %1175 = vmatprep.subr.mxu0 0.0
      %1176 = vmatpush1.msra.mxu0 0.0
      %1177 = vmatprep.subr.mxu0 0.0
      %1178 = vmatpush1.msra.mxu0 0.0
      %1179 = vmatprep.subr.mxu0 0.0
      %1180 = vmatpush1.msra.mxu0 0.0
      %1181 = vmatprep.subr.mxu0 0.0
      %1182 = vmatpush1.msra.mxu0 0.0
      %1183 = vmatprep.subr.mxu0 0.0
      %1184 = vmatpush1.msra.mxu0 0.0
      %1185 = vmatprep.subr.mxu0 0.0
      %1186 = vmatpush1.msra.mxu0 0.0
      %1187 = vmatprep.subr.mxu0 0.0
      %1188 = vmatpush1.msra.mxu0 0.0
      %1189 = vmatprep.subr.mxu0 0.0
      %1190 = vmatpush1.msra.mxu0 0.0
      %1191 = vmatprep.subr.mxu0 0.0
      %1192 = vmatpush1.msra.mxu0 0.0
      %1193 = vmatprep.subr.mxu0 0.0
      %1194 = vmatpush1.msra.mxu0 0.0
      %1195 = vmatprep.subr.mxu0 0.0
      %1196 = vmatpush1.msra.mxu0 0.0
      %1197 = vmatprep.subr.mxu0 0.0
      %1198 = vmatpush1.msra.mxu0 0.0
      %1199 = vmatprep.subr.mxu0 0.0
      %1200 = vmatpush1.msra.mxu0 0.0
      %1201 = vmatprep.mubr.f32.mxu0 0.0
      %1202 = vmatmul.mubr.f32.gmra.mrb[0].mxu0 %v1052
      %v1203 = vpop.f32.mrb[0].mxu0
      %v1204 = vadd.f32 0.0, %v1203
      %v1205 = vpop.f32.mrb[0].mxu0
      %v1206 = vadd.f32 0.0, %v1205
      %1207 = vdwg.mxu0
      %v1208 = vadd.f32 %v1007, %v1133
      %v1209 = vadd.f32 %v1008, %v1135
      %v1210 = vadd.f32 %v1009, %v1204
      %v1211 = vadd.f32 %v1010, %v1206
      %s1212 = scalar_lea.vmem %s2, 32
      %v1213 = vld [vmem:[%s1212] sm:$0xff]
      %v1215 = vsel %vm494, %v1213, 0
      %v1217 = vsel %vm498, %v405, 0
      %v1219 = vsel %vm498, %v410, 0
      %v1221 = vsel %vm498, %v406, 0
      %v1223 = vsel %vm498, %v411, 0
      %1225 = vmatprep.subr.mxu0 %v1219
      %1226 = vmatpush1.msra.mxu0 %v1217
      %1227 = vmatprep.subr.mxu0 0.0
      %1228 = vmatpush1.msra.mxu0 0.0
      %1229 = vmatprep.subr.mxu0 0.0
      %1230 = vmatpush1.msra.mxu0 0.0
      %1231 = vmatprep.subr.mxu0 0.0
      %1232 = vmatpush1.msra.mxu0 0.0
      %1233 = vmatprep.subr.mxu0 0.0
      %1234 = vmatpush1.msra.mxu0 0.0
      %1235 = vmatprep.subr.mxu0 0.0
      %1236 = vmatpush1.msra.mxu0 0.0
      %1237 = vmatprep.subr.mxu0 0.0
      %1238 = vmatpush1.msra.mxu0 0.0
      %1239 = vmatprep.subr.mxu0 0.0
      %1240 = vmatpush1.msra.mxu0 0.0
      %1241 = vmatprep.subr.mxu0 0.0
      %1242 = vmatpush1.msra.mxu0 0.0
      %1243 = vmatprep.subr.mxu0 0.0
      %1244 = vmatpush1.msra.mxu0 0.0
      %1245 = vmatprep.subr.mxu0 0.0
      %1246 = vmatpush1.msra.mxu0 0.0
      %1247 = vmatprep.subr.mxu0 0.0
      %1248 = vmatpush1.msra.mxu0 0.0
      %1249 = vmatprep.subr.mxu0 0.0
      %1250 = vmatpush1.msra.mxu0 0.0
      %1251 = vmatprep.subr.mxu0 0.0
      %1252 = vmatpush1.msra.mxu0 0.0
      %1253 = vmatprep.subr.mxu0 0.0
      %1254 = vmatpush1.msra.mxu0 0.0
      %1255 = vmatprep.subr.mxu0 0.0
      %1256 = vmatpush1.msra.mxu0 0.0
      %1257 = vmatprep.subr.mxu0 0.0
      %1258 = vmatpush1.msra.mxu0 0.0
      %1259 = vmatprep.subr.mxu0 0.0
      %1260 = vmatpush1.msra.mxu0 0.0
      %1261 = vmatprep.subr.mxu0 0.0
      %1262 = vmatpush1.msra.mxu0 0.0
      %1263 = vmatprep.subr.mxu0 0.0
      %1264 = vmatpush1.msra.mxu0 0.0
      %1265 = vmatprep.subr.mxu0 0.0
      %1266 = vmatpush1.msra.mxu0 0.0
      %1267 = vmatprep.subr.mxu0 0.0
      %1268 = vmatpush1.msra.mxu0 0.0
      %1269 = vmatprep.subr.mxu0 0.0
      %1270 = vmatpush1.msra.mxu0 0.0
      %1271 = vmatprep.subr.mxu0 0.0
      %1272 = vmatpush1.msra.mxu0 0.0
      %1273 = vmatprep.subr.mxu0 0.0
      %1274 = vmatpush1.msra.mxu0 0.0
      %1275 = vmatprep.subr.mxu0 0.0
      %1276 = vmatpush1.msra.mxu0 0.0
      %1277 = vmatprep.subr.mxu0 0.0
      %1278 = vmatpush1.msra.mxu0 0.0
      %1279 = vmatprep.subr.mxu0 0.0
      %1280 = vmatpush1.msra.mxu0 0.0
      %1281 = vmatprep.subr.mxu0 0.0
      %1282 = vmatpush1.msra.mxu0 0.0
      %1283 = vmatprep.subr.mxu0 0.0
      %1284 = vmatpush1.msra.mxu0 0.0
      %1285 = vmatprep.subr.mxu0 0.0
      %1286 = vmatpush1.msra.mxu0 0.0
      %1287 = vmatprep.subr.mxu0 0.0
      %1288 = vmatpush1.msra.mxu0 0.0
      %1289 = vmatprep.mubr.f32.mxu0 0.0
      %1290 = vmatmul.mubr.f32.gmra.mrb[0].mxu0 %v1215
      %v1291 = vpop.f32.mrb[0].mxu0
      %v1292 = vadd.f32 0.0, %v1291
      %v1293 = vpop.f32.mrb[0].mxu0
      %v1294 = vadd.f32 0.0, %v1293
      %1295 = vdwg.mxu0
      %1296 = vmatprep.subr.mxu0 %v1223
      %1297 = vmatpush1.msra.mxu0 %v1221
      %1298 = vmatprep.subr.mxu0 0.0
      %1299 = vmatpush1.msra.mxu0 0.0
      %1300 = vmatprep.subr.mxu0 0.0
      %1301 = vmatpush1.msra.mxu0 0.0
      %1302 = vmatprep.subr.mxu0 0.0
      %1303 = vmatpush1.msra.mxu0 0.0
      %1304 = vmatprep.subr.mxu0 0.0
      %1305 = vmatpush1.msra.mxu0 0.0
      %1306 = vmatprep.subr.mxu0 0.0
      %1307 = vmatpush1.msra.mxu0 0.0
      %1308 = vmatprep.subr.mxu0 0.0
      %1309 = vmatpush1.msra.mxu0 0.0
      %1310 = vmatprep.subr.mxu0 0.0
      %1311 = vmatpush1.msra.mxu0 0.0
      %1312 = vmatprep.subr.mxu0 0.0
      %1313 = vmatpush1.msra.mxu0 0.0
      %1314 = vmatprep.subr.mxu0 0.0
      %1315 = vmatpush1.msra.mxu0 0.0
      %1316 = vmatprep.subr.mxu0 0.0
      %1317 = vmatpush1.msra.mxu0 0.0
      %1318 = vmatprep.subr.mxu0 0.0
      %1319 = vmatpush1.msra.mxu0 0.0
      %1320 = vmatprep.subr.mxu0 0.0
      %1321 = vmatpush1.msra.mxu0 0.0
      %1322 = vmatprep.subr.mxu0 0.0
      %1323 = vmatpush1.msra.mxu0 0.0
      %1324 = vmatprep.subr.mxu0 0.0
      %1325 = vmatpush1.msra.mxu0 0.0
      %1326 = vmatprep.subr.mxu0 0.0
      %1327 = vmatpush1.msra.mxu0 0.0
      %1328 = vmatprep.subr.mxu0 0.0
      %1329 = vmatpush1.msra.mxu0 0.0
      %1330 = vmatprep.subr.mxu0 0.0
      %1331 = vmatpush1.msra.mxu0 0.0
      %1332 = vmatprep.subr.mxu0 0.0
      %1333 = vmatpush1.msra.mxu0 0.0
      %1334 = vmatprep.subr.mxu0 0.0
      %1335 = vmatpush1.msra.mxu0 0.0
      %1336 = vmatprep.subr.mxu0 0.0
      %1337 = vmatpush1.msra.mxu0 0.0
      %1338 = vmatprep.subr.mxu0 0.0
      %1339 = vmatpush1.msra.mxu0 0.0
      %1340 = vmatprep.subr.mxu0 0.0
      %1341 = vmatpush1.msra.mxu0 0.0
      %1342 = vmatprep.subr.mxu0 0.0
      %1343 = vmatpush1.msra.mxu0 0.0
      %1344 = vmatprep.subr.mxu0 0.0
      %1345 = vmatpush1.msra.mxu0 0.0
      %1346 = vmatprep.subr.mxu0 0.0
      %1347 = vmatpush1.msra.mxu0 0.0
      %1348 = vmatprep.subr.mxu0 0.0
      %1349 = vmatpush1.msra.mxu0 0.0
      %1350 = vmatprep.subr.mxu0 0.0
      %1351 = vmatpush1.msra.mxu0 0.0
      %1352 = vmatprep.subr.mxu0 0.0
      %1353 = vmatpush1.msra.mxu0 0.0
      %1354 = vmatprep.subr.mxu0 0.0
      %1355 = vmatpush1.msra.mxu0 0.0
      %1356 = vmatprep.subr.mxu0 0.0
      %1357 = vmatpush1.msra.mxu0 0.0
      %1358 = vmatprep.subr.mxu0 0.0
      %1359 = vmatpush1.msra.mxu0 0.0
      %1360 = vmatprep.mubr.f32.mxu0 0.0
      %1361 = vmatmul.mubr.f32.gmra.mrb[0].mxu0 %v1215
      %v1362 = vpop.f32.mrb[0].mxu0
      %v1363 = vadd.f32 0.0, %v1362
      %v1364 = vpop.f32.mrb[0].mxu0
      %v1365 = vadd.f32 0.0, %v1364
      %1366 = vdwg.mxu0
      %v1367 = vadd.f32 %v1208, %v1292
      %v1368 = vadd.f32 %v1209, %v1294
      %v1369 = vadd.f32 %v1210, %v1363
      %v1370 = vadd.f32 %v1211, %v1365
      %s1371 = scalar_lea.vmem %s2, 40
      %v1372 = vld [vmem:[%s1371] sm:$0xff]
      %1373 = vrot.lane.b32.xlu0 %v405, 127
      %v1374 = vpop.permute.xlu0 %1373
      %1375 = vrot.lane.b32.xlu0 %v410, 127
      %v1376 = vpop.permute.xlu0 %1375
      %1377 = vrot.lane.b32.xlu0 %v406, 127
      %v1378 = vpop.permute.xlu0 %1377
      %1379 = vrot.lane.b32.xlu0 %v411, 127
      %v1380 = vpop.permute.xlu0 %1379
      %vm1381 = vcmp.lt.s32.totalorder %v423, 127
      %v1382 = vsel %vm1381, %v1378, %v1380
      %v1383 = vsel %vm1381, %v1376, %v1378
      %v1384 = vsel %vm1381, %v1374, %v1376
      %v1385 = vsel %vm1381, %v1380, %v1374
      %v1387 = vlaneseq
      %v1388 = vshrl.u32 %v1387, 7
      %v1389 = vsub.s32 0, %v1388
      %v1390 = vrot.slane %v398, %v1389
      %v1391 = vlaneseq
      %v1392 = vshrl.u32 %v1391, 7
      %v1393 = vsub.s32 1, %v1392
      %v1394 = vrot.slane %v398, %v1393
      %v1395 = vlaneseq
      %v1396 = vshrl.u32 %v1395, 7
      %v1397 = vsub.s32 2, %v1396
      %v1398 = vrot.slane %v398, %v1397
      %v1399 = vlaneseq
      %v1400 = vshrl.u32 %v1399, 7
      %v1401 = vsub.s32 3, %v1400
      %v1402 = vrot.slane %v398, %v1401
      %v1407 = vmul.f32 %v1384, %v1390
      %v1408 = vmul.f32 %v1383, %v1394
      %v1409 = vmul.f32 %v1382, %v1398
      %v1410 = vmul.f32 %v1385, %v1402
      %v1412 = vsel %vm494, %v1372, 0
      %v1415 = vsel %vm498, %v1407, 0
      %v1418 = vsel %vm498, %v1408, 0
      %v1421 = vsel %vm498, %v1409, 0
      %v1424 = vsel %vm498, %v1410, 0
      %1426 = vmatprep.subr.mxu0 %v1418
      %1427 = vmatpush1.msra.mxu0 %v1415
      %1428 = vmatprep.subr.mxu0 0.0
      %1429 = vmatpush1.msra.mxu0 0.0
      %1430 = vmatprep.subr.mxu0 0.0
      %1431 = vmatpush1.msra.mxu0 0.0
      %1432 = vmatprep.subr.mxu0 0.0
      %1433 = vmatpush1.msra.mxu0 0.0
      %1434 = vmatprep.subr.mxu0 0.0
      %1435 = vmatpush1.msra.mxu0 0.0
      %1436 = vmatprep.subr.mxu0 0.0
      %1437 = vmatpush1.msra.mxu0 0.0
      %1438 = vmatprep.subr.mxu0 0.0
      %1439 = vmatpush1.msra.mxu0 0.0
      %1440 = vmatprep.subr.mxu0 0.0
      %1441 = vmatpush1.msra.mxu0 0.0
      %1442 = vmatprep.subr.mxu0 0.0
      %1443 = vmatpush1.msra.mxu0 0.0
      %1444 = vmatprep.subr.mxu0 0.0
      %1445 = vmatpush1.msra.mxu0 0.0
      %1446 = vmatprep.subr.mxu0 0.0
      %1447 = vmatpush1.msra.mxu0 0.0
      %1448 = vmatprep.subr.mxu0 0.0
      %1449 = vmatpush1.msra.mxu0 0.0
      %1450 = vmatprep.subr.mxu0 0.0
      %1451 = vmatpush1.msra.mxu0 0.0
      %1452 = vmatprep.subr.mxu0 0.0
      %1453 = vmatpush1.msra.mxu0 0.0
      %1454 = vmatprep.subr.mxu0 0.0
      %1455 = vmatpush1.msra.mxu0 0.0
      %1456 = vmatprep.subr.mxu0 0.0
      %1457 = vmatpush1.msra.mxu0 0.0
      %1458 = vmatprep.subr.mxu0 0.0
      %1459 = vmatpush1.msra.mxu0 0.0
      %1460 = vmatprep.subr.mxu0 0.0
      %1461 = vmatpush1.msra.mxu0 0.0
      %1462 = vmatprep.subr.mxu0 0.0
      %1463 = vmatpush1.msra.mxu0 0.0
      %1464 = vmatprep.subr.mxu0 0.0
      %1465 = vmatpush1.msra.mxu0 0.0
      %1466 = vmatprep.subr.mxu0 0.0
      %1467 = vmatpush1.msra.mxu0 0.0
      %1468 = vmatprep.subr.mxu0 0.0
      %1469 = vmatpush1.msra.mxu0 0.0
      %1470 = vmatprep.subr.mxu0 0.0
      %1471 = vmatpush1.msra.mxu0 0.0
      %1472 = vmatprep.subr.mxu0 0.0
      %1473 = vmatpush1.msra.mxu0 0.0
      %1474 = vmatprep.subr.mxu0 0.0
      %1475 = vmatpush1.msra.mxu0 0.0
      %1476 = vmatprep.subr.mxu0 0.0
      %1477 = vmatpush1.msra.mxu0 0.0
      %1478 = vmatprep.subr.mxu0 0.0
      %1479 = vmatpush1.msra.mxu0 0.0
      %1480 = vmatprep.subr.mxu0 0.0
      %1481 = vmatpush1.msra.mxu0 0.0
      %1482 = vmatprep.subr.mxu0 0.0
      %1483 = vmatpush1.msra.mxu0 0.0
      %1484 = vmatprep.subr.mxu0 0.0
      %1485 = vmatpush1.msra.mxu0 0.0
      %1486 = vmatprep.subr.mxu0 0.0
      %1487 = vmatpush1.msra.mxu0 0.0
      %1488 = vmatprep.subr.mxu0 0.0
      %1489 = vmatpush1.msra.mxu0 0.0
      %1490 = vmatprep.mubr.f32.mxu0 0.0
      %1491 = vmatmul.mubr.f32.gmra.mrb[0].mxu0 %v1412
      %v1492 = vpop.f32.mrb[0].mxu0
      %v1493 = vadd.f32 0.0, %v1492
      %v1494 = vpop.f32.mrb[0].mxu0
      %v1495 = vadd.f32 0.0, %v1494
      %1496 = vdwg.mxu0
      %1497 = vmatprep.subr.mxu0 %v1424
      %1498 = vmatpush1.msra.mxu0 %v1421
      %1499 = vmatprep.subr.mxu0 0.0
      %1500 = vmatpush1.msra.mxu0 0.0
      %1501 = vmatprep.subr.mxu0 0.0
      %1502 = vmatpush1.msra.mxu0 0.0
      %1503 = vmatprep.subr.mxu0 0.0
      %1504 = vmatpush1.msra.mxu0 0.0
      %1505 = vmatprep.subr.mxu0 0.0
      %1506 = vmatpush1.msra.mxu0 0.0
      %1507 = vmatprep.subr.mxu0 0.0
      %1508 = vmatpush1.msra.mxu0 0.0
      %1509 = vmatprep.subr.mxu0 0.0
      %1510 = vmatpush1.msra.mxu0 0.0
      %1511 = vmatprep.subr.mxu0 0.0
      %1512 = vmatpush1.msra.mxu0 0.0
      %1513 = vmatprep.subr.mxu0 0.0
      %1514 = vmatpush1.msra.mxu0 0.0
      %1515 = vmatprep.subr.mxu0 0.0
      %1516 = vmatpush1.msra.mxu0 0.0
      %1517 = vmatprep.subr.mxu0 0.0
      %1518 = vmatpush1.msra.mxu0 0.0
      %1519 = vmatprep.subr.mxu0 0.0
      %1520 = vmatpush1.msra.mxu0 0.0
      %1521 = vmatprep.subr.mxu0 0.0
      %1522 = vmatpush1.msra.mxu0 0.0
      %1523 = vmatprep.subr.mxu0 0.0
      %1524 = vmatpush1.msra.mxu0 0.0
      %1525 = vmatprep.subr.mxu0 0.0
      %1526 = vmatpush1.msra.mxu0 0.0
      %1527 = vmatprep.subr.mxu0 0.0
      %1528 = vmatpush1.msra.mxu0 0.0
      %1529 = vmatprep.subr.mxu0 0.0
      %1530 = vmatpush1.msra.mxu0 0.0
      %1531 = vmatprep.subr.mxu0 0.0
      %1532 = vmatpush1.msra.mxu0 0.0
      %1533 = vmatprep.subr.mxu0 0.0
      %1534 = vmatpush1.msra.mxu0 0.0
      %1535 = vmatprep.subr.mxu0 0.0
      %1536 = vmatpush1.msra.mxu0 0.0
      %1537 = vmatprep.subr.mxu0 0.0
      %1538 = vmatpush1.msra.mxu0 0.0
      %1539 = vmatprep.subr.mxu0 0.0
      %1540 = vmatpush1.msra.mxu0 0.0
      %1541 = vmatprep.subr.mxu0 0.0
      %1542 = vmatpush1.msra.mxu0 0.0
      %1543 = vmatprep.subr.mxu0 0.0
      %1544 = vmatpush1.msra.mxu0 0.0
      %1545 = vmatprep.subr.mxu0 0.0
      %1546 = vmatpush1.msra.mxu0 0.0
      %1547 = vmatprep.subr.mxu0 0.0
      %1548 = vmatpush1.msra.mxu0 0.0
      %1549 = vmatprep.subr.mxu0 0.0
      %1550 = vmatpush1.msra.mxu0 0.0
      %1551 = vmatprep.subr.mxu0 0.0
      %1552 = vmatpush1.msra.mxu0 0.0
      %1553 = vmatprep.subr.mxu0 0.0
      %1554 = vmatpush1.msra.mxu0 0.0
      %1555 = vmatprep.subr.mxu0 0.0
      %1556 = vmatpush1.msra.mxu0 0.0
      %1557 = vmatprep.subr.mxu0 0.0
      %1558 = vmatpush1.msra.mxu0 0.0
      %1559 = vmatprep.subr.mxu0 0.0
      %1560 = vmatpush1.msra.mxu0 0.0
      %1561 = vmatprep.mubr.f32.mxu0 0.0
      %1562 = vmatmul.mubr.f32.gmra.mrb[0].mxu0 %v1412
      %v1563 = vpop.f32.mrb[0].mxu0
      %v1564 = vadd.f32 0.0, %v1563
      %v1565 = vpop.f32.mrb[0].mxu0
      %v1566 = vadd.f32 0.0, %v1565
      %1567 = vdwg.mxu0
      %v1568 = vadd.f32 %v1367, %v1493
      %v1569 = vadd.f32 %v1368, %v1495
      %v1570 = vadd.f32 %v1369, %v1564
      %v1571 = vadd.f32 %v1370, %v1566
      %s1572 = scalar_lea.vmem %s2, 48
      %v1573 = vld [vmem:[%s1572] sm:$0xff]
      %1574 = vrot.lane.b32.xlu0 %v405, 113
      %v1575 = vpop.permute.xlu0 %1574
      %1576 = vrot.lane.b32.xlu0 %v410, 113
      %v1577 = vpop.permute.xlu0 %1576
      %1578 = vrot.lane.b32.xlu0 %v406, 113
      %v1579 = vpop.permute.xlu0 %1578
      %1580 = vrot.lane.b32.xlu0 %v411, 113
      %v1581 = vpop.permute.xlu0 %1580
      %vm1582 = vcmp.lt.s32.totalorder %v423, 113
      %v1583 = vsel %vm1582, %v1579, %v1581
      %v1584 = vsel %vm1582, %v1577, %v1579
      %v1585 = vsel %vm1582, %v1575, %v1577
      %v1586 = vsel %vm1582, %v1581, %v1575
      %v1588 = vlaneseq
      %v1589 = vshrl.u32 %v1588, 7
      %v1590 = vsub.s32 0, %v1589
      %v1591 = vrot.slane %v400, %v1590
      %v1592 = vlaneseq
      %v1593 = vshrl.u32 %v1592, 7
      %v1594 = vsub.s32 1, %v1593
      %v1595 = vrot.slane %v400, %v1594
      %v1596 = vlaneseq
      %v1597 = vshrl.u32 %v1596, 7
      %v1598 = vsub.s32 2, %v1597
      %v1599 = vrot.slane %v400, %v1598
      %v1600 = vlaneseq
      %v1601 = vshrl.u32 %v1600, 7
      %v1602 = vsub.s32 3, %v1601
      %v1603 = vrot.slane %v400, %v1602
      %v1608 = vmul.f32 %v1585, %v1591
      %v1609 = vmul.f32 %v1584, %v1595
      %v1610 = vmul.f32 %v1583, %v1599
      %v1611 = vmul.f32 %v1586, %v1603
      %v1613 = vsel %vm494, %v1573, 0
      %v1616 = vsel %vm498, %v1608, 0
      %v1619 = vsel %vm498, %v1609, 0
      %v1622 = vsel %vm498, %v1610, 0
      %v1625 = vsel %vm498, %v1611, 0
      %1627 = vmatprep.subr.mxu0 %v1619
      %1628 = vmatpush1.msra.mxu0 %v1616
      %1629 = vmatprep.subr.mxu0 0.0
      %1630 = vmatpush1.msra.mxu0 0.0
      %1631 = vmatprep.subr.mxu0 0.0
      %1632 = vmatpush1.msra.mxu0 0.0
      %1633 = vmatprep.subr.mxu0 0.0
      %1634 = vmatpush1.msra.mxu0 0.0
      %1635 = vmatprep.subr.mxu0 0.0
      %1636 = vmatpush1.msra.mxu0 0.0
      %1637 = vmatprep.subr.mxu0 0.0
      %1638 = vmatpush1.msra.mxu0 0.0
      %1639 = vmatprep.subr.mxu0 0.0
      %1640 = vmatpush1.msra.mxu0 0.0
      %1641 = vmatprep.subr.mxu0 0.0
      %1642 = vmatpush1.msra.mxu0 0.0
      %1643 = vmatprep.subr.mxu0 0.0
      %1644 = vmatpush1.msra.mxu0 0.0
      %1645 = vmatprep.subr.mxu0 0.0
      %1646 = vmatpush1.msra.mxu0 0.0
      %1647 = vmatprep.subr.mxu0 0.0
      %1648 = vmatpush1.msra.mxu0 0.0
      %1649 = vmatprep.subr.mxu0 0.0
      %1650 = vmatpush1.msra.mxu0 0.0
      %1651 = vmatprep.subr.mxu0 0.0
      %1652 = vmatpush1.msra.mxu0 0.0
      %1653 = vmatprep.subr.mxu0 0.0
      %1654 = vmatpush1.msra.mxu0 0.0
      %1655 = vmatprep.subr.mxu0 0.0
      %1656 = vmatpush1.msra.mxu0 0.0
      %1657 = vmatprep.subr.mxu0 0.0
      %1658 = vmatpush1.msra.mxu0 0.0
      %1659 = vmatprep.subr.mxu0 0.0
      %1660 = vmatpush1.msra.mxu0 0.0
      %1661 = vmatprep.subr.mxu0 0.0
      %1662 = vmatpush1.msra.mxu0 0.0
      %1663 = vmatprep.subr.mxu0 0.0
      %1664 = vmatpush1.msra.mxu0 0.0
      %1665 = vmatprep.subr.mxu0 0.0
      %1666 = vmatpush1.msra.mxu0 0.0
      %1667 = vmatprep.subr.mxu0 0.0
      %1668 = vmatpush1.msra.mxu0 0.0
      %1669 = vmatprep.subr.mxu0 0.0
      %1670 = vmatpush1.msra.mxu0 0.0
      %1671 = vmatprep.subr.mxu0 0.0
      %1672 = vmatpush1.msra.mxu0 0.0
      %1673 = vmatprep.subr.mxu0 0.0
      %1674 = vmatpush1.msra.mxu0 0.0
      %1675 = vmatprep.subr.mxu0 0.0
      %1676 = vmatpush1.msra.mxu0 0.0
      %1677 = vmatprep.subr.mxu0 0.0
      %1678 = vmatpush1.msra.mxu0 0.0
      %1679 = vmatprep.subr.mxu0 0.0
      %1680 = vmatpush1.msra.mxu0 0.0
      %1681 = vmatprep.subr.mxu0 0.0
      %1682 = vmatpush1.msra.mxu0 0.0
      %1683 = vmatprep.subr.mxu0 0.0
      %1684 = vmatpush1.msra.mxu0 0.0
      %1685 = vmatprep.subr.mxu0 0.0
      %1686 = vmatpush1.msra.mxu0 0.0
      %1687 = vmatprep.subr.mxu0 0.0
      %1688 = vmatpush1.msra.mxu0 0.0
      %1689 = vmatprep.subr.mxu0 0.0
      %1690 = vmatpush1.msra.mxu0 0.0
      %1691 = vmatprep.mubr.f32.mxu0 0.0
      %1692 = vmatmul.mubr.f32.gmra.mrb[0].mxu0 %v1613
      %v1693 = vpop.f32.mrb[0].mxu0
      %v1694 = vadd.f32 0.0, %v1693
      %v1695 = vpop.f32.mrb[0].mxu0
      %v1696 = vadd.f32 0.0, %v1695
      %1697 = vdwg.mxu0
      %1698 = vmatprep.subr.mxu0 %v1625
      %1699 = vmatpush1.msra.mxu0 %v1622
      %1700 = vmatprep.subr.mxu0 0.0
      %1701 = vmatpush1.msra.mxu0 0.0
      %1702 = vmatprep.subr.mxu0 0.0
      %1703 = vmatpush1.msra.mxu0 0.0
      %1704 = vmatprep.subr.mxu0 0.0
      %1705 = vmatpush1.msra.mxu0 0.0
      %1706 = vmatprep.subr.mxu0 0.0
      %1707 = vmatpush1.msra.mxu0 0.0
      %1708 = vmatprep.subr.mxu0 0.0
      %1709 = vmatpush1.msra.mxu0 0.0
      %1710 = vmatprep.subr.mxu0 0.0
      %1711 = vmatpush1.msra.mxu0 0.0
      %1712 = vmatprep.subr.mxu0 0.0
      %1713 = vmatpush1.msra.mxu0 0.0
      %1714 = vmatprep.subr.mxu0 0.0
      %1715 = vmatpush1.msra.mxu0 0.0
      %1716 = vmatprep.subr.mxu0 0.0
      %1717 = vmatpush1.msra.mxu0 0.0
      %1718 = vmatprep.subr.mxu0 0.0
      %1719 = vmatpush1.msra.mxu0 0.0
      %1720 = vmatprep.subr.mxu0 0.0
      %1721 = vmatpush1.msra.mxu0 0.0
      %1722 = vmatprep.subr.mxu0 0.0
      %1723 = vmatpush1.msra.mxu0 0.0
      %1724 = vmatprep.subr.mxu0 0.0
      %1725 = vmatpush1.msra.mxu0 0.0
      %1726 = vmatprep.subr.mxu0 0.0
      %1727 = vmatpush1.msra.mxu0 0.0
      %1728 = vmatprep.subr.mxu0 0.0
      %1729 = vmatpush1.msra.mxu0 0.0
      %1730 = vmatprep.subr.mxu0 0.0
      %1731 = vmatpush1.msra.mxu0 0.0
      %1732 = vmatprep.subr.mxu0 0.0
      %1733 = vmatpush1.msra.mxu0 0.0
      %1734 = vmatprep.subr.mxu0 0.0
      %1735 = vmatpush1.msra.mxu0 0.0
      %1736 = vmatprep.subr.mxu0 0.0
      %1737 = vmatpush1.msra.mxu0 0.0
      %1738 = vmatprep.subr.mxu0 0.0
      %1739 = vmatpush1.msra.mxu0 0.0
      %1740 = vmatprep.subr.mxu0 0.0
      %1741 = vmatpush1.msra.mxu0 0.0
      %1742 = vmatprep.subr.mxu0 0.0
      %1743 = vmatpush1.msra.mxu0 0.0
      %1744 = vmatprep.subr.mxu0 0.0
      %1745 = vmatpush1.msra.mxu0 0.0
      %1746 = vmatprep.subr.mxu0 0.0
      %1747 = vmatpush1.msra.mxu0 0.0
      %1748 = vmatprep.subr.mxu0 0.0
      %1749 = vmatpush1.msra.mxu0 0.0
      %1750 = vmatprep.subr.mxu0 0.0
      %1751 = vmatpush1.msra.mxu0 0.0
      %1752 = vmatprep.subr.mxu0 0.0
      %1753 = vmatpush1.msra.mxu0 0.0
      %1754 = vmatprep.subr.mxu0 0.0
      %1755 = vmatpush1.msra.mxu0 0.0
      %1756 = vmatprep.subr.mxu0 0.0
      %1757 = vmatpush1.msra.mxu0 0.0
      %1758 = vmatprep.subr.mxu0 0.0
      %1759 = vmatpush1.msra.mxu0 0.0
      %1760 = vmatprep.subr.mxu0 0.0
      %1761 = vmatpush1.msra.mxu0 0.0
      %1762 = vmatprep.mubr.f32.mxu0 0.0
      %1763 = vmatmul.mubr.f32.gmra.mrb[0].mxu0 %v1613
      %v1764 = vpop.f32.mrb[0].mxu0
      %v1765 = vadd.f32 0.0, %v1764
      %v1766 = vpop.f32.mrb[0].mxu0
      %v1767 = vadd.f32 0.0, %v1766
      %1768 = vdwg.mxu0
      %v1769 = vadd.f32 %v1568, %v1694
      %v1770 = vadd.f32 %v1569, %v1696
      %v1771 = vadd.f32 %v1570, %v1765
      %v1772 = vadd.f32 %v1571, %v1767
      %s1773 = scalar_lea.vmem %s2, 56
      %v1774 = vld [vmem:[%s1773] sm:$0xff]
      %1775 = vrot.lane.b32.xlu0 %v405, 112
      %v1776 = vpop.permute.xlu0 %1775
      %1777 = vrot.lane.b32.xlu0 %v410, 112
      %v1778 = vpop.permute.xlu0 %1777
      %1779 = vrot.lane.b32.xlu0 %v406, 112
      %v1780 = vpop.permute.xlu0 %1779
      %1781 = vrot.lane.b32.xlu0 %v411, 112
      %v1782 = vpop.permute.xlu0 %1781
      %vm1783 = vcmp.lt.s32.totalorder %v423, 112
      %v1784 = vsel %vm1783, %v1780, %v1782
      %v1785 = vsel %vm1783, %v1778, %v1780
      %v1786 = vsel %vm1783, %v1776, %v1778
      %v1787 = vsel %vm1783, %v1782, %v1776
      %v1789 = vlaneseq
      %v1790 = vshrl.u32 %v1789, 7
      %v1791 = vsub.s32 0, %v1790
      %v1792 = vrot.slane %v402, %v1791
      %v1793 = vlaneseq
      %v1794 = vshrl.u32 %v1793, 7
      %v1795 = vsub.s32 1, %v1794
      %v1796 = vrot.slane %v402, %v1795
      %v1797 = vlaneseq
      %v1798 = vshrl.u32 %v1797, 7
      %v1799 = vsub.s32 2, %v1798
      %v1800 = vrot.slane %v402, %v1799
      %v1801 = vlaneseq
      %v1802 = vshrl.u32 %v1801, 7
      %v1803 = vsub.s32 3, %v1802
      %v1804 = vrot.slane %v402, %v1803
      %v1809 = vmul.f32 %v1786, %v1792
      %v1810 = vmul.f32 %v1785, %v1796
      %v1811 = vmul.f32 %v1784, %v1800
      %v1812 = vmul.f32 %v1787, %v1804
      %v1814 = vsel %vm494, %v1774, 0
      %v1817 = vsel %vm498, %v1809, 0
      %v1820 = vsel %vm498, %v1810, 0
      %v1823 = vsel %vm498, %v1811, 0
      %v1826 = vsel %vm498, %v1812, 0
      %1828 = vmatprep.subr.mxu0 %v1820
      %1829 = vmatpush1.msra.mxu0 %v1817
      %1830 = vmatprep.subr.mxu0 0.0
      %1831 = vmatpush1.msra.mxu0 0.0
      %1832 = vmatprep.subr.mxu0 0.0
      %1833 = vmatpush1.msra.mxu0 0.0
      %1834 = vmatprep.subr.mxu0 0.0
      %1835 = vmatpush1.msra.mxu0 0.0
      %1836 = vmatprep.subr.mxu0 0.0
      %1837 = vmatpush1.msra.mxu0 0.0
      %1838 = vmatprep.subr.mxu0 0.0
      %1839 = vmatpush1.msra.mxu0 0.0
      %1840 = vmatprep.subr.mxu0 0.0
      %1841 = vmatpush1.msra.mxu0 0.0
      %1842 = vmatprep.subr.mxu0 0.0
      %1843 = vmatpush1.msra.mxu0 0.0
      %1844 = vmatprep.subr.mxu0 0.0
      %1845 = vmatpush1.msra.mxu0 0.0
      %1846 = vmatprep.subr.mxu0 0.0
      %1847 = vmatpush1.msra.mxu0 0.0
      %1848 = vmatprep.subr.mxu0 0.0
      %1849 = vmatpush1.msra.mxu0 0.0
      %1850 = vmatprep.subr.mxu0 0.0
      %1851 = vmatpush1.msra.mxu0 0.0
      %1852 = vmatprep.subr.mxu0 0.0
      %1853 = vmatpush1.msra.mxu0 0.0
      %1854 = vmatprep.subr.mxu0 0.0
      %1855 = vmatpush1.msra.mxu0 0.0
      %1856 = vmatprep.subr.mxu0 0.0
      %1857 = vmatpush1.msra.mxu0 0.0
      %1858 = vmatprep.subr.mxu0 0.0
      %1859 = vmatpush1.msra.mxu0 0.0
      %1860 = vmatprep.subr.mxu0 0.0
      %1861 = vmatpush1.msra.mxu0 0.0
      %1862 = vmatprep.subr.mxu0 0.0
      %1863 = vmatpush1.msra.mxu0 0.0
      %1864 = vmatprep.subr.mxu0 0.0
      %1865 = vmatpush1.msra.mxu0 0.0
      %1866 = vmatprep.subr.mxu0 0.0
      %1867 = vmatpush1.msra.mxu0 0.0
      %1868 = vmatprep.subr.mxu0 0.0
      %1869 = vmatpush1.msra.mxu0 0.0
      %1870 = vmatprep.subr.mxu0 0.0
      %1871 = vmatpush1.msra.mxu0 0.0
      %1872 = vmatprep.subr.mxu0 0.0
      %1873 = vmatpush1.msra.mxu0 0.0
      %1874 = vmatprep.subr.mxu0 0.0
      %1875 = vmatpush1.msra.mxu0 0.0
      %1876 = vmatprep.subr.mxu0 0.0
      %1877 = vmatpush1.msra.mxu0 0.0
      %1878 = vmatprep.subr.mxu0 0.0
      %1879 = vmatpush1.msra.mxu0 0.0
      %1880 = vmatprep.subr.mxu0 0.0
      %1881 = vmatpush1.msra.mxu0 0.0
      %1882 = vmatprep.subr.mxu0 0.0
      %1883 = vmatpush1.msra.mxu0 0.0
      %1884 = vmatprep.subr.mxu0 0.0
      %1885 = vmatpush1.msra.mxu0 0.0
      %1886 = vmatprep.subr.mxu0 0.0
      %1887 = vmatpush1.msra.mxu0 0.0
      %1888 = vmatprep.subr.mxu0 0.0
      %1889 = vmatpush1.msra.mxu0 0.0
      %1890 = vmatprep.subr.mxu0 0.0
      %1891 = vmatpush1.msra.mxu0 0.0
      %1892 = vmatprep.mubr.f32.mxu0 0.0
      %1893 = vmatmul.mubr.f32.gmra.mrb[0].mxu0 %v1814
      %v1894 = vpop.f32.mrb[0].mxu0
      %v1895 = vadd.f32 0.0, %v1894
      %v1896 = vpop.f32.mrb[0].mxu0
      %v1897 = vadd.f32 0.0, %v1896
      %1898 = vdwg.mxu0
      %1899 = vmatprep.subr.mxu0 %v1826
      %1900 = vmatpush1.msra.mxu0 %v1823
      %1901 = vmatprep.subr.mxu0 0.0
      %1902 = vmatpush1.msra.mxu0 0.0
      %1903 = vmatprep.subr.mxu0 0.0
      %1904 = vmatpush1.msra.mxu0 0.0
      %1905 = vmatprep.subr.mxu0 0.0
      %1906 = vmatpush1.msra.mxu0 0.0
      %1907 = vmatprep.subr.mxu0 0.0
      %1908 = vmatpush1.msra.mxu0 0.0
      %1909 = vmatprep.subr.mxu0 0.0
      %1910 = vmatpush1.msra.mxu0 0.0
      %1911 = vmatprep.subr.mxu0 0.0
      %1912 = vmatpush1.msra.mxu0 0.0
      %1913 = vmatprep.subr.mxu0 0.0
      %1914 = vmatpush1.msra.mxu0 0.0
      %1915 = vmatprep.subr.mxu0 0.0
      %1916 = vmatpush1.msra.mxu0 0.0
      %1917 = vmatprep.subr.mxu0 0.0
      %1918 = vmatpush1.msra.mxu0 0.0
      %1919 = vmatprep.subr.mxu0 0.0
      %1920 = vmatpush1.msra.mxu0 0.0
      %1921 = vmatprep.subr.mxu0 0.0
      %1922 = vmatpush1.msra.mxu0 0.0
      %1923 = vmatprep.subr.mxu0 0.0
      %1924 = vmatpush1.msra.mxu0 0.0
      %1925 = vmatprep.subr.mxu0 0.0
      %1926 = vmatpush1.msra.mxu0 0.0
      %1927 = vmatprep.subr.mxu0 0.0
      %1928 = vmatpush1.msra.mxu0 0.0
      %1929 = vmatprep.subr.mxu0 0.0
      %1930 = vmatpush1.msra.mxu0 0.0
      %1931 = vmatprep.subr.mxu0 0.0
      %1932 = vmatpush1.msra.mxu0 0.0
      %1933 = vmatprep.subr.mxu0 0.0
      %1934 = vmatpush1.msra.mxu0 0.0
      %1935 = vmatprep.subr.mxu0 0.0
      %1936 = vmatpush1.msra.mxu0 0.0
      %1937 = vmatprep.subr.mxu0 0.0
      %1938 = vmatpush1.msra.mxu0 0.0
      %1939 = vmatprep.subr.mxu0 0.0
      %1940 = vmatpush1.msra.mxu0 0.0
      %1941 = vmatprep.subr.mxu0 0.0
      %1942 = vmatpush1.msra.mxu0 0.0
      %1943 = vmatprep.subr.mxu0 0.0
      %1944 = vmatpush1.msra.mxu0 0.0
      %1945 = vmatprep.subr.mxu0 0.0
      %1946 = vmatpush1.msra.mxu0 0.0
      %1947 = vmatprep.subr.mxu0 0.0
      %1948 = vmatpush1.msra.mxu0 0.0
      %1949 = vmatprep.subr.mxu0 0.0
      %1950 = vmatpush1.msra.mxu0 0.0
      %1951 = vmatprep.subr.mxu0 0.0
      %1952 = vmatpush1.msra.mxu0 0.0
      %1953 = vmatprep.subr.mxu0 0.0
      %1954 = vmatpush1.msra.mxu0 0.0
      %1955 = vmatprep.subr.mxu0 0.0
      %1956 = vmatpush1.msra.mxu0 0.0
      %1957 = vmatprep.subr.mxu0 0.0
      %1958 = vmatpush1.msra.mxu0 0.0
      %1959 = vmatprep.subr.mxu0 0.0
      %1960 = vmatpush1.msra.mxu0 0.0
      %1961 = vmatprep.subr.mxu0 0.0
      %1962 = vmatpush1.msra.mxu0 0.0
      %1963 = vmatprep.mubr.f32.mxu0 0.0
      %1964 = vmatmul.mubr.f32.gmra.mrb[0].mxu0 %v1814
      %v1965 = vpop.f32.mrb[0].mxu0
      %v1966 = vadd.f32 0.0, %v1965
      %v1967 = vpop.f32.mrb[0].mxu0
      %v1968 = vadd.f32 0.0, %v1967
      %1969 = vdwg.mxu0
      %v1970 = vadd.f32 %v1769, %v1895
      %v1971 = vadd.f32 %v1770, %v1897
      %v1972 = vadd.f32 %v1771, %v1966
      %v1973 = vadd.f32 %v1772, %v1968
      %s1974 = scalar_lea.vmem %s2, 64
      %v1975 = vld [vmem:[%s1974] sm:$0xff]
      %1976 = vrot.lane.b32.xlu0 %v405, 111
      %v1977 = vpop.permute.xlu0 %1976
      %1978 = vrot.lane.b32.xlu0 %v410, 111
      %v1979 = vpop.permute.xlu0 %1978
      %1980 = vrot.lane.b32.xlu0 %v406, 111
      %v1981 = vpop.permute.xlu0 %1980
      %1982 = vrot.lane.b32.xlu0 %v411, 111
      %v1983 = vpop.permute.xlu0 %1982
      %vm1984 = vcmp.lt.s32.totalorder %v423, 111
      %v1985 = vsel %vm1984, %v1981, %v1983
      %v1986 = vsel %vm1984, %v1979, %v1981
      %v1987 = vsel %vm1984, %v1977, %v1979
      %v1988 = vsel %vm1984, %v1983, %v1977
      %v1990 = vlaneseq
      %v1991 = vshrl.u32 %v1990, 7
      %v1992 = vsub.s32 0, %v1991
      %v1993 = vrot.slane %v404, %v1992
      %v1994 = vlaneseq
      %v1995 = vshrl.u32 %v1994, 7
      %v1996 = vsub.s32 1, %v1995
      %v1997 = vrot.slane %v404, %v1996
      %v1998 = vlaneseq
      %v1999 = vshrl.u32 %v1998, 7
      %v2000 = vsub.s32 2, %v1999
      %v2001 = vrot.slane %v404, %v2000
      %v2002 = vlaneseq
      %v2003 = vshrl.u32 %v2002, 7
      %v2004 = vsub.s32 3, %v2003
      %v2005 = vrot.slane %v404, %v2004
      %v2010 = vmul.f32 %v1987, %v1993
      %v2011 = vmul.f32 %v1986, %v1997
      %v2012 = vmul.f32 %v1985, %v2001
      %v2013 = vmul.f32 %v1988, %v2005
      %v2015 = vsel %vm494, %v1975, 0
      %v2018 = vsel %vm498, %v2010, 0
      %v2021 = vsel %vm498, %v2011, 0
      %v2024 = vsel %vm498, %v2012, 0
      %v2027 = vsel %vm498, %v2013, 0
      %2029 = vmatprep.subr.mxu0 %v2021
      %2030 = vmatpush1.msra.mxu0 %v2018
      %2031 = vmatprep.subr.mxu0 0.0
      %2032 = vmatpush1.msra.mxu0 0.0
      %2033 = vmatprep.subr.mxu0 0.0
      %2034 = vmatpush1.msra.mxu0 0.0
      %2035 = vmatprep.subr.mxu0 0.0
      %2036 = vmatpush1.msra.mxu0 0.0
      %2037 = vmatprep.subr.mxu0 0.0
      %2038 = vmatpush1.msra.mxu0 0.0
      %2039 = vmatprep.subr.mxu0 0.0
      %2040 = vmatpush1.msra.mxu0 0.0
      %2041 = vmatprep.subr.mxu0 0.0
      %2042 = vmatpush1.msra.mxu0 0.0
      %2043 = vmatprep.subr.mxu0 0.0
      %2044 = vmatpush1.msra.mxu0 0.0
      %2045 = vmatprep.subr.mxu0 0.0
      %2046 = vmatpush1.msra.mxu0 0.0
      %2047 = vmatprep.subr.mxu0 0.0
      %2048 = vmatpush1.msra.mxu0 0.0
      %2049 = vmatprep.subr.mxu0 0.0
      %2050 = vmatpush1.msra.mxu0 0.0
      %2051 = vmatprep.subr.mxu0 0.0
      %2052 = vmatpush1.msra.mxu0 0.0
      %2053 = vmatprep.subr.mxu0 0.0
      %2054 = vmatpush1.msra.mxu0 0.0
      %2055 = vmatprep.subr.mxu0 0.0
      %2056 = vmatpush1.msra.mxu0 0.0
      %2057 = vmatprep.subr.mxu0 0.0
      %2058 = vmatpush1.msra.mxu0 0.0
      %2059 = vmatprep.subr.mxu0 0.0
      %2060 = vmatpush1.msra.mxu0 0.0
      %2061 = vmatprep.subr.mxu0 0.0
      %2062 = vmatpush1.msra.mxu0 0.0
      %2063 = vmatprep.subr.mxu0 0.0
      %2064 = vmatpush1.msra.mxu0 0.0
      %2065 = vmatprep.subr.mxu0 0.0
      %2066 = vmatpush1.msra.mxu0 0.0
      %2067 = vmatprep.subr.mxu0 0.0
      %2068 = vmatpush1.msra.mxu0 0.0
      %2069 = vmatprep.subr.mxu0 0.0
      %2070 = vmatpush1.msra.mxu0 0.0
      %2071 = vmatprep.subr.mxu0 0.0
      %2072 = vmatpush1.msra.mxu0 0.0
      %2073 = vmatprep.subr.mxu0 0.0
      %2074 = vmatpush1.msra.mxu0 0.0
      %2075 = vmatprep.subr.mxu0 0.0
      %2076 = vmatpush1.msra.mxu0 0.0
      %2077 = vmatprep.subr.mxu0 0.0
      %2078 = vmatpush1.msra.mxu0 0.0
      %2079 = vmatprep.subr.mxu0 0.0
      %2080 = vmatpush1.msra.mxu0 0.0
      %2081 = vmatprep.subr.mxu0 0.0
      %2082 = vmatpush1.msra.mxu0 0.0
      %2083 = vmatprep.subr.mxu0 0.0
      %2084 = vmatpush1.msra.mxu0 0.0
      %2085 = vmatprep.subr.mxu0 0.0
      %2086 = vmatpush1.msra.mxu0 0.0
      %2087 = vmatprep.subr.mxu0 0.0
      %2088 = vmatpush1.msra.mxu0 0.0
      %2089 = vmatprep.subr.mxu0 0.0
      %2090 = vmatpush1.msra.mxu0 0.0
      %2091 = vmatprep.subr.mxu0 0.0
      %2092 = vmatpush1.msra.mxu0 0.0
      %2093 = vmatprep.mubr.f32.mxu0 0.0
      %2094 = vmatmul.mubr.f32.gmra.mrb[0].mxu0 %v2015
      %v2095 = vpop.f32.mrb[0].mxu0
      %v2096 = vadd.f32 0.0, %v2095
      %v2097 = vpop.f32.mrb[0].mxu0
      %v2098 = vadd.f32 0.0, %v2097
      %2099 = vdwg.mxu0
      %2100 = vmatprep.subr.mxu0 %v2027
      %2101 = vmatpush1.msra.mxu0 %v2024
      %2102 = vmatprep.subr.mxu0 0.0
      %2103 = vmatpush1.msra.mxu0 0.0
      %2104 = vmatprep.subr.mxu0 0.0
      %2105 = vmatpush1.msra.mxu0 0.0
      %2106 = vmatprep.subr.mxu0 0.0
      %2107 = vmatpush1.msra.mxu0 0.0
      %2108 = vmatprep.subr.mxu0 0.0
      %2109 = vmatpush1.msra.mxu0 0.0
      %2110 = vmatprep.subr.mxu0 0.0
      %2111 = vmatpush1.msra.mxu0 0.0
      %2112 = vmatprep.subr.mxu0 0.0
      %2113 = vmatpush1.msra.mxu0 0.0
      %2114 = vmatprep.subr.mxu0 0.0
      %2115 = vmatpush1.msra.mxu0 0.0
      %2116 = vmatprep.subr.mxu0 0.0
      %2117 = vmatpush1.msra.mxu0 0.0
      %2118 = vmatprep.subr.mxu0 0.0
      %2119 = vmatpush1.msra.mxu0 0.0
      %2120 = vmatprep.subr.mxu0 0.0
      %2121 = vmatpush1.msra.mxu0 0.0
      %2122 = vmatprep.subr.mxu0 0.0
      %2123 = vmatpush1.msra.mxu0 0.0
      %2124 = vmatprep.subr.mxu0 0.0
      %2125 = vmatpush1.msra.mxu0 0.0
      %2126 = vmatprep.subr.mxu0 0.0
      %2127 = vmatpush1.msra.mxu0 0.0
      %2128 = vmatprep.subr.mxu0 0.0
      %2129 = vmatpush1.msra.mxu0 0.0
      %2130 = vmatprep.subr.mxu0 0.0
      %2131 = vmatpush1.msra.mxu0 0.0
      %2132 = vmatprep.subr.mxu0 0.0
      %2133 = vmatpush1.msra.mxu0 0.0
      %2134 = vmatprep.subr.mxu0 0.0
      %2135 = vmatpush1.msra.mxu0 0.0
      %2136 = vmatprep.subr.mxu0 0.0
      %2137 = vmatpush1.msra.mxu0 0.0
      %2138 = vmatprep.subr.mxu0 0.0
      %2139 = vmatpush1.msra.mxu0 0.0
      %2140 = vmatprep.subr.mxu0 0.0
      %2141 = vmatpush1.msra.mxu0 0.0
      %2142 = vmatprep.subr.mxu0 0.0
      %2143 = vmatpush1.msra.mxu0 0.0
      %2144 = vmatprep.subr.mxu0 0.0
      %2145 = vmatpush1.msra.mxu0 0.0
      %2146 = vmatprep.subr.mxu0 0.0
      %2147 = vmatpush1.msra.mxu0 0.0
      %2148 = vmatprep.subr.mxu0 0.0
      %2149 = vmatpush1.msra.mxu0 0.0
      %2150 = vmatprep.subr.mxu0 0.0
      %2151 = vmatpush1.msra.mxu0 0.0
      %2152 = vmatprep.subr.mxu0 0.0
      %2153 = vmatpush1.msra.mxu0 0.0
      %2154 = vmatprep.subr.mxu0 0.0
      %2155 = vmatpush1.msra.mxu0 0.0
      %2156 = vmatprep.subr.mxu0 0.0
      %2157 = vmatpush1.msra.mxu0 0.0
      %2158 = vmatprep.subr.mxu0 0.0
      %2159 = vmatpush1.msra.mxu0 0.0
      %2160 = vmatprep.subr.mxu0 0.0
      %2161 = vmatpush1.msra.mxu0 0.0
      %2162 = vmatprep.subr.mxu0 0.0
      %2163 = vmatpush1.msra.mxu0 0.0
      %2164 = vmatprep.mubr.f32.mxu0 0.0
      %2165 = vmatmul.mubr.f32.gmra.mrb[0].mxu0 %v2015
      %v2166 = vpop.f32.mrb[0].mxu0
      %v2167 = vadd.f32 0.0, %v2166
      %v2168 = vpop.f32.mrb[0].mxu0
      %v2169 = vadd.f32 0.0, %v2168
      %2170 = vdwg.mxu0
      %v2171 = vadd.f32 %v1970, %v2096
      %v2172 = vadd.f32 %v1971, %v2098
      %v2173 = vadd.f32 %v1972, %v2167
      %v2174 = vadd.f32 %v1973, %v2169
      %v2175 = vld [vmem:[%s4] sm:$0xff]
      %2177 = vset.pattern.permute.xlu0 0
      %2178 = vperm.xlu0 %2177, %v2175
      %v2179 = vpop.permute.xlu0 %2178
      %v2181 = vadd.f32 %v2171, %v2179
      %v2182 = vadd.f32 %v2172, %v2179
      %v2183 = vadd.f32 %v2173, %v2179
      %v2184 = vadd.f32 %v2174, %v2179
      %vm2185 = vcmp.ge.f32.partialorder %v2181, 0.0
      %vm2186 = vcmp.ge.f32.partialorder %v2182, 0.0
      %vm2187 = vcmp.ge.f32.partialorder %v2183, 0.0
      %vm2188 = vcmp.ge.f32.partialorder %v2184, 0.0
      %v2189 = vld [vmem:[%s5] sm:$0xff]
      %2191 = vset.pattern.permute.xlu0 0
      %2192 = vperm.xlu0 %2191, %v2189
      %v2193 = vpop.permute.xlu0 %2192
      %v2195 = vmul.f32 %v2193, %v2181
      %v2196 = vmul.f32 %v2193, %v2182
      %v2197 = vmul.f32 %v2193, %v2183
      %v2198 = vmul.f32 %v2193, %v2184
      %v2199 = vsel %vm2185, %v2181, %v2195
      %v2200 = vsel %vm2186, %v2182, %v2196
      %v2201 = vsel %vm2187, %v2183, %v2197
      %v2202 = vsel %vm2188, %v2184, %v2198
      %2203 = vrot.lane.b32.xlu0 %v2199, 17
      %v2204 = vpop.permute.xlu0 %2203
      %2205 = vrot.lane.b32.xlu0 %v2200, 17
      %v2206 = vpop.permute.xlu0 %2205
      %2207 = vrot.lane.b32.xlu0 %v2201, 17
      %v2208 = vpop.permute.xlu0 %2207
      %2209 = vrot.lane.b32.xlu0 %v2202, 17
      %v2210 = vpop.permute.xlu0 %2209
      %v2211 = vsel %vm424, %v2208, %v2210
      %v2212 = vsel %vm424, %v2206, %v2208
      %v2213 = vsel %vm424, %v2204, %v2206
      %v2214 = vsel %vm424, %v2210, %v2204
      %v2215 = vmul.f32 %v2214, %v433
      %v2216 = vmul.f32 %v2213, %v437
      %v2217 = vmul.f32 %v2212, %v441
      %v2218 = vmul.f32 %v2211, %v445
      %2219 = vrot.lane.b32.xlu0 %v2199, 16
      %v2220 = vpop.permute.xlu0 %2219
      %2221 = vrot.lane.b32.xlu0 %v2200, 16
      %v2222 = vpop.permute.xlu0 %2221
      %2223 = vrot.lane.b32.xlu0 %v2201, 16
      %v2224 = vpop.permute.xlu0 %2223
      %2225 = vrot.lane.b32.xlu0 %v2202, 16
      %v2226 = vpop.permute.xlu0 %2225
      %v2227 = vsel %vm464, %v2224, %v2226
      %v2228 = vsel %vm464, %v2222, %v2224
      %v2229 = vsel %vm464, %v2220, %v2222
      %v2230 = vsel %vm464, %v2226, %v2220
      %v2231 = vmul.f32 %v2230, %v473
      %v2232 = vmul.f32 %v2229, %v477
      %v2233 = vmul.f32 %v2228, %v481
      %v2234 = vmul.f32 %v2227, %v485
      %2235 = vrot.lane.b32.xlu0 %v2199, 15
      %v2236 = vpop.permute.xlu0 %2235
      %2237 = vrot.lane.b32.xlu0 %v2200, 15
      %v2238 = vpop.permute.xlu0 %2237
      %2239 = vrot.lane.b32.xlu0 %v2201, 15
      %v2240 = vpop.permute.xlu0 %2239
      %2241 = vrot.lane.b32.xlu0 %v2202, 15
      %v2242 = vpop.permute.xlu0 %2241
      %v2243 = vsel %vm820, %v2240, %v2242
      %v2244 = vsel %vm820, %v2238, %v2240
      %v2245 = vsel %vm820, %v2236, %v2238
      %v2246 = vsel %vm820, %v2242, %v2236
      %v2247 = vmul.f32 %v2246, %v829
      %v2248 = vmul.f32 %v2245, %v833
      %v2249 = vmul.f32 %v2244, %v837
      %v2250 = vmul.f32 %v2243, %v841
      %2251 = vrot.lane.b32.xlu0 %v2199, 1
      %v2252 = vpop.permute.xlu0 %2251
      %2253 = vrot.lane.b32.xlu0 %v2200, 1
      %v2254 = vpop.permute.xlu0 %2253
      %2255 = vrot.lane.b32.xlu0 %v2201, 1
      %v2256 = vpop.permute.xlu0 %2255
      %2257 = vrot.lane.b32.xlu0 %v2202, 1
      %v2258 = vpop.permute.xlu0 %2257
      %v2259 = vsel %vm1021, %v2256, %v2258
      %v2260 = vsel %vm1021, %v2254, %v2256
      %v2261 = vsel %vm1021, %v2252, %v2254
      %v2262 = vsel %vm1021, %v2258, %v2252
      %v2263 = vmul.f32 %v2262, %v1030
      %v2264 = vmul.f32 %v2261, %v1034
      %v2265 = vmul.f32 %v2260, %v1038
      %v2266 = vmul.f32 %v2259, %v1042
      %2267 = vrot.lane.b32.xlu0 %v2199, 127
      %v2268 = vpop.permute.xlu0 %2267
      %2269 = vrot.lane.b32.xlu0 %v2200, 127
      %v2270 = vpop.permute.xlu0 %2269
      %2271 = vrot.lane.b32.xlu0 %v2201, 127
      %v2272 = vpop.permute.xlu0 %2271
      %2273 = vrot.lane.b32.xlu0 %v2202, 127
      %v2274 = vpop.permute.xlu0 %2273
      %v2275 = vsel %vm1381, %v2272, %v2274
      %v2276 = vsel %vm1381, %v2270, %v2272
      %v2277 = vsel %vm1381, %v2268, %v2270
      %v2278 = vsel %vm1381, %v2274, %v2268
      %v2279 = vmul.f32 %v2277, %v1390
      %v2280 = vmul.f32 %v2276, %v1394
      %v2281 = vmul.f32 %v2275, %v1398
      %v2282 = vmul.f32 %v2278, %v1402
      %2283 = vrot.lane.b32.xlu0 %v2199, 113
      %v2284 = vpop.permute.xlu0 %2283
      %2285 = vrot.lane.b32.xlu0 %v2200, 113
      %v2286 = vpop.permute.xlu0 %2285
      %2287 = vrot.lane.b32.xlu0 %v2201, 113
      %v2288 = vpop.permute.xlu0 %2287
      %2289 = vrot.lane.b32.xlu0 %v2202, 113
      %v2290 = vpop.permute.xlu0 %2289
      %v2291 = vsel %vm1582, %v2288, %v2290
      %v2292 = vsel %vm1582, %v2286, %v2288
      %v2293 = vsel %vm1582, %v2284, %v2286
      %v2294 = vsel %vm1582, %v2290, %v2284
      %v2295 = vmul.f32 %v2293, %v1591
      %v2296 = vmul.f32 %v2292, %v1595
      %v2297 = vmul.f32 %v2291, %v1599
      %v2298 = vmul.f32 %v2294, %v1603
      %2299 = vrot.lane.b32.xlu0 %v2199, 112
      %v2300 = vpop.permute.xlu0 %2299
      %2301 = vrot.lane.b32.xlu0 %v2200, 112
      %v2302 = vpop.permute.xlu0 %2301
      %2303 = vrot.lane.b32.xlu0 %v2201, 112
      %v2304 = vpop.permute.xlu0 %2303
      %2305 = vrot.lane.b32.xlu0 %v2202, 112
      %v2306 = vpop.permute.xlu0 %2305
      %v2307 = vsel %vm1783, %v2304, %v2306
      %v2308 = vsel %vm1783, %v2302, %v2304
      %v2309 = vsel %vm1783, %v2300, %v2302
      %v2310 = vsel %vm1783, %v2306, %v2300
      %v2311 = vmul.f32 %v2309, %v1792
      %v2312 = vmul.f32 %v2308, %v1796
      %v2313 = vmul.f32 %v2307, %v1800
      %v2314 = vmul.f32 %v2310, %v1804
      %2315 = vrot.lane.b32.xlu0 %v2199, 111
      %v2316 = vpop.permute.xlu0 %2315
      %2317 = vrot.lane.b32.xlu0 %v2200, 111
      %v2318 = vpop.permute.xlu0 %2317
      %2319 = vrot.lane.b32.xlu0 %v2201, 111
      %v2320 = vpop.permute.xlu0 %2319
      %2321 = vrot.lane.b32.xlu0 %v2202, 111
      %v2322 = vpop.permute.xlu0 %2321
      %v2323 = vsel %vm1984, %v2320, %v2322
      %v2324 = vsel %vm1984, %v2318, %v2320
      %v2325 = vsel %vm1984, %v2316, %v2318
      %v2326 = vsel %vm1984, %v2322, %v2316
      %v2327 = vmul.f32 %v2325, %v1993
      %v2328 = vmul.f32 %v2324, %v1997
      %v2329 = vmul.f32 %v2323, %v2001
      %v2330 = vmul.f32 %v2326, %v2005
      %v2331 = vld [vmem:[%s3] sm:$0xff]
      %s2332 = scalar_lea.vmem %s4, 8
      %v2333 = vld [vmem:[%s2332] sm:$0xff]
      %2335 = vset.pattern.permute.xlu0 0
      %2336 = vperm.xlu0 %2335, %v2333
      %v2337 = vpop.permute.xlu0 %2336
      %vm2339 = vcmask 588800
      %v2341 = vsel %vm2339, %v2331, 0
      %2343 = vmatprep.subr.mxu0 %v2216
      %2344 = vmatpush1.msra.mxu0 %v2215
      %2345 = vmatprep.subr.mxu0 %v2232
      %2346 = vmatpush1.msra.mxu0 %v2231
      %2347 = vmatprep.subr.mxu0 %v2248
      %2348 = vmatpush1.msra.mxu0 %v2247
      %2349 = vmatprep.subr.mxu0 %v2264
      %2350 = vmatpush1.msra.mxu0 %v2263
      %2351 = vmatprep.subr.mxu0 %v2200
      %2352 = vmatpush1.msra.mxu0 %v2199
      %2353 = vmatprep.subr.mxu0 %v2280
      %2354 = vmatpush1.msra.mxu0 %v2279
      %2355 = vmatprep.subr.mxu0 %v2296
      %2356 = vmatpush1.msra.mxu0 %v2295
      %2357 = vmatprep.subr.mxu0 %v2312
      %2358 = vmatpush1.msra.mxu0 %v2311
      %2359 = vmatprep.subr.mxu0 %v2328
      %2360 = vmatpush1.msra.mxu0 %v2327
      %2361 = vmatprep.subr.mxu0 0.0
      %2362 = vmatpush1.msra.mxu0 0.0
      %2363 = vmatprep.subr.mxu0 0.0
      %2364 = vmatpush1.msra.mxu0 0.0
      %2365 = vmatprep.subr.mxu0 0.0
      %2366 = vmatpush1.msra.mxu0 0.0
      %2367 = vmatprep.subr.mxu0 0.0
      %2368 = vmatpush1.msra.mxu0 0.0
      %2369 = vmatprep.subr.mxu0 0.0
      %2370 = vmatpush1.msra.mxu0 0.0
      %2371 = vmatprep.subr.mxu0 0.0
      %2372 = vmatpush1.msra.mxu0 0.0
      %2373 = vmatprep.subr.mxu0 0.0
      %2374 = vmatpush1.msra.mxu0 0.0
      %2375 = vmatprep.subr.mxu0 0.0
      %2376 = vmatpush1.msra.mxu0 0.0
      %2377 = vmatprep.subr.mxu0 0.0
      %2378 = vmatpush1.msra.mxu0 0.0
      %2379 = vmatprep.subr.mxu0 0.0
      %2380 = vmatpush1.msra.mxu0 0.0
      %2381 = vmatprep.subr.mxu0 0.0
      %2382 = vmatpush1.msra.mxu0 0.0
      %2383 = vmatprep.subr.mxu0 0.0
      %2384 = vmatpush1.msra.mxu0 0.0
      %2385 = vmatprep.subr.mxu0 0.0
      %2386 = vmatpush1.msra.mxu0 0.0
      %2387 = vmatprep.subr.mxu0 0.0
      %2388 = vmatpush1.msra.mxu0 0.0
      %2389 = vmatprep.subr.mxu0 0.0
      %2390 = vmatpush1.msra.mxu0 0.0
      %2391 = vmatprep.subr.mxu0 0.0
      %2392 = vmatpush1.msra.mxu0 0.0
      %2393 = vmatprep.subr.mxu0 0.0
      %2394 = vmatpush1.msra.mxu0 0.0
      %2395 = vmatprep.subr.mxu0 0.0
      %2396 = vmatpush1.msra.mxu0 0.0
      %2397 = vmatprep.subr.mxu0 0.0
      %2398 = vmatpush1.msra.mxu0 0.0
      %2399 = vmatprep.subr.mxu0 0.0
      %2400 = vmatpush1.msra.mxu0 0.0
      %2401 = vmatprep.subr.mxu0 0.0
      %2402 = vmatpush1.msra.mxu0 0.0
      %2403 = vmatprep.subr.mxu0 0.0
      %2404 = vmatpush1.msra.mxu0 0.0
      %2405 = vmatprep.subr.mxu0 0.0
      %2406 = vmatpush1.msra.mxu0 0.0
      %2407 = vmatprep.mubr.f32.mxu0 0.0
      %2408 = vmatmul.mubr.f32.gmra.mrb[0].mxu0 %v2341
      %v2409 = vpop.f32.mrb[0].mxu0
      %v2410 = vadd.f32 %v2337, %v2409
      %v2411 = vpop.f32.mrb[0].mxu0
      %v2412 = vadd.f32 %v2337, %v2411
      %2413 = vdwg.mxu0
      %2414 = vmatprep.subr.mxu0 %v2218
      %2415 = vmatpush1.msra.mxu0 %v2217
      %2416 = vmatprep.subr.mxu0 %v2234
      %2417 = vmatpush1.msra.mxu0 %v2233
      %2418 = vmatprep.subr.mxu0 %v2250
      %2419 = vmatpush1.msra.mxu0 %v2249
      %2420 = vmatprep.subr.mxu0 %v2266
      %2421 = vmatpush1.msra.mxu0 %v2265
      %2422 = vmatprep.subr.mxu0 %v2202
      %2423 = vmatpush1.msra.mxu0 %v2201
      %2424 = vmatprep.subr.mxu0 %v2282
      %2425 = vmatpush1.msra.mxu0 %v2281
      %2426 = vmatprep.subr.mxu0 %v2298
      %2427 = vmatpush1.msra.mxu0 %v2297
      %2428 = vmatprep.subr.mxu0 %v2314
      %2429 = vmatpush1.msra.mxu0 %v2313
      %2430 = vmatprep.subr.mxu0 %v2330
      %2431 = vmatpush1.msra.mxu0 %v2329
      %2432 = vmatprep.subr.mxu0 0.0
      %2433 = vmatpush1.msra.mxu0 0.0
      %2434 = vmatprep.subr.mxu0 0.0
      %2435 = vmatpush1.msra.mxu0 0.0
      %2436 = vmatprep.subr.mxu0 0.0
      %2437 = vmatpush1.msra.mxu0 0.0
      %2438 = vmatprep.subr.mxu0 0.0
      %2439 = vmatpush1.msra.mxu0 0.0
      %2440 = vmatprep.subr.mxu0 0.0
      %2441 = vmatpush1.msra.mxu0 0.0
      %2442 = vmatprep.subr.mxu0 0.0
      %2443 = vmatpush1.msra.mxu0 0.0
      %2444 = vmatprep.subr.mxu0 0.0
      %2445 = vmatpush1.msra.mxu0 0.0
      %2446 = vmatprep.subr.mxu0 0.0
      %2447 = vmatpush1.msra.mxu0 0.0
      %2448 = vmatprep.subr.mxu0 0.0
      %2449 = vmatpush1.msra.mxu0 0.0
      %2450 = vmatprep.subr.mxu0 0.0
      %2451 = vmatpush1.msra.mxu0 0.0
      %2452 = vmatprep.subr.mxu0 0.0
      %2453 = vmatpush1.msra.mxu0 0.0
      %2454 = vmatprep.subr.mxu0 0.0
      %2455 = vmatpush1.msra.mxu0 0.0
      %2456 = vmatprep.subr.mxu0 0.0
      %2457 = vmatpush1.msra.mxu0 0.0
      %2458 = vmatprep.subr.mxu0 0.0
      %2459 = vmatpush1.msra.mxu0 0.0
      %2460 = vmatprep.subr.mxu0 0.0
      %2461 = vmatpush1.msra.mxu0 0.0
      %2462 = vmatprep.subr.mxu0 0.0
      %2463 = vmatpush1.msra.mxu0 0.0
      %2464 = vmatprep.subr.mxu0 0.0
      %2465 = vmatpush1.msra.mxu0 0.0
      %2466 = vmatprep.subr.mxu0 0.0
      %2467 = vmatpush1.msra.mxu0 0.0
      %2468 = vmatprep.subr.mxu0 0.0
      %2469 = vmatpush1.msra.mxu0 0.0
      %2470 = vmatprep.subr.mxu0 0.0
      %2471 = vmatpush1.msra.mxu0 0.0
      %2472 = vmatprep.subr.mxu0 0.0
      %2473 = vmatpush1.msra.mxu0 0.0
      %2474 = vmatprep.subr.mxu0 0.0
      %2475 = vmatpush1.msra.mxu0 0.0
      %2476 = vmatprep.subr.mxu0 0.0
      %2477 = vmatpush1.msra.mxu0 0.0
      %2478 = vmatprep.mubr.f32.mxu0 0.0
      %2479 = vmatmul.mubr.f32.gmra.mrb[0].mxu0 %v2341
      %v2480 = vpop.f32.mrb[0].mxu0
      %v2481 = vadd.f32 %v2337, %v2480
      %v2482 = vpop.f32.mrb[0].mxu0
      %v2483 = vadd.f32 %v2337, %v2482
      %2484 = vdwg.mxu0
      %vm2485 = vcmp.ge.f32.partialorder %v2410, 0.0
      %vm2486 = vcmp.ge.f32.partialorder %v2412, 0.0
      %vm2487 = vcmp.ge.f32.partialorder %v2481, 0.0
      %vm2488 = vcmp.ge.f32.partialorder %v2483, 0.0
      %s2489 = scalar_lea.vmem %s5, 8
      %v2490 = vld [vmem:[%s2489] sm:$0xff]
      %2492 = vset.pattern.permute.xlu0 0
      %2493 = vperm.xlu0 %2492, %v2490
      %v2494 = vpop.permute.xlu0 %2493
      %v2496 = vmul.f32 %v2494, %v2410
      %v2497 = vmul.f32 %v2494, %v2412
      %v2498 = vmul.f32 %v2494, %v2481
      %v2499 = vmul.f32 %v2494, %v2483
      %v2500 = vsel %vm2485, %v2410, %v2496
      %v2501 = vsel %vm2486, %v2412, %v2497
      %v2502 = vsel %vm2487, %v2481, %v2498
      %v2503 = vsel %vm2488, %v2483, %v2499
      %2504 = vrot.lane.b32.xlu0 %v2500, 17
      %v2505 = vpop.permute.xlu0 %2504
      %2506 = vrot.lane.b32.xlu0 %v2501, 17
      %v2507 = vpop.permute.xlu0 %2506
      %2508 = vrot.lane.b32.xlu0 %v2502, 17
      %v2509 = vpop.permute.xlu0 %2508
      %2510 = vrot.lane.b32.xlu0 %v2503, 17
      %v2511 = vpop.permute.xlu0 %2510
      %v2512 = vsel %vm424, %v2509, %v2511
      %v2513 = vsel %vm424, %v2507, %v2509
      %v2514 = vsel %vm424, %v2505, %v2507
      %v2515 = vsel %vm424, %v2511, %v2505
      %v2516 = vmul.f32 %v2515, %v433
      %v2517 = vmul.f32 %v2514, %v437
      %v2518 = vmul.f32 %v2513, %v441
      %v2519 = vmul.f32 %v2512, %v445
      %2520 = vrot.lane.b32.xlu0 %v2500, 16
      %v2521 = vpop.permute.xlu0 %2520
      %2522 = vrot.lane.b32.xlu0 %v2501, 16
      %v2523 = vpop.permute.xlu0 %2522
      %2524 = vrot.lane.b32.xlu0 %v2502, 16
      %v2525 = vpop.permute.xlu0 %2524
      %2526 = vrot.lane.b32.xlu0 %v2503, 16
      %v2527 = vpop.permute.xlu0 %2526
      %v2528 = vsel %vm464, %v2525, %v2527
      %v2529 = vsel %vm464, %v2523, %v2525
      %v2530 = vsel %vm464, %v2521, %v2523
      %v2531 = vsel %vm464, %v2527, %v2521
      %v2532 = vmul.f32 %v2531, %v473
      %v2533 = vmul.f32 %v2530, %v477
      %v2534 = vmul.f32 %v2529, %v481
      %v2535 = vmul.f32 %v2528, %v485
      %2536 = vrot.lane.b32.xlu0 %v2500, 15
      %v2537 = vpop.permute.xlu0 %2536
      %2538 = vrot.lane.b32.xlu0 %v2501, 15
      %v2539 = vpop.permute.xlu0 %2538
      %2540 = vrot.lane.b32.xlu0 %v2502, 15
      %v2541 = vpop.permute.xlu0 %2540
      %2542 = vrot.lane.b32.xlu0 %v2503, 15
      %v2543 = vpop.permute.xlu0 %2542
      %v2544 = vsel %vm820, %v2541, %v2543
      %v2545 = vsel %vm820, %v2539, %v2541
      %v2546 = vsel %vm820, %v2537, %v2539
      %v2547 = vsel %vm820, %v2543, %v2537
      %v2548 = vmul.f32 %v2547, %v829
      %v2549 = vmul.f32 %v2546, %v833
      %v2550 = vmul.f32 %v2545, %v837
      %v2551 = vmul.f32 %v2544, %v841
      %2552 = vrot.lane.b32.xlu0 %v2500, 1
      %v2553 = vpop.permute.xlu0 %2552
      %2554 = vrot.lane.b32.xlu0 %v2501, 1
      %v2555 = vpop.permute.xlu0 %2554
      %2556 = vrot.lane.b32.xlu0 %v2502, 1
      %v2557 = vpop.permute.xlu0 %2556
      %2558 = vrot.lane.b32.xlu0 %v2503, 1
      %v2559 = vpop.permute.xlu0 %2558
      %v2560 = vsel %vm1021, %v2557, %v2559
      %v2561 = vsel %vm1021, %v2555, %v2557
      %v2562 = vsel %vm1021, %v2553, %v2555
      %v2563 = vsel %vm1021, %v2559, %v2553
      %v2564 = vmul.f32 %v2563, %v1030
      %v2565 = vmul.f32 %v2562, %v1034
      %v2566 = vmul.f32 %v2561, %v1038
      %v2567 = vmul.f32 %v2560, %v1042
      %2568 = vrot.lane.b32.xlu0 %v2500, 127
      %v2569 = vpop.permute.xlu0 %2568
      %2570 = vrot.lane.b32.xlu0 %v2501, 127
      %v2571 = vpop.permute.xlu0 %2570
      %2572 = vrot.lane.b32.xlu0 %v2502, 127
      %v2573 = vpop.permute.xlu0 %2572
      %2574 = vrot.lane.b32.xlu0 %v2503, 127
      %v2575 = vpop.permute.xlu0 %2574
      %v2576 = vsel %vm1381, %v2573, %v2575
      %v2577 = vsel %vm1381, %v2571, %v2573
      %v2578 = vsel %vm1381, %v2569, %v2571
      %v2579 = vsel %vm1381, %v2575, %v2569
      %v2580 = vmul.f32 %v2578, %v1390
      %v2581 = vmul.f32 %v2577, %v1394
      %v2582 = vmul.f32 %v2576, %v1398
      %v2583 = vmul.f32 %v2579, %v1402
      %2584 = vrot.lane.b32.xlu0 %v2500, 113
      %v2585 = vpop.permute.xlu0 %2584
      %2586 = vrot.lane.b32.xlu0 %v2501, 113
      %v2587 = vpop.permute.xlu0 %2586
      %2588 = vrot.lane.b32.xlu0 %v2502, 113
      %v2589 = vpop.permute.xlu0 %2588
      %2590 = vrot.lane.b32.xlu0 %v2503, 113
      %v2591 = vpop.permute.xlu0 %2590
      %v2592 = vsel %vm1582, %v2589, %v2591
      %v2593 = vsel %vm1582, %v2587, %v2589
      %v2594 = vsel %vm1582, %v2585, %v2587
      %v2595 = vsel %vm1582, %v2591, %v2585
      %v2596 = vmul.f32 %v2594, %v1591
      %v2597 = vmul.f32 %v2593, %v1595
      %v2598 = vmul.f32 %v2592, %v1599
      %v2599 = vmul.f32 %v2595, %v1603
      %2600 = vrot.lane.b32.xlu0 %v2500, 112
      %v2601 = vpop.permute.xlu0 %2600
      %2602 = vrot.lane.b32.xlu0 %v2501, 112
      %v2603 = vpop.permute.xlu0 %2602
      %2604 = vrot.lane.b32.xlu0 %v2502, 112
      %v2605 = vpop.permute.xlu0 %2604
      %2606 = vrot.lane.b32.xlu0 %v2503, 112
      %v2607 = vpop.permute.xlu0 %2606
      %v2608 = vsel %vm1783, %v2605, %v2607
      %v2609 = vsel %vm1783, %v2603, %v2605
      %v2610 = vsel %vm1783, %v2601, %v2603
      %v2611 = vsel %vm1783, %v2607, %v2601
      %v2612 = vmul.f32 %v2610, %v1792
      %v2613 = vmul.f32 %v2609, %v1796
      %v2614 = vmul.f32 %v2608, %v1800
      %v2615 = vmul.f32 %v2611, %v1804
      %2616 = vrot.lane.b32.xlu0 %v2500, 111
      %v2617 = vpop.permute.xlu0 %2616
      %2618 = vrot.lane.b32.xlu0 %v2501, 111
      %v2619 = vpop.permute.xlu0 %2618
      %2620 = vrot.lane.b32.xlu0 %v2502, 111
      %v2621 = vpop.permute.xlu0 %2620
      %2622 = vrot.lane.b32.xlu0 %v2503, 111
      %v2623 = vpop.permute.xlu0 %2622
      %v2624 = vsel %vm1984, %v2621, %v2623
      %v2625 = vsel %vm1984, %v2619, %v2621
      %v2626 = vsel %vm1984, %v2617, %v2619
      %v2627 = vsel %vm1984, %v2623, %v2617
      %v2628 = vmul.f32 %v2626, %v1993
      %v2629 = vmul.f32 %v2625, %v1997
      %v2630 = vmul.f32 %v2624, %v2001
      %v2631 = vmul.f32 %v2627, %v2005
      %s2632 = scalar_lea.vmem %s3, 8
      %v2633 = vld [vmem:[%s2632] sm:$0xff]
      %s2634 = scalar_lea.vmem %s4, 16
      %v2635 = vld [vmem:[%s2634] sm:$0xff]
      %2637 = vset.pattern.permute.xlu0 0
      %2638 = vperm.xlu0 %2637, %v2635
      %v2639 = vpop.permute.xlu0 %2638
      %v2642 = vsel %vm2339, %v2633, 0
      %2644 = vmatprep.subr.mxu0 %v2517
      %2645 = vmatpush1.msra.mxu0 %v2516
      %2646 = vmatprep.subr.mxu0 %v2533
      %2647 = vmatpush1.msra.mxu0 %v2532
      %2648 = vmatprep.subr.mxu0 %v2549
      %2649 = vmatpush1.msra.mxu0 %v2548
      %2650 = vmatprep.subr.mxu0 %v2565
      %2651 = vmatpush1.msra.mxu0 %v2564
      %2652 = vmatprep.subr.mxu0 %v2501
      %2653 = vmatpush1.msra.mxu0 %v2500
      %2654 = vmatprep.subr.mxu0 %v2581
      %2655 = vmatpush1.msra.mxu0 %v2580
      %2656 = vmatprep.subr.mxu0 %v2597
      %2657 = vmatpush1.msra.mxu0 %v2596
      %2658 = vmatprep.subr.mxu0 %v2613
      %2659 = vmatpush1.msra.mxu0 %v2612
      %2660 = vmatprep.subr.mxu0 %v2629
      %2661 = vmatpush1.msra.mxu0 %v2628
      %2662 = vmatprep.subr.mxu0 0.0
      %2663 = vmatpush1.msra.mxu0 0.0
      %2664 = vmatprep.subr.mxu0 0.0
      %2665 = vmatpush1.msra.mxu0 0.0
      %2666 = vmatprep.subr.mxu0 0.0
      %2667 = vmatpush1.msra.mxu0 0.0
      %2668 = vmatprep.subr.mxu0 0.0
      %2669 = vmatpush1.msra.mxu0 0.0
      %2670 = vmatprep.subr.mxu0 0.0
      %2671 = vmatpush1.msra.mxu0 0.0
      %2672 = vmatprep.subr.mxu0 0.0
      %2673 = vmatpush1.msra.mxu0 0.0
      %2674 = vmatprep.subr.mxu0 0.0
      %2675 = vmatpush1.msra.mxu0 0.0
      %2676 = vmatprep.subr.mxu0 0.0
      %2677 = vmatpush1.msra.mxu0 0.0
      %2678 = vmatprep.subr.mxu0 0.0
      %2679 = vmatpush1.msra.mxu0 0.0
      %2680 = vmatprep.subr.mxu0 0.0
      %2681 = vmatpush1.msra.mxu0 0.0
      %2682 = vmatprep.subr.mxu0 0.0
      %2683 = vmatpush1.msra.mxu0 0.0
      %2684 = vmatprep.subr.mxu0 0.0
      %2685 = vmatpush1.msra.mxu0 0.0
      %2686 = vmatprep.subr.mxu0 0.0
      %2687 = vmatpush1.msra.mxu0 0.0
      %2688 = vmatprep.subr.mxu0 0.0
      %2689 = vmatpush1.msra.mxu0 0.0
      %2690 = vmatprep.subr.mxu0 0.0
      %2691 = vmatpush1.msra.mxu0 0.0
      %2692 = vmatprep.subr.mxu0 0.0
      %2693 = vmatpush1.msra.mxu0 0.0
      %2694 = vmatprep.subr.mxu0 0.0
      %2695 = vmatpush1.msra.mxu0 0.0
      %2696 = vmatprep.subr.mxu0 0.0
      %2697 = vmatpush1.msra.mxu0 0.0
      %2698 = vmatprep.subr.mxu0 0.0
      %2699 = vmatpush1.msra.mxu0 0.0
      %2700 = vmatprep.subr.mxu0 0.0
      %2701 = vmatpush1.msra.mxu0 0.0
      %2702 = vmatprep.subr.mxu0 0.0
      %2703 = vmatpush1.msra.mxu0 0.0
      %2704 = vmatprep.subr.mxu0 0.0
      %2705 = vmatpush1.msra.mxu0 0.0
      %2706 = vmatprep.subr.mxu0 0.0
      %2707 = vmatpush1.msra.mxu0 0.0
      %2708 = vmatprep.mubr.f32.mxu0 0.0
      %2709 = vmatmul.mubr.f32.gmra.mrb[0].mxu0 %v2642
      %v2710 = vpop.f32.mrb[0].mxu0
      %v2711 = vadd.f32 %v2639, %v2710
      %v2712 = vpop.f32.mrb[0].mxu0
      %v2713 = vadd.f32 %v2639, %v2712
      %2714 = vdwg.mxu0
      %2715 = vmatprep.subr.mxu0 %v2519
      %2716 = vmatpush1.msra.mxu0 %v2518
      %2717 = vmatprep.subr.mxu0 %v2535
      %2718 = vmatpush1.msra.mxu0 %v2534
      %2719 = vmatprep.subr.mxu0 %v2551
      %2720 = vmatpush1.msra.mxu0 %v2550
      %2721 = vmatprep.subr.mxu0 %v2567
      %2722 = vmatpush1.msra.mxu0 %v2566
      %2723 = vmatprep.subr.mxu0 %v2503
      %2724 = vmatpush1.msra.mxu0 %v2502
      %2725 = vmatprep.subr.mxu0 %v2583
      %2726 = vmatpush1.msra.mxu0 %v2582
      %2727 = vmatprep.subr.mxu0 %v2599
      %2728 = vmatpush1.msra.mxu0 %v2598
      %2729 = vmatprep.subr.mxu0 %v2615
      %2730 = vmatpush1.msra.mxu0 %v2614
      %2731 = vmatprep.subr.mxu0 %v2631
      %2732 = vmatpush1.msra.mxu0 %v2630
      %2733 = vmatprep.subr.mxu0 0.0
      %2734 = vmatpush1.msra.mxu0 0.0
      %2735 = vmatprep.subr.mxu0 0.0
      %2736 = vmatpush1.msra.mxu0 0.0
      %2737 = vmatprep.subr.mxu0 0.0
      %2738 = vmatpush1.msra.mxu0 0.0
      %2739 = vmatprep.subr.mxu0 0.0
      %2740 = vmatpush1.msra.mxu0 0.0
      %2741 = vmatprep.subr.mxu0 0.0
      %2742 = vmatpush1.msra.mxu0 0.0
      %2743 = vmatprep.subr.mxu0 0.0
      %2744 = vmatpush1.msra.mxu0 0.0
      %2745 = vmatprep.subr.mxu0 0.0
      %2746 = vmatpush1.msra.mxu0 0.0
      %2747 = vmatprep.subr.mxu0 0.0
      %2748 = vmatpush1.msra.mxu0 0.0
      %2749 = vmatprep.subr.mxu0 0.0
      %2750 = vmatpush1.msra.mxu0 0.0
      %2751 = vmatprep.subr.mxu0 0.0
      %2752 = vmatpush1.msra.mxu0 0.0
      %2753 = vmatprep.subr.mxu0 0.0
      %2754 = vmatpush1.msra.mxu0 0.0
      %2755 = vmatprep.subr.mxu0 0.0
      %2756 = vmatpush1.msra.mxu0 0.0
      %2757 = vmatprep.subr.mxu0 0.0
      %2758 = vmatpush1.msra.mxu0 0.0
      %2759 = vmatprep.subr.mxu0 0.0
      %2760 = vmatpush1.msra.mxu0 0.0
      %2761 = vmatprep.subr.mxu0 0.0
      %2762 = vmatpush1.msra.mxu0 0.0
      %2763 = vmatprep.subr.mxu0 0.0
      %2764 = vmatpush1.msra.mxu0 0.0
      %2765 = vmatprep.subr.mxu0 0.0
      %2766 = vmatpush1.msra.mxu0 0.0
      %2767 = vmatprep.subr.mxu0 0.0
      %2768 = vmatpush1.msra.mxu0 0.0
      %2769 = vmatprep.subr.mxu0 0.0
      %2770 = vmatpush1.msra.mxu0 0.0
      %2771 = vmatprep.subr.mxu0 0.0
      %2772 = vmatpush1.msra.mxu0 0.0
      %2773 = vmatprep.subr.mxu0 0.0
      %2774 = vmatpush1.msra.mxu0 0.0
      %2775 = vmatprep.subr.mxu0 0.0
      %2776 = vmatpush1.msra.mxu0 0.0
      %2777 = vmatprep.subr.mxu0 0.0
      %2778 = vmatpush1.msra.mxu0 0.0
      %2779 = vmatprep.mubr.f32.mxu0 0.0
      %2780 = vmatmul.mubr.f32.gmra.mrb[0].mxu0 %v2642
      %v2781 = vpop.f32.mrb[0].mxu0
      %v2782 = vadd.f32 %v2639, %v2781
      %v2783 = vpop.f32.mrb[0].mxu0
      %v2784 = vadd.f32 %v2639, %v2783
      %2785 = vdwg.mxu0
      %vm2786 = vcmp.ge.f32.partialorder %v2711, 0.0
      %vm2787 = vcmp.ge.f32.partialorder %v2713, 0.0
      %vm2788 = vcmp.ge.f32.partialorder %v2782, 0.0
      %vm2789 = vcmp.ge.f32.partialorder %v2784, 0.0
      %s2790 = scalar_lea.vmem %s5, 16
      %v2791 = vld [vmem:[%s2790] sm:$0xff]
      %2793 = vset.pattern.permute.xlu0 0
      %2794 = vperm.xlu0 %2793, %v2791
      %v2795 = vpop.permute.xlu0 %2794
      %v2797 = vmul.f32 %v2795, %v2711
      %v2798 = vmul.f32 %v2795, %v2713
      %v2799 = vmul.f32 %v2795, %v2782
      %v2800 = vmul.f32 %v2795, %v2784
      %v2801 = vsel %vm2786, %v2711, %v2797
      %v2802 = vsel %vm2787, %v2713, %v2798
      %v2803 = vsel %vm2788, %v2782, %v2799
      %v2804 = vsel %vm2789, %v2784, %v2800
      %2805 = vrot.lane.b32.xlu0 %v2801, 17
      %v2806 = vpop.permute.xlu0 %2805
      %2807 = vrot.lane.b32.xlu0 %v2802, 17
      %v2808 = vpop.permute.xlu0 %2807
      %2809 = vrot.lane.b32.xlu0 %v2803, 17
      %v2810 = vpop.permute.xlu0 %2809
      %2811 = vrot.lane.b32.xlu0 %v2804, 17
      %v2812 = vpop.permute.xlu0 %2811
      %v2813 = vsel %vm424, %v2810, %v2812
      %v2814 = vsel %vm424, %v2808, %v2810
      %v2815 = vsel %vm424, %v2806, %v2808
      %v2816 = vsel %vm424, %v2812, %v2806
      %v2817 = vmul.f32 %v2816, %v433
      %v2818 = vmul.f32 %v2815, %v437
      %v2819 = vmul.f32 %v2814, %v441
      %v2820 = vmul.f32 %v2813, %v445
      %2821 = vrot.lane.b32.xlu0 %v2801, 16
      %v2822 = vpop.permute.xlu0 %2821
      %2823 = vrot.lane.b32.xlu0 %v2802, 16
      %v2824 = vpop.permute.xlu0 %2823
      %2825 = vrot.lane.b32.xlu0 %v2803, 16
      %v2826 = vpop.permute.xlu0 %2825
      %2827 = vrot.lane.b32.xlu0 %v2804, 16
      %v2828 = vpop.permute.xlu0 %2827
      %v2829 = vsel %vm464, %v2826, %v2828
      %v2830 = vsel %vm464, %v2824, %v2826
      %v2831 = vsel %vm464, %v2822, %v2824
      %v2832 = vsel %vm464, %v2828, %v2822
      %v2833 = vmul.f32 %v2832, %v473
      %v2834 = vmul.f32 %v2831, %v477
      %v2835 = vmul.f32 %v2830, %v481
      %v2836 = vmul.f32 %v2829, %v485
      %2837 = vrot.lane.b32.xlu0 %v2801, 15
      %v2838 = vpop.permute.xlu0 %2837
      %2839 = vrot.lane.b32.xlu0 %v2802, 15
      %v2840 = vpop.permute.xlu0 %2839
      %2841 = vrot.lane.b32.xlu0 %v2803, 15
      %v2842 = vpop.permute.xlu0 %2841
      %2843 = vrot.lane.b32.xlu0 %v2804, 15
      %v2844 = vpop.permute.xlu0 %2843
      %v2845 = vsel %vm820, %v2842, %v2844
      %v2846 = vsel %vm820, %v2840, %v2842
      %v2847 = vsel %vm820, %v2838, %v2840
      %v2848 = vsel %vm820, %v2844, %v2838
      %v2849 = vmul.f32 %v2848, %v829
      %v2850 = vmul.f32 %v2847, %v833
      %v2851 = vmul.f32 %v2846, %v837
      %v2852 = vmul.f32 %v2845, %v841
      %2853 = vrot.lane.b32.xlu0 %v2801, 1
      %v2854 = vpop.permute.xlu0 %2853
      %2855 = vrot.lane.b32.xlu0 %v2802, 1
      %v2856 = vpop.permute.xlu0 %2855
      %2857 = vrot.lane.b32.xlu0 %v2803, 1
      %v2858 = vpop.permute.xlu0 %2857
      %2859 = vrot.lane.b32.xlu0 %v2804, 1
      %v2860 = vpop.permute.xlu0 %2859
      %v2861 = vsel %vm1021, %v2858, %v2860
      %v2862 = vsel %vm1021, %v2856, %v2858
      %v2863 = vsel %vm1021, %v2854, %v2856
      %v2864 = vsel %vm1021, %v2860, %v2854
      %v2865 = vmul.f32 %v2864, %v1030
      %v2866 = vmul.f32 %v2863, %v1034
      %v2867 = vmul.f32 %v2862, %v1038
      %v2868 = vmul.f32 %v2861, %v1042
      %2869 = vrot.lane.b32.xlu0 %v2801, 127
      %v2870 = vpop.permute.xlu0 %2869
      %2871 = vrot.lane.b32.xlu0 %v2802, 127
      %v2872 = vpop.permute.xlu0 %2871
      %2873 = vrot.lane.b32.xlu0 %v2803, 127
      %v2874 = vpop.permute.xlu0 %2873
      %2875 = vrot.lane.b32.xlu0 %v2804, 127
      %v2876 = vpop.permute.xlu0 %2875
      %v2877 = vsel %vm1381, %v2874, %v2876
      %v2878 = vsel %vm1381, %v2872, %v2874
      %v2879 = vsel %vm1381, %v2870, %v2872
      %v2880 = vsel %vm1381, %v2876, %v2870
      %v2881 = vmul.f32 %v2879, %v1390
      %v2882 = vmul.f32 %v2878, %v1394
      %v2883 = vmul.f32 %v2877, %v1398
      %v2884 = vmul.f32 %v2880, %v1402
      %2885 = vrot.lane.b32.xlu0 %v2801, 113
      %v2886 = vpop.permute.xlu0 %2885
      %2887 = vrot.lane.b32.xlu0 %v2802, 113
      %v2888 = vpop.permute.xlu0 %2887
      %2889 = vrot.lane.b32.xlu0 %v2803, 113
      %v2890 = vpop.permute.xlu0 %2889
      %2891 = vrot.lane.b32.xlu0 %v2804, 113
      %v2892 = vpop.permute.xlu0 %2891
      %v2893 = vsel %vm1582, %v2890, %v2892
      %v2894 = vsel %vm1582, %v2888, %v2890
      %v2895 = vsel %vm1582, %v2886, %v2888
      %v2896 = vsel %vm1582, %v2892, %v2886
      %v2897 = vmul.f32 %v2895, %v1591
      %v2898 = vmul.f32 %v2894, %v1595
      %v2899 = vmul.f32 %v2893, %v1599
      %v2900 = vmul.f32 %v2896, %v1603
      %2901 = vrot.lane.b32.xlu0 %v2801, 112
      %v2902 = vpop.permute.xlu0 %2901
      %2903 = vrot.lane.b32.xlu0 %v2802, 112
      %v2904 = vpop.permute.xlu0 %2903
      %2905 = vrot.lane.b32.xlu0 %v2803, 112
      %v2906 = vpop.permute.xlu0 %2905
      %2907 = vrot.lane.b32.xlu0 %v2804, 112
      %v2908 = vpop.permute.xlu0 %2907
      %v2909 = vsel %vm1783, %v2906, %v2908
      %v2910 = vsel %vm1783, %v2904, %v2906
      %v2911 = vsel %vm1783, %v2902, %v2904
      %v2912 = vsel %vm1783, %v2908, %v2902
      %v2913 = vmul.f32 %v2911, %v1792
      %v2914 = vmul.f32 %v2910, %v1796
      %v2915 = vmul.f32 %v2909, %v1800
      %v2916 = vmul.f32 %v2912, %v1804
      %2917 = vrot.lane.b32.xlu0 %v2801, 111
      %v2918 = vpop.permute.xlu0 %2917
      %2919 = vrot.lane.b32.xlu0 %v2802, 111
      %v2920 = vpop.permute.xlu0 %2919
      %2921 = vrot.lane.b32.xlu0 %v2803, 111
      %v2922 = vpop.permute.xlu0 %2921
      %2923 = vrot.lane.b32.xlu0 %v2804, 111
      %v2924 = vpop.permute.xlu0 %2923
      %v2925 = vsel %vm1984, %v2922, %v2924
      %v2926 = vsel %vm1984, %v2920, %v2922
      %v2927 = vsel %vm1984, %v2918, %v2920
      %v2928 = vsel %vm1984, %v2924, %v2918
      %v2929 = vmul.f32 %v2927, %v1993
      %v2930 = vmul.f32 %v2926, %v1997
      %v2931 = vmul.f32 %v2925, %v2001
      %v2932 = vmul.f32 %v2928, %v2005
      %s2933 = scalar_lea.vmem %s3, 16
      %v2934 = vld [vmem:[%s2933] sm:$0xff]
      %s2935 = scalar_lea.vmem %s3, 24
      %v2936 = vld [vmem:[%s2935] sm:$0xff]
      %v2938 = vsel %vm2339, %v2936, 0
      %2940 = vmatprep.subr.mxu0 %v2517
      %2941 = vmatpush1.msra.mxu0 %v2516
      %2942 = vmatprep.subr.mxu0 %v2533
      %2943 = vmatpush1.msra.mxu0 %v2532
      %2944 = vmatprep.subr.mxu0 %v2549
      %2945 = vmatpush1.msra.mxu0 %v2548
      %2946 = vmatprep.subr.mxu0 %v2565
      %2947 = vmatpush1.msra.mxu0 %v2564
      %2948 = vmatprep.subr.mxu0 %v2501
      %2949 = vmatpush1.msra.mxu0 %v2500
      %2950 = vmatprep.subr.mxu0 %v2581
      %2951 = vmatpush1.msra.mxu0 %v2580
      %2952 = vmatprep.subr.mxu0 %v2597
      %2953 = vmatpush1.msra.mxu0 %v2596
      %2954 = vmatprep.subr.mxu0 %v2613
      %2955 = vmatpush1.msra.mxu0 %v2612
      %2956 = vmatprep.subr.mxu0 %v2629
      %2957 = vmatpush1.msra.mxu0 %v2628
      %2958 = vmatprep.subr.mxu0 0.0
      %2959 = vmatpush1.msra.mxu0 0.0
      %2960 = vmatprep.subr.mxu0 0.0
      %2961 = vmatpush1.msra.mxu0 0.0
      %2962 = vmatprep.subr.mxu0 0.0
      %2963 = vmatpush1.msra.mxu0 0.0
      %2964 = vmatprep.subr.mxu0 0.0
      %2965 = vmatpush1.msra.mxu0 0.0
      %2966 = vmatprep.subr.mxu0 0.0
      %2967 = vmatpush1.msra.mxu0 0.0
      %2968 = vmatprep.subr.mxu0 0.0
      %2969 = vmatpush1.msra.mxu0 0.0
      %2970 = vmatprep.subr.mxu0 0.0
      %2971 = vmatpush1.msra.mxu0 0.0
      %2972 = vmatprep.subr.mxu0 0.0
      %2973 = vmatpush1.msra.mxu0 0.0
      %2974 = vmatprep.subr.mxu0 0.0
      %2975 = vmatpush1.msra.mxu0 0.0
      %2976 = vmatprep.subr.mxu0 0.0
      %2977 = vmatpush1.msra.mxu0 0.0
      %2978 = vmatprep.subr.mxu0 0.0
      %2979 = vmatpush1.msra.mxu0 0.0
      %2980 = vmatprep.subr.mxu0 0.0
      %2981 = vmatpush1.msra.mxu0 0.0
      %2982 = vmatprep.subr.mxu0 0.0
      %2983 = vmatpush1.msra.mxu0 0.0
      %2984 = vmatprep.subr.mxu0 0.0
      %2985 = vmatpush1.msra.mxu0 0.0
      %2986 = vmatprep.subr.mxu0 0.0
      %2987 = vmatpush1.msra.mxu0 0.0
      %2988 = vmatprep.subr.mxu0 0.0
      %2989 = vmatpush1.msra.mxu0 0.0
      %2990 = vmatprep.subr.mxu0 0.0
      %2991 = vmatpush1.msra.mxu0 0.0
      %2992 = vmatprep.subr.mxu0 0.0
      %2993 = vmatpush1.msra.mxu0 0.0
      %2994 = vmatprep.subr.mxu0 0.0
      %2995 = vmatpush1.msra.mxu0 0.0
      %2996 = vmatprep.subr.mxu0 0.0
      %2997 = vmatpush1.msra.mxu0 0.0
      %2998 = vmatprep.subr.mxu0 0.0
      %2999 = vmatpush1.msra.mxu0 0.0
      %3000 = vmatprep.subr.mxu0 0.0
      %3001 = vmatpush1.msra.mxu0 0.0
      %3002 = vmatprep.subr.mxu0 0.0
      %3003 = vmatpush1.msra.mxu0 0.0
      %3004 = vmatprep.mubr.f32.mxu0 0.0
      %3005 = vmatmul.mubr.f32.gmra.mrb[0].mxu0 %v2938
      %v3006 = vpop.f32.mrb[0].mxu0
      %v3007 = vadd.f32 0.0, %v3006
      %v3008 = vpop.f32.mrb[0].mxu0
      %v3009 = vadd.f32 0.0, %v3008
      %3010 = vdwg.mxu0
      %3011 = vmatprep.subr.mxu0 %v2519
      %3012 = vmatpush1.msra.mxu0 %v2518
      %3013 = vmatprep.subr.mxu0 %v2535
      %3014 = vmatpush1.msra.mxu0 %v2534
      %3015 = vmatprep.subr.mxu0 %v2551
      %3016 = vmatpush1.msra.mxu0 %v2550
      %3017 = vmatprep.subr.mxu0 %v2567
      %3018 = vmatpush1.msra.mxu0 %v2566
      %3019 = vmatprep.subr.mxu0 %v2503
      %3020 = vmatpush1.msra.mxu0 %v2502
      %3021 = vmatprep.subr.mxu0 %v2583
      %3022 = vmatpush1.msra.mxu0 %v2582
      %3023 = vmatprep.subr.mxu0 %v2599
      %3024 = vmatpush1.msra.mxu0 %v2598
      %3025 = vmatprep.subr.mxu0 %v2615
      %3026 = vmatpush1.msra.mxu0 %v2614
      %3027 = vmatprep.subr.mxu0 %v2631
      %3028 = vmatpush1.msra.mxu0 %v2630
      %3029 = vmatprep.subr.mxu0 0.0
      %3030 = vmatpush1.msra.mxu0 0.0
      %3031 = vmatprep.subr.mxu0 0.0
      %3032 = vmatpush1.msra.mxu0 0.0
      %3033 = vmatprep.subr.mxu0 0.0
      %3034 = vmatpush1.msra.mxu0 0.0
      %3035 = vmatprep.subr.mxu0 0.0
      %3036 = vmatpush1.msra.mxu0 0.0
      %3037 = vmatprep.subr.mxu0 0.0
      %3038 = vmatpush1.msra.mxu0 0.0
      %3039 = vmatprep.subr.mxu0 0.0
      %3040 = vmatpush1.msra.mxu0 0.0
      %3041 = vmatprep.subr.mxu0 0.0
      %3042 = vmatpush1.msra.mxu0 0.0
      %3043 = vmatprep.subr.mxu0 0.0
      %3044 = vmatpush1.msra.mxu0 0.0
      %3045 = vmatprep.subr.mxu0 0.0
      %3046 = vmatpush1.msra.mxu0 0.0
      %3047 = vmatprep.subr.mxu0 0.0
      %3048 = vmatpush1.msra.mxu0 0.0
      %3049 = vmatprep.subr.mxu0 0.0
      %3050 = vmatpush1.msra.mxu0 0.0
      %3051 = vmatprep.subr.mxu0 0.0
      %3052 = vmatpush1.msra.mxu0 0.0
      %3053 = vmatprep.subr.mxu0 0.0
      %3054 = vmatpush1.msra.mxu0 0.0
      %3055 = vmatprep.subr.mxu0 0.0
      %3056 = vmatpush1.msra.mxu0 0.0
      %3057 = vmatprep.subr.mxu0 0.0
      %3058 = vmatpush1.msra.mxu0 0.0
      %3059 = vmatprep.subr.mxu0 0.0
      %3060 = vmatpush1.msra.mxu0 0.0
      %3061 = vmatprep.subr.mxu0 0.0
      %3062 = vmatpush1.msra.mxu0 0.0
      %3063 = vmatprep.subr.mxu0 0.0
      %3064 = vmatpush1.msra.mxu0 0.0
      %3065 = vmatprep.subr.mxu0 0.0
      %3066 = vmatpush1.msra.mxu0 0.0
      %3067 = vmatprep.subr.mxu0 0.0
      %3068 = vmatpush1.msra.mxu0 0.0
      %3069 = vmatprep.subr.mxu0 0.0
      %3070 = vmatpush1.msra.mxu0 0.0
      %3071 = vmatprep.subr.mxu0 0.0
      %3072 = vmatpush1.msra.mxu0 0.0
      %3073 = vmatprep.subr.mxu0 0.0
      %3074 = vmatpush1.msra.mxu0 0.0
      %3075 = vmatprep.mubr.f32.mxu0 0.0
      %3076 = vmatmul.mubr.f32.gmra.mrb[0].mxu0 %v2938
      %v3077 = vpop.f32.mrb[0].mxu0
      %v3078 = vadd.f32 0.0, %v3077
      %v3079 = vpop.f32.mrb[0].mxu0
      %v3080 = vadd.f32 0.0, %v3079
      %3081 = vdwg.mxu0
      %v3083 = vsel %vm2339, %v2934, 0
      %3085 = vmatprep.subr.mxu0 %v2216
      %3086 = vmatpush1.msra.mxu0 %v2215
      %3087 = vmatprep.subr.mxu0 %v2232
      %3088 = vmatpush1.msra.mxu0 %v2231
      %3089 = vmatprep.subr.mxu0 %v2248
      %3090 = vmatpush1.msra.mxu0 %v2247
      %3091 = vmatprep.subr.mxu0 %v2264
      %3092 = vmatpush1.msra.mxu0 %v2263
      %3093 = vmatprep.subr.mxu0 %v2200
      %3094 = vmatpush1.msra.mxu0 %v2199
      %3095 = vmatprep.subr.mxu0 %v2280
      %3096 = vmatpush1.msra.mxu0 %v2279
      %3097 = vmatprep.subr.mxu0 %v2296
      %3098 = vmatpush1.msra.mxu0 %v2295
      %3099 = vmatprep.subr.mxu0 %v2312
      %3100 = vmatpush1.msra.mxu0 %v2311
      %3101 = vmatprep.subr.mxu0 %v2328
      %3102 = vmatpush1.msra.mxu0 %v2327
      %3103 = vmatprep.subr.mxu0 0.0
      %3104 = vmatpush1.msra.mxu0 0.0
      %3105 = vmatprep.subr.mxu0 0.0
      %3106 = vmatpush1.msra.mxu0 0.0
      %3107 = vmatprep.subr.mxu0 0.0
      %3108 = vmatpush1.msra.mxu0 0.0
      %3109 = vmatprep.subr.mxu0 0.0
      %3110 = vmatpush1.msra.mxu0 0.0
      %3111 = vmatprep.subr.mxu0 0.0
      %3112 = vmatpush1.msra.mxu0 0.0
      %3113 = vmatprep.subr.mxu0 0.0
      %3114 = vmatpush1.msra.mxu0 0.0
      %3115 = vmatprep.subr.mxu0 0.0
      %3116 = vmatpush1.msra.mxu0 0.0
      %3117 = vmatprep.subr.mxu0 0.0
      %3118 = vmatpush1.msra.mxu0 0.0
      %3119 = vmatprep.subr.mxu0 0.0
      %3120 = vmatpush1.msra.mxu0 0.0
      %3121 = vmatprep.subr.mxu0 0.0
      %3122 = vmatpush1.msra.mxu0 0.0
      %3123 = vmatprep.subr.mxu0 0.0
      %3124 = vmatpush1.msra.mxu0 0.0
      %3125 = vmatprep.subr.mxu0 0.0
      %3126 = vmatpush1.msra.mxu0 0.0
      %3127 = vmatprep.subr.mxu0 0.0
      %3128 = vmatpush1.msra.mxu0 0.0
      %3129 = vmatprep.subr.mxu0 0.0
      %3130 = vmatpush1.msra.mxu0 0.0
      %3131 = vmatprep.subr.mxu0 0.0
      %3132 = vmatpush1.msra.mxu0 0.0
      %3133 = vmatprep.subr.mxu0 0.0
      %3134 = vmatpush1.msra.mxu0 0.0
      %3135 = vmatprep.subr.mxu0 0.0
      %3136 = vmatpush1.msra.mxu0 0.0
      %3137 = vmatprep.subr.mxu0 0.0
      %3138 = vmatpush1.msra.mxu0 0.0
      %3139 = vmatprep.subr.mxu0 0.0
      %3140 = vmatpush1.msra.mxu0 0.0
      %3141 = vmatprep.subr.mxu0 0.0
      %3142 = vmatpush1.msra.mxu0 0.0
      %3143 = vmatprep.subr.mxu0 0.0
      %3144 = vmatpush1.msra.mxu0 0.0
      %3145 = vmatprep.subr.mxu0 0.0
      %3146 = vmatpush1.msra.mxu0 0.0
      %3147 = vmatprep.subr.mxu0 0.0
      %3148 = vmatpush1.msra.mxu0 0.0
      %3149 = vmatprep.mubr.f32.mxu0 0.0
      %3150 = vmatmul.mubr.f32.gmra.mrb[0].mxu0 %v3083
      %v3151 = vpop.f32.mrb[0].mxu0
      %v3152 = vadd.f32 %v3007, %v3151
      %v3153 = vpop.f32.mrb[0].mxu0
      %v3154 = vadd.f32 %v3009, %v3153
      %3155 = vdwg.mxu0
      %3156 = vmatprep.subr.mxu0 %v2218
      %3157 = vmatpush1.msra.mxu0 %v2217
      %3158 = vmatprep.subr.mxu0 %v2234
      %3159 = vmatpush1.msra.mxu0 %v2233
      %3160 = vmatprep.subr.mxu0 %v2250
      %3161 = vmatpush1.msra.mxu0 %v2249
      %3162 = vmatprep.subr.mxu0 %v2266
      %3163 = vmatpush1.msra.mxu0 %v2265
      %3164 = vmatprep.subr.mxu0 %v2202
      %3165 = vmatpush1.msra.mxu0 %v2201
      %3166 = vmatprep.subr.mxu0 %v2282
      %3167 = vmatpush1.msra.mxu0 %v2281
      %3168 = vmatprep.subr.mxu0 %v2298
      %3169 = vmatpush1.msra.mxu0 %v2297
      %3170 = vmatprep.subr.mxu0 %v2314
      %3171 = vmatpush1.msra.mxu0 %v2313
      %3172 = vmatprep.subr.mxu0 %v2330
      %3173 = vmatpush1.msra.mxu0 %v2329
      %3174 = vmatprep.subr.mxu0 0.0
      %3175 = vmatpush1.msra.mxu0 0.0
      %3176 = vmatprep.subr.mxu0 0.0
      %3177 = vmatpush1.msra.mxu0 0.0
      %3178 = vmatprep.subr.mxu0 0.0
      %3179 = vmatpush1.msra.mxu0 0.0
      %3180 = vmatprep.subr.mxu0 0.0
      %3181 = vmatpush1.msra.mxu0 0.0
      %3182 = vmatprep.subr.mxu0 0.0
      %3183 = vmatpush1.msra.mxu0 0.0
      %3184 = vmatprep.subr.mxu0 0.0
      %3185 = vmatpush1.msra.mxu0 0.0
      %3186 = vmatprep.subr.mxu0 0.0
      %3187 = vmatpush1.msra.mxu0 0.0
      %3188 = vmatprep.subr.mxu0 0.0
      %3189 = vmatpush1.msra.mxu0 0.0
      %3190 = vmatprep.subr.mxu0 0.0
      %3191 = vmatpush1.msra.mxu0 0.0
      %3192 = vmatprep.subr.mxu0 0.0
      %3193 = vmatpush1.msra.mxu0 0.0
      %3194 = vmatprep.subr.mxu0 0.0
      %3195 = vmatpush1.msra.mxu0 0.0
      %3196 = vmatprep.subr.mxu0 0.0
      %3197 = vmatpush1.msra.mxu0 0.0
      %3198 = vmatprep.subr.mxu0 0.0
      %3199 = vmatpush1.msra.mxu0 0.0
      %3200 = vmatprep.subr.mxu0 0.0
      %3201 = vmatpush1.msra.mxu0 0.0
      %3202 = vmatprep.subr.mxu0 0.0
      %3203 = vmatpush1.msra.mxu0 0.0
      %3204 = vmatprep.subr.mxu0 0.0
      %3205 = vmatpush1.msra.mxu0 0.0
      %3206 = vmatprep.subr.mxu0 0.0
      %3207 = vmatpush1.msra.mxu0 0.0
      %3208 = vmatprep.subr.mxu0 0.0
      %3209 = vmatpush1.msra.mxu0 0.0
      %3210 = vmatprep.subr.mxu0 0.0
      %3211 = vmatpush1.msra.mxu0 0.0
      %3212 = vmatprep.subr.mxu0 0.0
      %3213 = vmatpush1.msra.mxu0 0.0
      %3214 = vmatprep.subr.mxu0 0.0
      %3215 = vmatpush1.msra.mxu0 0.0
      %3216 = vmatprep.subr.mxu0 0.0
      %3217 = vmatpush1.msra.mxu0 0.0
      %3218 = vmatprep.subr.mxu0 0.0
      %3219 = vmatpush1.msra.mxu0 0.0
      %3220 = vmatprep.mubr.f32.mxu0 0.0
      %3221 = vmatmul.mubr.f32.gmra.mrb[0].mxu0 %v3083
      %v3222 = vpop.f32.mrb[0].mxu0
      %v3223 = vadd.f32 %v3078, %v3222
      %v3224 = vpop.f32.mrb[0].mxu0
      %v3225 = vadd.f32 %v3080, %v3224
      %3226 = vdwg.mxu0
      %s3227 = scalar_lea.vmem %s3, 32
      %v3228 = vld [vmem:[%s3227] sm:$0xff]
      %v3230 = vsel %vm2339, %v3228, 0
      %3232 = vmatprep.subr.mxu0 %v2818
      %3233 = vmatpush1.msra.mxu0 %v2817
      %3234 = vmatprep.subr.mxu0 %v2834
      %3235 = vmatpush1.msra.mxu0 %v2833
      %3236 = vmatprep.subr.mxu0 %v2850
      %3237 = vmatpush1.msra.mxu0 %v2849
      %3238 = vmatprep.subr.mxu0 %v2866
      %3239 = vmatpush1.msra.mxu0 %v2865
      %3240 = vmatprep.subr.mxu0 %v2802
      %3241 = vmatpush1.msra.mxu0 %v2801
      %3242 = vmatprep.subr.mxu0 %v2882
      %3243 = vmatpush1.msra.mxu0 %v2881
      %3244 = vmatprep.subr.mxu0 %v2898
      %3245 = vmatpush1.msra.mxu0 %v2897
      %3246 = vmatprep.subr.mxu0 %v2914
      %3247 = vmatpush1.msra.mxu0 %v2913
      %3248 = vmatprep.subr.mxu0 %v2930
      %3249 = vmatpush1.msra.mxu0 %v2929
      %3250 = vmatprep.subr.mxu0 0.0
      %3251 = vmatpush1.msra.mxu0 0.0
      %3252 = vmatprep.subr.mxu0 0.0
      %3253 = vmatpush1.msra.mxu0 0.0
      %3254 = vmatprep.subr.mxu0 0.0
      %3255 = vmatpush1.msra.mxu0 0.0
      %3256 = vmatprep.subr.mxu0 0.0
      %3257 = vmatpush1.msra.mxu0 0.0
      %3258 = vmatprep.subr.mxu0 0.0
      %3259 = vmatpush1.msra.mxu0 0.0
      %3260 = vmatprep.subr.mxu0 0.0
      %3261 = vmatpush1.msra.mxu0 0.0
      %3262 = vmatprep.subr.mxu0 0.0
      %3263 = vmatpush1.msra.mxu0 0.0
      %3264 = vmatprep.subr.mxu0 0.0
      %3265 = vmatpush1.msra.mxu0 0.0
      %3266 = vmatprep.subr.mxu0 0.0
      %3267 = vmatpush1.msra.mxu0 0.0
      %3268 = vmatprep.subr.mxu0 0.0
      %3269 = vmatpush1.msra.mxu0 0.0
      %3270 = vmatprep.subr.mxu0 0.0
      %3271 = vmatpush1.msra.mxu0 0.0
      %3272 = vmatprep.subr.mxu0 0.0
      %3273 = vmatpush1.msra.mxu0 0.0
      %3274 = vmatprep.subr.mxu0 0.0
      %3275 = vmatpush1.msra.mxu0 0.0
      %3276 = vmatprep.subr.mxu0 0.0
      %3277 = vmatpush1.msra.mxu0 0.0
      %3278 = vmatprep.subr.mxu0 0.0
      %3279 = vmatpush1.msra.mxu0 0.0
      %3280 = vmatprep.subr.mxu0 0.0
      %3281 = vmatpush1.msra.mxu0 0.0
      %3282 = vmatprep.subr.mxu0 0.0
      %3283 = vmatpush1.msra.mxu0 0.0
      %3284 = vmatprep.subr.mxu0 0.0
      %3285 = vmatpush1.msra.mxu0 0.0
      %3286 = vmatprep.subr.mxu0 0.0
      %3287 = vmatpush1.msra.mxu0 0.0
      %3288 = vmatprep.subr.mxu0 0.0
      %3289 = vmatpush1.msra.mxu0 0.0
      %3290 = vmatprep.subr.mxu0 0.0
      %3291 = vmatpush1.msra.mxu0 0.0
      %3292 = vmatprep.subr.mxu0 0.0
      %3293 = vmatpush1.msra.mxu0 0.0
      %3294 = vmatprep.subr.mxu0 0.0
      %3295 = vmatpush1.msra.mxu0 0.0
      %3296 = vmatprep.mubr.f32.mxu0 0.0
      %3297 = vmatmul.mubr.f32.gmra.mrb[0].mxu0 %v3230
      %v3298 = vpop.f32.mrb[0].mxu0
      %v3299 = vadd.f32 0.0, %v3298
      %v3300 = vpop.f32.mrb[0].mxu0
      %v3301 = vadd.f32 0.0, %v3300
      %3302 = vdwg.mxu0
      %3303 = vmatprep.subr.mxu0 %v2820
      %3304 = vmatpush1.msra.mxu0 %v2819
      %3305 = vmatprep.subr.mxu0 %v2836
      %3306 = vmatpush1.msra.mxu0 %v2835
      %3307 = vmatprep.subr.mxu0 %v2852
      %3308 = vmatpush1.msra.mxu0 %v2851
      %3309 = vmatprep.subr.mxu0 %v2868
      %3310 = vmatpush1.msra.mxu0 %v2867
      %3311 = vmatprep.subr.mxu0 %v2804
      %3312 = vmatpush1.msra.mxu0 %v2803
      %3313 = vmatprep.subr.mxu0 %v2884
      %3314 = vmatpush1.msra.mxu0 %v2883
      %3315 = vmatprep.subr.mxu0 %v2900
      %3316 = vmatpush1.msra.mxu0 %v2899
      %3317 = vmatprep.subr.mxu0 %v2916
      %3318 = vmatpush1.msra.mxu0 %v2915
      %3319 = vmatprep.subr.mxu0 %v2932
      %3320 = vmatpush1.msra.mxu0 %v2931
      %3321 = vmatprep.subr.mxu0 0.0
      %3322 = vmatpush1.msra.mxu0 0.0
      %3323 = vmatprep.subr.mxu0 0.0
      %3324 = vmatpush1.msra.mxu0 0.0
      %3325 = vmatprep.subr.mxu0 0.0
      %3326 = vmatpush1.msra.mxu0 0.0
      %3327 = vmatprep.subr.mxu0 0.0
      %3328 = vmatpush1.msra.mxu0 0.0
      %3329 = vmatprep.subr.mxu0 0.0
      %3330 = vmatpush1.msra.mxu0 0.0
      %3331 = vmatprep.subr.mxu0 0.0
      %3332 = vmatpush1.msra.mxu0 0.0
      %3333 = vmatprep.subr.mxu0 0.0
      %3334 = vmatpush1.msra.mxu0 0.0
      %3335 = vmatprep.subr.mxu0 0.0
      %3336 = vmatpush1.msra.mxu0 0.0
      %3337 = vmatprep.subr.mxu0 0.0
      %3338 = vmatpush1.msra.mxu0 0.0
      %3339 = vmatprep.subr.mxu0 0.0
      %3340 = vmatpush1.msra.mxu0 0.0
      %3341 = vmatprep.subr.mxu0 0.0
      %3342 = vmatpush1.msra.mxu0 0.0
      %3343 = vmatprep.subr.mxu0 0.0
      %3344 = vmatpush1.msra.mxu0 0.0
      %3345 = vmatprep.subr.mxu0 0.0
      %3346 = vmatpush1.msra.mxu0 0.0
      %3347 = vmatprep.subr.mxu0 0.0
      %3348 = vmatpush1.msra.mxu0 0.0
      %3349 = vmatprep.subr.mxu0 0.0
      %3350 = vmatpush1.msra.mxu0 0.0
      %3351 = vmatprep.subr.mxu0 0.0
      %3352 = vmatpush1.msra.mxu0 0.0
      %3353 = vmatprep.subr.mxu0 0.0
      %3354 = vmatpush1.msra.mxu0 0.0
      %3355 = vmatprep.subr.mxu0 0.0
      %3356 = vmatpush1.msra.mxu0 0.0
      %3357 = vmatprep.subr.mxu0 0.0
      %3358 = vmatpush1.msra.mxu0 0.0
      %3359 = vmatprep.subr.mxu0 0.0
      %3360 = vmatpush1.msra.mxu0 0.0
      %3361 = vmatprep.subr.mxu0 0.0
      %3362 = vmatpush1.msra.mxu0 0.0
      %3363 = vmatprep.subr.mxu0 0.0
      %3364 = vmatpush1.msra.mxu0 0.0
      %3365 = vmatprep.subr.mxu0 0.0
      %3366 = vmatpush1.msra.mxu0 0.0
      %3367 = vmatprep.mubr.f32.mxu0 0.0
      %3368 = vmatmul.mubr.f32.gmra.mrb[0].mxu0 %v3230
      %v3369 = vpop.f32.mrb[0].mxu0
      %v3370 = vadd.f32 0.0, %v3369
      %v3371 = vpop.f32.mrb[0].mxu0
      %v3372 = vadd.f32 0.0, %v3371
      %3373 = vdwg.mxu0
      %v3374 = vadd.f32 %v3152, %v3299
      %v3375 = vadd.f32 %v3154, %v3301
      %v3376 = vadd.f32 %v3223, %v3370
      %v3377 = vadd.f32 %v3225, %v3372
      %s3378 = scalar_lea.vmem %s4, 24
      %v3379 = vld [vmem:[%s3378] sm:$0xff]
      %3381 = vset.pattern.permute.xlu0 0
      %3382 = vperm.xlu0 %3381, %v3379
      %v3383 = vpop.permute.xlu0 %3382
      %v3385 = vadd.f32 %v3374, %v3383
      %v3386 = vadd.f32 %v3375, %v3383
      %v3387 = vadd.f32 %v3376, %v3383
      %v3388 = vadd.f32 %v3377, %v3383
      %vm3389 = vcmp.ge.f32.partialorder %v3385, 0.0
      %vm3390 = vcmp.ge.f32.partialorder %v3386, 0.0
      %vm3391 = vcmp.ge.f32.partialorder %v3387, 0.0
      %vm3392 = vcmp.ge.f32.partialorder %v3388, 0.0
      %s3393 = scalar_lea.vmem %s5, 24
      %v3394 = vld [vmem:[%s3393] sm:$0xff]
      %3396 = vset.pattern.permute.xlu0 0
      %3397 = vperm.xlu0 %3396, %v3394
      %v3398 = vpop.permute.xlu0 %3397
      %v3400 = vmul.f32 %v3398, %v3385
      %v3401 = vmul.f32 %v3398, %v3386
      %v3402 = vmul.f32 %v3398, %v3387
      %v3403 = vmul.f32 %v3398, %v3388
      %v3404 = vsel %vm3389, %v3385, %v3400
      %v3405 = vsel %vm3390, %v3386, %v3401
      %v3406 = vsel %vm3391, %v3387, %v3402
      %v3407 = vsel %vm3392, %v3388, %v3403
      %3408 = vrot.lane.b32.xlu0 %v3404, 17
      %v3409 = vpop.permute.xlu0 %3408
      %3410 = vrot.lane.b32.xlu0 %v3405, 17
      %v3411 = vpop.permute.xlu0 %3410
      %3412 = vrot.lane.b32.xlu0 %v3406, 17
      %v3413 = vpop.permute.xlu0 %3412
      %3414 = vrot.lane.b32.xlu0 %v3407, 17
      %v3415 = vpop.permute.xlu0 %3414
      %v3416 = vsel %vm424, %v3413, %v3415
      %v3417 = vsel %vm424, %v3411, %v3413
      %v3418 = vsel %vm424, %v3409, %v3411
      %v3419 = vsel %vm424, %v3415, %v3409
      %v3420 = vmul.f32 %v3419, %v433
      %v3421 = vmul.f32 %v3418, %v437
      %v3422 = vmul.f32 %v3417, %v441
      %v3423 = vmul.f32 %v3416, %v445
      %3424 = vrot.lane.b32.xlu0 %v3404, 16
      %v3425 = vpop.permute.xlu0 %3424
      %3426 = vrot.lane.b32.xlu0 %v3405, 16
      %v3427 = vpop.permute.xlu0 %3426
      %3428 = vrot.lane.b32.xlu0 %v3406, 16
      %v3429 = vpop.permute.xlu0 %3428
      %3430 = vrot.lane.b32.xlu0 %v3407, 16
      %v3431 = vpop.permute.xlu0 %3430
      %v3432 = vsel %vm464, %v3429, %v3431
      %v3433 = vsel %vm464, %v3427, %v3429
      %v3434 = vsel %vm464, %v3425, %v3427
      %v3435 = vsel %vm464, %v3431, %v3425
      %v3436 = vmul.f32 %v3435, %v473
      %v3437 = vmul.f32 %v3434, %v477
      %v3438 = vmul.f32 %v3433, %v481
      %v3439 = vmul.f32 %v3432, %v485
      %3440 = vrot.lane.b32.xlu0 %v3404, 15
      %v3441 = vpop.permute.xlu0 %3440
      %3442 = vrot.lane.b32.xlu0 %v3405, 15
      %v3443 = vpop.permute.xlu0 %3442
      %3444 = vrot.lane.b32.xlu0 %v3406, 15
      %v3445 = vpop.permute.xlu0 %3444
      %3446 = vrot.lane.b32.xlu0 %v3407, 15
      %v3447 = vpop.permute.xlu0 %3446
      %v3448 = vsel %vm820, %v3445, %v3447
      %v3449 = vsel %vm820, %v3443, %v3445
      %v3450 = vsel %vm820, %v3441, %v3443
      %v3451 = vsel %vm820, %v3447, %v3441
      %v3452 = vmul.f32 %v3451, %v829
      %v3453 = vmul.f32 %v3450, %v833
      %v3454 = vmul.f32 %v3449, %v837
      %v3455 = vmul.f32 %v3448, %v841
      %3456 = vrot.lane.b32.xlu0 %v3404, 1
      %v3457 = vpop.permute.xlu0 %3456
      %3458 = vrot.lane.b32.xlu0 %v3405, 1
      %v3459 = vpop.permute.xlu0 %3458
      %3460 = vrot.lane.b32.xlu0 %v3406, 1
      %v3461 = vpop.permute.xlu0 %3460
      %3462 = vrot.lane.b32.xlu0 %v3407, 1
      %v3463 = vpop.permute.xlu0 %3462
      %v3464 = vsel %vm1021, %v3461, %v3463
      %v3465 = vsel %vm1021, %v3459, %v3461
      %v3466 = vsel %vm1021, %v3457, %v3459
      %v3467 = vsel %vm1021, %v3463, %v3457
      %v3468 = vmul.f32 %v3467, %v1030
      %v3469 = vmul.f32 %v3466, %v1034
      %v3470 = vmul.f32 %v3465, %v1038
      %v3471 = vmul.f32 %v3464, %v1042
      %3472 = vrot.lane.b32.xlu0 %v3404, 127
      %v3473 = vpop.permute.xlu0 %3472
      %3474 = vrot.lane.b32.xlu0 %v3405, 127
      %v3475 = vpop.permute.xlu0 %3474
      %3476 = vrot.lane.b32.xlu0 %v3406, 127
      %v3477 = vpop.permute.xlu0 %3476
      %3478 = vrot.lane.b32.xlu0 %v3407, 127
      %v3479 = vpop.permute.xlu0 %3478
      %v3480 = vsel %vm1381, %v3477, %v3479
      %v3481 = vsel %vm1381, %v3475, %v3477
      %v3482 = vsel %vm1381, %v3473, %v3475
      %v3483 = vsel %vm1381, %v3479, %v3473
      %v3484 = vmul.f32 %v3482, %v1390
      %v3485 = vmul.f32 %v3481, %v1394
      %v3486 = vmul.f32 %v3480, %v1398
      %v3487 = vmul.f32 %v3483, %v1402
      %3488 = vrot.lane.b32.xlu0 %v3404, 113
      %v3489 = vpop.permute.xlu0 %3488
      %3490 = vrot.lane.b32.xlu0 %v3405, 113
      %v3491 = vpop.permute.xlu0 %3490
      %3492 = vrot.lane.b32.xlu0 %v3406, 113
      %v3493 = vpop.permute.xlu0 %3492
      %3494 = vrot.lane.b32.xlu0 %v3407, 113
      %v3495 = vpop.permute.xlu0 %3494
      %v3496 = vsel %vm1582, %v3493, %v3495
      %v3497 = vsel %vm1582, %v3491, %v3493
      %v3498 = vsel %vm1582, %v3489, %v3491
      %v3499 = vsel %vm1582, %v3495, %v3489
      %v3500 = vmul.f32 %v3498, %v1591
      %v3501 = vmul.f32 %v3497, %v1595
      %v3502 = vmul.f32 %v3496, %v1599
      %v3503 = vmul.f32 %v3499, %v1603
      %3504 = vrot.lane.b32.xlu0 %v3404, 112
      %v3505 = vpop.permute.xlu0 %3504
      %3506 = vrot.lane.b32.xlu0 %v3405, 112
      %v3507 = vpop.permute.xlu0 %3506
      %3508 = vrot.lane.b32.xlu0 %v3406, 112
      %v3509 = vpop.permute.xlu0 %3508
      %3510 = vrot.lane.b32.xlu0 %v3407, 112
      %v3511 = vpop.permute.xlu0 %3510
      %v3512 = vsel %vm1783, %v3509, %v3511
      %v3513 = vsel %vm1783, %v3507, %v3509
      %v3514 = vsel %vm1783, %v3505, %v3507
      %v3515 = vsel %vm1783, %v3511, %v3505
      %v3516 = vmul.f32 %v3514, %v1792
      %v3517 = vmul.f32 %v3513, %v1796
      %v3518 = vmul.f32 %v3512, %v1800
      %v3519 = vmul.f32 %v3515, %v1804
      %3520 = vrot.lane.b32.xlu0 %v3404, 111
      %v3521 = vpop.permute.xlu0 %3520
      %3522 = vrot.lane.b32.xlu0 %v3405, 111
      %v3523 = vpop.permute.xlu0 %3522
      %3524 = vrot.lane.b32.xlu0 %v3406, 111
      %v3525 = vpop.permute.xlu0 %3524
      %3526 = vrot.lane.b32.xlu0 %v3407, 111
      %v3527 = vpop.permute.xlu0 %3526
      %v3528 = vsel %vm1984, %v3525, %v3527
      %v3529 = vsel %vm1984, %v3523, %v3525
      %v3530 = vsel %vm1984, %v3521, %v3523
      %v3531 = vsel %vm1984, %v3527, %v3521
      %v3532 = vmul.f32 %v3530, %v1993
      %v3533 = vmul.f32 %v3529, %v1997
      %v3534 = vmul.f32 %v3528, %v2001
      %v3535 = vmul.f32 %v3531, %v2005
      %s3536 = scalar_lea.vmem %s3, 40
      %v3537 = vld [vmem:[%s3536] sm:$0xff]
      %s3538 = scalar_lea.vmem %s4, 32
      %v3539 = vld [vmem:[%s3538] sm:$0xff]
      %3541 = vset.pattern.permute.xlu0 0
      %3542 = vperm.xlu0 %3541, %v3539
      %v3543 = vpop.permute.xlu0 %3542
      %v3546 = vsel %vm2339, %v3537, 0
      %3548 = vmatprep.subr.mxu0 %v3421
      %3549 = vmatpush1.msra.mxu0 %v3420
      %3550 = vmatprep.subr.mxu0 %v3437
      %3551 = vmatpush1.msra.mxu0 %v3436
      %3552 = vmatprep.subr.mxu0 %v3453
      %3553 = vmatpush1.msra.mxu0 %v3452
      %3554 = vmatprep.subr.mxu0 %v3469
      %3555 = vmatpush1.msra.mxu0 %v3468
      %3556 = vmatprep.subr.mxu0 %v3405
      %3557 = vmatpush1.msra.mxu0 %v3404
      %3558 = vmatprep.subr.mxu0 %v3485
      %3559 = vmatpush1.msra.mxu0 %v3484
      %3560 = vmatprep.subr.mxu0 %v3501
      %3561 = vmatpush1.msra.mxu0 %v3500
      %3562 = vmatprep.subr.mxu0 %v3517
      %3563 = vmatpush1.msra.mxu0 %v3516
      %3564 = vmatprep.subr.mxu0 %v3533
      %3565 = vmatpush1.msra.mxu0 %v3532
      %3566 = vmatprep.subr.mxu0 0.0
      %3567 = vmatpush1.msra.mxu0 0.0
      %3568 = vmatprep.subr.mxu0 0.0
      %3569 = vmatpush1.msra.mxu0 0.0
      %3570 = vmatprep.subr.mxu0 0.0
      %3571 = vmatpush1.msra.mxu0 0.0
      %3572 = vmatprep.subr.mxu0 0.0
      %3573 = vmatpush1.msra.mxu0 0.0
      %3574 = vmatprep.subr.mxu0 0.0
      %3575 = vmatpush1.msra.mxu0 0.0
      %3576 = vmatprep.subr.mxu0 0.0
      %3577 = vmatpush1.msra.mxu0 0.0
      %3578 = vmatprep.subr.mxu0 0.0
      %3579 = vmatpush1.msra.mxu0 0.0
      %3580 = vmatprep.subr.mxu0 0.0
      %3581 = vmatpush1.msra.mxu0 0.0
      %3582 = vmatprep.subr.mxu0 0.0
      %3583 = vmatpush1.msra.mxu0 0.0
      %3584 = vmatprep.subr.mxu0 0.0
      %3585 = vmatpush1.msra.mxu0 0.0
      %3586 = vmatprep.subr.mxu0 0.0
      %3587 = vmatpush1.msra.mxu0 0.0
      %3588 = vmatprep.subr.mxu0 0.0
      %3589 = vmatpush1.msra.mxu0 0.0
      %3590 = vmatprep.subr.mxu0 0.0
      %3591 = vmatpush1.msra.mxu0 0.0
      %3592 = vmatprep.subr.mxu0 0.0
      %3593 = vmatpush1.msra.mxu0 0.0
      %3594 = vmatprep.subr.mxu0 0.0
      %3595 = vmatpush1.msra.mxu0 0.0
      %3596 = vmatprep.subr.mxu0 0.0
      %3597 = vmatpush1.msra.mxu0 0.0
      %3598 = vmatprep.subr.mxu0 0.0
      %3599 = vmatpush1.msra.mxu0 0.0
      %3600 = vmatprep.subr.mxu0 0.0
      %3601 = vmatpush1.msra.mxu0 0.0
      %3602 = vmatprep.subr.mxu0 0.0
      %3603 = vmatpush1.msra.mxu0 0.0
      %3604 = vmatprep.subr.mxu0 0.0
      %3605 = vmatpush1.msra.mxu0 0.0
      %3606 = vmatprep.subr.mxu0 0.0
      %3607 = vmatpush1.msra.mxu0 0.0
      %3608 = vmatprep.subr.mxu0 0.0
      %3609 = vmatpush1.msra.mxu0 0.0
      %3610 = vmatprep.subr.mxu0 0.0
      %3611 = vmatpush1.msra.mxu0 0.0
      %3612 = vmatprep.mubr.f32.mxu0 0.0
      %3613 = vmatmul.mubr.f32.gmra.mrb[0].mxu0 %v3546
      %v3614 = vpop.f32.mrb[0].mxu0
      %v3615 = vadd.f32 %v3543, %v3614
      %v3616 = vpop.f32.mrb[0].mxu0
      %v3617 = vadd.f32 %v3543, %v3616
      %3618 = vdwg.mxu0
      %3619 = vmatprep.subr.mxu0 %v3423
      %3620 = vmatpush1.msra.mxu0 %v3422
      %3621 = vmatprep.subr.mxu0 %v3439
      %3622 = vmatpush1.msra.mxu0 %v3438
      %3623 = vmatprep.subr.mxu0 %v3455
      %3624 = vmatpush1.msra.mxu0 %v3454
      %3625 = vmatprep.subr.mxu0 %v3471
      %3626 = vmatpush1.msra.mxu0 %v3470
      %3627 = vmatprep.subr.mxu0 %v3407
      %3628 = vmatpush1.msra.mxu0 %v3406
      %3629 = vmatprep.subr.mxu0 %v3487
      %3630 = vmatpush1.msra.mxu0 %v3486
      %3631 = vmatprep.subr.mxu0 %v3503
      %3632 = vmatpush1.msra.mxu0 %v3502
      %3633 = vmatprep.subr.mxu0 %v3519
      %3634 = vmatpush1.msra.mxu0 %v3518
      %3635 = vmatprep.subr.mxu0 %v3535
      %3636 = vmatpush1.msra.mxu0 %v3534
      %3637 = vmatprep.subr.mxu0 0.0
      %3638 = vmatpush1.msra.mxu0 0.0
      %3639 = vmatprep.subr.mxu0 0.0
      %3640 = vmatpush1.msra.mxu0 0.0
      %3641 = vmatprep.subr.mxu0 0.0
      %3642 = vmatpush1.msra.mxu0 0.0
      %3643 = vmatprep.subr.mxu0 0.0
      %3644 = vmatpush1.msra.mxu0 0.0
      %3645 = vmatprep.subr.mxu0 0.0
      %3646 = vmatpush1.msra.mxu0 0.0
      %3647 = vmatprep.subr.mxu0 0.0
      %3648 = vmatpush1.msra.mxu0 0.0
      %3649 = vmatprep.subr.mxu0 0.0
      %3650 = vmatpush1.msra.mxu0 0.0
      %3651 = vmatprep.subr.mxu0 0.0
      %3652 = vmatpush1.msra.mxu0 0.0
      %3653 = vmatprep.subr.mxu0 0.0
      %3654 = vmatpush1.msra.mxu0 0.0
      %3655 = vmatprep.subr.mxu0 0.0
      %3656 = vmatpush1.msra.mxu0 0.0
      %3657 = vmatprep.subr.mxu0 0.0
      %3658 = vmatpush1.msra.mxu0 0.0
      %3659 = vmatprep.subr.mxu0 0.0
      %3660 = vmatpush1.msra.mxu0 0.0
      %3661 = vmatprep.subr.mxu0 0.0
      %3662 = vmatpush1.msra.mxu0 0.0
      %3663 = vmatprep.subr.mxu0 0.0
      %3664 = vmatpush1.msra.mxu0 0.0
      %3665 = vmatprep.subr.mxu0 0.0
      %3666 = vmatpush1.msra.mxu0 0.0
      %3667 = vmatprep.subr.mxu0 0.0
      %3668 = vmatpush1.msra.mxu0 0.0
      %3669 = vmatprep.subr.mxu0 0.0
      %3670 = vmatpush1.msra.mxu0 0.0
      %3671 = vmatprep.subr.mxu0 0.0
      %3672 = vmatpush1.msra.mxu0 0.0
      %3673 = vmatprep.subr.mxu0 0.0
      %3674 = vmatpush1.msra.mxu0 0.0
      %3675 = vmatprep.subr.mxu0 0.0
      %3676 = vmatpush1.msra.mxu0 0.0
      %3677 = vmatprep.subr.mxu0 0.0
      %3678 = vmatpush1.msra.mxu0 0.0
      %3679 = vmatprep.subr.mxu0 0.0
      %3680 = vmatpush1.msra.mxu0 0.0
      %3681 = vmatprep.subr.mxu0 0.0
      %3682 = vmatpush1.msra.mxu0 0.0
      %3683 = vmatprep.mubr.f32.mxu0 0.0
      %3684 = vmatmul.mubr.f32.gmra.mrb[0].mxu0 %v3546
      %v3685 = vpop.f32.mrb[0].mxu0
      %v3686 = vadd.f32 %v3543, %v3685
      %v3687 = vpop.f32.mrb[0].mxu0
      %v3688 = vadd.f32 %v3543, %v3687
      %3689 = vdwg.mxu0
      %vm3690 = vcmp.ge.f32.partialorder %v3615, 0.0
      %vm3691 = vcmp.ge.f32.partialorder %v3617, 0.0
      %vm3692 = vcmp.ge.f32.partialorder %v3686, 0.0
      %vm3693 = vcmp.ge.f32.partialorder %v3688, 0.0
      %s3694 = scalar_lea.vmem %s5, 32
      %v3695 = vld [vmem:[%s3694] sm:$0xff]
      %3697 = vset.pattern.permute.xlu0 0
      %3698 = vperm.xlu0 %3697, %v3695
      %v3699 = vpop.permute.xlu0 %3698
      %v3701 = vmul.f32 %v3699, %v3615
      %v3702 = vmul.f32 %v3699, %v3617
      %v3703 = vmul.f32 %v3699, %v3686
      %v3704 = vmul.f32 %v3699, %v3688
      %v3705 = vsel %vm3690, %v3615, %v3701
      %v3706 = vsel %vm3691, %v3617, %v3702
      %v3707 = vsel %vm3692, %v3686, %v3703
      %v3708 = vsel %vm3693, %v3688, %v3704
      %3709 = vrot.lane.b32.xlu0 %v3705, 17
      %v3710 = vpop.permute.xlu0 %3709
      %3711 = vrot.lane.b32.xlu0 %v3706, 17
      %v3712 = vpop.permute.xlu0 %3711
      %3713 = vrot.lane.b32.xlu0 %v3707, 17
      %v3714 = vpop.permute.xlu0 %3713
      %3715 = vrot.lane.b32.xlu0 %v3708, 17
      %v3716 = vpop.permute.xlu0 %3715
      %v3717 = vsel %vm424, %v3714, %v3716
      %v3718 = vsel %vm424, %v3712, %v3714
      %v3719 = vsel %vm424, %v3710, %v3712
      %v3720 = vsel %vm424, %v3716, %v3710
      %v3721 = vmul.f32 %v3720, %v433
      %v3722 = vmul.f32 %v3719, %v437
      %v3723 = vmul.f32 %v3718, %v441
      %v3724 = vmul.f32 %v3717, %v445
      %3725 = vrot.lane.b32.xlu0 %v3705, 16
      %v3726 = vpop.permute.xlu0 %3725
      %3727 = vrot.lane.b32.xlu0 %v3706, 16
      %v3728 = vpop.permute.xlu0 %3727
      %3729 = vrot.lane.b32.xlu0 %v3707, 16
      %v3730 = vpop.permute.xlu0 %3729
      %3731 = vrot.lane.b32.xlu0 %v3708, 16
      %v3732 = vpop.permute.xlu0 %3731
      %v3733 = vsel %vm464, %v3730, %v3732
      %v3734 = vsel %vm464, %v3728, %v3730
      %v3735 = vsel %vm464, %v3726, %v3728
      %v3736 = vsel %vm464, %v3732, %v3726
      %v3737 = vmul.f32 %v3736, %v473
      %v3738 = vmul.f32 %v3735, %v477
      %v3739 = vmul.f32 %v3734, %v481
      %v3740 = vmul.f32 %v3733, %v485
      %3741 = vrot.lane.b32.xlu0 %v3705, 15
      %v3742 = vpop.permute.xlu0 %3741
      %3743 = vrot.lane.b32.xlu0 %v3706, 15
      %v3744 = vpop.permute.xlu0 %3743
      %3745 = vrot.lane.b32.xlu0 %v3707, 15
      %v3746 = vpop.permute.xlu0 %3745
      %3747 = vrot.lane.b32.xlu0 %v3708, 15
      %v3748 = vpop.permute.xlu0 %3747
      %v3749 = vsel %vm820, %v3746, %v3748
      %v3750 = vsel %vm820, %v3744, %v3746
      %v3751 = vsel %vm820, %v3742, %v3744
      %v3752 = vsel %vm820, %v3748, %v3742
      %v3753 = vmul.f32 %v3752, %v829
      %v3754 = vmul.f32 %v3751, %v833
      %v3755 = vmul.f32 %v3750, %v837
      %v3756 = vmul.f32 %v3749, %v841
      %3757 = vrot.lane.b32.xlu0 %v3705, 1
      %v3758 = vpop.permute.xlu0 %3757
      %3759 = vrot.lane.b32.xlu0 %v3706, 1
      %v3760 = vpop.permute.xlu0 %3759
      %3761 = vrot.lane.b32.xlu0 %v3707, 1
      %v3762 = vpop.permute.xlu0 %3761
      %3763 = vrot.lane.b32.xlu0 %v3708, 1
      %v3764 = vpop.permute.xlu0 %3763
      %v3765 = vsel %vm1021, %v3762, %v3764
      %v3766 = vsel %vm1021, %v3760, %v3762
      %v3767 = vsel %vm1021, %v3758, %v3760
      %v3768 = vsel %vm1021, %v3764, %v3758
      %v3769 = vmul.f32 %v3768, %v1030
      %v3770 = vmul.f32 %v3767, %v1034
      %v3771 = vmul.f32 %v3766, %v1038
      %v3772 = vmul.f32 %v3765, %v1042
      %3773 = vrot.lane.b32.xlu0 %v3705, 127
      %v3774 = vpop.permute.xlu0 %3773
      %3775 = vrot.lane.b32.xlu0 %v3706, 127
      %v3776 = vpop.permute.xlu0 %3775
      %3777 = vrot.lane.b32.xlu0 %v3707, 127
      %v3778 = vpop.permute.xlu0 %3777
      %3779 = vrot.lane.b32.xlu0 %v3708, 127
      %v3780 = vpop.permute.xlu0 %3779
      %v3781 = vsel %vm1381, %v3778, %v3780
      %v3782 = vsel %vm1381, %v3776, %v3778
      %v3783 = vsel %vm1381, %v3774, %v3776
      %v3784 = vsel %vm1381, %v3780, %v3774
      %v3785 = vmul.f32 %v3783, %v1390
      %v3786 = vmul.f32 %v3782, %v1394
      %v3787 = vmul.f32 %v3781, %v1398
      %v3788 = vmul.f32 %v3784, %v1402
      %3789 = vrot.lane.b32.xlu0 %v3705, 113
      %v3790 = vpop.permute.xlu0 %3789
      %3791 = vrot.lane.b32.xlu0 %v3706, 113
      %v3792 = vpop.permute.xlu0 %3791
      %3793 = vrot.lane.b32.xlu0 %v3707, 113
      %v3794 = vpop.permute.xlu0 %3793
      %3795 = vrot.lane.b32.xlu0 %v3708, 113
      %v3796 = vpop.permute.xlu0 %3795
      %v3797 = vsel %vm1582, %v3794, %v3796
      %v3798 = vsel %vm1582, %v3792, %v3794
      %v3799 = vsel %vm1582, %v3790, %v3792
      %v3800 = vsel %vm1582, %v3796, %v3790
      %v3801 = vmul.f32 %v3799, %v1591
      %v3802 = vmul.f32 %v3798, %v1595
      %v3803 = vmul.f32 %v3797, %v1599
      %v3804 = vmul.f32 %v3800, %v1603
      %3805 = vrot.lane.b32.xlu0 %v3705, 112
      %v3806 = vpop.permute.xlu0 %3805
      %3807 = vrot.lane.b32.xlu0 %v3706, 112
      %v3808 = vpop.permute.xlu0 %3807
      %3809 = vrot.lane.b32.xlu0 %v3707, 112
      %v3810 = vpop.permute.xlu0 %3809
      %3811 = vrot.lane.b32.xlu0 %v3708, 112
      %v3812 = vpop.permute.xlu0 %3811
      %v3813 = vsel %vm1783, %v3810, %v3812
      %v3814 = vsel %vm1783, %v3808, %v3810
      %v3815 = vsel %vm1783, %v3806, %v3808
      %v3816 = vsel %vm1783, %v3812, %v3806
      %v3817 = vmul.f32 %v3815, %v1792
      %v3818 = vmul.f32 %v3814, %v1796
      %v3819 = vmul.f32 %v3813, %v1800
      %v3820 = vmul.f32 %v3816, %v1804
      %3821 = vrot.lane.b32.xlu0 %v3705, 111
      %v3822 = vpop.permute.xlu0 %3821
      %3823 = vrot.lane.b32.xlu0 %v3706, 111
      %v3824 = vpop.permute.xlu0 %3823
      %3825 = vrot.lane.b32.xlu0 %v3707, 111
      %v3826 = vpop.permute.xlu0 %3825
      %3827 = vrot.lane.b32.xlu0 %v3708, 111
      %v3828 = vpop.permute.xlu0 %3827
      %v3829 = vsel %vm1984, %v3826, %v3828
      %v3830 = vsel %vm1984, %v3824, %v3826
      %v3831 = vsel %vm1984, %v3822, %v3824
      %v3832 = vsel %vm1984, %v3828, %v3822
      %v3833 = vmul.f32 %v3831, %v1993
      %v3834 = vmul.f32 %v3830, %v1997
      %v3835 = vmul.f32 %v3829, %v2001
      %v3836 = vmul.f32 %v3832, %v2005
      %s3837 = scalar_lea.vmem %s3, 48
      %v3838 = vld [vmem:[%s3837] sm:$0xff]
      %s3839 = scalar_lea.vmem %s4, 40
      %v3840 = vld [vmem:[%s3839] sm:$0xff]
      %3842 = vset.pattern.permute.xlu0 0
      %3843 = vperm.xlu0 %3842, %v3840
      %v3844 = vpop.permute.xlu0 %3843
      %v3847 = vsel %vm2339, %v3838, 0
      %3849 = vmatprep.subr.mxu0 %v3722
      %3850 = vmatpush1.msra.mxu0 %v3721
      %3851 = vmatprep.subr.mxu0 %v3738
      %3852 = vmatpush1.msra.mxu0 %v3737
      %3853 = vmatprep.subr.mxu0 %v3754
      %3854 = vmatpush1.msra.mxu0 %v3753
      %3855 = vmatprep.subr.mxu0 %v3770
      %3856 = vmatpush1.msra.mxu0 %v3769
      %3857 = vmatprep.subr.mxu0 %v3706
      %3858 = vmatpush1.msra.mxu0 %v3705
      %3859 = vmatprep.subr.mxu0 %v3786
      %3860 = vmatpush1.msra.mxu0 %v3785
      %3861 = vmatprep.subr.mxu0 %v3802
      %3862 = vmatpush1.msra.mxu0 %v3801
      %3863 = vmatprep.subr.mxu0 %v3818
      %3864 = vmatpush1.msra.mxu0 %v3817
      %3865 = vmatprep.subr.mxu0 %v3834
      %3866 = vmatpush1.msra.mxu0 %v3833
      %3867 = vmatprep.subr.mxu0 0.0
      %3868 = vmatpush1.msra.mxu0 0.0
      %3869 = vmatprep.subr.mxu0 0.0
      %3870 = vmatpush1.msra.mxu0 0.0
      %3871 = vmatprep.subr.mxu0 0.0
      %3872 = vmatpush1.msra.mxu0 0.0
      %3873 = vmatprep.subr.mxu0 0.0
      %3874 = vmatpush1.msra.mxu0 0.0
      %3875 = vmatprep.subr.mxu0 0.0
      %3876 = vmatpush1.msra.mxu0 0.0
      %3877 = vmatprep.subr.mxu0 0.0
      %3878 = vmatpush1.msra.mxu0 0.0
      %3879 = vmatprep.subr.mxu0 0.0
      %3880 = vmatpush1.msra.mxu0 0.0
      %3881 = vmatprep.subr.mxu0 0.0
      %3882 = vmatpush1.msra.mxu0 0.0
      %3883 = vmatprep.subr.mxu0 0.0
      %3884 = vmatpush1.msra.mxu0 0.0
      %3885 = vmatprep.subr.mxu0 0.0
      %3886 = vmatpush1.msra.mxu0 0.0
      %3887 = vmatprep.subr.mxu0 0.0
      %3888 = vmatpush1.msra.mxu0 0.0
      %3889 = vmatprep.subr.mxu0 0.0
      %3890 = vmatpush1.msra.mxu0 0.0
      %3891 = vmatprep.subr.mxu0 0.0
      %3892 = vmatpush1.msra.mxu0 0.0
      %3893 = vmatprep.subr.mxu0 0.0
      %3894 = vmatpush1.msra.mxu0 0.0
      %3895 = vmatprep.subr.mxu0 0.0
      %3896 = vmatpush1.msra.mxu0 0.0
      %3897 = vmatprep.subr.mxu0 0.0
      %3898 = vmatpush1.msra.mxu0 0.0
      %3899 = vmatprep.subr.mxu0 0.0
      %3900 = vmatpush1.msra.mxu0 0.0
      %3901 = vmatprep.subr.mxu0 0.0
      %3902 = vmatpush1.msra.mxu0 0.0
      %3903 = vmatprep.subr.mxu0 0.0
      %3904 = vmatpush1.msra.mxu0 0.0
      %3905 = vmatprep.subr.mxu0 0.0
      %3906 = vmatpush1.msra.mxu0 0.0
      %3907 = vmatprep.subr.mxu0 0.0
      %3908 = vmatpush1.msra.mxu0 0.0
      %3909 = vmatprep.subr.mxu0 0.0
      %3910 = vmatpush1.msra.mxu0 0.0
      %3911 = vmatprep.subr.mxu0 0.0
      %3912 = vmatpush1.msra.mxu0 0.0
      %3913 = vmatprep.mubr.f32.mxu0 0.0
      %3914 = vmatmul.mubr.f32.gmra.mrb[0].mxu0 %v3847
      %v3915 = vpop.f32.mrb[0].mxu0
      %v3916 = vadd.f32 %v3844, %v3915
      %v3917 = vpop.f32.mrb[0].mxu0
      %v3918 = vadd.f32 %v3844, %v3917
      %3919 = vdwg.mxu0
      %3920 = vmatprep.subr.mxu0 %v3724
      %3921 = vmatpush1.msra.mxu0 %v3723
      %3922 = vmatprep.subr.mxu0 %v3740
      %3923 = vmatpush1.msra.mxu0 %v3739
      %3924 = vmatprep.subr.mxu0 %v3756
      %3925 = vmatpush1.msra.mxu0 %v3755
      %3926 = vmatprep.subr.mxu0 %v3772
      %3927 = vmatpush1.msra.mxu0 %v3771
      %3928 = vmatprep.subr.mxu0 %v3708
      %3929 = vmatpush1.msra.mxu0 %v3707
      %3930 = vmatprep.subr.mxu0 %v3788
      %3931 = vmatpush1.msra.mxu0 %v3787
      %3932 = vmatprep.subr.mxu0 %v3804
      %3933 = vmatpush1.msra.mxu0 %v3803
      %3934 = vmatprep.subr.mxu0 %v3820
      %3935 = vmatpush1.msra.mxu0 %v3819
      %3936 = vmatprep.subr.mxu0 %v3836
      %3937 = vmatpush1.msra.mxu0 %v3835
      %3938 = vmatprep.subr.mxu0 0.0
      %3939 = vmatpush1.msra.mxu0 0.0
      %3940 = vmatprep.subr.mxu0 0.0
      %3941 = vmatpush1.msra.mxu0 0.0
      %3942 = vmatprep.subr.mxu0 0.0
      %3943 = vmatpush1.msra.mxu0 0.0
      %3944 = vmatprep.subr.mxu0 0.0
      %3945 = vmatpush1.msra.mxu0 0.0
      %3946 = vmatprep.subr.mxu0 0.0
      %3947 = vmatpush1.msra.mxu0 0.0
      %3948 = vmatprep.subr.mxu0 0.0
      %3949 = vmatpush1.msra.mxu0 0.0
      %3950 = vmatprep.subr.mxu0 0.0
      %3951 = vmatpush1.msra.mxu0 0.0
      %3952 = vmatprep.subr.mxu0 0.0
      %3953 = vmatpush1.msra.mxu0 0.0
      %3954 = vmatprep.subr.mxu0 0.0
      %3955 = vmatpush1.msra.mxu0 0.0
      %3956 = vmatprep.subr.mxu0 0.0
      %3957 = vmatpush1.msra.mxu0 0.0
      %3958 = vmatprep.subr.mxu0 0.0
      %3959 = vmatpush1.msra.mxu0 0.0
      %3960 = vmatprep.subr.mxu0 0.0
      %3961 = vmatpush1.msra.mxu0 0.0
      %3962 = vmatprep.subr.mxu0 0.0
      %3963 = vmatpush1.msra.mxu0 0.0
      %3964 = vmatprep.subr.mxu0 0.0
      %3965 = vmatpush1.msra.mxu0 0.0
      %3966 = vmatprep.subr.mxu0 0.0
      %3967 = vmatpush1.msra.mxu0 0.0
      %3968 = vmatprep.subr.mxu0 0.0
      %3969 = vmatpush1.msra.mxu0 0.0
      %3970 = vmatprep.subr.mxu0 0.0
      %3971 = vmatpush1.msra.mxu0 0.0
      %3972 = vmatprep.subr.mxu0 0.0
      %3973 = vmatpush1.msra.mxu0 0.0
      %3974 = vmatprep.subr.mxu0 0.0
      %3975 = vmatpush1.msra.mxu0 0.0
      %3976 = vmatprep.subr.mxu0 0.0
      %3977 = vmatpush1.msra.mxu0 0.0
      %3978 = vmatprep.subr.mxu0 0.0
      %3979 = vmatpush1.msra.mxu0 0.0
      %3980 = vmatprep.subr.mxu0 0.0
      %3981 = vmatpush1.msra.mxu0 0.0
      %3982 = vmatprep.subr.mxu0 0.0
      %3983 = vmatpush1.msra.mxu0 0.0
      %3984 = vmatprep.mubr.f32.mxu0 0.0
      %3985 = vmatmul.mubr.f32.gmra.mrb[0].mxu0 %v3847
      %v3986 = vpop.f32.mrb[0].mxu0
      %v3987 = vadd.f32 %v3844, %v3986
      %v3988 = vpop.f32.mrb[0].mxu0
      %v3989 = vadd.f32 %v3844, %v3988
      %3990 = vdwg.mxu0
      %vm3991 = vcmp.ge.f32.partialorder %v3916, 0.0
      %vm3992 = vcmp.ge.f32.partialorder %v3918, 0.0
      %vm3993 = vcmp.ge.f32.partialorder %v3987, 0.0
      %vm3994 = vcmp.ge.f32.partialorder %v3989, 0.0
      %s3995 = scalar_lea.vmem %s5, 40
      %v3996 = vld [vmem:[%s3995] sm:$0xff]
      %3998 = vset.pattern.permute.xlu0 0
      %3999 = vperm.xlu0 %3998, %v3996
      %v4000 = vpop.permute.xlu0 %3999
      %v4002 = vmul.f32 %v4000, %v3916
      %v4003 = vmul.f32 %v4000, %v3918
      %v4004 = vmul.f32 %v4000, %v3987
      %v4005 = vmul.f32 %v4000, %v3989
      %v4006 = vsel %vm3991, %v3916, %v4002
      %v4007 = vsel %vm3992, %v3918, %v4003
      %v4008 = vsel %vm3993, %v3987, %v4004
      %v4009 = vsel %vm3994, %v3989, %v4005
      %4010 = vrot.lane.b32.xlu0 %v4006, 17
      %v4011 = vpop.permute.xlu0 %4010
      %4012 = vrot.lane.b32.xlu0 %v4007, 17
      %v4013 = vpop.permute.xlu0 %4012
      %4014 = vrot.lane.b32.xlu0 %v4008, 17
      %v4015 = vpop.permute.xlu0 %4014
      %4016 = vrot.lane.b32.xlu0 %v4009, 17
      %v4017 = vpop.permute.xlu0 %4016
      %v4018 = vsel %vm424, %v4015, %v4017
      %v4019 = vsel %vm424, %v4013, %v4015
      %v4020 = vsel %vm424, %v4011, %v4013
      %v4021 = vsel %vm424, %v4017, %v4011
      %v4022 = vmul.f32 %v4021, %v433
      %v4023 = vmul.f32 %v4020, %v437
      %v4024 = vmul.f32 %v4019, %v441
      %v4025 = vmul.f32 %v4018, %v445
      %4026 = vrot.lane.b32.xlu0 %v4006, 16
      %v4027 = vpop.permute.xlu0 %4026
      %4028 = vrot.lane.b32.xlu0 %v4007, 16
      %v4029 = vpop.permute.xlu0 %4028
      %4030 = vrot.lane.b32.xlu0 %v4008, 16
      %v4031 = vpop.permute.xlu0 %4030
      %4032 = vrot.lane.b32.xlu0 %v4009, 16
      %v4033 = vpop.permute.xlu0 %4032
      %v4034 = vsel %vm464, %v4031, %v4033
      %v4035 = vsel %vm464, %v4029, %v4031
      %v4036 = vsel %vm464, %v4027, %v4029
      %v4037 = vsel %vm464, %v4033, %v4027
      %v4038 = vmul.f32 %v4037, %v473
      %v4039 = vmul.f32 %v4036, %v477
      %v4040 = vmul.f32 %v4035, %v481
      %v4041 = vmul.f32 %v4034, %v485
      %4042 = vrot.lane.b32.xlu0 %v4006, 15
      %v4043 = vpop.permute.xlu0 %4042
      %4044 = vrot.lane.b32.xlu0 %v4007, 15
      %v4045 = vpop.permute.xlu0 %4044
      %4046 = vrot.lane.b32.xlu0 %v4008, 15
      %v4047 = vpop.permute.xlu0 %4046
      %4048 = vrot.lane.b32.xlu0 %v4009, 15
      %v4049 = vpop.permute.xlu0 %4048
      %v4050 = vsel %vm820, %v4047, %v4049
      %v4051 = vsel %vm820, %v4045, %v4047
      %v4052 = vsel %vm820, %v4043, %v4045
      %v4053 = vsel %vm820, %v4049, %v4043
      %v4054 = vmul.f32 %v4053, %v829
      %v4055 = vmul.f32 %v4052, %v833
      %v4056 = vmul.f32 %v4051, %v837
      %v4057 = vmul.f32 %v4050, %v841
      %4058 = vrot.lane.b32.xlu0 %v4006, 1
      %v4059 = vpop.permute.xlu0 %4058
      %4060 = vrot.lane.b32.xlu0 %v4007, 1
      %v4061 = vpop.permute.xlu0 %4060
      %4062 = vrot.lane.b32.xlu0 %v4008, 1
      %v4063 = vpop.permute.xlu0 %4062
      %4064 = vrot.lane.b32.xlu0 %v4009, 1
      %v4065 = vpop.permute.xlu0 %4064
      %v4066 = vsel %vm1021, %v4063, %v4065
      %v4067 = vsel %vm1021, %v4061, %v4063
      %v4068 = vsel %vm1021, %v4059, %v4061
      %v4069 = vsel %vm1021, %v4065, %v4059
      %v4070 = vmul.f32 %v4069, %v1030
      %v4071 = vmul.f32 %v4068, %v1034
      %v4072 = vmul.f32 %v4067, %v1038
      %v4073 = vmul.f32 %v4066, %v1042
      %4074 = vrot.lane.b32.xlu0 %v4006, 127
      %v4075 = vpop.permute.xlu0 %4074
      %4076 = vrot.lane.b32.xlu0 %v4007, 127
      %v4077 = vpop.permute.xlu0 %4076
      %4078 = vrot.lane.b32.xlu0 %v4008, 127
      %v4079 = vpop.permute.xlu0 %4078
      %4080 = vrot.lane.b32.xlu0 %v4009, 127
      %v4081 = vpop.permute.xlu0 %4080
      %v4082 = vsel %vm1381, %v4079, %v4081
      %v4083 = vsel %vm1381, %v4077, %v4079
      %v4084 = vsel %vm1381, %v4075, %v4077
      %v4085 = vsel %vm1381, %v4081, %v4075
      %v4086 = vmul.f32 %v4084, %v1390
      %v4087 = vmul.f32 %v4083, %v1394
      %v4088 = vmul.f32 %v4082, %v1398
      %v4089 = vmul.f32 %v4085, %v1402
      %4090 = vrot.lane.b32.xlu0 %v4006, 113
      %v4091 = vpop.permute.xlu0 %4090
      %4092 = vrot.lane.b32.xlu0 %v4007, 113
      %v4093 = vpop.permute.xlu0 %4092
      %4094 = vrot.lane.b32.xlu0 %v4008, 113
      %v4095 = vpop.permute.xlu0 %4094
      %4096 = vrot.lane.b32.xlu0 %v4009, 113
      %v4097 = vpop.permute.xlu0 %4096
      %v4098 = vsel %vm1582, %v4095, %v4097
      %v4099 = vsel %vm1582, %v4093, %v4095
      %v4100 = vsel %vm1582, %v4091, %v4093
      %v4101 = vsel %vm1582, %v4097, %v4091
      %v4102 = vmul.f32 %v4100, %v1591
      %v4103 = vmul.f32 %v4099, %v1595
      %v4104 = vmul.f32 %v4098, %v1599
      %v4105 = vmul.f32 %v4101, %v1603
      %4106 = vrot.lane.b32.xlu0 %v4006, 112
      %v4107 = vpop.permute.xlu0 %4106
      %4108 = vrot.lane.b32.xlu0 %v4007, 112
      %v4109 = vpop.permute.xlu0 %4108
      %4110 = vrot.lane.b32.xlu0 %v4008, 112
      %v4111 = vpop.permute.xlu0 %4110
      %4112 = vrot.lane.b32.xlu0 %v4009, 112
      %v4113 = vpop.permute.xlu0 %4112
      %v4114 = vsel %vm1783, %v4111, %v4113
      %v4115 = vsel %vm1783, %v4109, %v4111
      %v4116 = vsel %vm1783, %v4107, %v4109
      %v4117 = vsel %vm1783, %v4113, %v4107
      %v4118 = vmul.f32 %v4116, %v1792
      %v4119 = vmul.f32 %v4115, %v1796
      %v4120 = vmul.f32 %v4114, %v1800
      %v4121 = vmul.f32 %v4117, %v1804
      %4122 = vrot.lane.b32.xlu0 %v4006, 111
      %v4123 = vpop.permute.xlu0 %4122
      %4124 = vrot.lane.b32.xlu0 %v4007, 111
      %v4125 = vpop.permute.xlu0 %4124
      %4126 = vrot.lane.b32.xlu0 %v4008, 111
      %v4127 = vpop.permute.xlu0 %4126
      %4128 = vrot.lane.b32.xlu0 %v4009, 111
      %v4129 = vpop.permute.xlu0 %4128
      %v4130 = vsel %vm1984, %v4127, %v4129
      %v4131 = vsel %vm1984, %v4125, %v4127
      %v4132 = vsel %vm1984, %v4123, %v4125
      %v4133 = vsel %vm1984, %v4129, %v4123
      %v4134 = vmul.f32 %v4132, %v1993
      %v4135 = vmul.f32 %v4131, %v1997
      %v4136 = vmul.f32 %v4130, %v2001
      %v4137 = vmul.f32 %v4133, %v2005
      %s4138 = scalar_lea.vmem %s3, 56
      %v4139 = vld [vmem:[%s4138] sm:$0xff]
      %s4140 = scalar_lea.vmem %s3, 64
      %v4141 = vld [vmem:[%s4140] sm:$0xff]
      %v4143 = vsel %vm2339, %v4141, 0
      %4145 = vmatprep.subr.mxu0 %v3722
      %4146 = vmatpush1.msra.mxu0 %v3721
      %4147 = vmatprep.subr.mxu0 %v3738
      %4148 = vmatpush1.msra.mxu0 %v3737
      %4149 = vmatprep.subr.mxu0 %v3754
      %4150 = vmatpush1.msra.mxu0 %v3753
      %4151 = vmatprep.subr.mxu0 %v3770
      %4152 = vmatpush1.msra.mxu0 %v3769
      %4153 = vmatprep.subr.mxu0 %v3706
      %4154 = vmatpush1.msra.mxu0 %v3705
      %4155 = vmatprep.subr.mxu0 %v3786
      %4156 = vmatpush1.msra.mxu0 %v3785
      %4157 = vmatprep.subr.mxu0 %v3802
      %4158 = vmatpush1.msra.mxu0 %v3801
      %4159 = vmatprep.subr.mxu0 %v3818
      %4160 = vmatpush1.msra.mxu0 %v3817
      %4161 = vmatprep.subr.mxu0 %v3834
      %4162 = vmatpush1.msra.mxu0 %v3833
      %4163 = vmatprep.subr.mxu0 0.0
      %4164 = vmatpush1.msra.mxu0 0.0
      %4165 = vmatprep.subr.mxu0 0.0
      %4166 = vmatpush1.msra.mxu0 0.0
      %4167 = vmatprep.subr.mxu0 0.0
      %4168 = vmatpush1.msra.mxu0 0.0
      %4169 = vmatprep.subr.mxu0 0.0
      %4170 = vmatpush1.msra.mxu0 0.0
      %4171 = vmatprep.subr.mxu0 0.0
      %4172 = vmatpush1.msra.mxu0 0.0
      %4173 = vmatprep.subr.mxu0 0.0
      %4174 = vmatpush1.msra.mxu0 0.0
      %4175 = vmatprep.subr.mxu0 0.0
      %4176 = vmatpush1.msra.mxu0 0.0
      %4177 = vmatprep.subr.mxu0 0.0
      %4178 = vmatpush1.msra.mxu0 0.0
      %4179 = vmatprep.subr.mxu0 0.0
      %4180 = vmatpush1.msra.mxu0 0.0
      %4181 = vmatprep.subr.mxu0 0.0
      %4182 = vmatpush1.msra.mxu0 0.0
      %4183 = vmatprep.subr.mxu0 0.0
      %4184 = vmatpush1.msra.mxu0 0.0
      %4185 = vmatprep.subr.mxu0 0.0
      %4186 = vmatpush1.msra.mxu0 0.0
      %4187 = vmatprep.subr.mxu0 0.0
      %4188 = vmatpush1.msra.mxu0 0.0
      %4189 = vmatprep.subr.mxu0 0.0
      %4190 = vmatpush1.msra.mxu0 0.0
      %4191 = vmatprep.subr.mxu0 0.0
      %4192 = vmatpush1.msra.mxu0 0.0
      %4193 = vmatprep.subr.mxu0 0.0
      %4194 = vmatpush1.msra.mxu0 0.0
      %4195 = vmatprep.subr.mxu0 0.0
      %4196 = vmatpush1.msra.mxu0 0.0
      %4197 = vmatprep.subr.mxu0 0.0
      %4198 = vmatpush1.msra.mxu0 0.0
      %4199 = vmatprep.subr.mxu0 0.0
      %4200 = vmatpush1.msra.mxu0 0.0
      %4201 = vmatprep.subr.mxu0 0.0
      %4202 = vmatpush1.msra.mxu0 0.0
      %4203 = vmatprep.subr.mxu0 0.0
      %4204 = vmatpush1.msra.mxu0 0.0
      %4205 = vmatprep.subr.mxu0 0.0
      %4206 = vmatpush1.msra.mxu0 0.0
      %4207 = vmatprep.subr.mxu0 0.0
      %4208 = vmatpush1.msra.mxu0 0.0
      %4209 = vmatprep.mubr.f32.mxu0 0.0
      %4210 = vmatmul.mubr.f32.gmra.mrb[0].mxu0 %v4143
      %v4211 = vpop.f32.mrb[0].mxu0
      %v4212 = vadd.f32 0.0, %v4211
      %v4213 = vpop.f32.mrb[0].mxu0
      %v4214 = vadd.f32 0.0, %v4213
      %4215 = vdwg.mxu0
      %4216 = vmatprep.subr.mxu0 %v3724
      %4217 = vmatpush1.msra.mxu0 %v3723
      %4218 = vmatprep.subr.mxu0 %v3740
      %4219 = vmatpush1.msra.mxu0 %v3739
      %4220 = vmatprep.subr.mxu0 %v3756
      %4221 = vmatpush1.msra.mxu0 %v3755
      %4222 = vmatprep.subr.mxu0 %v3772
      %4223 = vmatpush1.msra.mxu0 %v3771
      %4224 = vmatprep.subr.mxu0 %v3708
      %4225 = vmatpush1.msra.mxu0 %v3707
      %4226 = vmatprep.subr.mxu0 %v3788
      %4227 = vmatpush1.msra.mxu0 %v3787
      %4228 = vmatprep.subr.mxu0 %v3804
      %4229 = vmatpush1.msra.mxu0 %v3803
      %4230 = vmatprep.subr.mxu0 %v3820
      %4231 = vmatpush1.msra.mxu0 %v3819
      %4232 = vmatprep.subr.mxu0 %v3836
      %4233 = vmatpush1.msra.mxu0 %v3835
      %4234 = vmatprep.subr.mxu0 0.0
      %4235 = vmatpush1.msra.mxu0 0.0
      %4236 = vmatprep.subr.mxu0 0.0
      %4237 = vmatpush1.msra.mxu0 0.0
      %4238 = vmatprep.subr.mxu0 0.0
      %4239 = vmatpush1.msra.mxu0 0.0
      %4240 = vmatprep.subr.mxu0 0.0
      %4241 = vmatpush1.msra.mxu0 0.0
      %4242 = vmatprep.subr.mxu0 0.0
      %4243 = vmatpush1.msra.mxu0 0.0
      %4244 = vmatprep.subr.mxu0 0.0
      %4245 = vmatpush1.msra.mxu0 0.0
      %4246 = vmatprep.subr.mxu0 0.0
      %4247 = vmatpush1.msra.mxu0 0.0
      %4248 = vmatprep.subr.mxu0 0.0
      %4249 = vmatpush1.msra.mxu0 0.0
      %4250 = vmatprep.subr.mxu0 0.0
      %4251 = vmatpush1.msra.mxu0 0.0
      %4252 = vmatprep.subr.mxu0 0.0
      %4253 = vmatpush1.msra.mxu0 0.0
      %4254 = vmatprep.subr.mxu0 0.0
      %4255 = vmatpush1.msra.mxu0 0.0
      %4256 = vmatprep.subr.mxu0 0.0
      %4257 = vmatpush1.msra.mxu0 0.0
      %4258 = vmatprep.subr.mxu0 0.0
      %4259 = vmatpush1.msra.mxu0 0.0
      %4260 = vmatprep.subr.mxu0 0.0
      %4261 = vmatpush1.msra.mxu0 0.0
      %4262 = vmatprep.subr.mxu0 0.0
      %4263 = vmatpush1.msra.mxu0 0.0
      %4264 = vmatprep.subr.mxu0 0.0
      %4265 = vmatpush1.msra.mxu0 0.0
      %4266 = vmatprep.subr.mxu0 0.0
      %4267 = vmatpush1.msra.mxu0 0.0
      %4268 = vmatprep.subr.mxu0 0.0
      %4269 = vmatpush1.msra.mxu0 0.0
      %4270 = vmatprep.subr.mxu0 0.0
      %4271 = vmatpush1.msra.mxu0 0.0
      %4272 = vmatprep.subr.mxu0 0.0
      %4273 = vmatpush1.msra.mxu0 0.0
      %4274 = vmatprep.subr.mxu0 0.0
      %4275 = vmatpush1.msra.mxu0 0.0
      %4276 = vmatprep.subr.mxu0 0.0
      %4277 = vmatpush1.msra.mxu0 0.0
      %4278 = vmatprep.subr.mxu0 0.0
      %4279 = vmatpush1.msra.mxu0 0.0
      %4280 = vmatprep.mubr.f32.mxu0 0.0
      %4281 = vmatmul.mubr.f32.gmra.mrb[0].mxu0 %v4143
      %v4282 = vpop.f32.mrb[0].mxu0
      %v4283 = vadd.f32 0.0, %v4282
      %v4284 = vpop.f32.mrb[0].mxu0
      %v4285 = vadd.f32 0.0, %v4284
      %4286 = vdwg.mxu0
      %v4288 = vsel %vm2339, %v4139, 0
      %4290 = vmatprep.subr.mxu0 %v3421
      %4291 = vmatpush1.msra.mxu0 %v3420
      %4292 = vmatprep.subr.mxu0 %v3437
      %4293 = vmatpush1.msra.mxu0 %v3436
      %4294 = vmatprep.subr.mxu0 %v3453
      %4295 = vmatpush1.msra.mxu0 %v3452
      %4296 = vmatprep.subr.mxu0 %v3469
      %4297 = vmatpush1.msra.mxu0 %v3468
      %4298 = vmatprep.subr.mxu0 %v3405
      %4299 = vmatpush1.msra.mxu0 %v3404
      %4300 = vmatprep.subr.mxu0 %v3485
      %4301 = vmatpush1.msra.mxu0 %v3484
      %4302 = vmatprep.subr.mxu0 %v3501
      %4303 = vmatpush1.msra.mxu0 %v3500
      %4304 = vmatprep.subr.mxu0 %v3517
      %4305 = vmatpush1.msra.mxu0 %v3516
      %4306 = vmatprep.subr.mxu0 %v3533
      %4307 = vmatpush1.msra.mxu0 %v3532
      %4308 = vmatprep.subr.mxu0 0.0
      %4309 = vmatpush1.msra.mxu0 0.0
      %4310 = vmatprep.subr.mxu0 0.0
      %4311 = vmatpush1.msra.mxu0 0.0
      %4312 = vmatprep.subr.mxu0 0.0
      %4313 = vmatpush1.msra.mxu0 0.0
      %4314 = vmatprep.subr.mxu0 0.0
      %4315 = vmatpush1.msra.mxu0 0.0
      %4316 = vmatprep.subr.mxu0 0.0
      %4317 = vmatpush1.msra.mxu0 0.0
      %4318 = vmatprep.subr.mxu0 0.0
      %4319 = vmatpush1.msra.mxu0 0.0
      %4320 = vmatprep.subr.mxu0 0.0
      %4321 = vmatpush1.msra.mxu0 0.0
      %4322 = vmatprep.subr.mxu0 0.0
      %4323 = vmatpush1.msra.mxu0 0.0
      %4324 = vmatprep.subr.mxu0 0.0
      %4325 = vmatpush1.msra.mxu0 0.0
      %4326 = vmatprep.subr.mxu0 0.0
      %4327 = vmatpush1.msra.mxu0 0.0
      %4328 = vmatprep.subr.mxu0 0.0
      %4329 = vmatpush1.msra.mxu0 0.0
      %4330 = vmatprep.subr.mxu0 0.0
      %4331 = vmatpush1.msra.mxu0 0.0
      %4332 = vmatprep.subr.mxu0 0.0
      %4333 = vmatpush1.msra.mxu0 0.0
      %4334 = vmatprep.subr.mxu0 0.0
      %4335 = vmatpush1.msra.mxu0 0.0
      %4336 = vmatprep.subr.mxu0 0.0
      %4337 = vmatpush1.msra.mxu0 0.0
      %4338 = vmatprep.subr.mxu0 0.0
      %4339 = vmatpush1.msra.mxu0 0.0
      %4340 = vmatprep.subr.mxu0 0.0
      %4341 = vmatpush1.msra.mxu0 0.0
      %4342 = vmatprep.subr.mxu0 0.0
      %4343 = vmatpush1.msra.mxu0 0.0
      %4344 = vmatprep.subr.mxu0 0.0
      %4345 = vmatpush1.msra.mxu0 0.0
      %4346 = vmatprep.subr.mxu0 0.0
      %4347 = vmatpush1.msra.mxu0 0.0
      %4348 = vmatprep.subr.mxu0 0.0
      %4349 = vmatpush1.msra.mxu0 0.0
      %4350 = vmatprep.subr.mxu0 0.0
      %4351 = vmatpush1.msra.mxu0 0.0
      %4352 = vmatprep.subr.mxu0 0.0
      %4353 = vmatpush1.msra.mxu0 0.0
      %4354 = vmatprep.mubr.f32.mxu0 0.0
      %4355 = vmatmul.mubr.f32.gmra.mrb[0].mxu0 %v4288
      %v4356 = vpop.f32.mrb[0].mxu0
      %v4357 = vadd.f32 %v4212, %v4356
      %v4358 = vpop.f32.mrb[0].mxu0
      %v4359 = vadd.f32 %v4214, %v4358
      %4360 = vdwg.mxu0
      %4361 = vmatprep.subr.mxu0 %v3423
      %4362 = vmatpush1.msra.mxu0 %v3422
      %4363 = vmatprep.subr.mxu0 %v3439
      %4364 = vmatpush1.msra.mxu0 %v3438
      %4365 = vmatprep.subr.mxu0 %v3455
      %4366 = vmatpush1.msra.mxu0 %v3454
      %4367 = vmatprep.subr.mxu0 %v3471
      %4368 = vmatpush1.msra.mxu0 %v3470
      %4369 = vmatprep.subr.mxu0 %v3407
      %4370 = vmatpush1.msra.mxu0 %v3406
      %4371 = vmatprep.subr.mxu0 %v3487
      %4372 = vmatpush1.msra.mxu0 %v3486
      %4373 = vmatprep.subr.mxu0 %v3503
      %4374 = vmatpush1.msra.mxu0 %v3502
      %4375 = vmatprep.subr.mxu0 %v3519
      %4376 = vmatpush1.msra.mxu0 %v3518
      %4377 = vmatprep.subr.mxu0 %v3535
      %4378 = vmatpush1.msra.mxu0 %v3534
      %4379 = vmatprep.subr.mxu0 0.0
      %4380 = vmatpush1.msra.mxu0 0.0
      %4381 = vmatprep.subr.mxu0 0.0
      %4382 = vmatpush1.msra.mxu0 0.0
      %4383 = vmatprep.subr.mxu0 0.0
      %4384 = vmatpush1.msra.mxu0 0.0
      %4385 = vmatprep.subr.mxu0 0.0
      %4386 = vmatpush1.msra.mxu0 0.0
      %4387 = vmatprep.subr.mxu0 0.0
      %4388 = vmatpush1.msra.mxu0 0.0
      %4389 = vmatprep.subr.mxu0 0.0
      %4390 = vmatpush1.msra.mxu0 0.0
      %4391 = vmatprep.subr.mxu0 0.0
      %4392 = vmatpush1.msra.mxu0 0.0
      %4393 = vmatprep.subr.mxu0 0.0
      %4394 = vmatpush1.msra.mxu0 0.0
      %4395 = vmatprep.subr.mxu0 0.0
      %4396 = vmatpush1.msra.mxu0 0.0
      %4397 = vmatprep.subr.mxu0 0.0
      %4398 = vmatpush1.msra.mxu0 0.0
      %4399 = vmatprep.subr.mxu0 0.0
      %4400 = vmatpush1.msra.mxu0 0.0
      %4401 = vmatprep.subr.mxu0 0.0
      %4402 = vmatpush1.msra.mxu0 0.0
      %4403 = vmatprep.subr.mxu0 0.0
      %4404 = vmatpush1.msra.mxu0 0.0
      %4405 = vmatprep.subr.mxu0 0.0
      %4406 = vmatpush1.msra.mxu0 0.0
      %4407 = vmatprep.subr.mxu0 0.0
      %4408 = vmatpush1.msra.mxu0 0.0
      %4409 = vmatprep.subr.mxu0 0.0
      %4410 = vmatpush1.msra.mxu0 0.0
      %4411 = vmatprep.subr.mxu0 0.0
      %4412 = vmatpush1.msra.mxu0 0.0
      %4413 = vmatprep.subr.mxu0 0.0
      %4414 = vmatpush1.msra.mxu0 0.0
      %4415 = vmatprep.subr.mxu0 0.0
      %4416 = vmatpush1.msra.mxu0 0.0
      %4417 = vmatprep.subr.mxu0 0.0
      %4418 = vmatpush1.msra.mxu0 0.0
      %4419 = vmatprep.subr.mxu0 0.0
      %4420 = vmatpush1.msra.mxu0 0.0
      %4421 = vmatprep.subr.mxu0 0.0
      %4422 = vmatpush1.msra.mxu0 0.0
      %4423 = vmatprep.subr.mxu0 0.0
      %4424 = vmatpush1.msra.mxu0 0.0
      %4425 = vmatprep.mubr.f32.mxu0 0.0
      %4426 = vmatmul.mubr.f32.gmra.mrb[0].mxu0 %v4288
      %v4427 = vpop.f32.mrb[0].mxu0
      %v4428 = vadd.f32 %v4283, %v4427
      %v4429 = vpop.f32.mrb[0].mxu0
      %v4430 = vadd.f32 %v4285, %v4429
      %4431 = vdwg.mxu0
      %s4432 = scalar_lea.vmem %s3, 72
      %v4433 = vld [vmem:[%s4432] sm:$0xff]
      %v4435 = vsel %vm2339, %v4433, 0
      %4437 = vmatprep.subr.mxu0 %v4023
      %4438 = vmatpush1.msra.mxu0 %v4022
      %4439 = vmatprep.subr.mxu0 %v4039
      %4440 = vmatpush1.msra.mxu0 %v4038
      %4441 = vmatprep.subr.mxu0 %v4055
      %4442 = vmatpush1.msra.mxu0 %v4054
      %4443 = vmatprep.subr.mxu0 %v4071
      %4444 = vmatpush1.msra.mxu0 %v4070
      %4445 = vmatprep.subr.mxu0 %v4007
      %4446 = vmatpush1.msra.mxu0 %v4006
      %4447 = vmatprep.subr.mxu0 %v4087
      %4448 = vmatpush1.msra.mxu0 %v4086
      %4449 = vmatprep.subr.mxu0 %v4103
      %4450 = vmatpush1.msra.mxu0 %v4102
      %4451 = vmatprep.subr.mxu0 %v4119
      %4452 = vmatpush1.msra.mxu0 %v4118
      %4453 = vmatprep.subr.mxu0 %v4135
      %4454 = vmatpush1.msra.mxu0 %v4134
      %4455 = vmatprep.subr.mxu0 0.0
      %4456 = vmatpush1.msra.mxu0 0.0
      %4457 = vmatprep.subr.mxu0 0.0
      %4458 = vmatpush1.msra.mxu0 0.0
      %4459 = vmatprep.subr.mxu0 0.0
      %4460 = vmatpush1.msra.mxu0 0.0
      %4461 = vmatprep.subr.mxu0 0.0
      %4462 = vmatpush1.msra.mxu0 0.0
      %4463 = vmatprep.subr.mxu0 0.0
      %4464 = vmatpush1.msra.mxu0 0.0
      %4465 = vmatprep.subr.mxu0 0.0
      %4466 = vmatpush1.msra.mxu0 0.0
      %4467 = vmatprep.subr.mxu0 0.0
      %4468 = vmatpush1.msra.mxu0 0.0
      %4469 = vmatprep.subr.mxu0 0.0
      %4470 = vmatpush1.msra.mxu0 0.0
      %4471 = vmatprep.subr.mxu0 0.0
      %4472 = vmatpush1.msra.mxu0 0.0
      %4473 = vmatprep.subr.mxu0 0.0
      %4474 = vmatpush1.msra.mxu0 0.0
      %4475 = vmatprep.subr.mxu0 0.0
      %4476 = vmatpush1.msra.mxu0 0.0
      %4477 = vmatprep.subr.mxu0 0.0
      %4478 = vmatpush1.msra.mxu0 0.0
      %4479 = vmatprep.subr.mxu0 0.0
      %4480 = vmatpush1.msra.mxu0 0.0
      %4481 = vmatprep.subr.mxu0 0.0
      %4482 = vmatpush1.msra.mxu0 0.0
      %4483 = vmatprep.subr.mxu0 0.0
      %4484 = vmatpush1.msra.mxu0 0.0
      %4485 = vmatprep.subr.mxu0 0.0
      %4486 = vmatpush1.msra.mxu0 0.0
      %4487 = vmatprep.subr.mxu0 0.0
      %4488 = vmatpush1.msra.mxu0 0.0
      %4489 = vmatprep.subr.mxu0 0.0
      %4490 = vmatpush1.msra.mxu0 0.0
      %4491 = vmatprep.subr.mxu0 0.0
      %4492 = vmatpush1.msra.mxu0 0.0
      %4493 = vmatprep.subr.mxu0 0.0
      %4494 = vmatpush1.msra.mxu0 0.0
      %4495 = vmatprep.subr.mxu0 0.0
      %4496 = vmatpush1.msra.mxu0 0.0
      %4497 = vmatprep.subr.mxu0 0.0
      %4498 = vmatpush1.msra.mxu0 0.0
      %4499 = vmatprep.subr.mxu0 0.0
      %4500 = vmatpush1.msra.mxu0 0.0
      %4501 = vmatprep.mubr.f32.mxu0 0.0
      %4502 = vmatmul.mubr.f32.gmra.mrb[0].mxu0 %v4435
      %v4503 = vpop.f32.mrb[0].mxu0
      %v4504 = vadd.f32 0.0, %v4503
      %v4505 = vpop.f32.mrb[0].mxu0
      %v4506 = vadd.f32 0.0, %v4505
      %4507 = vdwg.mxu0
      %4508 = vmatprep.subr.mxu0 %v4025
      %4509 = vmatpush1.msra.mxu0 %v4024
      %4510 = vmatprep.subr.mxu0 %v4041
      %4511 = vmatpush1.msra.mxu0 %v4040
      %4512 = vmatprep.subr.mxu0 %v4057
      %4513 = vmatpush1.msra.mxu0 %v4056
      %4514 = vmatprep.subr.mxu0 %v4073
      %4515 = vmatpush1.msra.mxu0 %v4072
      %4516 = vmatprep.subr.mxu0 %v4009
      %4517 = vmatpush1.msra.mxu0 %v4008
      %4518 = vmatprep.subr.mxu0 %v4089
      %4519 = vmatpush1.msra.mxu0 %v4088
      %4520 = vmatprep.subr.mxu0 %v4105
      %4521 = vmatpush1.msra.mxu0 %v4104
      %4522 = vmatprep.subr.mxu0 %v4121
      %4523 = vmatpush1.msra.mxu0 %v4120
      %4524 = vmatprep.subr.mxu0 %v4137
      %4525 = vmatpush1.msra.mxu0 %v4136
      %4526 = vmatprep.subr.mxu0 0.0
      %4527 = vmatpush1.msra.mxu0 0.0
      %4528 = vmatprep.subr.mxu0 0.0
      %4529 = vmatpush1.msra.mxu0 0.0
      %4530 = vmatprep.subr.mxu0 0.0
      %4531 = vmatpush1.msra.mxu0 0.0
      %4532 = vmatprep.subr.mxu0 0.0
      %4533 = vmatpush1.msra.mxu0 0.0
      %4534 = vmatprep.subr.mxu0 0.0
      %4535 = vmatpush1.msra.mxu0 0.0
      %4536 = vmatprep.subr.mxu0 0.0
      %4537 = vmatpush1.msra.mxu0 0.0
      %4538 = vmatprep.subr.mxu0 0.0
      %4539 = vmatpush1.msra.mxu0 0.0
      %4540 = vmatprep.subr.mxu0 0.0
      %4541 = vmatpush1.msra.mxu0 0.0
      %4542 = vmatprep.subr.mxu0 0.0
      %4543 = vmatpush1.msra.mxu0 0.0
      %4544 = vmatprep.subr.mxu0 0.0
      %4545 = vmatpush1.msra.mxu0 0.0
      %4546 = vmatprep.subr.mxu0 0.0
      %4547 = vmatpush1.msra.mxu0 0.0
      %4548 = vmatprep.subr.mxu0 0.0
      %4549 = vmatpush1.msra.mxu0 0.0
      %4550 = vmatprep.subr.mxu0 0.0
      %4551 = vmatpush1.msra.mxu0 0.0
      %4552 = vmatprep.subr.mxu0 0.0
      %4553 = vmatpush1.msra.mxu0 0.0
      %4554 = vmatprep.subr.mxu0 0.0
      %4555 = vmatpush1.msra.mxu0 0.0
      %4556 = vmatprep.subr.mxu0 0.0
      %4557 = vmatpush1.msra.mxu0 0.0
      %4558 = vmatprep.subr.mxu0 0.0
      %4559 = vmatpush1.msra.mxu0 0.0
      %4560 = vmatprep.subr.mxu0 0.0
      %4561 = vmatpush1.msra.mxu0 0.0
      %4562 = vmatprep.subr.mxu0 0.0
      %4563 = vmatpush1.msra.mxu0 0.0
      %4564 = vmatprep.subr.mxu0 0.0
      %4565 = vmatpush1.msra.mxu0 0.0
      %4566 = vmatprep.subr.mxu0 0.0
      %4567 = vmatpush1.msra.mxu0 0.0
      %4568 = vmatprep.subr.mxu0 0.0
      %4569 = vmatpush1.msra.mxu0 0.0
      %4570 = vmatprep.subr.mxu0 0.0
      %4571 = vmatpush1.msra.mxu0 0.0
      %4572 = vmatprep.mubr.f32.mxu0 0.0
      %4573 = vmatmul.mubr.f32.gmra.mrb[0].mxu0 %v4435
      %v4574 = vpop.f32.mrb[0].mxu0
      %v4575 = vadd.f32 0.0, %v4574
      %v4576 = vpop.f32.mrb[0].mxu0
      %v4577 = vadd.f32 0.0, %v4576
      %4578 = vdwg.mxu0
      %v4579 = vadd.f32 %v4357, %v4504
      %v4580 = vadd.f32 %v4359, %v4506
      %v4581 = vadd.f32 %v4428, %v4575
      %v4582 = vadd.f32 %v4430, %v4577
      %s4583 = scalar_lea.vmem %s4, 48
      %v4584 = vld [vmem:[%s4583] sm:$0xff]
      %4586 = vset.pattern.permute.xlu0 0
      %4587 = vperm.xlu0 %4586, %v4584
      %v4588 = vpop.permute.xlu0 %4587
      %v4590 = vadd.f32 %v4579, %v4588
      %v4591 = vadd.f32 %v4580, %v4588
      %v4592 = vadd.f32 %v4581, %v4588
      %v4593 = vadd.f32 %v4582, %v4588
      %vm4594 = vcmp.ge.f32.partialorder %v4590, 0.0
      %vm4595 = vcmp.ge.f32.partialorder %v4591, 0.0
      %vm4596 = vcmp.ge.f32.partialorder %v4592, 0.0
      %vm4597 = vcmp.ge.f32.partialorder %v4593, 0.0
      %s4598 = scalar_lea.vmem %s5, 48
      %v4599 = vld [vmem:[%s4598] sm:$0xff]
      %4601 = vset.pattern.permute.xlu0 0
      %4602 = vperm.xlu0 %4601, %v4599
      %v4603 = vpop.permute.xlu0 %4602
      %v4605 = vmul.f32 %v4603, %v4590
      %v4606 = vmul.f32 %v4603, %v4591
      %v4607 = vmul.f32 %v4603, %v4592
      %v4608 = vmul.f32 %v4603, %v4593
      %v4609 = vsel %vm4594, %v4590, %v4605
      %v4610 = vsel %vm4595, %v4591, %v4606
      %v4611 = vsel %vm4596, %v4592, %v4607
      %v4612 = vsel %vm4597, %v4593, %v4608
      %4613 = vrot.lane.b32.xlu0 %v4609, 17
      %v4614 = vpop.permute.xlu0 %4613
      %4615 = vrot.lane.b32.xlu0 %v4610, 17
      %v4616 = vpop.permute.xlu0 %4615
      %4617 = vrot.lane.b32.xlu0 %v4611, 17
      %v4618 = vpop.permute.xlu0 %4617
      %4619 = vrot.lane.b32.xlu0 %v4612, 17
      %v4620 = vpop.permute.xlu0 %4619
      %v4621 = vsel %vm424, %v4618, %v4620
      %v4622 = vsel %vm424, %v4616, %v4618
      %v4623 = vsel %vm424, %v4614, %v4616
      %v4624 = vsel %vm424, %v4620, %v4614
      %v4625 = vmul.f32 %v4624, %v433
      %v4626 = vmul.f32 %v4623, %v437
      %v4627 = vmul.f32 %v4622, %v441
      %v4628 = vmul.f32 %v4621, %v445
      %4629 = vrot.lane.b32.xlu0 %v4609, 16
      %v4630 = vpop.permute.xlu0 %4629
      %4631 = vrot.lane.b32.xlu0 %v4610, 16
      %v4632 = vpop.permute.xlu0 %4631
      %4633 = vrot.lane.b32.xlu0 %v4611, 16
      %v4634 = vpop.permute.xlu0 %4633
      %4635 = vrot.lane.b32.xlu0 %v4612, 16
      %v4636 = vpop.permute.xlu0 %4635
      %v4637 = vsel %vm464, %v4634, %v4636
      %v4638 = vsel %vm464, %v4632, %v4634
      %v4639 = vsel %vm464, %v4630, %v4632
      %v4640 = vsel %vm464, %v4636, %v4630
      %v4641 = vmul.f32 %v4640, %v473
      %v4642 = vmul.f32 %v4639, %v477
      %v4643 = vmul.f32 %v4638, %v481
      %v4644 = vmul.f32 %v4637, %v485
      %4645 = vrot.lane.b32.xlu0 %v4609, 15
      %v4646 = vpop.permute.xlu0 %4645
      %4647 = vrot.lane.b32.xlu0 %v4610, 15
      %v4648 = vpop.permute.xlu0 %4647
      %4649 = vrot.lane.b32.xlu0 %v4611, 15
      %v4650 = vpop.permute.xlu0 %4649
      %4651 = vrot.lane.b32.xlu0 %v4612, 15
      %v4652 = vpop.permute.xlu0 %4651
      %v4653 = vsel %vm820, %v4650, %v4652
      %v4654 = vsel %vm820, %v4648, %v4650
      %v4655 = vsel %vm820, %v4646, %v4648
      %v4656 = vsel %vm820, %v4652, %v4646
      %v4657 = vmul.f32 %v4656, %v829
      %v4658 = vmul.f32 %v4655, %v833
      %v4659 = vmul.f32 %v4654, %v837
      %v4660 = vmul.f32 %v4653, %v841
      %4661 = vrot.lane.b32.xlu0 %v4609, 1
      %v4662 = vpop.permute.xlu0 %4661
      %4663 = vrot.lane.b32.xlu0 %v4610, 1
      %v4664 = vpop.permute.xlu0 %4663
      %4665 = vrot.lane.b32.xlu0 %v4611, 1
      %v4666 = vpop.permute.xlu0 %4665
      %4667 = vrot.lane.b32.xlu0 %v4612, 1
      %v4668 = vpop.permute.xlu0 %4667
      %v4669 = vsel %vm1021, %v4666, %v4668
      %v4670 = vsel %vm1021, %v4664, %v4666
      %v4671 = vsel %vm1021, %v4662, %v4664
      %v4672 = vsel %vm1021, %v4668, %v4662
      %v4673 = vmul.f32 %v4672, %v1030
      %v4674 = vmul.f32 %v4671, %v1034
      %v4675 = vmul.f32 %v4670, %v1038
      %v4676 = vmul.f32 %v4669, %v1042
      %4677 = vrot.lane.b32.xlu0 %v4609, 127
      %v4678 = vpop.permute.xlu0 %4677
      %4679 = vrot.lane.b32.xlu0 %v4610, 127
      %v4680 = vpop.permute.xlu0 %4679
      %4681 = vrot.lane.b32.xlu0 %v4611, 127
      %v4682 = vpop.permute.xlu0 %4681
      %4683 = vrot.lane.b32.xlu0 %v4612, 127
      %v4684 = vpop.permute.xlu0 %4683
      %v4685 = vsel %vm1381, %v4682, %v4684
      %v4686 = vsel %vm1381, %v4680, %v4682
      %v4687 = vsel %vm1381, %v4678, %v4680
      %v4688 = vsel %vm1381, %v4684, %v4678
      %v4689 = vmul.f32 %v4687, %v1390
      %v4690 = vmul.f32 %v4686, %v1394
      %v4691 = vmul.f32 %v4685, %v1398
      %v4692 = vmul.f32 %v4688, %v1402
      %4693 = vrot.lane.b32.xlu0 %v4609, 113
      %v4694 = vpop.permute.xlu0 %4693
      %4695 = vrot.lane.b32.xlu0 %v4610, 113
      %v4696 = vpop.permute.xlu0 %4695
      %4697 = vrot.lane.b32.xlu0 %v4611, 113
      %v4698 = vpop.permute.xlu0 %4697
      %4699 = vrot.lane.b32.xlu0 %v4612, 113
      %v4700 = vpop.permute.xlu0 %4699
      %v4701 = vsel %vm1582, %v4698, %v4700
      %v4702 = vsel %vm1582, %v4696, %v4698
      %v4703 = vsel %vm1582, %v4694, %v4696
      %v4704 = vsel %vm1582, %v4700, %v4694
      %v4705 = vmul.f32 %v4703, %v1591
      %v4706 = vmul.f32 %v4702, %v1595
      %v4707 = vmul.f32 %v4701, %v1599
      %v4708 = vmul.f32 %v4704, %v1603
      %4709 = vrot.lane.b32.xlu0 %v4609, 112
      %v4710 = vpop.permute.xlu0 %4709
      %4711 = vrot.lane.b32.xlu0 %v4610, 112
      %v4712 = vpop.permute.xlu0 %4711
      %4713 = vrot.lane.b32.xlu0 %v4611, 112
      %v4714 = vpop.permute.xlu0 %4713
      %4715 = vrot.lane.b32.xlu0 %v4612, 112
      %v4716 = vpop.permute.xlu0 %4715
      %v4717 = vsel %vm1783, %v4714, %v4716
      %v4718 = vsel %vm1783, %v4712, %v4714
      %v4719 = vsel %vm1783, %v4710, %v4712
      %v4720 = vsel %vm1783, %v4716, %v4710
      %v4721 = vmul.f32 %v4719, %v1792
      %v4722 = vmul.f32 %v4718, %v1796
      %v4723 = vmul.f32 %v4717, %v1800
      %v4724 = vmul.f32 %v4720, %v1804
      %4725 = vrot.lane.b32.xlu0 %v4609, 111
      %v4726 = vpop.permute.xlu0 %4725
      %4727 = vrot.lane.b32.xlu0 %v4610, 111
      %v4728 = vpop.permute.xlu0 %4727
      %4729 = vrot.lane.b32.xlu0 %v4611, 111
      %v4730 = vpop.permute.xlu0 %4729
      %4731 = vrot.lane.b32.xlu0 %v4612, 111
      %v4732 = vpop.permute.xlu0 %4731
      %v4733 = vsel %vm1984, %v4730, %v4732
      %v4734 = vsel %vm1984, %v4728, %v4730
      %v4735 = vsel %vm1984, %v4726, %v4728
      %v4736 = vsel %vm1984, %v4732, %v4726
      %v4737 = vmul.f32 %v4735, %v1993
      %v4738 = vmul.f32 %v4734, %v1997
      %v4739 = vmul.f32 %v4733, %v2001
      %v4740 = vmul.f32 %v4736, %v2005
      %s4741 = scalar_lea.vmem %s3, 80
      %v4742 = vld [vmem:[%s4741] sm:$0xff]
      %s4743 = scalar_lea.vmem %s4, 56
      %v4744 = vld [vmem:[%s4743] sm:$0xff]
      %4746 = vset.pattern.permute.xlu0 0
      %4747 = vperm.xlu0 %4746, %v4744
      %v4748 = vpop.permute.xlu0 %4747
      %v4751 = vsel %vm2339, %v4742, 0
      %4753 = vmatprep.subr.mxu0 %v4626
      %4754 = vmatpush1.msra.mxu0 %v4625
      %4755 = vmatprep.subr.mxu0 %v4642
      %4756 = vmatpush1.msra.mxu0 %v4641
      %4757 = vmatprep.subr.mxu0 %v4658
      %4758 = vmatpush1.msra.mxu0 %v4657
      %4759 = vmatprep.subr.mxu0 %v4674
      %4760 = vmatpush1.msra.mxu0 %v4673
      %4761 = vmatprep.subr.mxu0 %v4610
      %4762 = vmatpush1.msra.mxu0 %v4609
      %4763 = vmatprep.subr.mxu0 %v4690
      %4764 = vmatpush1.msra.mxu0 %v4689
      %4765 = vmatprep.subr.mxu0 %v4706
      %4766 = vmatpush1.msra.mxu0 %v4705
      %4767 = vmatprep.subr.mxu0 %v4722
      %4768 = vmatpush1.msra.mxu0 %v4721
      %4769 = vmatprep.subr.mxu0 %v4738
      %4770 = vmatpush1.msra.mxu0 %v4737
      %4771 = vmatprep.subr.mxu0 0.0
      %4772 = vmatpush1.msra.mxu0 0.0
      %4773 = vmatprep.subr.mxu0 0.0
      %4774 = vmatpush1.msra.mxu0 0.0
      %4775 = vmatprep.subr.mxu0 0.0
      %4776 = vmatpush1.msra.mxu0 0.0
      %4777 = vmatprep.subr.mxu0 0.0
      %4778 = vmatpush1.msra.mxu0 0.0
      %4779 = vmatprep.subr.mxu0 0.0
      %4780 = vmatpush1.msra.mxu0 0.0
      %4781 = vmatprep.subr.mxu0 0.0
      %4782 = vmatpush1.msra.mxu0 0.0
      %4783 = vmatprep.subr.mxu0 0.0
      %4784 = vmatpush1.msra.mxu0 0.0
      %4785 = vmatprep.subr.mxu0 0.0
      %4786 = vmatpush1.msra.mxu0 0.0
      %4787 = vmatprep.subr.mxu0 0.0
      %4788 = vmatpush1.msra.mxu0 0.0
      %4789 = vmatprep.subr.mxu0 0.0
      %4790 = vmatpush1.msra.mxu0 0.0
      %4791 = vmatprep.subr.mxu0 0.0
      %4792 = vmatpush1.msra.mxu0 0.0
      %4793 = vmatprep.subr.mxu0 0.0
      %4794 = vmatpush1.msra.mxu0 0.0
      %4795 = vmatprep.subr.mxu0 0.0
      %4796 = vmatpush1.msra.mxu0 0.0
      %4797 = vmatprep.subr.mxu0 0.0
      %4798 = vmatpush1.msra.mxu0 0.0
      %4799 = vmatprep.subr.mxu0 0.0
      %4800 = vmatpush1.msra.mxu0 0.0
      %4801 = vmatprep.subr.mxu0 0.0
      %4802 = vmatpush1.msra.mxu0 0.0
      %4803 = vmatprep.subr.mxu0 0.0
      %4804 = vmatpush1.msra.mxu0 0.0
      %4805 = vmatprep.subr.mxu0 0.0
      %4806 = vmatpush1.msra.mxu0 0.0
      %4807 = vmatprep.subr.mxu0 0.0
      %4808 = vmatpush1.msra.mxu0 0.0
      %4809 = vmatprep.subr.mxu0 0.0
      %4810 = vmatpush1.msra.mxu0 0.0
      %4811 = vmatprep.subr.mxu0 0.0
      %4812 = vmatpush1.msra.mxu0 0.0
      %4813 = vmatprep.subr.mxu0 0.0
      %4814 = vmatpush1.msra.mxu0 0.0
      %4815 = vmatprep.subr.mxu0 0.0
      %4816 = vmatpush1.msra.mxu0 0.0
      %4817 = vmatprep.mubr.f32.mxu0 0.0
      %4818 = vmatmul.mubr.f32.gmra.mrb[0].mxu0 %v4751
      %v4819 = vpop.f32.mrb[0].mxu0
      %v4820 = vadd.f32 %v4748, %v4819
      %v4821 = vpop.f32.mrb[0].mxu0
      %v4822 = vadd.f32 %v4748, %v4821
      %4823 = vdwg.mxu0
      %4824 = vmatprep.subr.mxu0 %v4628
      %4825 = vmatpush1.msra.mxu0 %v4627
      %4826 = vmatprep.subr.mxu0 %v4644
      %4827 = vmatpush1.msra.mxu0 %v4643
      %4828 = vmatprep.subr.mxu0 %v4660
      %4829 = vmatpush1.msra.mxu0 %v4659
      %4830 = vmatprep.subr.mxu0 %v4676
      %4831 = vmatpush1.msra.mxu0 %v4675
      %4832 = vmatprep.subr.mxu0 %v4612
      %4833 = vmatpush1.msra.mxu0 %v4611
      %4834 = vmatprep.subr.mxu0 %v4692
      %4835 = vmatpush1.msra.mxu0 %v4691
      %4836 = vmatprep.subr.mxu0 %v4708
      %4837 = vmatpush1.msra.mxu0 %v4707
      %4838 = vmatprep.subr.mxu0 %v4724
      %4839 = vmatpush1.msra.mxu0 %v4723
      %4840 = vmatprep.subr.mxu0 %v4740
      %4841 = vmatpush1.msra.mxu0 %v4739
      %4842 = vmatprep.subr.mxu0 0.0
      %4843 = vmatpush1.msra.mxu0 0.0
      %4844 = vmatprep.subr.mxu0 0.0
      %4845 = vmatpush1.msra.mxu0 0.0
      %4846 = vmatprep.subr.mxu0 0.0
      %4847 = vmatpush1.msra.mxu0 0.0
      %4848 = vmatprep.subr.mxu0 0.0
      %4849 = vmatpush1.msra.mxu0 0.0
      %4850 = vmatprep.subr.mxu0 0.0
      %4851 = vmatpush1.msra.mxu0 0.0
      %4852 = vmatprep.subr.mxu0 0.0
      %4853 = vmatpush1.msra.mxu0 0.0
      %4854 = vmatprep.subr.mxu0 0.0
      %4855 = vmatpush1.msra.mxu0 0.0
      %4856 = vmatprep.subr.mxu0 0.0
      %4857 = vmatpush1.msra.mxu0 0.0
      %4858 = vmatprep.subr.mxu0 0.0
      %4859 = vmatpush1.msra.mxu0 0.0
      %4860 = vmatprep.subr.mxu0 0.0
      %4861 = vmatpush1.msra.mxu0 0.0
      %4862 = vmatprep.subr.mxu0 0.0
      %4863 = vmatpush1.msra.mxu0 0.0
      %4864 = vmatprep.subr.mxu0 0.0
      %4865 = vmatpush1.msra.mxu0 0.0
      %4866 = vmatprep.subr.mxu0 0.0
      %4867 = vmatpush1.msra.mxu0 0.0
      %4868 = vmatprep.subr.mxu0 0.0
      %4869 = vmatpush1.msra.mxu0 0.0
      %4870 = vmatprep.subr.mxu0 0.0
      %4871 = vmatpush1.msra.mxu0 0.0
      %4872 = vmatprep.subr.mxu0 0.0
      %4873 = vmatpush1.msra.mxu0 0.0
      %4874 = vmatprep.subr.mxu0 0.0
      %4875 = vmatpush1.msra.mxu0 0.0
      %4876 = vmatprep.subr.mxu0 0.0
      %4877 = vmatpush1.msra.mxu0 0.0
      %4878 = vmatprep.subr.mxu0 0.0
      %4879 = vmatpush1.msra.mxu0 0.0
      %4880 = vmatprep.subr.mxu0 0.0
      %4881 = vmatpush1.msra.mxu0 0.0
      %4882 = vmatprep.subr.mxu0 0.0
      %4883 = vmatpush1.msra.mxu0 0.0
      %4884 = vmatprep.subr.mxu0 0.0
      %4885 = vmatpush1.msra.mxu0 0.0
      %4886 = vmatprep.subr.mxu0 0.0
      %4887 = vmatpush1.msra.mxu0 0.0
      %4888 = vmatprep.mubr.f32.mxu0 0.0
      %4889 = vmatmul.mubr.f32.gmra.mrb[0].mxu0 %v4751
      %v4890 = vpop.f32.mrb[0].mxu0
      %v4891 = vadd.f32 %v4748, %v4890
      %v4892 = vpop.f32.mrb[0].mxu0
      %v4893 = vadd.f32 %v4748, %v4892
      %4894 = vdwg.mxu0
      %vm4895 = vcmp.ge.f32.partialorder %v4820, 0.0
      %vm4896 = vcmp.ge.f32.partialorder %v4822, 0.0
      %vm4897 = vcmp.ge.f32.partialorder %v4891, 0.0
      %vm4898 = vcmp.ge.f32.partialorder %v4893, 0.0
      %s4899 = scalar_lea.vmem %s5, 56
      %v4900 = vld [vmem:[%s4899] sm:$0xff]
      %4902 = vset.pattern.permute.xlu0 0
      %4903 = vperm.xlu0 %4902, %v4900
      %v4904 = vpop.permute.xlu0 %4903
      %v4906 = vmul.f32 %v4904, %v4820
      %v4907 = vmul.f32 %v4904, %v4822
      %v4908 = vmul.f32 %v4904, %v4891
      %v4909 = vmul.f32 %v4904, %v4893
      %v4910 = vsel %vm4895, %v4820, %v4906
      %v4911 = vsel %vm4896, %v4822, %v4907
      %v4912 = vsel %vm4897, %v4891, %v4908
      %v4913 = vsel %vm4898, %v4893, %v4909
      %4914 = vrot.lane.b32.xlu0 %v4910, 17
      %v4915 = vpop.permute.xlu0 %4914
      %4916 = vrot.lane.b32.xlu0 %v4911, 17
      %v4917 = vpop.permute.xlu0 %4916
      %4918 = vrot.lane.b32.xlu0 %v4912, 17
      %v4919 = vpop.permute.xlu0 %4918
      %4920 = vrot.lane.b32.xlu0 %v4913, 17
      %v4921 = vpop.permute.xlu0 %4920
      %v4922 = vsel %vm424, %v4919, %v4921
      %v4923 = vsel %vm424, %v4917, %v4919
      %v4924 = vsel %vm424, %v4915, %v4917
      %v4925 = vsel %vm424, %v4921, %v4915
      %v4926 = vmul.f32 %v4925, %v433
      %v4927 = vmul.f32 %v4924, %v437
      %v4928 = vmul.f32 %v4923, %v441
      %v4929 = vmul.f32 %v4922, %v445
      %4930 = vrot.lane.b32.xlu0 %v4910, 16
      %v4931 = vpop.permute.xlu0 %4930
      %4932 = vrot.lane.b32.xlu0 %v4911, 16
      %v4933 = vpop.permute.xlu0 %4932
      %4934 = vrot.lane.b32.xlu0 %v4912, 16
      %v4935 = vpop.permute.xlu0 %4934
      %4936 = vrot.lane.b32.xlu0 %v4913, 16
      %v4937 = vpop.permute.xlu0 %4936
      %v4938 = vsel %vm464, %v4935, %v4937
      %v4939 = vsel %vm464, %v4933, %v4935
      %v4940 = vsel %vm464, %v4931, %v4933
      %v4941 = vsel %vm464, %v4937, %v4931
      %v4942 = vmul.f32 %v4941, %v473
      %v4943 = vmul.f32 %v4940, %v477
      %v4944 = vmul.f32 %v4939, %v481
      %v4945 = vmul.f32 %v4938, %v485
      %4946 = vrot.lane.b32.xlu0 %v4910, 15
      %v4947 = vpop.permute.xlu0 %4946
      %4948 = vrot.lane.b32.xlu0 %v4911, 15
      %v4949 = vpop.permute.xlu0 %4948
      %4950 = vrot.lane.b32.xlu0 %v4912, 15
      %v4951 = vpop.permute.xlu0 %4950
      %4952 = vrot.lane.b32.xlu0 %v4913, 15
      %v4953 = vpop.permute.xlu0 %4952
      %v4954 = vsel %vm820, %v4951, %v4953
      %v4955 = vsel %vm820, %v4949, %v4951
      %v4956 = vsel %vm820, %v4947, %v4949
      %v4957 = vsel %vm820, %v4953, %v4947
      %v4958 = vmul.f32 %v4957, %v829
      %v4959 = vmul.f32 %v4956, %v833
      %v4960 = vmul.f32 %v4955, %v837
      %v4961 = vmul.f32 %v4954, %v841
      %4962 = vrot.lane.b32.xlu0 %v4910, 1
      %v4963 = vpop.permute.xlu0 %4962
      %4964 = vrot.lane.b32.xlu0 %v4911, 1
      %v4965 = vpop.permute.xlu0 %4964
      %4966 = vrot.lane.b32.xlu0 %v4912, 1
      %v4967 = vpop.permute.xlu0 %4966
      %4968 = vrot.lane.b32.xlu0 %v4913, 1
      %v4969 = vpop.permute.xlu0 %4968
      %v4970 = vsel %vm1021, %v4967, %v4969
      %v4971 = vsel %vm1021, %v4965, %v4967
      %v4972 = vsel %vm1021, %v4963, %v4965
      %v4973 = vsel %vm1021, %v4969, %v4963
      %v4974 = vmul.f32 %v4973, %v1030
      %v4975 = vmul.f32 %v4972, %v1034
      %v4976 = vmul.f32 %v4971, %v1038
      %v4977 = vmul.f32 %v4970, %v1042
      %4978 = vrot.lane.b32.xlu0 %v4910, 127
      %v4979 = vpop.permute.xlu0 %4978
      %4980 = vrot.lane.b32.xlu0 %v4911, 127
      %v4981 = vpop.permute.xlu0 %4980
      %4982 = vrot.lane.b32.xlu0 %v4912, 127
      %v4983 = vpop.permute.xlu0 %4982
      %4984 = vrot.lane.b32.xlu0 %v4913, 127
      %v4985 = vpop.permute.xlu0 %4984
      %v4986 = vsel %vm1381, %v4983, %v4985
      %v4987 = vsel %vm1381, %v4981, %v4983
      %v4988 = vsel %vm1381, %v4979, %v4981
      %v4989 = vsel %vm1381, %v4985, %v4979
      %v4990 = vmul.f32 %v4988, %v1390
      %v4991 = vmul.f32 %v4987, %v1394
      %v4992 = vmul.f32 %v4986, %v1398
      %v4993 = vmul.f32 %v4989, %v1402
      %4994 = vrot.lane.b32.xlu0 %v4910, 113
      %v4995 = vpop.permute.xlu0 %4994
      %4996 = vrot.lane.b32.xlu0 %v4911, 113
      %v4997 = vpop.permute.xlu0 %4996
      %4998 = vrot.lane.b32.xlu0 %v4912, 113
      %v4999 = vpop.permute.xlu0 %4998
      %5000 = vrot.lane.b32.xlu0 %v4913, 113
      %v5001 = vpop.permute.xlu0 %5000
      %v5002 = vsel %vm1582, %v4999, %v5001
      %v5003 = vsel %vm1582, %v4997, %v4999
      %v5004 = vsel %vm1582, %v4995, %v4997
      %v5005 = vsel %vm1582, %v5001, %v4995
      %v5006 = vmul.f32 %v5004, %v1591
      %v5007 = vmul.f32 %v5003, %v1595
      %v5008 = vmul.f32 %v5002, %v1599
      %v5009 = vmul.f32 %v5005, %v1603
      %5010 = vrot.lane.b32.xlu0 %v4910, 112
      %v5011 = vpop.permute.xlu0 %5010
      %5012 = vrot.lane.b32.xlu0 %v4911, 112
      %v5013 = vpop.permute.xlu0 %5012
      %5014 = vrot.lane.b32.xlu0 %v4912, 112
      %v5015 = vpop.permute.xlu0 %5014
      %5016 = vrot.lane.b32.xlu0 %v4913, 112
      %v5017 = vpop.permute.xlu0 %5016
      %v5018 = vsel %vm1783, %v5015, %v5017
      %v5019 = vsel %vm1783, %v5013, %v5015
      %v5020 = vsel %vm1783, %v5011, %v5013
      %v5021 = vsel %vm1783, %v5017, %v5011
      %v5022 = vmul.f32 %v5020, %v1792
      %v5023 = vmul.f32 %v5019, %v1796
      %v5024 = vmul.f32 %v5018, %v1800
      %v5025 = vmul.f32 %v5021, %v1804
      %5026 = vrot.lane.b32.xlu0 %v4910, 111
      %v5027 = vpop.permute.xlu0 %5026
      %5028 = vrot.lane.b32.xlu0 %v4911, 111
      %v5029 = vpop.permute.xlu0 %5028
      %5030 = vrot.lane.b32.xlu0 %v4912, 111
      %v5031 = vpop.permute.xlu0 %5030
      %5032 = vrot.lane.b32.xlu0 %v4913, 111
      %v5033 = vpop.permute.xlu0 %5032
      %v5034 = vsel %vm1984, %v5031, %v5033
      %v5035 = vsel %vm1984, %v5029, %v5031
      %v5036 = vsel %vm1984, %v5027, %v5029
      %v5037 = vsel %vm1984, %v5033, %v5027
      %v5038 = vmul.f32 %v5036, %v1993
      %v5039 = vmul.f32 %v5035, %v1997
      %v5040 = vmul.f32 %v5034, %v2001
      %v5041 = vmul.f32 %v5037, %v2005
      %s5042 = scalar_lea.vmem %s3, 88
      %v5043 = vld [vmem:[%s5042] sm:$0xff]
      %s5044 = scalar_lea.vmem %s4, 64
      %v5045 = vld [vmem:[%s5044] sm:$0xff]
      %5047 = vset.pattern.permute.xlu0 0
      %5048 = vperm.xlu0 %5047, %v5045
      %v5049 = vpop.permute.xlu0 %5048
      %v5052 = vsel %vm2339, %v5043, 0
      %5054 = vmatprep.subr.mxu0 %v4927
      %5055 = vmatpush1.msra.mxu0 %v4926
      %5056 = vmatprep.subr.mxu0 %v4943
      %5057 = vmatpush1.msra.mxu0 %v4942
      %5058 = vmatprep.subr.mxu0 %v4959
      %5059 = vmatpush1.msra.mxu0 %v4958
      %5060 = vmatprep.subr.mxu0 %v4975
      %5061 = vmatpush1.msra.mxu0 %v4974
      %5062 = vmatprep.subr.mxu0 %v4911
      %5063 = vmatpush1.msra.mxu0 %v4910
      %5064 = vmatprep.subr.mxu0 %v4991
      %5065 = vmatpush1.msra.mxu0 %v4990
      %5066 = vmatprep.subr.mxu0 %v5007
      %5067 = vmatpush1.msra.mxu0 %v5006
      %5068 = vmatprep.subr.mxu0 %v5023
      %5069 = vmatpush1.msra.mxu0 %v5022
      %5070 = vmatprep.subr.mxu0 %v5039
      %5071 = vmatpush1.msra.mxu0 %v5038
      %5072 = vmatprep.subr.mxu0 0.0
      %5073 = vmatpush1.msra.mxu0 0.0
      %5074 = vmatprep.subr.mxu0 0.0
      %5075 = vmatpush1.msra.mxu0 0.0
      %5076 = vmatprep.subr.mxu0 0.0
      %5077 = vmatpush1.msra.mxu0 0.0
      %5078 = vmatprep.subr.mxu0 0.0
      %5079 = vmatpush1.msra.mxu0 0.0
      %5080 = vmatprep.subr.mxu0 0.0
      %5081 = vmatpush1.msra.mxu0 0.0
      %5082 = vmatprep.subr.mxu0 0.0
      %5083 = vmatpush1.msra.mxu0 0.0
      %5084 = vmatprep.subr.mxu0 0.0
      %5085 = vmatpush1.msra.mxu0 0.0
      %5086 = vmatprep.subr.mxu0 0.0
      %5087 = vmatpush1.msra.mxu0 0.0
      %5088 = vmatprep.subr.mxu0 0.0
      %5089 = vmatpush1.msra.mxu0 0.0
      %5090 = vmatprep.subr.mxu0 0.0
      %5091 = vmatpush1.msra.mxu0 0.0
      %5092 = vmatprep.subr.mxu0 0.0
      %5093 = vmatpush1.msra.mxu0 0.0
      %5094 = vmatprep.subr.mxu0 0.0
      %5095 = vmatpush1.msra.mxu0 0.0
      %5096 = vmatprep.subr.mxu0 0.0
      %5097 = vmatpush1.msra.mxu0 0.0
      %5098 = vmatprep.subr.mxu0 0.0
      %5099 = vmatpush1.msra.mxu0 0.0
      %5100 = vmatprep.subr.mxu0 0.0
      %5101 = vmatpush1.msra.mxu0 0.0
      %5102 = vmatprep.subr.mxu0 0.0
      %5103 = vmatpush1.msra.mxu0 0.0
      %5104 = vmatprep.subr.mxu0 0.0
      %5105 = vmatpush1.msra.mxu0 0.0
      %5106 = vmatprep.subr.mxu0 0.0
      %5107 = vmatpush1.msra.mxu0 0.0
      %5108 = vmatprep.subr.mxu0 0.0
      %5109 = vmatpush1.msra.mxu0 0.0
      %5110 = vmatprep.subr.mxu0 0.0
      %5111 = vmatpush1.msra.mxu0 0.0
      %5112 = vmatprep.subr.mxu0 0.0
      %5113 = vmatpush1.msra.mxu0 0.0
      %5114 = vmatprep.subr.mxu0 0.0
      %5115 = vmatpush1.msra.mxu0 0.0
      %5116 = vmatprep.subr.mxu0 0.0
      %5117 = vmatpush1.msra.mxu0 0.0
      %5118 = vmatprep.mubr.f32.mxu0 0.0
      %5119 = vmatmul.mubr.f32.gmra.mrb[0].mxu0 %v5052
      %v5120 = vpop.f32.mrb[0].mxu0
      %v5121 = vadd.f32 %v5049, %v5120
      %v5122 = vpop.f32.mrb[0].mxu0
      %v5123 = vadd.f32 %v5049, %v5122
      %5124 = vdwg.mxu0
      %5125 = vmatprep.subr.mxu0 %v4929
      %5126 = vmatpush1.msra.mxu0 %v4928
      %5127 = vmatprep.subr.mxu0 %v4945
      %5128 = vmatpush1.msra.mxu0 %v4944
      %5129 = vmatprep.subr.mxu0 %v4961
      %5130 = vmatpush1.msra.mxu0 %v4960
      %5131 = vmatprep.subr.mxu0 %v4977
      %5132 = vmatpush1.msra.mxu0 %v4976
      %5133 = vmatprep.subr.mxu0 %v4913
      %5134 = vmatpush1.msra.mxu0 %v4912
      %5135 = vmatprep.subr.mxu0 %v4993
      %5136 = vmatpush1.msra.mxu0 %v4992
      %5137 = vmatprep.subr.mxu0 %v5009
      %5138 = vmatpush1.msra.mxu0 %v5008
      %5139 = vmatprep.subr.mxu0 %v5025
      %5140 = vmatpush1.msra.mxu0 %v5024
      %5141 = vmatprep.subr.mxu0 %v5041
      %5142 = vmatpush1.msra.mxu0 %v5040
      %5143 = vmatprep.subr.mxu0 0.0
      %5144 = vmatpush1.msra.mxu0 0.0
      %5145 = vmatprep.subr.mxu0 0.0
      %5146 = vmatpush1.msra.mxu0 0.0
      %5147 = vmatprep.subr.mxu0 0.0
      %5148 = vmatpush1.msra.mxu0 0.0
      %5149 = vmatprep.subr.mxu0 0.0
      %5150 = vmatpush1.msra.mxu0 0.0
      %5151 = vmatprep.subr.mxu0 0.0
      %5152 = vmatpush1.msra.mxu0 0.0
      %5153 = vmatprep.subr.mxu0 0.0
      %5154 = vmatpush1.msra.mxu0 0.0
      %5155 = vmatprep.subr.mxu0 0.0
      %5156 = vmatpush1.msra.mxu0 0.0
      %5157 = vmatprep.subr.mxu0 0.0
      %5158 = vmatpush1.msra.mxu0 0.0
      %5159 = vmatprep.subr.mxu0 0.0
      %5160 = vmatpush1.msra.mxu0 0.0
      %5161 = vmatprep.subr.mxu0 0.0
      %5162 = vmatpush1.msra.mxu0 0.0
      %5163 = vmatprep.subr.mxu0 0.0
      %5164 = vmatpush1.msra.mxu0 0.0
      %5165 = vmatprep.subr.mxu0 0.0
      %5166 = vmatpush1.msra.mxu0 0.0
      %5167 = vmatprep.subr.mxu0 0.0
      %5168 = vmatpush1.msra.mxu0 0.0
      %5169 = vmatprep.subr.mxu0 0.0
      %5170 = vmatpush1.msra.mxu0 0.0
      %5171 = vmatprep.subr.mxu0 0.0
      %5172 = vmatpush1.msra.mxu0 0.0
      %5173 = vmatprep.subr.mxu0 0.0
      %5174 = vmatpush1.msra.mxu0 0.0
      %5175 = vmatprep.subr.mxu0 0.0
      %5176 = vmatpush1.msra.mxu0 0.0
      %5177 = vmatprep.subr.mxu0 0.0
      %5178 = vmatpush1.msra.mxu0 0.0
      %5179 = vmatprep.subr.mxu0 0.0
      %5180 = vmatpush1.msra.mxu0 0.0
      %5181 = vmatprep.subr.mxu0 0.0
      %5182 = vmatpush1.msra.mxu0 0.0
      %5183 = vmatprep.subr.mxu0 0.0
      %5184 = vmatpush1.msra.mxu0 0.0
      %5185 = vmatprep.subr.mxu0 0.0
      %5186 = vmatpush1.msra.mxu0 0.0
      %5187 = vmatprep.subr.mxu0 0.0
      %5188 = vmatpush1.msra.mxu0 0.0
      %5189 = vmatprep.mubr.f32.mxu0 0.0
      %5190 = vmatmul.mubr.f32.gmra.mrb[0].mxu0 %v5052
      %v5191 = vpop.f32.mrb[0].mxu0
      %v5192 = vadd.f32 %v5049, %v5191
      %v5193 = vpop.f32.mrb[0].mxu0
      %v5194 = vadd.f32 %v5049, %v5193
      %5195 = vdwg.mxu0
      %vm5196 = vcmp.ge.f32.partialorder %v5121, 0.0
      %vm5197 = vcmp.ge.f32.partialorder %v5123, 0.0
      %vm5198 = vcmp.ge.f32.partialorder %v5192, 0.0
      %vm5199 = vcmp.ge.f32.partialorder %v5194, 0.0
      %s5200 = scalar_lea.vmem %s5, 64
      %v5201 = vld [vmem:[%s5200] sm:$0xff]
      %5203 = vset.pattern.permute.xlu0 0
      %5204 = vperm.xlu0 %5203, %v5201
      %v5205 = vpop.permute.xlu0 %5204
      %v5207 = vmul.f32 %v5205, %v5121
      %v5208 = vmul.f32 %v5205, %v5123
      %v5209 = vmul.f32 %v5205, %v5192
      %v5210 = vmul.f32 %v5205, %v5194
      %v5211 = vsel %vm5196, %v5121, %v5207
      %v5212 = vsel %vm5197, %v5123, %v5208
      %v5213 = vsel %vm5198, %v5192, %v5209
      %v5214 = vsel %vm5199, %v5194, %v5210
      %5215 = vrot.lane.b32.xlu0 %v5211, 17
      %v5216 = vpop.permute.xlu0 %5215
      %5217 = vrot.lane.b32.xlu0 %v5212, 17
      %v5218 = vpop.permute.xlu0 %5217
      %5219 = vrot.lane.b32.xlu0 %v5213, 17
      %v5220 = vpop.permute.xlu0 %5219
      %5221 = vrot.lane.b32.xlu0 %v5214, 17
      %v5222 = vpop.permute.xlu0 %5221
      %v5223 = vsel %vm424, %v5220, %v5222
      %v5224 = vsel %vm424, %v5218, %v5220
      %v5225 = vsel %vm424, %v5216, %v5218
      %v5226 = vsel %vm424, %v5222, %v5216
      %v5227 = vmul.f32 %v5226, %v433
      %v5228 = vmul.f32 %v5225, %v437
      %v5229 = vmul.f32 %v5224, %v441
      %v5230 = vmul.f32 %v5223, %v445
      %5231 = vrot.lane.b32.xlu0 %v5211, 16
      %v5232 = vpop.permute.xlu0 %5231
      %5233 = vrot.lane.b32.xlu0 %v5212, 16
      %v5234 = vpop.permute.xlu0 %5233
      %5235 = vrot.lane.b32.xlu0 %v5213, 16
      %v5236 = vpop.permute.xlu0 %5235
      %5237 = vrot.lane.b32.xlu0 %v5214, 16
      %v5238 = vpop.permute.xlu0 %5237
      %v5239 = vsel %vm464, %v5236, %v5238
      %v5240 = vsel %vm464, %v5234, %v5236
      %v5241 = vsel %vm464, %v5232, %v5234
      %v5242 = vsel %vm464, %v5238, %v5232
      %v5243 = vmul.f32 %v5242, %v473
      %v5244 = vmul.f32 %v5241, %v477
      %v5245 = vmul.f32 %v5240, %v481
      %v5246 = vmul.f32 %v5239, %v485
      %5247 = vrot.lane.b32.xlu0 %v5211, 15
      %v5248 = vpop.permute.xlu0 %5247
      %5249 = vrot.lane.b32.xlu0 %v5212, 15
      %v5250 = vpop.permute.xlu0 %5249
      %5251 = vrot.lane.b32.xlu0 %v5213, 15
      %v5252 = vpop.permute.xlu0 %5251
      %5253 = vrot.lane.b32.xlu0 %v5214, 15
      %v5254 = vpop.permute.xlu0 %5253
      %v5255 = vsel %vm820, %v5252, %v5254
      %v5256 = vsel %vm820, %v5250, %v5252
      %v5257 = vsel %vm820, %v5248, %v5250
      %v5258 = vsel %vm820, %v5254, %v5248
      %v5259 = vmul.f32 %v5258, %v829
      %v5260 = vmul.f32 %v5257, %v833
      %v5261 = vmul.f32 %v5256, %v837
      %v5262 = vmul.f32 %v5255, %v841
      %5263 = vrot.lane.b32.xlu0 %v5211, 1
      %v5264 = vpop.permute.xlu0 %5263
      %5265 = vrot.lane.b32.xlu0 %v5212, 1
      %v5266 = vpop.permute.xlu0 %5265
      %5267 = vrot.lane.b32.xlu0 %v5213, 1
      %v5268 = vpop.permute.xlu0 %5267
      %5269 = vrot.lane.b32.xlu0 %v5214, 1
      %v5270 = vpop.permute.xlu0 %5269
      %v5271 = vsel %vm1021, %v5268, %v5270
      %v5272 = vsel %vm1021, %v5266, %v5268
      %v5273 = vsel %vm1021, %v5264, %v5266
      %v5274 = vsel %vm1021, %v5270, %v5264
      %v5275 = vmul.f32 %v5274, %v1030
      %v5276 = vmul.f32 %v5273, %v1034
      %v5277 = vmul.f32 %v5272, %v1038
      %v5278 = vmul.f32 %v5271, %v1042
      %5279 = vrot.lane.b32.xlu0 %v5211, 127
      %v5280 = vpop.permute.xlu0 %5279
      %5281 = vrot.lane.b32.xlu0 %v5212, 127
      %v5282 = vpop.permute.xlu0 %5281
      %5283 = vrot.lane.b32.xlu0 %v5213, 127
      %v5284 = vpop.permute.xlu0 %5283
      %5285 = vrot.lane.b32.xlu0 %v5214, 127
      %v5286 = vpop.permute.xlu0 %5285
      %v5287 = vsel %vm1381, %v5284, %v5286
      %v5288 = vsel %vm1381, %v5282, %v5284
      %v5289 = vsel %vm1381, %v5280, %v5282
      %v5290 = vsel %vm1381, %v5286, %v5280
      %v5291 = vmul.f32 %v5289, %v1390
      %v5292 = vmul.f32 %v5288, %v1394
      %v5293 = vmul.f32 %v5287, %v1398
      %v5294 = vmul.f32 %v5290, %v1402
      %5295 = vrot.lane.b32.xlu0 %v5211, 113
      %v5296 = vpop.permute.xlu0 %5295
      %5297 = vrot.lane.b32.xlu0 %v5212, 113
      %v5298 = vpop.permute.xlu0 %5297
      %5299 = vrot.lane.b32.xlu0 %v5213, 113
      %v5300 = vpop.permute.xlu0 %5299
      %5301 = vrot.lane.b32.xlu0 %v5214, 113
      %v5302 = vpop.permute.xlu0 %5301
      %v5303 = vsel %vm1582, %v5300, %v5302
      %v5304 = vsel %vm1582, %v5298, %v5300
      %v5305 = vsel %vm1582, %v5296, %v5298
      %v5306 = vsel %vm1582, %v5302, %v5296
      %v5307 = vmul.f32 %v5305, %v1591
      %v5308 = vmul.f32 %v5304, %v1595
      %v5309 = vmul.f32 %v5303, %v1599
      %v5310 = vmul.f32 %v5306, %v1603
      %5311 = vrot.lane.b32.xlu0 %v5211, 112
      %v5312 = vpop.permute.xlu0 %5311
      %5313 = vrot.lane.b32.xlu0 %v5212, 112
      %v5314 = vpop.permute.xlu0 %5313
      %5315 = vrot.lane.b32.xlu0 %v5213, 112
      %v5316 = vpop.permute.xlu0 %5315
      %5317 = vrot.lane.b32.xlu0 %v5214, 112
      %v5318 = vpop.permute.xlu0 %5317
      %v5319 = vsel %vm1783, %v5316, %v5318
      %v5320 = vsel %vm1783, %v5314, %v5316
      %v5321 = vsel %vm1783, %v5312, %v5314
      %v5322 = vsel %vm1783, %v5318, %v5312
      %v5323 = vmul.f32 %v5321, %v1792
      %v5324 = vmul.f32 %v5320, %v1796
      %v5325 = vmul.f32 %v5319, %v1800
      %v5326 = vmul.f32 %v5322, %v1804
      %5327 = vrot.lane.b32.xlu0 %v5211, 111
      %v5328 = vpop.permute.xlu0 %5327
      %5329 = vrot.lane.b32.xlu0 %v5212, 111
      %v5330 = vpop.permute.xlu0 %5329
      %5331 = vrot.lane.b32.xlu0 %v5213, 111
      %v5332 = vpop.permute.xlu0 %5331
      %5333 = vrot.lane.b32.xlu0 %v5214, 111
      %v5334 = vpop.permute.xlu0 %5333
      %v5335 = vsel %vm1984, %v5332, %v5334
      %v5336 = vsel %vm1984, %v5330, %v5332
      %v5337 = vsel %vm1984, %v5328, %v5330
      %v5338 = vsel %vm1984, %v5334, %v5328
      %v5339 = vmul.f32 %v5337, %v1993
      %v5340 = vmul.f32 %v5336, %v1997
      %v5341 = vmul.f32 %v5335, %v2001
      %v5342 = vmul.f32 %v5338, %v2005
      %s5343 = scalar_lea.vmem %s3, 96
      %v5344 = vld [vmem:[%s5343] sm:$0xff]
      %s5345 = scalar_lea.vmem %s3, 104
      %v5346 = vld [vmem:[%s5345] sm:$0xff]
      %v5348 = vsel %vm2339, %v5346, 0
      %5350 = vmatprep.subr.mxu0 %v4927
      %5351 = vmatpush1.msra.mxu0 %v4926
      %5352 = vmatprep.subr.mxu0 %v4943
      %5353 = vmatpush1.msra.mxu0 %v4942
      %5354 = vmatprep.subr.mxu0 %v4959
      %5355 = vmatpush1.msra.mxu0 %v4958
      %5356 = vmatprep.subr.mxu0 %v4975
      %5357 = vmatpush1.msra.mxu0 %v4974
      %5358 = vmatprep.subr.mxu0 %v4911
      %5359 = vmatpush1.msra.mxu0 %v4910
      %5360 = vmatprep.subr.mxu0 %v4991
      %5361 = vmatpush1.msra.mxu0 %v4990
      %5362 = vmatprep.subr.mxu0 %v5007
      %5363 = vmatpush1.msra.mxu0 %v5006
      %5364 = vmatprep.subr.mxu0 %v5023
      %5365 = vmatpush1.msra.mxu0 %v5022
      %5366 = vmatprep.subr.mxu0 %v5039
      %5367 = vmatpush1.msra.mxu0 %v5038
      %5368 = vmatprep.subr.mxu0 0.0
      %5369 = vmatpush1.msra.mxu0 0.0
      %5370 = vmatprep.subr.mxu0 0.0
      %5371 = vmatpush1.msra.mxu0 0.0
      %5372 = vmatprep.subr.mxu0 0.0
      %5373 = vmatpush1.msra.mxu0 0.0
      %5374 = vmatprep.subr.mxu0 0.0
      %5375 = vmatpush1.msra.mxu0 0.0
      %5376 = vmatprep.subr.mxu0 0.0
      %5377 = vmatpush1.msra.mxu0 0.0
      %5378 = vmatprep.subr.mxu0 0.0
      %5379 = vmatpush1.msra.mxu0 0.0
      %5380 = vmatprep.subr.mxu0 0.0
      %5381 = vmatpush1.msra.mxu0 0.0
      %5382 = vmatprep.subr.mxu0 0.0
      %5383 = vmatpush1.msra.mxu0 0.0
      %5384 = vmatprep.subr.mxu0 0.0
      %5385 = vmatpush1.msra.mxu0 0.0
      %5386 = vmatprep.subr.mxu0 0.0
      %5387 = vmatpush1.msra.mxu0 0.0
      %5388 = vmatprep.subr.mxu0 0.0
      %5389 = vmatpush1.msra.mxu0 0.0
      %5390 = vmatprep.subr.mxu0 0.0
      %5391 = vmatpush1.msra.mxu0 0.0
      %5392 = vmatprep.subr.mxu0 0.0
      %5393 = vmatpush1.msra.mxu0 0.0
      %5394 = vmatprep.subr.mxu0 0.0
      %5395 = vmatpush1.msra.mxu0 0.0
      %5396 = vmatprep.subr.mxu0 0.0
      %5397 = vmatpush1.msra.mxu0 0.0
      %5398 = vmatprep.subr.mxu0 0.0
      %5399 = vmatpush1.msra.mxu0 0.0
      %5400 = vmatprep.subr.mxu0 0.0
      %5401 = vmatpush1.msra.mxu0 0.0
      %5402 = vmatprep.subr.mxu0 0.0
      %5403 = vmatpush1.msra.mxu0 0.0
      %5404 = vmatprep.subr.mxu0 0.0
      %5405 = vmatpush1.msra.mxu0 0.0
      %5406 = vmatprep.subr.mxu0 0.0
      %5407 = vmatpush1.msra.mxu0 0.0
      %5408 = vmatprep.subr.mxu0 0.0
      %5409 = vmatpush1.msra.mxu0 0.0
      %5410 = vmatprep.subr.mxu0 0.0
      %5411 = vmatpush1.msra.mxu0 0.0
      %5412 = vmatprep.subr.mxu0 0.0
      %5413 = vmatpush1.msra.mxu0 0.0
      %5414 = vmatprep.mubr.f32.mxu0 0.0
      %5415 = vmatmul.mubr.f32.gmra.mrb[0].mxu0 %v5348
      %v5416 = vpop.f32.mrb[0].mxu0
      %v5417 = vadd.f32 0.0, %v5416
      %v5418 = vpop.f32.mrb[0].mxu0
      %v5419 = vadd.f32 0.0, %v5418
      %5420 = vdwg.mxu0
      %5421 = vmatprep.subr.mxu0 %v4929
      %5422 = vmatpush1.msra.mxu0 %v4928
      %5423 = vmatprep.subr.mxu0 %v4945
      %5424 = vmatpush1.msra.mxu0 %v4944
      %5425 = vmatprep.subr.mxu0 %v4961
      %5426 = vmatpush1.msra.mxu0 %v4960
      %5427 = vmatprep.subr.mxu0 %v4977
      %5428 = vmatpush1.msra.mxu0 %v4976
      %5429 = vmatprep.subr.mxu0 %v4913
      %5430 = vmatpush1.msra.mxu0 %v4912
      %5431 = vmatprep.subr.mxu0 %v4993
      %5432 = vmatpush1.msra.mxu0 %v4992
      %5433 = vmatprep.subr.mxu0 %v5009
      %5434 = vmatpush1.msra.mxu0 %v5008
      %5435 = vmatprep.subr.mxu0 %v5025
      %5436 = vmatpush1.msra.mxu0 %v5024
      %5437 = vmatprep.subr.mxu0 %v5041
      %5438 = vmatpush1.msra.mxu0 %v5040
      %5439 = vmatprep.subr.mxu0 0.0
      %5440 = vmatpush1.msra.mxu0 0.0
      %5441 = vmatprep.subr.mxu0 0.0
      %5442 = vmatpush1.msra.mxu0 0.0
      %5443 = vmatprep.subr.mxu0 0.0
      %5444 = vmatpush1.msra.mxu0 0.0
      %5445 = vmatprep.subr.mxu0 0.0
      %5446 = vmatpush1.msra.mxu0 0.0
      %5447 = vmatprep.subr.mxu0 0.0
      %5448 = vmatpush1.msra.mxu0 0.0
      %5449 = vmatprep.subr.mxu0 0.0
      %5450 = vmatpush1.msra.mxu0 0.0
      %5451 = vmatprep.subr.mxu0 0.0
      %5452 = vmatpush1.msra.mxu0 0.0
      %5453 = vmatprep.subr.mxu0 0.0
      %5454 = vmatpush1.msra.mxu0 0.0
      %5455 = vmatprep.subr.mxu0 0.0
      %5456 = vmatpush1.msra.mxu0 0.0
      %5457 = vmatprep.subr.mxu0 0.0
      %5458 = vmatpush1.msra.mxu0 0.0
      %5459 = vmatprep.subr.mxu0 0.0
      %5460 = vmatpush1.msra.mxu0 0.0
      %5461 = vmatprep.subr.mxu0 0.0
      %5462 = vmatpush1.msra.mxu0 0.0
      %5463 = vmatprep.subr.mxu0 0.0
      %5464 = vmatpush1.msra.mxu0 0.0
      %5465 = vmatprep.subr.mxu0 0.0
      %5466 = vmatpush1.msra.mxu0 0.0
      %5467 = vmatprep.subr.mxu0 0.0
      %5468 = vmatpush1.msra.mxu0 0.0
      %5469 = vmatprep.subr.mxu0 0.0
      %5470 = vmatpush1.msra.mxu0 0.0
      %5471 = vmatprep.subr.mxu0 0.0
      %5472 = vmatpush1.msra.mxu0 0.0
      %5473 = vmatprep.subr.mxu0 0.0
      %5474 = vmatpush1.msra.mxu0 0.0
      %5475 = vmatprep.subr.mxu0 0.0
      %5476 = vmatpush1.msra.mxu0 0.0
      %5477 = vmatprep.subr.mxu0 0.0
      %5478 = vmatpush1.msra.mxu0 0.0
      %5479 = vmatprep.subr.mxu0 0.0
      %5480 = vmatpush1.msra.mxu0 0.0
      %5481 = vmatprep.subr.mxu0 0.0
      %5482 = vmatpush1.msra.mxu0 0.0
      %5483 = vmatprep.subr.mxu0 0.0
      %5484 = vmatpush1.msra.mxu0 0.0
      %5485 = vmatprep.mubr.f32.mxu0 0.0
      %5486 = vmatmul.mubr.f32.gmra.mrb[0].mxu0 %v5348
      %v5487 = vpop.f32.mrb[0].mxu0
      %v5488 = vadd.f32 0.0, %v5487
      %v5489 = vpop.f32.mrb[0].mxu0
      %v5490 = vadd.f32 0.0, %v5489
      %5491 = vdwg.mxu0
      %v5493 = vsel %vm2339, %v5344, 0
      %5495 = vmatprep.subr.mxu0 %v4626
      %5496 = vmatpush1.msra.mxu0 %v4625
      %5497 = vmatprep.subr.mxu0 %v4642
      %5498 = vmatpush1.msra.mxu0 %v4641
      %5499 = vmatprep.subr.mxu0 %v4658
      %5500 = vmatpush1.msra.mxu0 %v4657
      %5501 = vmatprep.subr.mxu0 %v4674
      %5502 = vmatpush1.msra.mxu0 %v4673
      %5503 = vmatprep.subr.mxu0 %v4610
      %5504 = vmatpush1.msra.mxu0 %v4609
      %5505 = vmatprep.subr.mxu0 %v4690
      %5506 = vmatpush1.msra.mxu0 %v4689
      %5507 = vmatprep.subr.mxu0 %v4706
      %5508 = vmatpush1.msra.mxu0 %v4705
      %5509 = vmatprep.subr.mxu0 %v4722
      %5510 = vmatpush1.msra.mxu0 %v4721
      %5511 = vmatprep.subr.mxu0 %v4738
      %5512 = vmatpush1.msra.mxu0 %v4737
      %5513 = vmatprep.subr.mxu0 0.0
      %5514 = vmatpush1.msra.mxu0 0.0
      %5515 = vmatprep.subr.mxu0 0.0
      %5516 = vmatpush1.msra.mxu0 0.0
      %5517 = vmatprep.subr.mxu0 0.0
      %5518 = vmatpush1.msra.mxu0 0.0
      %5519 = vmatprep.subr.mxu0 0.0
      %5520 = vmatpush1.msra.mxu0 0.0
      %5521 = vmatprep.subr.mxu0 0.0
      %5522 = vmatpush1.msra.mxu0 0.0
      %5523 = vmatprep.subr.mxu0 0.0
      %5524 = vmatpush1.msra.mxu0 0.0
      %5525 = vmatprep.subr.mxu0 0.0
      %5526 = vmatpush1.msra.mxu0 0.0
      %5527 = vmatprep.subr.mxu0 0.0
      %5528 = vmatpush1.msra.mxu0 0.0
      %5529 = vmatprep.subr.mxu0 0.0
      %5530 = vmatpush1.msra.mxu0 0.0
      %5531 = vmatprep.subr.mxu0 0.0
      %5532 = vmatpush1.msra.mxu0 0.0
      %5533 = vmatprep.subr.mxu0 0.0
      %5534 = vmatpush1.msra.mxu0 0.0
      %5535 = vmatprep.subr.mxu0 0.0
      %5536 = vmatpush1.msra.mxu0 0.0
      %5537 = vmatprep.subr.mxu0 0.0
      %5538 = vmatpush1.msra.mxu0 0.0
      %5539 = vmatprep.subr.mxu0 0.0
      %5540 = vmatpush1.msra.mxu0 0.0
      %5541 = vmatprep.subr.mxu0 0.0
      %5542 = vmatpush1.msra.mxu0 0.0
      %5543 = vmatprep.subr.mxu0 0.0
      %5544 = vmatpush1.msra.mxu0 0.0
      %5545 = vmatprep.subr.mxu0 0.0
      %5546 = vmatpush1.msra.mxu0 0.0
      %5547 = vmatprep.subr.mxu0 0.0
      %5548 = vmatpush1.msra.mxu0 0.0
      %5549 = vmatprep.subr.mxu0 0.0
      %5550 = vmatpush1.msra.mxu0 0.0
      %5551 = vmatprep.subr.mxu0 0.0
      %5552 = vmatpush1.msra.mxu0 0.0
      %5553 = vmatprep.subr.mxu0 0.0
      %5554 = vmatpush1.msra.mxu0 0.0
      %5555 = vmatprep.subr.mxu0 0.0
      %5556 = vmatpush1.msra.mxu0 0.0
      %5557 = vmatprep.subr.mxu0 0.0
      %5558 = vmatpush1.msra.mxu0 0.0
      %5559 = vmatprep.mubr.f32.mxu0 0.0
      %5560 = vmatmul.mubr.f32.gmra.mrb[0].mxu0 %v5493
      %v5561 = vpop.f32.mrb[0].mxu0
      %v5562 = vadd.f32 %v5417, %v5561
      %v5563 = vpop.f32.mrb[0].mxu0
      %v5564 = vadd.f32 %v5419, %v5563
      %5565 = vdwg.mxu0
      %5566 = vmatprep.subr.mxu0 %v4628
      %5567 = vmatpush1.msra.mxu0 %v4627
      %5568 = vmatprep.subr.mxu0 %v4644
      %5569 = vmatpush1.msra.mxu0 %v4643
      %5570 = vmatprep.subr.mxu0 %v4660
      %5571 = vmatpush1.msra.mxu0 %v4659
      %5572 = vmatprep.subr.mxu0 %v4676
      %5573 = vmatpush1.msra.mxu0 %v4675
      %5574 = vmatprep.subr.mxu0 %v4612
      %5575 = vmatpush1.msra.mxu0 %v4611
      %5576 = vmatprep.subr.mxu0 %v4692
      %5577 = vmatpush1.msra.mxu0 %v4691
      %5578 = vmatprep.subr.mxu0 %v4708
      %5579 = vmatpush1.msra.mxu0 %v4707
      %5580 = vmatprep.subr.mxu0 %v4724
      %5581 = vmatpush1.msra.mxu0 %v4723
      %5582 = vmatprep.subr.mxu0 %v4740
      %5583 = vmatpush1.msra.mxu0 %v4739
      %5584 = vmatprep.subr.mxu0 0.0
      %5585 = vmatpush1.msra.mxu0 0.0
      %5586 = vmatprep.subr.mxu0 0.0
      %5587 = vmatpush1.msra.mxu0 0.0
      %5588 = vmatprep.subr.mxu0 0.0
      %5589 = vmatpush1.msra.mxu0 0.0
      %5590 = vmatprep.subr.mxu0 0.0
      %5591 = vmatpush1.msra.mxu0 0.0
      %5592 = vmatprep.subr.mxu0 0.0
      %5593 = vmatpush1.msra.mxu0 0.0
      %5594 = vmatprep.subr.mxu0 0.0
      %5595 = vmatpush1.msra.mxu0 0.0
      %5596 = vmatprep.subr.mxu0 0.0
      %5597 = vmatpush1.msra.mxu0 0.0
      %5598 = vmatprep.subr.mxu0 0.0
      %5599 = vmatpush1.msra.mxu0 0.0
      %5600 = vmatprep.subr.mxu0 0.0
      %5601 = vmatpush1.msra.mxu0 0.0
      %5602 = vmatprep.subr.mxu0 0.0
      %5603 = vmatpush1.msra.mxu0 0.0
      %5604 = vmatprep.subr.mxu0 0.0
      %5605 = vmatpush1.msra.mxu0 0.0
      %5606 = vmatprep.subr.mxu0 0.0
      %5607 = vmatpush1.msra.mxu0 0.0
      %5608 = vmatprep.subr.mxu0 0.0
      %5609 = vmatpush1.msra.mxu0 0.0
      %5610 = vmatprep.subr.mxu0 0.0
      %5611 = vmatpush1.msra.mxu0 0.0
      %5612 = vmatprep.subr.mxu0 0.0
      %5613 = vmatpush1.msra.mxu0 0.0
      %5614 = vmatprep.subr.mxu0 0.0
      %5615 = vmatpush1.msra.mxu0 0.0
      %5616 = vmatprep.subr.mxu0 0.0
      %5617 = vmatpush1.msra.mxu0 0.0
      %5618 = vmatprep.subr.mxu0 0.0
      %5619 = vmatpush1.msra.mxu0 0.0
      %5620 = vmatprep.subr.mxu0 0.0
      %5621 = vmatpush1.msra.mxu0 0.0
      %5622 = vmatprep.subr.mxu0 0.0
      %5623 = vmatpush1.msra.mxu0 0.0
      %5624 = vmatprep.subr.mxu0 0.0
      %5625 = vmatpush1.msra.mxu0 0.0
      %5626 = vmatprep.subr.mxu0 0.0
      %5627 = vmatpush1.msra.mxu0 0.0
      %5628 = vmatprep.subr.mxu0 0.0
      %5629 = vmatpush1.msra.mxu0 0.0
      %5630 = vmatprep.mubr.f32.mxu0 0.0
      %5631 = vmatmul.mubr.f32.gmra.mrb[0].mxu0 %v5493
      %v5632 = vpop.f32.mrb[0].mxu0
      %v5633 = vadd.f32 %v5488, %v5632
      %v5634 = vpop.f32.mrb[0].mxu0
      %v5635 = vadd.f32 %v5490, %v5634
      %5636 = vdwg.mxu0
      %s5637 = scalar_lea.vmem %s3, 112
      %v5638 = vld [vmem:[%s5637] sm:$0xff]
      %v5640 = vsel %vm2339, %v5638, 0
      %5642 = vmatprep.subr.mxu0 %v5228
      %5643 = vmatpush1.msra.mxu0 %v5227
      %5644 = vmatprep.subr.mxu0 %v5244
      %5645 = vmatpush1.msra.mxu0 %v5243
      %5646 = vmatprep.subr.mxu0 %v5260
      %5647 = vmatpush1.msra.mxu0 %v5259
      %5648 = vmatprep.subr.mxu0 %v5276
      %5649 = vmatpush1.msra.mxu0 %v5275
      %5650 = vmatprep.subr.mxu0 %v5212
      %5651 = vmatpush1.msra.mxu0 %v5211
      %5652 = vmatprep.subr.mxu0 %v5292
      %5653 = vmatpush1.msra.mxu0 %v5291
      %5654 = vmatprep.subr.mxu0 %v5308
      %5655 = vmatpush1.msra.mxu0 %v5307
      %5656 = vmatprep.subr.mxu0 %v5324
      %5657 = vmatpush1.msra.mxu0 %v5323
      %5658 = vmatprep.subr.mxu0 %v5340
      %5659 = vmatpush1.msra.mxu0 %v5339
      %5660 = vmatprep.subr.mxu0 0.0
      %5661 = vmatpush1.msra.mxu0 0.0
      %5662 = vmatprep.subr.mxu0 0.0
      %5663 = vmatpush1.msra.mxu0 0.0
      %5664 = vmatprep.subr.mxu0 0.0
      %5665 = vmatpush1.msra.mxu0 0.0
      %5666 = vmatprep.subr.mxu0 0.0
      %5667 = vmatpush1.msra.mxu0 0.0
      %5668 = vmatprep.subr.mxu0 0.0
      %5669 = vmatpush1.msra.mxu0 0.0
      %5670 = vmatprep.subr.mxu0 0.0
      %5671 = vmatpush1.msra.mxu0 0.0
      %5672 = vmatprep.subr.mxu0 0.0
      %5673 = vmatpush1.msra.mxu0 0.0
      %5674 = vmatprep.subr.mxu0 0.0
      %5675 = vmatpush1.msra.mxu0 0.0
      %5676 = vmatprep.subr.mxu0 0.0
      %5677 = vmatpush1.msra.mxu0 0.0
      %5678 = vmatprep.subr.mxu0 0.0
      %5679 = vmatpush1.msra.mxu0 0.0
      %5680 = vmatprep.subr.mxu0 0.0
      %5681 = vmatpush1.msra.mxu0 0.0
      %5682 = vmatprep.subr.mxu0 0.0
      %5683 = vmatpush1.msra.mxu0 0.0
      %5684 = vmatprep.subr.mxu0 0.0
      %5685 = vmatpush1.msra.mxu0 0.0
      %5686 = vmatprep.subr.mxu0 0.0
      %5687 = vmatpush1.msra.mxu0 0.0
      %5688 = vmatprep.subr.mxu0 0.0
      %5689 = vmatpush1.msra.mxu0 0.0
      %5690 = vmatprep.subr.mxu0 0.0
      %5691 = vmatpush1.msra.mxu0 0.0
      %5692 = vmatprep.subr.mxu0 0.0
      %5693 = vmatpush1.msra.mxu0 0.0
      %5694 = vmatprep.subr.mxu0 0.0
      %5695 = vmatpush1.msra.mxu0 0.0
      %5696 = vmatprep.subr.mxu0 0.0
      %5697 = vmatpush1.msra.mxu0 0.0
      %5698 = vmatprep.subr.mxu0 0.0
      %5699 = vmatpush1.msra.mxu0 0.0
      %5700 = vmatprep.subr.mxu0 0.0
      %5701 = vmatpush1.msra.mxu0 0.0
      %5702 = vmatprep.subr.mxu0 0.0
      %5703 = vmatpush1.msra.mxu0 0.0
      %5704 = vmatprep.subr.mxu0 0.0
      %5705 = vmatpush1.msra.mxu0 0.0
      %5706 = vmatprep.mubr.f32.mxu0 0.0
      %5707 = vmatmul.mubr.f32.gmra.mrb[0].mxu0 %v5640
      %v5708 = vpop.f32.mrb[0].mxu0
      %v5709 = vadd.f32 0.0, %v5708
      %v5710 = vpop.f32.mrb[0].mxu0
      %v5711 = vadd.f32 0.0, %v5710
      %5712 = vdwg.mxu0
      %5713 = vmatprep.subr.mxu0 %v5230
      %5714 = vmatpush1.msra.mxu0 %v5229
      %5715 = vmatprep.subr.mxu0 %v5246
      %5716 = vmatpush1.msra.mxu0 %v5245
      %5717 = vmatprep.subr.mxu0 %v5262
      %5718 = vmatpush1.msra.mxu0 %v5261
      %5719 = vmatprep.subr.mxu0 %v5278
      %5720 = vmatpush1.msra.mxu0 %v5277
      %5721 = vmatprep.subr.mxu0 %v5214
      %5722 = vmatpush1.msra.mxu0 %v5213
      %5723 = vmatprep.subr.mxu0 %v5294
      %5724 = vmatpush1.msra.mxu0 %v5293
      %5725 = vmatprep.subr.mxu0 %v5310
      %5726 = vmatpush1.msra.mxu0 %v5309
      %5727 = vmatprep.subr.mxu0 %v5326
      %5728 = vmatpush1.msra.mxu0 %v5325
      %5729 = vmatprep.subr.mxu0 %v5342
      %5730 = vmatpush1.msra.mxu0 %v5341
      %5731 = vmatprep.subr.mxu0 0.0
      %5732 = vmatpush1.msra.mxu0 0.0
      %5733 = vmatprep.subr.mxu0 0.0
      %5734 = vmatpush1.msra.mxu0 0.0
      %5735 = vmatprep.subr.mxu0 0.0
      %5736 = vmatpush1.msra.mxu0 0.0
      %5737 = vmatprep.subr.mxu0 0.0
      %5738 = vmatpush1.msra.mxu0 0.0
      %5739 = vmatprep.subr.mxu0 0.0
      %5740 = vmatpush1.msra.mxu0 0.0
      %5741 = vmatprep.subr.mxu0 0.0
      %5742 = vmatpush1.msra.mxu0 0.0
      %5743 = vmatprep.subr.mxu0 0.0
      %5744 = vmatpush1.msra.mxu0 0.0
      %5745 = vmatprep.subr.mxu0 0.0
      %5746 = vmatpush1.msra.mxu0 0.0
      %5747 = vmatprep.subr.mxu0 0.0
      %5748 = vmatpush1.msra.mxu0 0.0
      %5749 = vmatprep.subr.mxu0 0.0
      %5750 = vmatpush1.msra.mxu0 0.0
      %5751 = vmatprep.subr.mxu0 0.0
      %5752 = vmatpush1.msra.mxu0 0.0
      %5753 = vmatprep.subr.mxu0 0.0
      %5754 = vmatpush1.msra.mxu0 0.0
      %5755 = vmatprep.subr.mxu0 0.0
      %5756 = vmatpush1.msra.mxu0 0.0
      %5757 = vmatprep.subr.mxu0 0.0
      %5758 = vmatpush1.msra.mxu0 0.0
      %5759 = vmatprep.subr.mxu0 0.0
      %5760 = vmatpush1.msra.mxu0 0.0
      %5761 = vmatprep.subr.mxu0 0.0
      %5762 = vmatpush1.msra.mxu0 0.0
      %5763 = vmatprep.subr.mxu0 0.0
      %5764 = vmatpush1.msra.mxu0 0.0
      %5765 = vmatprep.subr.mxu0 0.0
      %5766 = vmatpush1.msra.mxu0 0.0
      %5767 = vmatprep.subr.mxu0 0.0
      %5768 = vmatpush1.msra.mxu0 0.0
      %5769 = vmatprep.subr.mxu0 0.0
      %5770 = vmatpush1.msra.mxu0 0.0
      %5771 = vmatprep.subr.mxu0 0.0
      %5772 = vmatpush1.msra.mxu0 0.0
      %5773 = vmatprep.subr.mxu0 0.0
      %5774 = vmatpush1.msra.mxu0 0.0
      %5775 = vmatprep.subr.mxu0 0.0
      %5776 = vmatpush1.msra.mxu0 0.0
      %5777 = vmatprep.mubr.f32.mxu0 0.0
      %5778 = vmatmul.mubr.f32.gmra.mrb[0].mxu0 %v5640
      %v5779 = vpop.f32.mrb[0].mxu0
      %v5780 = vadd.f32 0.0, %v5779
      %v5781 = vpop.f32.mrb[0].mxu0
      %v5782 = vadd.f32 0.0, %v5781
      %5783 = vdwg.mxu0
      %v5784 = vadd.f32 %v5562, %v5709
      %v5785 = vadd.f32 %v5564, %v5711
      %v5786 = vadd.f32 %v5633, %v5780
      %v5787 = vadd.f32 %v5635, %v5782
      %s5788 = scalar_lea.vmem %s4, 72
      %v5789 = vld [vmem:[%s5788] sm:$0xff]
      %5791 = vset.pattern.permute.xlu0 0
      %5792 = vperm.xlu0 %5791, %v5789
      %v5793 = vpop.permute.xlu0 %5792
      %v5795 = vadd.f32 %v5784, %v5793
      %v5796 = vadd.f32 %v5785, %v5793
      %v5797 = vadd.f32 %v5786, %v5793
      %v5798 = vadd.f32 %v5787, %v5793
      %vm5799 = vcmp.ge.f32.partialorder %v5795, 0.0
      %vm5800 = vcmp.ge.f32.partialorder %v5796, 0.0
      %vm5801 = vcmp.ge.f32.partialorder %v5797, 0.0
      %vm5802 = vcmp.ge.f32.partialorder %v5798, 0.0
      %s5803 = scalar_lea.vmem %s5, 72
      %v5804 = vld [vmem:[%s5803] sm:$0xff]
      %5806 = vset.pattern.permute.xlu0 0
      %5807 = vperm.xlu0 %5806, %v5804
      %v5808 = vpop.permute.xlu0 %5807
      %v5810 = vmul.f32 %v5808, %v5795
      %v5811 = vmul.f32 %v5808, %v5796
      %v5812 = vmul.f32 %v5808, %v5797
      %v5813 = vmul.f32 %v5808, %v5798
      %v5814 = vsel %vm5799, %v5795, %v5810
      %v5815 = vsel %vm5800, %v5796, %v5811
      %v5816 = vsel %vm5801, %v5797, %v5812
      %v5817 = vsel %vm5802, %v5798, %v5813
      %5818 = vrot.lane.b32.xlu0 %v5814, 17
      %v5819 = vpop.permute.xlu0 %5818
      %5820 = vrot.lane.b32.xlu0 %v5815, 17
      %v5821 = vpop.permute.xlu0 %5820
      %5822 = vrot.lane.b32.xlu0 %v5816, 17
      %v5823 = vpop.permute.xlu0 %5822
      %5824 = vrot.lane.b32.xlu0 %v5817, 17
      %v5825 = vpop.permute.xlu0 %5824
      %v5826 = vsel %vm424, %v5823, %v5825
      %v5827 = vsel %vm424, %v5821, %v5823
      %v5828 = vsel %vm424, %v5819, %v5821
      %v5829 = vsel %vm424, %v5825, %v5819
      %v5830 = vmul.f32 %v5829, %v433
      %v5831 = vmul.f32 %v5828, %v437
      %v5832 = vmul.f32 %v5827, %v441
      %v5833 = vmul.f32 %v5826, %v445
      %5834 = vrot.lane.b32.xlu0 %v5814, 16
      %v5835 = vpop.permute.xlu0 %5834
      %5836 = vrot.lane.b32.xlu0 %v5815, 16
      %v5837 = vpop.permute.xlu0 %5836
      %5838 = vrot.lane.b32.xlu0 %v5816, 16
      %v5839 = vpop.permute.xlu0 %5838
      %5840 = vrot.lane.b32.xlu0 %v5817, 16
      %v5841 = vpop.permute.xlu0 %5840
      %v5842 = vsel %vm464, %v5839, %v5841
      %v5843 = vsel %vm464, %v5837, %v5839
      %v5844 = vsel %vm464, %v5835, %v5837
      %v5845 = vsel %vm464, %v5841, %v5835
      %v5846 = vmul.f32 %v5845, %v473
      %v5847 = vmul.f32 %v5844, %v477
      %v5848 = vmul.f32 %v5843, %v481
      %v5849 = vmul.f32 %v5842, %v485
      %5850 = vrot.lane.b32.xlu0 %v5814, 15
      %v5851 = vpop.permute.xlu0 %5850
      %5852 = vrot.lane.b32.xlu0 %v5815, 15
      %v5853 = vpop.permute.xlu0 %5852
      %5854 = vrot.lane.b32.xlu0 %v5816, 15
      %v5855 = vpop.permute.xlu0 %5854
      %5856 = vrot.lane.b32.xlu0 %v5817, 15
      %v5857 = vpop.permute.xlu0 %5856
      %v5858 = vsel %vm820, %v5855, %v5857
      %v5859 = vsel %vm820, %v5853, %v5855
      %v5860 = vsel %vm820, %v5851, %v5853
      %v5861 = vsel %vm820, %v5857, %v5851
      %v5862 = vmul.f32 %v5861, %v829
      %v5863 = vmul.f32 %v5860, %v833
      %v5864 = vmul.f32 %v5859, %v837
      %v5865 = vmul.f32 %v5858, %v841
      %5866 = vrot.lane.b32.xlu0 %v5814, 1
      %v5867 = vpop.permute.xlu0 %5866
      %5868 = vrot.lane.b32.xlu0 %v5815, 1
      %v5869 = vpop.permute.xlu0 %5868
      %5870 = vrot.lane.b32.xlu0 %v5816, 1
      %v5871 = vpop.permute.xlu0 %5870
      %5872 = vrot.lane.b32.xlu0 %v5817, 1
      %v5873 = vpop.permute.xlu0 %5872
      %v5874 = vsel %vm1021, %v5871, %v5873
      %v5875 = vsel %vm1021, %v5869, %v5871
      %v5876 = vsel %vm1021, %v5867, %v5869
      %v5877 = vsel %vm1021, %v5873, %v5867
      %v5878 = vmul.f32 %v5877, %v1030
      %v5879 = vmul.f32 %v5876, %v1034
      %v5880 = vmul.f32 %v5875, %v1038
      %v5881 = vmul.f32 %v5874, %v1042
      %5882 = vrot.lane.b32.xlu0 %v5814, 127
      %v5883 = vpop.permute.xlu0 %5882
      %5884 = vrot.lane.b32.xlu0 %v5815, 127
      %v5885 = vpop.permute.xlu0 %5884
      %5886 = vrot.lane.b32.xlu0 %v5816, 127
      %v5887 = vpop.permute.xlu0 %5886
      %5888 = vrot.lane.b32.xlu0 %v5817, 127
      %v5889 = vpop.permute.xlu0 %5888
      %v5890 = vsel %vm1381, %v5887, %v5889
      %v5891 = vsel %vm1381, %v5885, %v5887
      %v5892 = vsel %vm1381, %v5883, %v5885
      %v5893 = vsel %vm1381, %v5889, %v5883
      %v5894 = vmul.f32 %v5892, %v1390
      %v5895 = vmul.f32 %v5891, %v1394
      %v5896 = vmul.f32 %v5890, %v1398
      %v5897 = vmul.f32 %v5893, %v1402
      %5898 = vrot.lane.b32.xlu0 %v5814, 113
      %v5899 = vpop.permute.xlu0 %5898
      %5900 = vrot.lane.b32.xlu0 %v5815, 113
      %v5901 = vpop.permute.xlu0 %5900
      %5902 = vrot.lane.b32.xlu0 %v5816, 113
      %v5903 = vpop.permute.xlu0 %5902
      %5904 = vrot.lane.b32.xlu0 %v5817, 113
      %v5905 = vpop.permute.xlu0 %5904
      %v5906 = vsel %vm1582, %v5903, %v5905
      %v5907 = vsel %vm1582, %v5901, %v5903
      %v5908 = vsel %vm1582, %v5899, %v5901
      %v5909 = vsel %vm1582, %v5905, %v5899
      %v5910 = vmul.f32 %v5908, %v1591
      %v5911 = vmul.f32 %v5907, %v1595
      %v5912 = vmul.f32 %v5906, %v1599
      %v5913 = vmul.f32 %v5909, %v1603
      %5914 = vrot.lane.b32.xlu0 %v5814, 112
      %v5915 = vpop.permute.xlu0 %5914
      %5916 = vrot.lane.b32.xlu0 %v5815, 112
      %v5917 = vpop.permute.xlu0 %5916
      %5918 = vrot.lane.b32.xlu0 %v5816, 112
      %v5919 = vpop.permute.xlu0 %5918
      %5920 = vrot.lane.b32.xlu0 %v5817, 112
      %v5921 = vpop.permute.xlu0 %5920
      %v5922 = vsel %vm1783, %v5919, %v5921
      %v5923 = vsel %vm1783, %v5917, %v5919
      %v5924 = vsel %vm1783, %v5915, %v5917
      %v5925 = vsel %vm1783, %v5921, %v5915
      %v5926 = vmul.f32 %v5924, %v1792
      %v5927 = vmul.f32 %v5923, %v1796
      %v5928 = vmul.f32 %v5922, %v1800
      %v5929 = vmul.f32 %v5925, %v1804
      %5930 = vrot.lane.b32.xlu0 %v5814, 111
      %v5931 = vpop.permute.xlu0 %5930
      %5932 = vrot.lane.b32.xlu0 %v5815, 111
      %v5933 = vpop.permute.xlu0 %5932
      %5934 = vrot.lane.b32.xlu0 %v5816, 111
      %v5935 = vpop.permute.xlu0 %5934
      %5936 = vrot.lane.b32.xlu0 %v5817, 111
      %v5937 = vpop.permute.xlu0 %5936
      %v5938 = vsel %vm1984, %v5935, %v5937
      %v5939 = vsel %vm1984, %v5933, %v5935
      %v5940 = vsel %vm1984, %v5931, %v5933
      %v5941 = vsel %vm1984, %v5937, %v5931
      %v5942 = vmul.f32 %v5940, %v1993
      %v5943 = vmul.f32 %v5939, %v1997
      %v5944 = vmul.f32 %v5938, %v2001
      %v5945 = vmul.f32 %v5941, %v2005
      %s5946 = scalar_lea.vmem %s3, 120
      %v5947 = vld [vmem:[%s5946] sm:$0xff]
      %s5948 = scalar_lea.vmem %s4, 80
      %v5949 = vld [vmem:[%s5948] sm:$0xff]
      %5951 = vset.pattern.permute.xlu0 0
      %5952 = vperm.xlu0 %5951, %v5949
      %v5953 = vpop.permute.xlu0 %5952
      %v5956 = vsel %vm2339, %v5947, 0
      %5958 = vmatprep.subr.mxu0 %v5831
      %5959 = vmatpush1.msra.mxu0 %v5830
      %5960 = vmatprep.subr.mxu0 %v5847
      %5961 = vmatpush1.msra.mxu0 %v5846
      %5962 = vmatprep.subr.mxu0 %v5863
      %5963 = vmatpush1.msra.mxu0 %v5862
      %5964 = vmatprep.subr.mxu0 %v5879
      %5965 = vmatpush1.msra.mxu0 %v5878
      %5966 = vmatprep.subr.mxu0 %v5815
      %5967 = vmatpush1.msra.mxu0 %v5814
      %5968 = vmatprep.subr.mxu0 %v5895
      %5969 = vmatpush1.msra.mxu0 %v5894
      %5970 = vmatprep.subr.mxu0 %v5911
      %5971 = vmatpush1.msra.mxu0 %v5910
      %5972 = vmatprep.subr.mxu0 %v5927
      %5973 = vmatpush1.msra.mxu0 %v5926
      %5974 = vmatprep.subr.mxu0 %v5943
      %5975 = vmatpush1.msra.mxu0 %v5942
      %5976 = vmatprep.subr.mxu0 0.0
      %5977 = vmatpush1.msra.mxu0 0.0
      %5978 = vmatprep.subr.mxu0 0.0
      %5979 = vmatpush1.msra.mxu0 0.0
      %5980 = vmatprep.subr.mxu0 0.0
      %5981 = vmatpush1.msra.mxu0 0.0
      %5982 = vmatprep.subr.mxu0 0.0
      %5983 = vmatpush1.msra.mxu0 0.0
      %5984 = vmatprep.subr.mxu0 0.0
      %5985 = vmatpush1.msra.mxu0 0.0
      %5986 = vmatprep.subr.mxu0 0.0
      %5987 = vmatpush1.msra.mxu0 0.0
      %5988 = vmatprep.subr.mxu0 0.0
      %5989 = vmatpush1.msra.mxu0 0.0
      %5990 = vmatprep.subr.mxu0 0.0
      %5991 = vmatpush1.msra.mxu0 0.0
      %5992 = vmatprep.subr.mxu0 0.0
      %5993 = vmatpush1.msra.mxu0 0.0
      %5994 = vmatprep.subr.mxu0 0.0
      %5995 = vmatpush1.msra.mxu0 0.0
      %5996 = vmatprep.subr.mxu0 0.0
      %5997 = vmatpush1.msra.mxu0 0.0
      %5998 = vmatprep.subr.mxu0 0.0
      %5999 = vmatpush1.msra.mxu0 0.0
      %6000 = vmatprep.subr.mxu0 0.0
      %6001 = vmatpush1.msra.mxu0 0.0
      %6002 = vmatprep.subr.mxu0 0.0
      %6003 = vmatpush1.msra.mxu0 0.0
      %6004 = vmatprep.subr.mxu0 0.0
      %6005 = vmatpush1.msra.mxu0 0.0
      %6006 = vmatprep.subr.mxu0 0.0
      %6007 = vmatpush1.msra.mxu0 0.0
      %6008 = vmatprep.subr.mxu0 0.0
      %6009 = vmatpush1.msra.mxu0 0.0
      %6010 = vmatprep.subr.mxu0 0.0
      %6011 = vmatpush1.msra.mxu0 0.0
      %6012 = vmatprep.subr.mxu0 0.0
      %6013 = vmatpush1.msra.mxu0 0.0
      %6014 = vmatprep.subr.mxu0 0.0
      %6015 = vmatpush1.msra.mxu0 0.0
      %6016 = vmatprep.subr.mxu0 0.0
      %6017 = vmatpush1.msra.mxu0 0.0
      %6018 = vmatprep.subr.mxu0 0.0
      %6019 = vmatpush1.msra.mxu0 0.0
      %6020 = vmatprep.subr.mxu0 0.0
      %6021 = vmatpush1.msra.mxu0 0.0
      %6022 = vmatprep.mubr.f32.mxu0 0.0
      %6023 = vmatmul.mubr.f32.gmra.mrb[0].mxu0 %v5956
      %v6024 = vpop.f32.mrb[0].mxu0
      %v6025 = vadd.f32 %v5953, %v6024
      %v6026 = vpop.f32.mrb[0].mxu0
      %v6027 = vadd.f32 %v5953, %v6026
      %6028 = vdwg.mxu0
      %6029 = vmatprep.subr.mxu0 %v5833
      %6030 = vmatpush1.msra.mxu0 %v5832
      %6031 = vmatprep.subr.mxu0 %v5849
      %6032 = vmatpush1.msra.mxu0 %v5848
      %6033 = vmatprep.subr.mxu0 %v5865
      %6034 = vmatpush1.msra.mxu0 %v5864
      %6035 = vmatprep.subr.mxu0 %v5881
      %6036 = vmatpush1.msra.mxu0 %v5880
      %6037 = vmatprep.subr.mxu0 %v5817
      %6038 = vmatpush1.msra.mxu0 %v5816
      %6039 = vmatprep.subr.mxu0 %v5897
      %6040 = vmatpush1.msra.mxu0 %v5896
      %6041 = vmatprep.subr.mxu0 %v5913
      %6042 = vmatpush1.msra.mxu0 %v5912
      %6043 = vmatprep.subr.mxu0 %v5929
      %6044 = vmatpush1.msra.mxu0 %v5928
      %6045 = vmatprep.subr.mxu0 %v5945
      %6046 = vmatpush1.msra.mxu0 %v5944
      %6047 = vmatprep.subr.mxu0 0.0
      %6048 = vmatpush1.msra.mxu0 0.0
      %6049 = vmatprep.subr.mxu0 0.0
      %6050 = vmatpush1.msra.mxu0 0.0
      %6051 = vmatprep.subr.mxu0 0.0
      %6052 = vmatpush1.msra.mxu0 0.0
      %6053 = vmatprep.subr.mxu0 0.0
      %6054 = vmatpush1.msra.mxu0 0.0
      %6055 = vmatprep.subr.mxu0 0.0
      %6056 = vmatpush1.msra.mxu0 0.0
      %6057 = vmatprep.subr.mxu0 0.0
      %6058 = vmatpush1.msra.mxu0 0.0
      %6059 = vmatprep.subr.mxu0 0.0
      %6060 = vmatpush1.msra.mxu0 0.0
      %6061 = vmatprep.subr.mxu0 0.0
      %6062 = vmatpush1.msra.mxu0 0.0
      %6063 = vmatprep.subr.mxu0 0.0
      %6064 = vmatpush1.msra.mxu0 0.0
      %6065 = vmatprep.subr.mxu0 0.0
      %6066 = vmatpush1.msra.mxu0 0.0
      %6067 = vmatprep.subr.mxu0 0.0
      %6068 = vmatpush1.msra.mxu0 0.0
      %6069 = vmatprep.subr.mxu0 0.0
      %6070 = vmatpush1.msra.mxu0 0.0
      %6071 = vmatprep.subr.mxu0 0.0
      %6072 = vmatpush1.msra.mxu0 0.0
      %6073 = vmatprep.subr.mxu0 0.0
      %6074 = vmatpush1.msra.mxu0 0.0
      %6075 = vmatprep.subr.mxu0 0.0
      %6076 = vmatpush1.msra.mxu0 0.0
      %6077 = vmatprep.subr.mxu0 0.0
      %6078 = vmatpush1.msra.mxu0 0.0
      %6079 = vmatprep.subr.mxu0 0.0
      %6080 = vmatpush1.msra.mxu0 0.0
      %6081 = vmatprep.subr.mxu0 0.0
      %6082 = vmatpush1.msra.mxu0 0.0
      %6083 = vmatprep.subr.mxu0 0.0
      %6084 = vmatpush1.msra.mxu0 0.0
      %6085 = vmatprep.subr.mxu0 0.0
      %6086 = vmatpush1.msra.mxu0 0.0
      %6087 = vmatprep.subr.mxu0 0.0
      %6088 = vmatpush1.msra.mxu0 0.0
      %6089 = vmatprep.subr.mxu0 0.0
      %6090 = vmatpush1.msra.mxu0 0.0
      %6091 = vmatprep.subr.mxu0 0.0
      %6092 = vmatpush1.msra.mxu0 0.0
      %6093 = vmatprep.mubr.f32.mxu0 0.0
      %6094 = vmatmul.mubr.f32.gmra.mrb[0].mxu0 %v5956
      %v6095 = vpop.f32.mrb[0].mxu0
      %v6096 = vadd.f32 %v5953, %v6095
      %v6097 = vpop.f32.mrb[0].mxu0
      %v6098 = vadd.f32 %v5953, %v6097
      %6099 = vdwg.mxu0
      %vm6100 = vcmp.ge.f32.partialorder %v6025, 0.0
      %vm6101 = vcmp.ge.f32.partialorder %v6027, 0.0
      %vm6102 = vcmp.ge.f32.partialorder %v6096, 0.0
      %vm6103 = vcmp.ge.f32.partialorder %v6098, 0.0
      %s6104 = scalar_lea.vmem %s5, 80
      %v6105 = vld [vmem:[%s6104] sm:$0xff]
      %6107 = vset.pattern.permute.xlu0 0
      %6108 = vperm.xlu0 %6107, %v6105
      %v6109 = vpop.permute.xlu0 %6108
      %v6111 = vmul.f32 %v6109, %v6025
      %v6112 = vmul.f32 %v6109, %v6027
      %v6113 = vmul.f32 %v6109, %v6096
      %v6114 = vmul.f32 %v6109, %v6098
      %v6115 = vsel %vm6100, %v6025, %v6111
      %v6116 = vsel %vm6101, %v6027, %v6112
      %v6117 = vsel %vm6102, %v6096, %v6113
      %v6118 = vsel %vm6103, %v6098, %v6114
      %6119 = vrot.lane.b32.xlu0 %v6115, 17
      %v6120 = vpop.permute.xlu0 %6119
      %6121 = vrot.lane.b32.xlu0 %v6116, 17
      %v6122 = vpop.permute.xlu0 %6121
      %6123 = vrot.lane.b32.xlu0 %v6117, 17
      %v6124 = vpop.permute.xlu0 %6123
      %6125 = vrot.lane.b32.xlu0 %v6118, 17
      %v6126 = vpop.permute.xlu0 %6125
      %v6127 = vsel %vm424, %v6124, %v6126
      %v6128 = vsel %vm424, %v6122, %v6124
      %v6129 = vsel %vm424, %v6120, %v6122
      %v6130 = vsel %vm424, %v6126, %v6120
      %v6131 = vmul.f32 %v6130, %v433
      %v6132 = vmul.f32 %v6129, %v437
      %v6133 = vmul.f32 %v6128, %v441
      %v6134 = vmul.f32 %v6127, %v445
      %6135 = vrot.lane.b32.xlu0 %v6115, 16
      %v6136 = vpop.permute.xlu0 %6135
      %6137 = vrot.lane.b32.xlu0 %v6116, 16
      %v6138 = vpop.permute.xlu0 %6137
      %6139 = vrot.lane.b32.xlu0 %v6117, 16
      %v6140 = vpop.permute.xlu0 %6139
      %6141 = vrot.lane.b32.xlu0 %v6118, 16
      %v6142 = vpop.permute.xlu0 %6141
      %v6143 = vsel %vm464, %v6140, %v6142
      %v6144 = vsel %vm464, %v6138, %v6140
      %v6145 = vsel %vm464, %v6136, %v6138
      %v6146 = vsel %vm464, %v6142, %v6136
      %v6147 = vmul.f32 %v6146, %v473
      %v6148 = vmul.f32 %v6145, %v477
      %v6149 = vmul.f32 %v6144, %v481
      %v6150 = vmul.f32 %v6143, %v485
      %6151 = vrot.lane.b32.xlu0 %v6115, 15
      %v6152 = vpop.permute.xlu0 %6151
      %6153 = vrot.lane.b32.xlu0 %v6116, 15
      %v6154 = vpop.permute.xlu0 %6153
      %6155 = vrot.lane.b32.xlu0 %v6117, 15
      %v6156 = vpop.permute.xlu0 %6155
      %6157 = vrot.lane.b32.xlu0 %v6118, 15
      %v6158 = vpop.permute.xlu0 %6157
      %v6159 = vsel %vm820, %v6156, %v6158
      %v6160 = vsel %vm820, %v6154, %v6156
      %v6161 = vsel %vm820, %v6152, %v6154
      %v6162 = vsel %vm820, %v6158, %v6152
      %v6163 = vmul.f32 %v6162, %v829
      %v6164 = vmul.f32 %v6161, %v833
      %v6165 = vmul.f32 %v6160, %v837
      %v6166 = vmul.f32 %v6159, %v841
      %6167 = vrot.lane.b32.xlu0 %v6115, 1
      %v6168 = vpop.permute.xlu0 %6167
      %6169 = vrot.lane.b32.xlu0 %v6116, 1
      %v6170 = vpop.permute.xlu0 %6169
      %6171 = vrot.lane.b32.xlu0 %v6117, 1
      %v6172 = vpop.permute.xlu0 %6171
      %6173 = vrot.lane.b32.xlu0 %v6118, 1
      %v6174 = vpop.permute.xlu0 %6173
      %v6175 = vsel %vm1021, %v6172, %v6174
      %v6176 = vsel %vm1021, %v6170, %v6172
      %v6177 = vsel %vm1021, %v6168, %v6170
      %v6178 = vsel %vm1021, %v6174, %v6168
      %v6179 = vmul.f32 %v6178, %v1030
      %v6180 = vmul.f32 %v6177, %v1034
      %v6181 = vmul.f32 %v6176, %v1038
      %v6182 = vmul.f32 %v6175, %v1042
      %6183 = vrot.lane.b32.xlu0 %v6115, 127
      %v6184 = vpop.permute.xlu0 %6183
      %6185 = vrot.lane.b32.xlu0 %v6116, 127
      %v6186 = vpop.permute.xlu0 %6185
      %6187 = vrot.lane.b32.xlu0 %v6117, 127
      %v6188 = vpop.permute.xlu0 %6187
      %6189 = vrot.lane.b32.xlu0 %v6118, 127
      %v6190 = vpop.permute.xlu0 %6189
      %v6191 = vsel %vm1381, %v6188, %v6190
      %v6192 = vsel %vm1381, %v6186, %v6188
      %v6193 = vsel %vm1381, %v6184, %v6186
      %v6194 = vsel %vm1381, %v6190, %v6184
      %v6195 = vmul.f32 %v6193, %v1390
      %v6196 = vmul.f32 %v6192, %v1394
      %v6197 = vmul.f32 %v6191, %v1398
      %v6198 = vmul.f32 %v6194, %v1402
      %6199 = vrot.lane.b32.xlu0 %v6115, 113
      %v6200 = vpop.permute.xlu0 %6199
      %6201 = vrot.lane.b32.xlu0 %v6116, 113
      %v6202 = vpop.permute.xlu0 %6201
      %6203 = vrot.lane.b32.xlu0 %v6117, 113
      %v6204 = vpop.permute.xlu0 %6203
      %6205 = vrot.lane.b32.xlu0 %v6118, 113
      %v6206 = vpop.permute.xlu0 %6205
      %v6207 = vsel %vm1582, %v6204, %v6206
      %v6208 = vsel %vm1582, %v6202, %v6204
      %v6209 = vsel %vm1582, %v6200, %v6202
      %v6210 = vsel %vm1582, %v6206, %v6200
      %v6211 = vmul.f32 %v6209, %v1591
      %v6212 = vmul.f32 %v6208, %v1595
      %v6213 = vmul.f32 %v6207, %v1599
      %v6214 = vmul.f32 %v6210, %v1603
      %6215 = vrot.lane.b32.xlu0 %v6115, 112
      %v6216 = vpop.permute.xlu0 %6215
      %6217 = vrot.lane.b32.xlu0 %v6116, 112
      %v6218 = vpop.permute.xlu0 %6217
      %6219 = vrot.lane.b32.xlu0 %v6117, 112
      %v6220 = vpop.permute.xlu0 %6219
      %6221 = vrot.lane.b32.xlu0 %v6118, 112
      %v6222 = vpop.permute.xlu0 %6221
      %v6223 = vsel %vm1783, %v6220, %v6222
      %v6224 = vsel %vm1783, %v6218, %v6220
      %v6225 = vsel %vm1783, %v6216, %v6218
      %v6226 = vsel %vm1783, %v6222, %v6216
      %v6227 = vmul.f32 %v6225, %v1792
      %v6228 = vmul.f32 %v6224, %v1796
      %v6229 = vmul.f32 %v6223, %v1800
      %v6230 = vmul.f32 %v6226, %v1804
      %6231 = vrot.lane.b32.xlu0 %v6115, 111
      %v6232 = vpop.permute.xlu0 %6231
      %6233 = vrot.lane.b32.xlu0 %v6116, 111
      %v6234 = vpop.permute.xlu0 %6233
      %6235 = vrot.lane.b32.xlu0 %v6117, 111
      %v6236 = vpop.permute.xlu0 %6235
      %6237 = vrot.lane.b32.xlu0 %v6118, 111
      %v6238 = vpop.permute.xlu0 %6237
      %v6239 = vsel %vm1984, %v6236, %v6238
      %v6240 = vsel %vm1984, %v6234, %v6236
      %v6241 = vsel %vm1984, %v6232, %v6234
      %v6242 = vsel %vm1984, %v6238, %v6232
      %v6243 = vmul.f32 %v6241, %v1993
      %v6244 = vmul.f32 %v6240, %v1997
      %v6245 = vmul.f32 %v6239, %v2001
      %v6246 = vmul.f32 %v6242, %v2005
      %s6247 = scalar_lea.vmem %s3, 128
      %v6248 = vld [vmem:[%s6247] sm:$0xff]
      %s6249 = scalar_lea.vmem %s4, 88
      %v6250 = vld [vmem:[%s6249] sm:$0xff]
      %6252 = vset.pattern.permute.xlu0 0
      %6253 = vperm.xlu0 %6252, %v6250
      %v6254 = vpop.permute.xlu0 %6253
      %v6257 = vsel %vm2339, %v6248, 0
      %6259 = vmatprep.subr.mxu0 %v6132
      %6260 = vmatpush1.msra.mxu0 %v6131
      %6261 = vmatprep.subr.mxu0 %v6148
      %6262 = vmatpush1.msra.mxu0 %v6147
      %6263 = vmatprep.subr.mxu0 %v6164
      %6264 = vmatpush1.msra.mxu0 %v6163
      %6265 = vmatprep.subr.mxu0 %v6180
      %6266 = vmatpush1.msra.mxu0 %v6179
      %6267 = vmatprep.subr.mxu0 %v6116
      %6268 = vmatpush1.msra.mxu0 %v6115
      %6269 = vmatprep.subr.mxu0 %v6196
      %6270 = vmatpush1.msra.mxu0 %v6195
      %6271 = vmatprep.subr.mxu0 %v6212
      %6272 = vmatpush1.msra.mxu0 %v6211
      %6273 = vmatprep.subr.mxu0 %v6228
      %6274 = vmatpush1.msra.mxu0 %v6227
      %6275 = vmatprep.subr.mxu0 %v6244
      %6276 = vmatpush1.msra.mxu0 %v6243
      %6277 = vmatprep.subr.mxu0 0.0
      %6278 = vmatpush1.msra.mxu0 0.0
      %6279 = vmatprep.subr.mxu0 0.0
      %6280 = vmatpush1.msra.mxu0 0.0
      %6281 = vmatprep.subr.mxu0 0.0
      %6282 = vmatpush1.msra.mxu0 0.0
      %6283 = vmatprep.subr.mxu0 0.0
      %6284 = vmatpush1.msra.mxu0 0.0
      %6285 = vmatprep.subr.mxu0 0.0
      %6286 = vmatpush1.msra.mxu0 0.0
      %6287 = vmatprep.subr.mxu0 0.0
      %6288 = vmatpush1.msra.mxu0 0.0
      %6289 = vmatprep.subr.mxu0 0.0
      %6290 = vmatpush1.msra.mxu0 0.0
      %6291 = vmatprep.subr.mxu0 0.0
      %6292 = vmatpush1.msra.mxu0 0.0
      %6293 = vmatprep.subr.mxu0 0.0
      %6294 = vmatpush1.msra.mxu0 0.0
      %6295 = vmatprep.subr.mxu0 0.0
      %6296 = vmatpush1.msra.mxu0 0.0
      %6297 = vmatprep.subr.mxu0 0.0
      %6298 = vmatpush1.msra.mxu0 0.0
      %6299 = vmatprep.subr.mxu0 0.0
      %6300 = vmatpush1.msra.mxu0 0.0
      %6301 = vmatprep.subr.mxu0 0.0
      %6302 = vmatpush1.msra.mxu0 0.0
      %6303 = vmatprep.subr.mxu0 0.0
      %6304 = vmatpush1.msra.mxu0 0.0
      %6305 = vmatprep.subr.mxu0 0.0
      %6306 = vmatpush1.msra.mxu0 0.0
      %6307 = vmatprep.subr.mxu0 0.0
      %6308 = vmatpush1.msra.mxu0 0.0
      %6309 = vmatprep.subr.mxu0 0.0
      %6310 = vmatpush1.msra.mxu0 0.0
      %6311 = vmatprep.subr.mxu0 0.0
      %6312 = vmatpush1.msra.mxu0 0.0
      %6313 = vmatprep.subr.mxu0 0.0
      %6314 = vmatpush1.msra.mxu0 0.0
      %6315 = vmatprep.subr.mxu0 0.0
      %6316 = vmatpush1.msra.mxu0 0.0
      %6317 = vmatprep.subr.mxu0 0.0
      %6318 = vmatpush1.msra.mxu0 0.0
      %6319 = vmatprep.subr.mxu0 0.0
      %6320 = vmatpush1.msra.mxu0 0.0
      %6321 = vmatprep.subr.mxu0 0.0
      %6322 = vmatpush1.msra.mxu0 0.0
      %6323 = vmatprep.mubr.f32.mxu0 0.0
      %6324 = vmatmul.mubr.f32.gmra.mrb[0].mxu0 %v6257
      %v6325 = vpop.f32.mrb[0].mxu0
      %v6326 = vadd.f32 %v6254, %v6325
      %v6327 = vpop.f32.mrb[0].mxu0
      %v6328 = vadd.f32 %v6254, %v6327
      %6329 = vdwg.mxu0
      %6330 = vmatprep.subr.mxu0 %v6134
      %6331 = vmatpush1.msra.mxu0 %v6133
      %6332 = vmatprep.subr.mxu0 %v6150
      %6333 = vmatpush1.msra.mxu0 %v6149
      %6334 = vmatprep.subr.mxu0 %v6166
      %6335 = vmatpush1.msra.mxu0 %v6165
      %6336 = vmatprep.subr.mxu0 %v6182
      %6337 = vmatpush1.msra.mxu0 %v6181
      %6338 = vmatprep.subr.mxu0 %v6118
      %6339 = vmatpush1.msra.mxu0 %v6117
      %6340 = vmatprep.subr.mxu0 %v6198
      %6341 = vmatpush1.msra.mxu0 %v6197
      %6342 = vmatprep.subr.mxu0 %v6214
      %6343 = vmatpush1.msra.mxu0 %v6213
      %6344 = vmatprep.subr.mxu0 %v6230
      %6345 = vmatpush1.msra.mxu0 %v6229
      %6346 = vmatprep.subr.mxu0 %v6246
      %6347 = vmatpush1.msra.mxu0 %v6245
      %6348 = vmatprep.subr.mxu0 0.0
      %6349 = vmatpush1.msra.mxu0 0.0
      %6350 = vmatprep.subr.mxu0 0.0
      %6351 = vmatpush1.msra.mxu0 0.0
      %6352 = vmatprep.subr.mxu0 0.0
      %6353 = vmatpush1.msra.mxu0 0.0
      %6354 = vmatprep.subr.mxu0 0.0
      %6355 = vmatpush1.msra.mxu0 0.0
      %6356 = vmatprep.subr.mxu0 0.0
      %6357 = vmatpush1.msra.mxu0 0.0
      %6358 = vmatprep.subr.mxu0 0.0
      %6359 = vmatpush1.msra.mxu0 0.0
      %6360 = vmatprep.subr.mxu0 0.0
      %6361 = vmatpush1.msra.mxu0 0.0
      %6362 = vmatprep.subr.mxu0 0.0
      %6363 = vmatpush1.msra.mxu0 0.0
      %6364 = vmatprep.subr.mxu0 0.0
      %6365 = vmatpush1.msra.mxu0 0.0
      %6366 = vmatprep.subr.mxu0 0.0
      %6367 = vmatpush1.msra.mxu0 0.0
      %6368 = vmatprep.subr.mxu0 0.0
      %6369 = vmatpush1.msra.mxu0 0.0
      %6370 = vmatprep.subr.mxu0 0.0
      %6371 = vmatpush1.msra.mxu0 0.0
      %6372 = vmatprep.subr.mxu0 0.0
      %6373 = vmatpush1.msra.mxu0 0.0
      %6374 = vmatprep.subr.mxu0 0.0
      %6375 = vmatpush1.msra.mxu0 0.0
      %6376 = vmatprep.subr.mxu0 0.0
      %6377 = vmatpush1.msra.mxu0 0.0
      %6378 = vmatprep.subr.mxu0 0.0
      %6379 = vmatpush1.msra.mxu0 0.0
      %6380 = vmatprep.subr.mxu0 0.0
      %6381 = vmatpush1.msra.mxu0 0.0
      %6382 = vmatprep.subr.mxu0 0.0
      %6383 = vmatpush1.msra.mxu0 0.0
      %6384 = vmatprep.subr.mxu0 0.0
      %6385 = vmatpush1.msra.mxu0 0.0
      %6386 = vmatprep.subr.mxu0 0.0
      %6387 = vmatpush1.msra.mxu0 0.0
      %6388 = vmatprep.subr.mxu0 0.0
      %6389 = vmatpush1.msra.mxu0 0.0
      %6390 = vmatprep.subr.mxu0 0.0
      %6391 = vmatpush1.msra.mxu0 0.0
      %6392 = vmatprep.subr.mxu0 0.0
      %6393 = vmatpush1.msra.mxu0 0.0
      %6394 = vmatprep.mubr.f32.mxu0 0.0
      %6395 = vmatmul.mubr.f32.gmra.mrb[0].mxu0 %v6257
      %v6396 = vpop.f32.mrb[0].mxu0
      %v6397 = vadd.f32 %v6254, %v6396
      %v6398 = vpop.f32.mrb[0].mxu0
      %v6399 = vadd.f32 %v6254, %v6398
      %6400 = vdwg.mxu0
      %vm6401 = vcmp.ge.f32.partialorder %v6326, 0.0
      %vm6402 = vcmp.ge.f32.partialorder %v6328, 0.0
      %vm6403 = vcmp.ge.f32.partialorder %v6397, 0.0
      %vm6404 = vcmp.ge.f32.partialorder %v6399, 0.0
      %s6405 = scalar_lea.vmem %s5, 88
      %v6406 = vld [vmem:[%s6405] sm:$0xff]
      %6408 = vset.pattern.permute.xlu0 0
      %6409 = vperm.xlu0 %6408, %v6406
      %v6410 = vpop.permute.xlu0 %6409
      %v6412 = vmul.f32 %v6410, %v6326
      %v6413 = vmul.f32 %v6410, %v6328
      %v6414 = vmul.f32 %v6410, %v6397
      %v6415 = vmul.f32 %v6410, %v6399
      %v6416 = vsel %vm6401, %v6326, %v6412
      %v6417 = vsel %vm6402, %v6328, %v6413
      %v6418 = vsel %vm6403, %v6397, %v6414
      %v6419 = vsel %vm6404, %v6399, %v6415
      %6420 = vrot.lane.b32.xlu0 %v6416, 17
      %v6421 = vpop.permute.xlu0 %6420
      %6422 = vrot.lane.b32.xlu0 %v6417, 17
      %v6423 = vpop.permute.xlu0 %6422
      %6424 = vrot.lane.b32.xlu0 %v6418, 17
      %v6425 = vpop.permute.xlu0 %6424
      %6426 = vrot.lane.b32.xlu0 %v6419, 17
      %v6427 = vpop.permute.xlu0 %6426
      %v6428 = vsel %vm424, %v6425, %v6427
      %v6429 = vsel %vm424, %v6423, %v6425
      %v6430 = vsel %vm424, %v6421, %v6423
      %v6431 = vsel %vm424, %v6427, %v6421
      %v6432 = vmul.f32 %v6431, %v433
      %v6433 = vmul.f32 %v6430, %v437
      %v6434 = vmul.f32 %v6429, %v441
      %v6435 = vmul.f32 %v6428, %v445
      %6436 = vrot.lane.b32.xlu0 %v6416, 16
      %v6437 = vpop.permute.xlu0 %6436
      %6438 = vrot.lane.b32.xlu0 %v6417, 16
      %v6439 = vpop.permute.xlu0 %6438
      %6440 = vrot.lane.b32.xlu0 %v6418, 16
      %v6441 = vpop.permute.xlu0 %6440
      %6442 = vrot.lane.b32.xlu0 %v6419, 16
      %v6443 = vpop.permute.xlu0 %6442
      %v6444 = vsel %vm464, %v6441, %v6443
      %v6445 = vsel %vm464, %v6439, %v6441
      %v6446 = vsel %vm464, %v6437, %v6439
      %v6447 = vsel %vm464, %v6443, %v6437
      %v6448 = vmul.f32 %v6447, %v473
      %v6449 = vmul.f32 %v6446, %v477
      %v6450 = vmul.f32 %v6445, %v481
      %v6451 = vmul.f32 %v6444, %v485
      %6452 = vrot.lane.b32.xlu0 %v6416, 15
      %v6453 = vpop.permute.xlu0 %6452
      %6454 = vrot.lane.b32.xlu0 %v6417, 15
      %v6455 = vpop.permute.xlu0 %6454
      %6456 = vrot.lane.b32.xlu0 %v6418, 15
      %v6457 = vpop.permute.xlu0 %6456
      %6458 = vrot.lane.b32.xlu0 %v6419, 15
      %v6459 = vpop.permute.xlu0 %6458
      %v6460 = vsel %vm820, %v6457, %v6459
      %v6461 = vsel %vm820, %v6455, %v6457
      %v6462 = vsel %vm820, %v6453, %v6455
      %v6463 = vsel %vm820, %v6459, %v6453
      %v6464 = vmul.f32 %v6463, %v829
      %v6465 = vmul.f32 %v6462, %v833
      %v6466 = vmul.f32 %v6461, %v837
      %v6467 = vmul.f32 %v6460, %v841
      %6468 = vrot.lane.b32.xlu0 %v6416, 1
      %v6469 = vpop.permute.xlu0 %6468
      %6470 = vrot.lane.b32.xlu0 %v6417, 1
      %v6471 = vpop.permute.xlu0 %6470
      %6472 = vrot.lane.b32.xlu0 %v6418, 1
      %v6473 = vpop.permute.xlu0 %6472
      %6474 = vrot.lane.b32.xlu0 %v6419, 1
      %v6475 = vpop.permute.xlu0 %6474
      %v6476 = vsel %vm1021, %v6473, %v6475
      %v6477 = vsel %vm1021, %v6471, %v6473
      %v6478 = vsel %vm1021, %v6469, %v6471
      %v6479 = vsel %vm1021, %v6475, %v6469
      %v6480 = vmul.f32 %v6479, %v1030
      %v6481 = vmul.f32 %v6478, %v1034
      %v6482 = vmul.f32 %v6477, %v1038
      %v6483 = vmul.f32 %v6476, %v1042
      %6484 = vrot.lane.b32.xlu0 %v6416, 127
      %v6485 = vpop.permute.xlu0 %6484
      %6486 = vrot.lane.b32.xlu0 %v6417, 127
      %v6487 = vpop.permute.xlu0 %6486
      %6488 = vrot.lane.b32.xlu0 %v6418, 127
      %v6489 = vpop.permute.xlu0 %6488
      %6490 = vrot.lane.b32.xlu0 %v6419, 127
      %v6491 = vpop.permute.xlu0 %6490
      %v6492 = vsel %vm1381, %v6489, %v6491
      %v6493 = vsel %vm1381, %v6487, %v6489
      %v6494 = vsel %vm1381, %v6485, %v6487
      %v6495 = vsel %vm1381, %v6491, %v6485
      %v6496 = vmul.f32 %v6494, %v1390
      %v6497 = vmul.f32 %v6493, %v1394
      %v6498 = vmul.f32 %v6492, %v1398
      %v6499 = vmul.f32 %v6495, %v1402
      %6500 = vrot.lane.b32.xlu0 %v6416, 113
      %v6501 = vpop.permute.xlu0 %6500
      %6502 = vrot.lane.b32.xlu0 %v6417, 113
      %v6503 = vpop.permute.xlu0 %6502
      %6504 = vrot.lane.b32.xlu0 %v6418, 113
      %v6505 = vpop.permute.xlu0 %6504
      %6506 = vrot.lane.b32.xlu0 %v6419, 113
      %v6507 = vpop.permute.xlu0 %6506
      %v6508 = vsel %vm1582, %v6505, %v6507
      %v6509 = vsel %vm1582, %v6503, %v6505
      %v6510 = vsel %vm1582, %v6501, %v6503
      %v6511 = vsel %vm1582, %v6507, %v6501
      %v6512 = vmul.f32 %v6510, %v1591
      %v6513 = vmul.f32 %v6509, %v1595
      %v6514 = vmul.f32 %v6508, %v1599
      %v6515 = vmul.f32 %v6511, %v1603
      %6516 = vrot.lane.b32.xlu0 %v6416, 112
      %v6517 = vpop.permute.xlu0 %6516
      %6518 = vrot.lane.b32.xlu0 %v6417, 112
      %v6519 = vpop.permute.xlu0 %6518
      %6520 = vrot.lane.b32.xlu0 %v6418, 112
      %v6521 = vpop.permute.xlu0 %6520
      %6522 = vrot.lane.b32.xlu0 %v6419, 112
      %v6523 = vpop.permute.xlu0 %6522
      %v6524 = vsel %vm1783, %v6521, %v6523
      %v6525 = vsel %vm1783, %v6519, %v6521
      %v6526 = vsel %vm1783, %v6517, %v6519
      %v6527 = vsel %vm1783, %v6523, %v6517
      %v6528 = vmul.f32 %v6526, %v1792
      %v6529 = vmul.f32 %v6525, %v1796
      %v6530 = vmul.f32 %v6524, %v1800
      %v6531 = vmul.f32 %v6527, %v1804
      %6532 = vrot.lane.b32.xlu0 %v6416, 111
      %v6533 = vpop.permute.xlu0 %6532
      %6534 = vrot.lane.b32.xlu0 %v6417, 111
      %v6535 = vpop.permute.xlu0 %6534
      %6536 = vrot.lane.b32.xlu0 %v6418, 111
      %v6537 = vpop.permute.xlu0 %6536
      %6538 = vrot.lane.b32.xlu0 %v6419, 111
      %v6539 = vpop.permute.xlu0 %6538
      %v6540 = vsel %vm1984, %v6537, %v6539
      %v6541 = vsel %vm1984, %v6535, %v6537
      %v6542 = vsel %vm1984, %v6533, %v6535
      %v6543 = vsel %vm1984, %v6539, %v6533
      %v6544 = vmul.f32 %v6542, %v1993
      %v6545 = vmul.f32 %v6541, %v1997
      %v6546 = vmul.f32 %v6540, %v2001
      %v6547 = vmul.f32 %v6543, %v2005
      %s6548 = scalar_lea.vmem %s3, 136
      %v6549 = vld [vmem:[%s6548] sm:$0xff]
      %s6550 = scalar_lea.vmem %s3, 144
      %v6551 = vld [vmem:[%s6550] sm:$0xff]
      %v6553 = vsel %vm2339, %v6551, 0
      %6555 = vmatprep.subr.mxu0 %v6132
      %6556 = vmatpush1.msra.mxu0 %v6131
      %6557 = vmatprep.subr.mxu0 %v6148
      %6558 = vmatpush1.msra.mxu0 %v6147
      %6559 = vmatprep.subr.mxu0 %v6164
      %6560 = vmatpush1.msra.mxu0 %v6163
      %6561 = vmatprep.subr.mxu0 %v6180
      %6562 = vmatpush1.msra.mxu0 %v6179
      %6563 = vmatprep.subr.mxu0 %v6116
      %6564 = vmatpush1.msra.mxu0 %v6115
      %6565 = vmatprep.subr.mxu0 %v6196
      %6566 = vmatpush1.msra.mxu0 %v6195
      %6567 = vmatprep.subr.mxu0 %v6212
      %6568 = vmatpush1.msra.mxu0 %v6211
      %6569 = vmatprep.subr.mxu0 %v6228
      %6570 = vmatpush1.msra.mxu0 %v6227
      %6571 = vmatprep.subr.mxu0 %v6244
      %6572 = vmatpush1.msra.mxu0 %v6243
      %6573 = vmatprep.subr.mxu0 0.0
      %6574 = vmatpush1.msra.mxu0 0.0
      %6575 = vmatprep.subr.mxu0 0.0
      %6576 = vmatpush1.msra.mxu0 0.0
      %6577 = vmatprep.subr.mxu0 0.0
      %6578 = vmatpush1.msra.mxu0 0.0
      %6579 = vmatprep.subr.mxu0 0.0
      %6580 = vmatpush1.msra.mxu0 0.0
      %6581 = vmatprep.subr.mxu0 0.0
      %6582 = vmatpush1.msra.mxu0 0.0
      %6583 = vmatprep.subr.mxu0 0.0
      %6584 = vmatpush1.msra.mxu0 0.0
      %6585 = vmatprep.subr.mxu0 0.0
      %6586 = vmatpush1.msra.mxu0 0.0
      %6587 = vmatprep.subr.mxu0 0.0
      %6588 = vmatpush1.msra.mxu0 0.0
      %6589 = vmatprep.subr.mxu0 0.0
      %6590 = vmatpush1.msra.mxu0 0.0
      %6591 = vmatprep.subr.mxu0 0.0
      %6592 = vmatpush1.msra.mxu0 0.0
      %6593 = vmatprep.subr.mxu0 0.0
      %6594 = vmatpush1.msra.mxu0 0.0
      %6595 = vmatprep.subr.mxu0 0.0
      %6596 = vmatpush1.msra.mxu0 0.0
      %6597 = vmatprep.subr.mxu0 0.0
      %6598 = vmatpush1.msra.mxu0 0.0
      %6599 = vmatprep.subr.mxu0 0.0
      %6600 = vmatpush1.msra.mxu0 0.0
      %6601 = vmatprep.subr.mxu0 0.0
      %6602 = vmatpush1.msra.mxu0 0.0
      %6603 = vmatprep.subr.mxu0 0.0
      %6604 = vmatpush1.msra.mxu0 0.0
      %6605 = vmatprep.subr.mxu0 0.0
      %6606 = vmatpush1.msra.mxu0 0.0
      %6607 = vmatprep.subr.mxu0 0.0
      %6608 = vmatpush1.msra.mxu0 0.0
      %6609 = vmatprep.subr.mxu0 0.0
      %6610 = vmatpush1.msra.mxu0 0.0
      %6611 = vmatprep.subr.mxu0 0.0
      %6612 = vmatpush1.msra.mxu0 0.0
      %6613 = vmatprep.subr.mxu0 0.0
      %6614 = vmatpush1.msra.mxu0 0.0
      %6615 = vmatprep.subr.mxu0 0.0
      %6616 = vmatpush1.msra.mxu0 0.0
      %6617 = vmatprep.subr.mxu0 0.0
      %6618 = vmatpush1.msra.mxu0 0.0
      %6619 = vmatprep.mubr.f32.mxu0 0.0
      %6620 = vmatmul.mubr.f32.gmra.mrb[0].mxu0 %v6553
      %v6621 = vpop.f32.mrb[0].mxu0
      %v6622 = vadd.f32 0.0, %v6621
      %v6623 = vpop.f32.mrb[0].mxu0
      %v6624 = vadd.f32 0.0, %v6623
      %6625 = vdwg.mxu0
      %6626 = vmatprep.subr.mxu0 %v6134
      %6627 = vmatpush1.msra.mxu0 %v6133
      %6628 = vmatprep.subr.mxu0 %v6150
      %6629 = vmatpush1.msra.mxu0 %v6149
      %6630 = vmatprep.subr.mxu0 %v6166
      %6631 = vmatpush1.msra.mxu0 %v6165
      %6632 = vmatprep.subr.mxu0 %v6182
      %6633 = vmatpush1.msra.mxu0 %v6181
      %6634 = vmatprep.subr.mxu0 %v6118
      %6635 = vmatpush1.msra.mxu0 %v6117
      %6636 = vmatprep.subr.mxu0 %v6198
      %6637 = vmatpush1.msra.mxu0 %v6197
      %6638 = vmatprep.subr.mxu0 %v6214
      %6639 = vmatpush1.msra.mxu0 %v6213
      %6640 = vmatprep.subr.mxu0 %v6230
      %6641 = vmatpush1.msra.mxu0 %v6229
      %6642 = vmatprep.subr.mxu0 %v6246
      %6643 = vmatpush1.msra.mxu0 %v6245
      %6644 = vmatprep.subr.mxu0 0.0
      %6645 = vmatpush1.msra.mxu0 0.0
      %6646 = vmatprep.subr.mxu0 0.0
      %6647 = vmatpush1.msra.mxu0 0.0
      %6648 = vmatprep.subr.mxu0 0.0
      %6649 = vmatpush1.msra.mxu0 0.0
      %6650 = vmatprep.subr.mxu0 0.0
      %6651 = vmatpush1.msra.mxu0 0.0
      %6652 = vmatprep.subr.mxu0 0.0
      %6653 = vmatpush1.msra.mxu0 0.0
      %6654 = vmatprep.subr.mxu0 0.0
      %6655 = vmatpush1.msra.mxu0 0.0
      %6656 = vmatprep.subr.mxu0 0.0
      %6657 = vmatpush1.msra.mxu0 0.0
      %6658 = vmatprep.subr.mxu0 0.0
      %6659 = vmatpush1.msra.mxu0 0.0
      %6660 = vmatprep.subr.mxu0 0.0
      %6661 = vmatpush1.msra.mxu0 0.0
      %6662 = vmatprep.subr.mxu0 0.0
      %6663 = vmatpush1.msra.mxu0 0.0
      %6664 = vmatprep.subr.mxu0 0.0
      %6665 = vmatpush1.msra.mxu0 0.0
      %6666 = vmatprep.subr.mxu0 0.0
      %6667 = vmatpush1.msra.mxu0 0.0
      %6668 = vmatprep.subr.mxu0 0.0
      %6669 = vmatpush1.msra.mxu0 0.0
      %6670 = vmatprep.subr.mxu0 0.0
      %6671 = vmatpush1.msra.mxu0 0.0
      %6672 = vmatprep.subr.mxu0 0.0
      %6673 = vmatpush1.msra.mxu0 0.0
      %6674 = vmatprep.subr.mxu0 0.0
      %6675 = vmatpush1.msra.mxu0 0.0
      %6676 = vmatprep.subr.mxu0 0.0
      %6677 = vmatpush1.msra.mxu0 0.0
      %6678 = vmatprep.subr.mxu0 0.0
      %6679 = vmatpush1.msra.mxu0 0.0
      %6680 = vmatprep.subr.mxu0 0.0
      %6681 = vmatpush1.msra.mxu0 0.0
      %6682 = vmatprep.subr.mxu0 0.0
      %6683 = vmatpush1.msra.mxu0 0.0
      %6684 = vmatprep.subr.mxu0 0.0
      %6685 = vmatpush1.msra.mxu0 0.0
      %6686 = vmatprep.subr.mxu0 0.0
      %6687 = vmatpush1.msra.mxu0 0.0
      %6688 = vmatprep.subr.mxu0 0.0
      %6689 = vmatpush1.msra.mxu0 0.0
      %6690 = vmatprep.mubr.f32.mxu0 0.0
      %6691 = vmatmul.mubr.f32.gmra.mrb[0].mxu0 %v6553
      %v6692 = vpop.f32.mrb[0].mxu0
      %v6693 = vadd.f32 0.0, %v6692
      %v6694 = vpop.f32.mrb[0].mxu0
      %v6695 = vadd.f32 0.0, %v6694
      %6696 = vdwg.mxu0
      %v6698 = vsel %vm2339, %v6549, 0
      %6700 = vmatprep.subr.mxu0 %v5831
      %6701 = vmatpush1.msra.mxu0 %v5830
      %6702 = vmatprep.subr.mxu0 %v5847
      %6703 = vmatpush1.msra.mxu0 %v5846
      %6704 = vmatprep.subr.mxu0 %v5863
      %6705 = vmatpush1.msra.mxu0 %v5862
      %6706 = vmatprep.subr.mxu0 %v5879
      %6707 = vmatpush1.msra.mxu0 %v5878
      %6708 = vmatprep.subr.mxu0 %v5815
      %6709 = vmatpush1.msra.mxu0 %v5814
      %6710 = vmatprep.subr.mxu0 %v5895
      %6711 = vmatpush1.msra.mxu0 %v5894
      %6712 = vmatprep.subr.mxu0 %v5911
      %6713 = vmatpush1.msra.mxu0 %v5910
      %6714 = vmatprep.subr.mxu0 %v5927
      %6715 = vmatpush1.msra.mxu0 %v5926
      %6716 = vmatprep.subr.mxu0 %v5943
      %6717 = vmatpush1.msra.mxu0 %v5942
      %6718 = vmatprep.subr.mxu0 0.0
      %6719 = vmatpush1.msra.mxu0 0.0
      %6720 = vmatprep.subr.mxu0 0.0
      %6721 = vmatpush1.msra.mxu0 0.0
      %6722 = vmatprep.subr.mxu0 0.0
      %6723 = vmatpush1.msra.mxu0 0.0
      %6724 = vmatprep.subr.mxu0 0.0
      %6725 = vmatpush1.msra.mxu0 0.0
      %6726 = vmatprep.subr.mxu0 0.0
      %6727 = vmatpush1.msra.mxu0 0.0
      %6728 = vmatprep.subr.mxu0 0.0
      %6729 = vmatpush1.msra.mxu0 0.0
      %6730 = vmatprep.subr.mxu0 0.0
      %6731 = vmatpush1.msra.mxu0 0.0
      %6732 = vmatprep.subr.mxu0 0.0
      %6733 = vmatpush1.msra.mxu0 0.0
      %6734 = vmatprep.subr.mxu0 0.0
      %6735 = vmatpush1.msra.mxu0 0.0
      %6736 = vmatprep.subr.mxu0 0.0
      %6737 = vmatpush1.msra.mxu0 0.0
      %6738 = vmatprep.subr.mxu0 0.0
      %6739 = vmatpush1.msra.mxu0 0.0
      %6740 = vmatprep.subr.mxu0 0.0
      %6741 = vmatpush1.msra.mxu0 0.0
      %6742 = vmatprep.subr.mxu0 0.0
      %6743 = vmatpush1.msra.mxu0 0.0
      %6744 = vmatprep.subr.mxu0 0.0
      %6745 = vmatpush1.msra.mxu0 0.0
      %6746 = vmatprep.subr.mxu0 0.0
      %6747 = vmatpush1.msra.mxu0 0.0
      %6748 = vmatprep.subr.mxu0 0.0
      %6749 = vmatpush1.msra.mxu0 0.0
      %6750 = vmatprep.subr.mxu0 0.0
      %6751 = vmatpush1.msra.mxu0 0.0
      %6752 = vmatprep.subr.mxu0 0.0
      %6753 = vmatpush1.msra.mxu0 0.0
      %6754 = vmatprep.subr.mxu0 0.0
      %6755 = vmatpush1.msra.mxu0 0.0
      %6756 = vmatprep.subr.mxu0 0.0
      %6757 = vmatpush1.msra.mxu0 0.0
      %6758 = vmatprep.subr.mxu0 0.0
      %6759 = vmatpush1.msra.mxu0 0.0
      %6760 = vmatprep.subr.mxu0 0.0
      %6761 = vmatpush1.msra.mxu0 0.0
      %6762 = vmatprep.subr.mxu0 0.0
      %6763 = vmatpush1.msra.mxu0 0.0
      %6764 = vmatprep.mubr.f32.mxu0 0.0
      %6765 = vmatmul.mubr.f32.gmra.mrb[0].mxu0 %v6698
      %v6766 = vpop.f32.mrb[0].mxu0
      %v6767 = vadd.f32 %v6622, %v6766
      %v6768 = vpop.f32.mrb[0].mxu0
      %v6769 = vadd.f32 %v6624, %v6768
      %6770 = vdwg.mxu0
      %6771 = vmatprep.subr.mxu0 %v5833
      %6772 = vmatpush1.msra.mxu0 %v5832
      %6773 = vmatprep.subr.mxu0 %v5849
      %6774 = vmatpush1.msra.mxu0 %v5848
      %6775 = vmatprep.subr.mxu0 %v5865
      %6776 = vmatpush1.msra.mxu0 %v5864
      %6777 = vmatprep.subr.mxu0 %v5881
      %6778 = vmatpush1.msra.mxu0 %v5880
      %6779 = vmatprep.subr.mxu0 %v5817
      %6780 = vmatpush1.msra.mxu0 %v5816
      %6781 = vmatprep.subr.mxu0 %v5897
      %6782 = vmatpush1.msra.mxu0 %v5896
      %6783 = vmatprep.subr.mxu0 %v5913
      %6784 = vmatpush1.msra.mxu0 %v5912
      %6785 = vmatprep.subr.mxu0 %v5929
      %6786 = vmatpush1.msra.mxu0 %v5928
      %6787 = vmatprep.subr.mxu0 %v5945
      %6788 = vmatpush1.msra.mxu0 %v5944
      %6789 = vmatprep.subr.mxu0 0.0
      %6790 = vmatpush1.msra.mxu0 0.0
      %6791 = vmatprep.subr.mxu0 0.0
      %6792 = vmatpush1.msra.mxu0 0.0
      %6793 = vmatprep.subr.mxu0 0.0
      %6794 = vmatpush1.msra.mxu0 0.0
      %6795 = vmatprep.subr.mxu0 0.0
      %6796 = vmatpush1.msra.mxu0 0.0
      %6797 = vmatprep.subr.mxu0 0.0
      %6798 = vmatpush1.msra.mxu0 0.0
      %6799 = vmatprep.subr.mxu0 0.0
      %6800 = vmatpush1.msra.mxu0 0.0
      %6801 = vmatprep.subr.mxu0 0.0
      %6802 = vmatpush1.msra.mxu0 0.0
      %6803 = vmatprep.subr.mxu0 0.0
      %6804 = vmatpush1.msra.mxu0 0.0
      %6805 = vmatprep.subr.mxu0 0.0
      %6806 = vmatpush1.msra.mxu0 0.0
      %6807 = vmatprep.subr.mxu0 0.0
      %6808 = vmatpush1.msra.mxu0 0.0
      %6809 = vmatprep.subr.mxu0 0.0
      %6810 = vmatpush1.msra.mxu0 0.0
      %6811 = vmatprep.subr.mxu0 0.0
      %6812 = vmatpush1.msra.mxu0 0.0
      %6813 = vmatprep.subr.mxu0 0.0
      %6814 = vmatpush1.msra.mxu0 0.0
      %6815 = vmatprep.subr.mxu0 0.0
      %6816 = vmatpush1.msra.mxu0 0.0
      %6817 = vmatprep.subr.mxu0 0.0
      %6818 = vmatpush1.msra.mxu0 0.0
      %6819 = vmatprep.subr.mxu0 0.0
      %6820 = vmatpush1.msra.mxu0 0.0
      %6821 = vmatprep.subr.mxu0 0.0
      %6822 = vmatpush1.msra.mxu0 0.0
      %6823 = vmatprep.subr.mxu0 0.0
      %6824 = vmatpush1.msra.mxu0 0.0
      %6825 = vmatprep.subr.mxu0 0.0
      %6826 = vmatpush1.msra.mxu0 0.0
      %6827 = vmatprep.subr.mxu0 0.0
      %6828 = vmatpush1.msra.mxu0 0.0
      %6829 = vmatprep.subr.mxu0 0.0
      %6830 = vmatpush1.msra.mxu0 0.0
      %6831 = vmatprep.subr.mxu0 0.0
      %6832 = vmatpush1.msra.mxu0 0.0
      %6833 = vmatprep.subr.mxu0 0.0
      %6834 = vmatpush1.msra.mxu0 0.0
      %6835 = vmatprep.mubr.f32.mxu0 0.0
      %6836 = vmatmul.mubr.f32.gmra.mrb[0].mxu0 %v6698
      %v6837 = vpop.f32.mrb[0].mxu0
      %v6838 = vadd.f32 %v6693, %v6837
      %v6839 = vpop.f32.mrb[0].mxu0
      %v6840 = vadd.f32 %v6695, %v6839
      %6841 = vdwg.mxu0
      %s6842 = scalar_lea.vmem %s3, 152
      %v6843 = vld [vmem:[%s6842] sm:$0xff]
      %v6845 = vsel %vm2339, %v6843, 0
      %6847 = vmatprep.subr.mxu0 %v6433
      %6848 = vmatpush1.msra.mxu0 %v6432
      %6849 = vmatprep.subr.mxu0 %v6449
      %6850 = vmatpush1.msra.mxu0 %v6448
      %6851 = vmatprep.subr.mxu0 %v6465
      %6852 = vmatpush1.msra.mxu0 %v6464
      %6853 = vmatprep.subr.mxu0 %v6481
      %6854 = vmatpush1.msra.mxu0 %v6480
      %6855 = vmatprep.subr.mxu0 %v6417
      %6856 = vmatpush1.msra.mxu0 %v6416
      %6857 = vmatprep.subr.mxu0 %v6497
      %6858 = vmatpush1.msra.mxu0 %v6496
      %6859 = vmatprep.subr.mxu0 %v6513
      %6860 = vmatpush1.msra.mxu0 %v6512
      %6861 = vmatprep.subr.mxu0 %v6529
      %6862 = vmatpush1.msra.mxu0 %v6528
      %6863 = vmatprep.subr.mxu0 %v6545
      %6864 = vmatpush1.msra.mxu0 %v6544
      %6865 = vmatprep.subr.mxu0 0.0
      %6866 = vmatpush1.msra.mxu0 0.0
      %6867 = vmatprep.subr.mxu0 0.0
      %6868 = vmatpush1.msra.mxu0 0.0
      %6869 = vmatprep.subr.mxu0 0.0
      %6870 = vmatpush1.msra.mxu0 0.0
      %6871 = vmatprep.subr.mxu0 0.0
      %6872 = vmatpush1.msra.mxu0 0.0
      %6873 = vmatprep.subr.mxu0 0.0
      %6874 = vmatpush1.msra.mxu0 0.0
      %6875 = vmatprep.subr.mxu0 0.0
      %6876 = vmatpush1.msra.mxu0 0.0
      %6877 = vmatprep.subr.mxu0 0.0
      %6878 = vmatpush1.msra.mxu0 0.0
      %6879 = vmatprep.subr.mxu0 0.0
      %6880 = vmatpush1.msra.mxu0 0.0
      %6881 = vmatprep.subr.mxu0 0.0
      %6882 = vmatpush1.msra.mxu0 0.0
      %6883 = vmatprep.subr.mxu0 0.0
      %6884 = vmatpush1.msra.mxu0 0.0
      %6885 = vmatprep.subr.mxu0 0.0
      %6886 = vmatpush1.msra.mxu0 0.0
      %6887 = vmatprep.subr.mxu0 0.0
      %6888 = vmatpush1.msra.mxu0 0.0
      %6889 = vmatprep.subr.mxu0 0.0
      %6890 = vmatpush1.msra.mxu0 0.0
      %6891 = vmatprep.subr.mxu0 0.0
      %6892 = vmatpush1.msra.mxu0 0.0
      %6893 = vmatprep.subr.mxu0 0.0
      %6894 = vmatpush1.msra.mxu0 0.0
      %6895 = vmatprep.subr.mxu0 0.0
      %6896 = vmatpush1.msra.mxu0 0.0
      %6897 = vmatprep.subr.mxu0 0.0
      %6898 = vmatpush1.msra.mxu0 0.0
      %6899 = vmatprep.subr.mxu0 0.0
      %6900 = vmatpush1.msra.mxu0 0.0
      %6901 = vmatprep.subr.mxu0 0.0
      %6902 = vmatpush1.msra.mxu0 0.0
      %6903 = vmatprep.subr.mxu0 0.0
      %6904 = vmatpush1.msra.mxu0 0.0
      %6905 = vmatprep.subr.mxu0 0.0
      %6906 = vmatpush1.msra.mxu0 0.0
      %6907 = vmatprep.subr.mxu0 0.0
      %6908 = vmatpush1.msra.mxu0 0.0
      %6909 = vmatprep.subr.mxu0 0.0
      %6910 = vmatpush1.msra.mxu0 0.0
      %6911 = vmatprep.mubr.f32.mxu0 0.0
      %6912 = vmatmul.mubr.f32.gmra.mrb[0].mxu0 %v6845
      %v6913 = vpop.f32.mrb[0].mxu0
      %v6914 = vadd.f32 0.0, %v6913
      %v6915 = vpop.f32.mrb[0].mxu0
      %v6916 = vadd.f32 0.0, %v6915
      %6917 = vdwg.mxu0
      %6918 = vmatprep.subr.mxu0 %v6435
      %6919 = vmatpush1.msra.mxu0 %v6434
      %6920 = vmatprep.subr.mxu0 %v6451
      %6921 = vmatpush1.msra.mxu0 %v6450
      %6922 = vmatprep.subr.mxu0 %v6467
      %6923 = vmatpush1.msra.mxu0 %v6466
      %6924 = vmatprep.subr.mxu0 %v6483
      %6925 = vmatpush1.msra.mxu0 %v6482
      %6926 = vmatprep.subr.mxu0 %v6419
      %6927 = vmatpush1.msra.mxu0 %v6418
      %6928 = vmatprep.subr.mxu0 %v6499
      %6929 = vmatpush1.msra.mxu0 %v6498
      %6930 = vmatprep.subr.mxu0 %v6515
      %6931 = vmatpush1.msra.mxu0 %v6514
      %6932 = vmatprep.subr.mxu0 %v6531
      %6933 = vmatpush1.msra.mxu0 %v6530
      %6934 = vmatprep.subr.mxu0 %v6547
      %6935 = vmatpush1.msra.mxu0 %v6546
      %6936 = vmatprep.subr.mxu0 0.0
      %6937 = vmatpush1.msra.mxu0 0.0
      %6938 = vmatprep.subr.mxu0 0.0
      %6939 = vmatpush1.msra.mxu0 0.0
      %6940 = vmatprep.subr.mxu0 0.0
      %6941 = vmatpush1.msra.mxu0 0.0
      %6942 = vmatprep.subr.mxu0 0.0
      %6943 = vmatpush1.msra.mxu0 0.0
      %6944 = vmatprep.subr.mxu0 0.0
      %6945 = vmatpush1.msra.mxu0 0.0
      %6946 = vmatprep.subr.mxu0 0.0
      %6947 = vmatpush1.msra.mxu0 0.0
      %6948 = vmatprep.subr.mxu0 0.0
      %6949 = vmatpush1.msra.mxu0 0.0
      %6950 = vmatprep.subr.mxu0 0.0
      %6951 = vmatpush1.msra.mxu0 0.0
      %6952 = vmatprep.subr.mxu0 0.0
      %6953 = vmatpush1.msra.mxu0 0.0
      %6954 = vmatprep.subr.mxu0 0.0
      %6955 = vmatpush1.msra.mxu0 0.0
      %6956 = vmatprep.subr.mxu0 0.0
      %6957 = vmatpush1.msra.mxu0 0.0
      %6958 = vmatprep.subr.mxu0 0.0
      %6959 = vmatpush1.msra.mxu0 0.0
      %6960 = vmatprep.subr.mxu0 0.0
      %6961 = vmatpush1.msra.mxu0 0.0
      %6962 = vmatprep.subr.mxu0 0.0
      %6963 = vmatpush1.msra.mxu0 0.0
      %6964 = vmatprep.subr.mxu0 0.0
      %6965 = vmatpush1.msra.mxu0 0.0
      %6966 = vmatprep.subr.mxu0 0.0
      %6967 = vmatpush1.msra.mxu0 0.0
      %6968 = vmatprep.subr.mxu0 0.0
      %6969 = vmatpush1.msra.mxu0 0.0
      %6970 = vmatprep.subr.mxu0 0.0
      %6971 = vmatpush1.msra.mxu0 0.0
      %6972 = vmatprep.subr.mxu0 0.0
      %6973 = vmatpush1.msra.mxu0 0.0
      %6974 = vmatprep.subr.mxu0 0.0
      %6975 = vmatpush1.msra.mxu0 0.0
      %6976 = vmatprep.subr.mxu0 0.0
      %6977 = vmatpush1.msra.mxu0 0.0
      %6978 = vmatprep.subr.mxu0 0.0
      %6979 = vmatpush1.msra.mxu0 0.0
      %6980 = vmatprep.subr.mxu0 0.0
      %6981 = vmatpush1.msra.mxu0 0.0
      %6982 = vmatprep.mubr.f32.mxu0 0.0
      %6983 = vmatmul.mubr.f32.gmra.mrb[0].mxu0 %v6845
      %v6984 = vpop.f32.mrb[0].mxu0
      %v6985 = vadd.f32 0.0, %v6984
      %v6986 = vpop.f32.mrb[0].mxu0
      %v6987 = vadd.f32 0.0, %v6986
      %6988 = vdwg.mxu0
      %v6989 = vadd.f32 %v6767, %v6914
      %v6990 = vadd.f32 %v6769, %v6916
      %v6991 = vadd.f32 %v6838, %v6985
      %v6992 = vadd.f32 %v6840, %v6987
      %s6993 = scalar_lea.vmem %s4, 96
      %v6994 = vld [vmem:[%s6993] sm:$0xff]
      %6996 = vset.pattern.permute.xlu0 0
      %6997 = vperm.xlu0 %6996, %v6994
      %v6998 = vpop.permute.xlu0 %6997
      %v7000 = vadd.f32 %v6989, %v6998
      %v7001 = vadd.f32 %v6990, %v6998
      %v7002 = vadd.f32 %v6991, %v6998
      %v7003 = vadd.f32 %v6992, %v6998
      %vm7004 = vcmp.ge.f32.partialorder %v7000, 0.0
      %vm7005 = vcmp.ge.f32.partialorder %v7001, 0.0
      %vm7006 = vcmp.ge.f32.partialorder %v7002, 0.0
      %vm7007 = vcmp.ge.f32.partialorder %v7003, 0.0
      %s7008 = scalar_lea.vmem %s5, 96
      %v7009 = vld [vmem:[%s7008] sm:$0xff]
      %7011 = vset.pattern.permute.xlu0 0
      %7012 = vperm.xlu0 %7011, %v7009
      %v7013 = vpop.permute.xlu0 %7012
      %v7015 = vmul.f32 %v7013, %v7000
      %v7016 = vmul.f32 %v7013, %v7001
      %v7017 = vmul.f32 %v7013, %v7002
      %v7018 = vmul.f32 %v7013, %v7003
      %v7019 = vsel %vm7004, %v7000, %v7015
      %v7020 = vsel %vm7005, %v7001, %v7016
      %v7021 = vsel %vm7006, %v7002, %v7017
      %v7022 = vsel %vm7007, %v7003, %v7018
      %7023 = vrot.lane.b32.xlu0 %v7019, 17
      %v7024 = vpop.permute.xlu0 %7023
      %7025 = vrot.lane.b32.xlu0 %v7020, 17
      %v7026 = vpop.permute.xlu0 %7025
      %7027 = vrot.lane.b32.xlu0 %v7021, 17
      %v7028 = vpop.permute.xlu0 %7027
      %7029 = vrot.lane.b32.xlu0 %v7022, 17
      %v7030 = vpop.permute.xlu0 %7029
      %v7031 = vsel %vm424, %v7028, %v7030
      %v7032 = vsel %vm424, %v7026, %v7028
      %v7033 = vsel %vm424, %v7024, %v7026
      %v7034 = vsel %vm424, %v7030, %v7024
      %v7035 = vmul.f32 %v7034, %v433
      %v7036 = vmul.f32 %v7033, %v437
      %v7037 = vmul.f32 %v7032, %v441
      %v7038 = vmul.f32 %v7031, %v445
      %7039 = vrot.lane.b32.xlu0 %v7019, 16
      %v7040 = vpop.permute.xlu0 %7039
      %7041 = vrot.lane.b32.xlu0 %v7020, 16
      %v7042 = vpop.permute.xlu0 %7041
      %7043 = vrot.lane.b32.xlu0 %v7021, 16
      %v7044 = vpop.permute.xlu0 %7043
      %7045 = vrot.lane.b32.xlu0 %v7022, 16
      %v7046 = vpop.permute.xlu0 %7045
      %v7047 = vsel %vm464, %v7044, %v7046
      %v7048 = vsel %vm464, %v7042, %v7044
      %v7049 = vsel %vm464, %v7040, %v7042
      %v7050 = vsel %vm464, %v7046, %v7040
      %v7051 = vmul.f32 %v7050, %v473
      %v7052 = vmul.f32 %v7049, %v477
      %v7053 = vmul.f32 %v7048, %v481
      %v7054 = vmul.f32 %v7047, %v485
      %7055 = vrot.lane.b32.xlu0 %v7019, 15
      %v7056 = vpop.permute.xlu0 %7055
      %7057 = vrot.lane.b32.xlu0 %v7020, 15
      %v7058 = vpop.permute.xlu0 %7057
      %7059 = vrot.lane.b32.xlu0 %v7021, 15
      %v7060 = vpop.permute.xlu0 %7059
      %7061 = vrot.lane.b32.xlu0 %v7022, 15
      %v7062 = vpop.permute.xlu0 %7061
      %v7063 = vsel %vm820, %v7060, %v7062
      %v7064 = vsel %vm820, %v7058, %v7060
      %v7065 = vsel %vm820, %v7056, %v7058
      %v7066 = vsel %vm820, %v7062, %v7056
      %v7067 = vmul.f32 %v7066, %v829
      %v7068 = vmul.f32 %v7065, %v833
      %v7069 = vmul.f32 %v7064, %v837
      %v7070 = vmul.f32 %v7063, %v841
      %7071 = vrot.lane.b32.xlu0 %v7019, 1
      %v7072 = vpop.permute.xlu0 %7071
      %7073 = vrot.lane.b32.xlu0 %v7020, 1
      %v7074 = vpop.permute.xlu0 %7073
      %7075 = vrot.lane.b32.xlu0 %v7021, 1
      %v7076 = vpop.permute.xlu0 %7075
      %7077 = vrot.lane.b32.xlu0 %v7022, 1
      %v7078 = vpop.permute.xlu0 %7077
      %v7079 = vsel %vm1021, %v7076, %v7078
      %v7080 = vsel %vm1021, %v7074, %v7076
      %v7081 = vsel %vm1021, %v7072, %v7074
      %v7082 = vsel %vm1021, %v7078, %v7072
      %v7083 = vmul.f32 %v7082, %v1030
      %v7084 = vmul.f32 %v7081, %v1034
      %v7085 = vmul.f32 %v7080, %v1038
      %v7086 = vmul.f32 %v7079, %v1042
      %7087 = vrot.lane.b32.xlu0 %v7019, 127
      %v7088 = vpop.permute.xlu0 %7087
      %7089 = vrot.lane.b32.xlu0 %v7020, 127
      %v7090 = vpop.permute.xlu0 %7089
      %7091 = vrot.lane.b32.xlu0 %v7021, 127
      %v7092 = vpop.permute.xlu0 %7091
      %7093 = vrot.lane.b32.xlu0 %v7022, 127
      %v7094 = vpop.permute.xlu0 %7093
      %v7095 = vsel %vm1381, %v7092, %v7094
      %v7096 = vsel %vm1381, %v7090, %v7092
      %v7097 = vsel %vm1381, %v7088, %v7090
      %v7098 = vsel %vm1381, %v7094, %v7088
      %v7099 = vmul.f32 %v7097, %v1390
      %v7100 = vmul.f32 %v7096, %v1394
      %v7101 = vmul.f32 %v7095, %v1398
      %v7102 = vmul.f32 %v7098, %v1402
      %7103 = vrot.lane.b32.xlu0 %v7019, 113
      %v7104 = vpop.permute.xlu0 %7103
      %7105 = vrot.lane.b32.xlu0 %v7020, 113
      %v7106 = vpop.permute.xlu0 %7105
      %7107 = vrot.lane.b32.xlu0 %v7021, 113
      %v7108 = vpop.permute.xlu0 %7107
      %7109 = vrot.lane.b32.xlu0 %v7022, 113
      %v7110 = vpop.permute.xlu0 %7109
      %v7111 = vsel %vm1582, %v7108, %v7110
      %v7112 = vsel %vm1582, %v7106, %v7108
      %v7113 = vsel %vm1582, %v7104, %v7106
      %v7114 = vsel %vm1582, %v7110, %v7104
      %v7115 = vmul.f32 %v7113, %v1591
      %v7116 = vmul.f32 %v7112, %v1595
      %v7117 = vmul.f32 %v7111, %v1599
      %v7118 = vmul.f32 %v7114, %v1603
      %7119 = vrot.lane.b32.xlu0 %v7019, 112
      %v7120 = vpop.permute.xlu0 %7119
      %7121 = vrot.lane.b32.xlu0 %v7020, 112
      %v7122 = vpop.permute.xlu0 %7121
      %7123 = vrot.lane.b32.xlu0 %v7021, 112
      %v7124 = vpop.permute.xlu0 %7123
      %7125 = vrot.lane.b32.xlu0 %v7022, 112
      %v7126 = vpop.permute.xlu0 %7125
      %v7127 = vsel %vm1783, %v7124, %v7126
      %v7128 = vsel %vm1783, %v7122, %v7124
      %v7129 = vsel %vm1783, %v7120, %v7122
      %v7130 = vsel %vm1783, %v7126, %v7120
      %v7131 = vmul.f32 %v7129, %v1792
      %v7132 = vmul.f32 %v7128, %v1796
      %v7133 = vmul.f32 %v7127, %v1800
      %v7134 = vmul.f32 %v7130, %v1804
      %7135 = vrot.lane.b32.xlu0 %v7019, 111
      %v7136 = vpop.permute.xlu0 %7135
      %7137 = vrot.lane.b32.xlu0 %v7020, 111
      %v7138 = vpop.permute.xlu0 %7137
      %7139 = vrot.lane.b32.xlu0 %v7021, 111
      %v7140 = vpop.permute.xlu0 %7139
      %7141 = vrot.lane.b32.xlu0 %v7022, 111
      %v7142 = vpop.permute.xlu0 %7141
      %v7143 = vsel %vm1984, %v7140, %v7142
      %v7144 = vsel %vm1984, %v7138, %v7140
      %v7145 = vsel %vm1984, %v7136, %v7138
      %v7146 = vsel %vm1984, %v7142, %v7136
      %v7147 = vmul.f32 %v7145, %v1993
      %v7148 = vmul.f32 %v7144, %v1997
      %v7149 = vmul.f32 %v7143, %v2001
      %v7150 = vmul.f32 %v7146, %v2005
      %s7151 = scalar_lea.vmem %s3, 160
      %v7152 = vld [vmem:[%s7151] sm:$0xff]
      %s7153 = scalar_lea.vmem %s4, 104
      %v7154 = vld [vmem:[%s7153] sm:$0xff]
      %7156 = vset.pattern.permute.xlu0 0
      %7157 = vperm.xlu0 %7156, %v7154
      %v7158 = vpop.permute.xlu0 %7157
      %v7161 = vsel %vm2339, %v7152, 0
      %7163 = vmatprep.subr.mxu0 %v7036
      %7164 = vmatpush1.msra.mxu0 %v7035
      %7165 = vmatprep.subr.mxu0 %v7052
      %7166 = vmatpush1.msra.mxu0 %v7051
      %7167 = vmatprep.subr.mxu0 %v7068
      %7168 = vmatpush1.msra.mxu0 %v7067
      %7169 = vmatprep.subr.mxu0 %v7084
      %7170 = vmatpush1.msra.mxu0 %v7083
      %7171 = vmatprep.subr.mxu0 %v7020
      %7172 = vmatpush1.msra.mxu0 %v7019
      %7173 = vmatprep.subr.mxu0 %v7100
      %7174 = vmatpush1.msra.mxu0 %v7099
      %7175 = vmatprep.subr.mxu0 %v7116
      %7176 = vmatpush1.msra.mxu0 %v7115
      %7177 = vmatprep.subr.mxu0 %v7132
      %7178 = vmatpush1.msra.mxu0 %v7131
      %7179 = vmatprep.subr.mxu0 %v7148
      %7180 = vmatpush1.msra.mxu0 %v7147
      %7181 = vmatprep.subr.mxu0 0.0
      %7182 = vmatpush1.msra.mxu0 0.0
      %7183 = vmatprep.subr.mxu0 0.0
      %7184 = vmatpush1.msra.mxu0 0.0
      %7185 = vmatprep.subr.mxu0 0.0
      %7186 = vmatpush1.msra.mxu0 0.0
      %7187 = vmatprep.subr.mxu0 0.0
      %7188 = vmatpush1.msra.mxu0 0.0
      %7189 = vmatprep.subr.mxu0 0.0
      %7190 = vmatpush1.msra.mxu0 0.0
      %7191 = vmatprep.subr.mxu0 0.0
      %7192 = vmatpush1.msra.mxu0 0.0
      %7193 = vmatprep.subr.mxu0 0.0
      %7194 = vmatpush1.msra.mxu0 0.0
      %7195 = vmatprep.subr.mxu0 0.0
      %7196 = vmatpush1.msra.mxu0 0.0
      %7197 = vmatprep.subr.mxu0 0.0
      %7198 = vmatpush1.msra.mxu0 0.0
      %7199 = vmatprep.subr.mxu0 0.0
      %7200 = vmatpush1.msra.mxu0 0.0
      %7201 = vmatprep.subr.mxu0 0.0
      %7202 = vmatpush1.msra.mxu0 0.0
      %7203 = vmatprep.subr.mxu0 0.0
      %7204 = vmatpush1.msra.mxu0 0.0
      %7205 = vmatprep.subr.mxu0 0.0
      %7206 = vmatpush1.msra.mxu0 0.0
      %7207 = vmatprep.subr.mxu0 0.0
      %7208 = vmatpush1.msra.mxu0 0.0
      %7209 = vmatprep.subr.mxu0 0.0
      %7210 = vmatpush1.msra.mxu0 0.0
      %7211 = vmatprep.subr.mxu0 0.0
      %7212 = vmatpush1.msra.mxu0 0.0
      %7213 = vmatprep.subr.mxu0 0.0
      %7214 = vmatpush1.msra.mxu0 0.0
      %7215 = vmatprep.subr.mxu0 0.0
      %7216 = vmatpush1.msra.mxu0 0.0
      %7217 = vmatprep.subr.mxu0 0.0
      %7218 = vmatpush1.msra.mxu0 0.0
      %7219 = vmatprep.subr.mxu0 0.0
      %7220 = vmatpush1.msra.mxu0 0.0
      %7221 = vmatprep.subr.mxu0 0.0
      %7222 = vmatpush1.msra.mxu0 0.0
      %7223 = vmatprep.subr.mxu0 0.0
      %7224 = vmatpush1.msra.mxu0 0.0
      %7225 = vmatprep.subr.mxu0 0.0
      %7226 = vmatpush1.msra.mxu0 0.0
      %7227 = vmatprep.mubr.f32.mxu0 0.0
      %7228 = vmatmul.mubr.f32.gmra.mrb[0].mxu0 %v7161
      %v7229 = vpop.f32.mrb[0].mxu0
      %v7230 = vadd.f32 %v7158, %v7229
      %v7231 = vpop.f32.mrb[0].mxu0
      %v7232 = vadd.f32 %v7158, %v7231
      %7233 = vdwg.mxu0
      %7234 = vmatprep.subr.mxu0 %v7038
      %7235 = vmatpush1.msra.mxu0 %v7037
      %7236 = vmatprep.subr.mxu0 %v7054
      %7237 = vmatpush1.msra.mxu0 %v7053
      %7238 = vmatprep.subr.mxu0 %v7070
      %7239 = vmatpush1.msra.mxu0 %v7069
      %7240 = vmatprep.subr.mxu0 %v7086
      %7241 = vmatpush1.msra.mxu0 %v7085
      %7242 = vmatprep.subr.mxu0 %v7022
      %7243 = vmatpush1.msra.mxu0 %v7021
      %7244 = vmatprep.subr.mxu0 %v7102
      %7245 = vmatpush1.msra.mxu0 %v7101
      %7246 = vmatprep.subr.mxu0 %v7118
      %7247 = vmatpush1.msra.mxu0 %v7117
      %7248 = vmatprep.subr.mxu0 %v7134
      %7249 = vmatpush1.msra.mxu0 %v7133
      %7250 = vmatprep.subr.mxu0 %v7150
      %7251 = vmatpush1.msra.mxu0 %v7149
      %7252 = vmatprep.subr.mxu0 0.0
      %7253 = vmatpush1.msra.mxu0 0.0
      %7254 = vmatprep.subr.mxu0 0.0
      %7255 = vmatpush1.msra.mxu0 0.0
      %7256 = vmatprep.subr.mxu0 0.0
      %7257 = vmatpush1.msra.mxu0 0.0
      %7258 = vmatprep.subr.mxu0 0.0
      %7259 = vmatpush1.msra.mxu0 0.0
      %7260 = vmatprep.subr.mxu0 0.0
      %7261 = vmatpush1.msra.mxu0 0.0
      %7262 = vmatprep.subr.mxu0 0.0
      %7263 = vmatpush1.msra.mxu0 0.0
      %7264 = vmatprep.subr.mxu0 0.0
      %7265 = vmatpush1.msra.mxu0 0.0
      %7266 = vmatprep.subr.mxu0 0.0
      %7267 = vmatpush1.msra.mxu0 0.0
      %7268 = vmatprep.subr.mxu0 0.0
      %7269 = vmatpush1.msra.mxu0 0.0
      %7270 = vmatprep.subr.mxu0 0.0
      %7271 = vmatpush1.msra.mxu0 0.0
      %7272 = vmatprep.subr.mxu0 0.0
      %7273 = vmatpush1.msra.mxu0 0.0
      %7274 = vmatprep.subr.mxu0 0.0
      %7275 = vmatpush1.msra.mxu0 0.0
      %7276 = vmatprep.subr.mxu0 0.0
      %7277 = vmatpush1.msra.mxu0 0.0
      %7278 = vmatprep.subr.mxu0 0.0
      %7279 = vmatpush1.msra.mxu0 0.0
      %7280 = vmatprep.subr.mxu0 0.0
      %7281 = vmatpush1.msra.mxu0 0.0
      %7282 = vmatprep.subr.mxu0 0.0
      %7283 = vmatpush1.msra.mxu0 0.0
      %7284 = vmatprep.subr.mxu0 0.0
      %7285 = vmatpush1.msra.mxu0 0.0
      %7286 = vmatprep.subr.mxu0 0.0
      %7287 = vmatpush1.msra.mxu0 0.0
      %7288 = vmatprep.subr.mxu0 0.0
      %7289 = vmatpush1.msra.mxu0 0.0
      %7290 = vmatprep.subr.mxu0 0.0
      %7291 = vmatpush1.msra.mxu0 0.0
      %7292 = vmatprep.subr.mxu0 0.0
      %7293 = vmatpush1.msra.mxu0 0.0
      %7294 = vmatprep.subr.mxu0 0.0
      %7295 = vmatpush1.msra.mxu0 0.0
      %7296 = vmatprep.subr.mxu0 0.0
      %7297 = vmatpush1.msra.mxu0 0.0
      %7298 = vmatprep.mubr.f32.mxu0 0.0
      %7299 = vmatmul.mubr.f32.gmra.mrb[0].mxu0 %v7161
      %v7300 = vpop.f32.mrb[0].mxu0
      %v7301 = vadd.f32 %v7158, %v7300
      %v7302 = vpop.f32.mrb[0].mxu0
      %v7303 = vadd.f32 %v7158, %v7302
      %7304 = vdwg.mxu0
      %vm7305 = vcmp.ge.f32.partialorder %v7230, 0.0
      %vm7306 = vcmp.ge.f32.partialorder %v7232, 0.0
      %vm7307 = vcmp.ge.f32.partialorder %v7301, 0.0
      %vm7308 = vcmp.ge.f32.partialorder %v7303, 0.0
      %s7309 = scalar_lea.vmem %s5, 104
      %v7310 = vld [vmem:[%s7309] sm:$0xff]
      %7312 = vset.pattern.permute.xlu0 0
      %7313 = vperm.xlu0 %7312, %v7310
      %v7314 = vpop.permute.xlu0 %7313
      %v7316 = vmul.f32 %v7314, %v7230
      %v7317 = vmul.f32 %v7314, %v7232
      %v7318 = vmul.f32 %v7314, %v7301
      %v7319 = vmul.f32 %v7314, %v7303
      %v7320 = vsel %vm7305, %v7230, %v7316
      %v7321 = vsel %vm7306, %v7232, %v7317
      %v7322 = vsel %vm7307, %v7301, %v7318
      %v7323 = vsel %vm7308, %v7303, %v7319
      %7324 = vrot.lane.b32.xlu0 %v7320, 17
      %v7325 = vpop.permute.xlu0 %7324
      %7326 = vrot.lane.b32.xlu0 %v7321, 17
      %v7327 = vpop.permute.xlu0 %7326
      %7328 = vrot.lane.b32.xlu0 %v7322, 17
      %v7329 = vpop.permute.xlu0 %7328
      %7330 = vrot.lane.b32.xlu0 %v7323, 17
      %v7331 = vpop.permute.xlu0 %7330
      %v7332 = vsel %vm424, %v7329, %v7331
      %v7333 = vsel %vm424, %v7327, %v7329
      %v7334 = vsel %vm424, %v7325, %v7327
      %v7335 = vsel %vm424, %v7331, %v7325
      %v7336 = vmul.f32 %v7335, %v433
      %v7337 = vmul.f32 %v7334, %v437
      %v7338 = vmul.f32 %v7333, %v441
      %v7339 = vmul.f32 %v7332, %v445
      %7340 = vrot.lane.b32.xlu0 %v7320, 16
      %v7341 = vpop.permute.xlu0 %7340
      %7342 = vrot.lane.b32.xlu0 %v7321, 16
      %v7343 = vpop.permute.xlu0 %7342
      %7344 = vrot.lane.b32.xlu0 %v7322, 16
      %v7345 = vpop.permute.xlu0 %7344
      %7346 = vrot.lane.b32.xlu0 %v7323, 16
      %v7347 = vpop.permute.xlu0 %7346
      %v7348 = vsel %vm464, %v7345, %v7347
      %v7349 = vsel %vm464, %v7343, %v7345
      %v7350 = vsel %vm464, %v7341, %v7343
      %v7351 = vsel %vm464, %v7347, %v7341
      %v7352 = vmul.f32 %v7351, %v473
      %v7353 = vmul.f32 %v7350, %v477
      %v7354 = vmul.f32 %v7349, %v481
      %v7355 = vmul.f32 %v7348, %v485
      %7356 = vrot.lane.b32.xlu0 %v7320, 15
      %v7357 = vpop.permute.xlu0 %7356
      %7358 = vrot.lane.b32.xlu0 %v7321, 15
      %v7359 = vpop.permute.xlu0 %7358
      %7360 = vrot.lane.b32.xlu0 %v7322, 15
      %v7361 = vpop.permute.xlu0 %7360
      %7362 = vrot.lane.b32.xlu0 %v7323, 15
      %v7363 = vpop.permute.xlu0 %7362
      %v7364 = vsel %vm820, %v7361, %v7363
      %v7365 = vsel %vm820, %v7359, %v7361
      %v7366 = vsel %vm820, %v7357, %v7359
      %v7367 = vsel %vm820, %v7363, %v7357
      %v7368 = vmul.f32 %v7367, %v829
      %v7369 = vmul.f32 %v7366, %v833
      %v7370 = vmul.f32 %v7365, %v837
      %v7371 = vmul.f32 %v7364, %v841
      %7372 = vrot.lane.b32.xlu0 %v7320, 1
      %v7373 = vpop.permute.xlu0 %7372
      %7374 = vrot.lane.b32.xlu0 %v7321, 1
      %v7375 = vpop.permute.xlu0 %7374
      %7376 = vrot.lane.b32.xlu0 %v7322, 1
      %v7377 = vpop.permute.xlu0 %7376
      %7378 = vrot.lane.b32.xlu0 %v7323, 1
      %v7379 = vpop.permute.xlu0 %7378
      %v7380 = vsel %vm1021, %v7377, %v7379
      %v7381 = vsel %vm1021, %v7375, %v7377
      %v7382 = vsel %vm1021, %v7373, %v7375
      %v7383 = vsel %vm1021, %v7379, %v7373
      %v7384 = vmul.f32 %v7383, %v1030
      %v7385 = vmul.f32 %v7382, %v1034
      %v7386 = vmul.f32 %v7381, %v1038
      %v7387 = vmul.f32 %v7380, %v1042
      %7388 = vrot.lane.b32.xlu0 %v7320, 127
      %v7389 = vpop.permute.xlu0 %7388
      %7390 = vrot.lane.b32.xlu0 %v7321, 127
      %v7391 = vpop.permute.xlu0 %7390
      %7392 = vrot.lane.b32.xlu0 %v7322, 127
      %v7393 = vpop.permute.xlu0 %7392
      %7394 = vrot.lane.b32.xlu0 %v7323, 127
      %v7395 = vpop.permute.xlu0 %7394
      %v7396 = vsel %vm1381, %v7393, %v7395
      %v7397 = vsel %vm1381, %v7391, %v7393
      %v7398 = vsel %vm1381, %v7389, %v7391
      %v7399 = vsel %vm1381, %v7395, %v7389
      %v7400 = vmul.f32 %v7398, %v1390
      %v7401 = vmul.f32 %v7397, %v1394
      %v7402 = vmul.f32 %v7396, %v1398
      %v7403 = vmul.f32 %v7399, %v1402
      %7404 = vrot.lane.b32.xlu0 %v7320, 113
      %v7405 = vpop.permute.xlu0 %7404
      %7406 = vrot.lane.b32.xlu0 %v7321, 113
      %v7407 = vpop.permute.xlu0 %7406
      %7408 = vrot.lane.b32.xlu0 %v7322, 113
      %v7409 = vpop.permute.xlu0 %7408
      %7410 = vrot.lane.b32.xlu0 %v7323, 113
      %v7411 = vpop.permute.xlu0 %7410
      %v7412 = vsel %vm1582, %v7409, %v7411
      %v7413 = vsel %vm1582, %v7407, %v7409
      %v7414 = vsel %vm1582, %v7405, %v7407
      %v7415 = vsel %vm1582, %v7411, %v7405
      %v7416 = vmul.f32 %v7414, %v1591
      %v7417 = vmul.f32 %v7413, %v1595
      %v7418 = vmul.f32 %v7412, %v1599
      %v7419 = vmul.f32 %v7415, %v1603
      %7420 = vrot.lane.b32.xlu0 %v7320, 112
      %v7421 = vpop.permute.xlu0 %7420
      %7422 = vrot.lane.b32.xlu0 %v7321, 112
      %v7423 = vpop.permute.xlu0 %7422
      %7424 = vrot.lane.b32.xlu0 %v7322, 112
      %v7425 = vpop.permute.xlu0 %7424
      %7426 = vrot.lane.b32.xlu0 %v7323, 112
      %v7427 = vpop.permute.xlu0 %7426
      %v7428 = vsel %vm1783, %v7425, %v7427
      %v7429 = vsel %vm1783, %v7423, %v7425
      %v7430 = vsel %vm1783, %v7421, %v7423
      %v7431 = vsel %vm1783, %v7427, %v7421
      %v7432 = vmul.f32 %v7430, %v1792
      %v7433 = vmul.f32 %v7429, %v1796
      %v7434 = vmul.f32 %v7428, %v1800
      %v7435 = vmul.f32 %v7431, %v1804
      %7436 = vrot.lane.b32.xlu0 %v7320, 111
      %v7437 = vpop.permute.xlu0 %7436
      %7438 = vrot.lane.b32.xlu0 %v7321, 111
      %v7439 = vpop.permute.xlu0 %7438
      %7440 = vrot.lane.b32.xlu0 %v7322, 111
      %v7441 = vpop.permute.xlu0 %7440
      %7442 = vrot.lane.b32.xlu0 %v7323, 111
      %v7443 = vpop.permute.xlu0 %7442
      %v7444 = vsel %vm1984, %v7441, %v7443
      %v7445 = vsel %vm1984, %v7439, %v7441
      %v7446 = vsel %vm1984, %v7437, %v7439
      %v7447 = vsel %vm1984, %v7443, %v7437
      %v7448 = vmul.f32 %v7446, %v1993
      %v7449 = vmul.f32 %v7445, %v1997
      %v7450 = vmul.f32 %v7444, %v2001
      %v7451 = vmul.f32 %v7447, %v2005
      %s7452 = scalar_lea.vmem %s3, 168
      %v7453 = vld [vmem:[%s7452] sm:$0xff]
      %s7454 = scalar_lea.vmem %s4, 112
      %v7455 = vld [vmem:[%s7454] sm:$0xff]
      %7457 = vset.pattern.permute.xlu0 0
      %7458 = vperm.xlu0 %7457, %v7455
      %v7459 = vpop.permute.xlu0 %7458
      %v7462 = vsel %vm2339, %v7453, 0
      %7464 = vmatprep.subr.mxu0 %v7337
      %7465 = vmatpush1.msra.mxu0 %v7336
      %7466 = vmatprep.subr.mxu0 %v7353
      %7467 = vmatpush1.msra.mxu0 %v7352
      %7468 = vmatprep.subr.mxu0 %v7369
      %7469 = vmatpush1.msra.mxu0 %v7368
      %7470 = vmatprep.subr.mxu0 %v7385
      %7471 = vmatpush1.msra.mxu0 %v7384
      %7472 = vmatprep.subr.mxu0 %v7321
      %7473 = vmatpush1.msra.mxu0 %v7320
      %7474 = vmatprep.subr.mxu0 %v7401
      %7475 = vmatpush1.msra.mxu0 %v7400
      %7476 = vmatprep.subr.mxu0 %v7417
      %7477 = vmatpush1.msra.mxu0 %v7416
      %7478 = vmatprep.subr.mxu0 %v7433
      %7479 = vmatpush1.msra.mxu0 %v7432
      %7480 = vmatprep.subr.mxu0 %v7449
      %7481 = vmatpush1.msra.mxu0 %v7448
      %7482 = vmatprep.subr.mxu0 0.0
      %7483 = vmatpush1.msra.mxu0 0.0
      %7484 = vmatprep.subr.mxu0 0.0
      %7485 = vmatpush1.msra.mxu0 0.0
      %7486 = vmatprep.subr.mxu0 0.0
      %7487 = vmatpush1.msra.mxu0 0.0
      %7488 = vmatprep.subr.mxu0 0.0
      %7489 = vmatpush1.msra.mxu0 0.0
      %7490 = vmatprep.subr.mxu0 0.0
      %7491 = vmatpush1.msra.mxu0 0.0
      %7492 = vmatprep.subr.mxu0 0.0
      %7493 = vmatpush1.msra.mxu0 0.0
      %7494 = vmatprep.subr.mxu0 0.0
      %7495 = vmatpush1.msra.mxu0 0.0
      %7496 = vmatprep.subr.mxu0 0.0
      %7497 = vmatpush1.msra.mxu0 0.0
      %7498 = vmatprep.subr.mxu0 0.0
      %7499 = vmatpush1.msra.mxu0 0.0
      %7500 = vmatprep.subr.mxu0 0.0
      %7501 = vmatpush1.msra.mxu0 0.0
      %7502 = vmatprep.subr.mxu0 0.0
      %7503 = vmatpush1.msra.mxu0 0.0
      %7504 = vmatprep.subr.mxu0 0.0
      %7505 = vmatpush1.msra.mxu0 0.0
      %7506 = vmatprep.subr.mxu0 0.0
      %7507 = vmatpush1.msra.mxu0 0.0
      %7508 = vmatprep.subr.mxu0 0.0
      %7509 = vmatpush1.msra.mxu0 0.0
      %7510 = vmatprep.subr.mxu0 0.0
      %7511 = vmatpush1.msra.mxu0 0.0
      %7512 = vmatprep.subr.mxu0 0.0
      %7513 = vmatpush1.msra.mxu0 0.0
      %7514 = vmatprep.subr.mxu0 0.0
      %7515 = vmatpush1.msra.mxu0 0.0
      %7516 = vmatprep.subr.mxu0 0.0
      %7517 = vmatpush1.msra.mxu0 0.0
      %7518 = vmatprep.subr.mxu0 0.0
      %7519 = vmatpush1.msra.mxu0 0.0
      %7520 = vmatprep.subr.mxu0 0.0
      %7521 = vmatpush1.msra.mxu0 0.0
      %7522 = vmatprep.subr.mxu0 0.0
      %7523 = vmatpush1.msra.mxu0 0.0
      %7524 = vmatprep.subr.mxu0 0.0
      %7525 = vmatpush1.msra.mxu0 0.0
      %7526 = vmatprep.subr.mxu0 0.0
      %7527 = vmatpush1.msra.mxu0 0.0
      %7528 = vmatprep.mubr.f32.mxu0 0.0
      %7529 = vmatmul.mubr.f32.gmra.mrb[0].mxu0 %v7462
      %v7530 = vpop.f32.mrb[0].mxu0
      %v7531 = vadd.f32 %v7459, %v7530
      %v7532 = vpop.f32.mrb[0].mxu0
      %v7533 = vadd.f32 %v7459, %v7532
      %7534 = vdwg.mxu0
      %7535 = vmatprep.subr.mxu0 %v7339
      %7536 = vmatpush1.msra.mxu0 %v7338
      %7537 = vmatprep.subr.mxu0 %v7355
      %7538 = vmatpush1.msra.mxu0 %v7354
      %7539 = vmatprep.subr.mxu0 %v7371
      %7540 = vmatpush1.msra.mxu0 %v7370
      %7541 = vmatprep.subr.mxu0 %v7387
      %7542 = vmatpush1.msra.mxu0 %v7386
      %7543 = vmatprep.subr.mxu0 %v7323
      %7544 = vmatpush1.msra.mxu0 %v7322
      %7545 = vmatprep.subr.mxu0 %v7403
      %7546 = vmatpush1.msra.mxu0 %v7402
      %7547 = vmatprep.subr.mxu0 %v7419
      %7548 = vmatpush1.msra.mxu0 %v7418
      %7549 = vmatprep.subr.mxu0 %v7435
      %7550 = vmatpush1.msra.mxu0 %v7434
      %7551 = vmatprep.subr.mxu0 %v7451
      %7552 = vmatpush1.msra.mxu0 %v7450
      %7553 = vmatprep.subr.mxu0 0.0
      %7554 = vmatpush1.msra.mxu0 0.0
      %7555 = vmatprep.subr.mxu0 0.0
      %7556 = vmatpush1.msra.mxu0 0.0
      %7557 = vmatprep.subr.mxu0 0.0
      %7558 = vmatpush1.msra.mxu0 0.0
      %7559 = vmatprep.subr.mxu0 0.0
      %7560 = vmatpush1.msra.mxu0 0.0
      %7561 = vmatprep.subr.mxu0 0.0
      %7562 = vmatpush1.msra.mxu0 0.0
      %7563 = vmatprep.subr.mxu0 0.0
      %7564 = vmatpush1.msra.mxu0 0.0
      %7565 = vmatprep.subr.mxu0 0.0
      %7566 = vmatpush1.msra.mxu0 0.0
      %7567 = vmatprep.subr.mxu0 0.0
      %7568 = vmatpush1.msra.mxu0 0.0
      %7569 = vmatprep.subr.mxu0 0.0
      %7570 = vmatpush1.msra.mxu0 0.0
      %7571 = vmatprep.subr.mxu0 0.0
      %7572 = vmatpush1.msra.mxu0 0.0
      %7573 = vmatprep.subr.mxu0 0.0
      %7574 = vmatpush1.msra.mxu0 0.0
      %7575 = vmatprep.subr.mxu0 0.0
      %7576 = vmatpush1.msra.mxu0 0.0
      %7577 = vmatprep.subr.mxu0 0.0
      %7578 = vmatpush1.msra.mxu0 0.0
      %7579 = vmatprep.subr.mxu0 0.0
      %7580 = vmatpush1.msra.mxu0 0.0
      %7581 = vmatprep.subr.mxu0 0.0
      %7582 = vmatpush1.msra.mxu0 0.0
      %7583 = vmatprep.subr.mxu0 0.0
      %7584 = vmatpush1.msra.mxu0 0.0
      %7585 = vmatprep.subr.mxu0 0.0
      %7586 = vmatpush1.msra.mxu0 0.0
      %7587 = vmatprep.subr.mxu0 0.0
      %7588 = vmatpush1.msra.mxu0 0.0
      %7589 = vmatprep.subr.mxu0 0.0
      %7590 = vmatpush1.msra.mxu0 0.0
      %7591 = vmatprep.subr.mxu0 0.0
      %7592 = vmatpush1.msra.mxu0 0.0
      %7593 = vmatprep.subr.mxu0 0.0
      %7594 = vmatpush1.msra.mxu0 0.0
      %7595 = vmatprep.subr.mxu0 0.0
      %7596 = vmatpush1.msra.mxu0 0.0
      %7597 = vmatprep.subr.mxu0 0.0
      %7598 = vmatpush1.msra.mxu0 0.0
      %7599 = vmatprep.mubr.f32.mxu0 0.0
      %7600 = vmatmul.mubr.f32.gmra.mrb[0].mxu0 %v7462
      %v7601 = vpop.f32.mrb[0].mxu0
      %v7602 = vadd.f32 %v7459, %v7601
      %v7603 = vpop.f32.mrb[0].mxu0
      %v7604 = vadd.f32 %v7459, %v7603
      %7605 = vdwg.mxu0
      %vm7606 = vcmp.ge.f32.partialorder %v7531, 0.0
      %vm7607 = vcmp.ge.f32.partialorder %v7533, 0.0
      %vm7608 = vcmp.ge.f32.partialorder %v7602, 0.0
      %vm7609 = vcmp.ge.f32.partialorder %v7604, 0.0
      %s7610 = scalar_lea.vmem %s5, 112
      %v7611 = vld [vmem:[%s7610] sm:$0xff]
      %7613 = vset.pattern.permute.xlu0 0
      %7614 = vperm.xlu0 %7613, %v7611
      %v7615 = vpop.permute.xlu0 %7614
      %v7617 = vmul.f32 %v7615, %v7531
      %v7618 = vmul.f32 %v7615, %v7533
      %v7619 = vmul.f32 %v7615, %v7602
      %v7620 = vmul.f32 %v7615, %v7604
      %v7621 = vsel %vm7606, %v7531, %v7617
      %v7622 = vsel %vm7607, %v7533, %v7618
      %v7623 = vsel %vm7608, %v7602, %v7619
      %v7624 = vsel %vm7609, %v7604, %v7620
      %v7625 = vld [vmem:[%s6] sm:$0xff]
      %v7626 = vld [vmem:[%s6 + $0x8] sm:$0xff]
      %s7627 = scalar_lea.vmem %s6, 16
      %v7628 = vld [vmem:[%s7627] sm:$0xff]
      %v7629 = vld [vmem:[%s7627 + $0x8] sm:$0xff]
      %vm7630 = vcmask 64512
      %v7632 = vsel %vm7630, %v7628, 0
      %v7635 = vsel %vm7630, %v7629, 0
      %7637 = vmatprep.subr.mxu0 %v7321
      %7638 = vmatpush1.msra.mxu0 %v7320
      %7639 = vmatprep.subr.mxu0 0.0
      %7640 = vmatpush1.msra.mxu0 0.0
      %7641 = vmatprep.subr.mxu0 0.0
      %7642 = vmatpush1.msra.mxu0 0.0
      %7643 = vmatprep.subr.mxu0 0.0
      %7644 = vmatpush1.msra.mxu0 0.0
      %7645 = vmatprep.subr.mxu0 0.0
      %7646 = vmatpush1.msra.mxu0 0.0
      %7647 = vmatprep.subr.mxu0 0.0
      %7648 = vmatpush1.msra.mxu0 0.0
      %7649 = vmatprep.subr.mxu0 0.0
      %7650 = vmatpush1.msra.mxu0 0.0
      %7651 = vmatprep.subr.mxu0 0.0
      %7652 = vmatpush1.msra.mxu0 0.0
      %7653 = vmatprep.subr.mxu0 0.0
      %7654 = vmatpush1.msra.mxu0 0.0
      %7655 = vmatprep.subr.mxu0 0.0
      %7656 = vmatpush1.msra.mxu0 0.0
      %7657 = vmatprep.subr.mxu0 0.0
      %7658 = vmatpush1.msra.mxu0 0.0
      %7659 = vmatprep.subr.mxu0 0.0
      %7660 = vmatpush1.msra.mxu0 0.0
      %7661 = vmatprep.subr.mxu0 0.0
      %7662 = vmatpush1.msra.mxu0 0.0
      %7663 = vmatprep.subr.mxu0 0.0
      %7664 = vmatpush1.msra.mxu0 0.0
      %7665 = vmatprep.subr.mxu0 0.0
      %7666 = vmatpush1.msra.mxu0 0.0
      %7667 = vmatprep.subr.mxu0 0.0
      %7668 = vmatpush1.msra.mxu0 0.0
      %7669 = vmatprep.subr.mxu0 0.0
      %7670 = vmatpush1.msra.mxu0 0.0
      %7671 = vmatprep.subr.mxu0 0.0
      %7672 = vmatpush1.msra.mxu0 0.0
      %7673 = vmatprep.subr.mxu0 0.0
      %7674 = vmatpush1.msra.mxu0 0.0
      %7675 = vmatprep.subr.mxu0 0.0
      %7676 = vmatpush1.msra.mxu0 0.0
      %7677 = vmatprep.subr.mxu0 0.0
      %7678 = vmatpush1.msra.mxu0 0.0
      %7679 = vmatprep.subr.mxu0 0.0
      %7680 = vmatpush1.msra.mxu0 0.0
      %7681 = vmatprep.subr.mxu0 0.0
      %7682 = vmatpush1.msra.mxu0 0.0
      %7683 = vmatprep.subr.mxu0 0.0
      %7684 = vmatpush1.msra.mxu0 0.0
      %7685 = vmatprep.subr.mxu0 0.0
      %7686 = vmatpush1.msra.mxu0 0.0
      %7687 = vmatprep.subr.mxu0 0.0
      %7688 = vmatpush1.msra.mxu0 0.0
      %7689 = vmatprep.subr.mxu0 0.0
      %7690 = vmatpush1.msra.mxu0 0.0
      %7691 = vmatprep.subr.mxu0 0.0
      %7692 = vmatpush1.msra.mxu0 0.0
      %7693 = vmatprep.subr.mxu0 0.0
      %7694 = vmatpush1.msra.mxu0 0.0
      %7695 = vmatprep.subr.mxu0 0.0
      %7696 = vmatpush1.msra.mxu0 0.0
      %7697 = vmatprep.subr.mxu0 0.0
      %7698 = vmatpush1.msra.mxu0 0.0
      %7699 = vmatprep.subr.mxu0 0.0
      %7700 = vmatpush1.msra.mxu0 0.0
      %7701 = vmatprep.mubr.f32.mxu0 0.0
      %7702 = vmatmul.mubr.f32.gmra.mrb[0].mxu0 %v7632
      %v7703 = vpop.f32.mrb[0].mxu0
      %v7704 = vadd.f32 0.0, %v7703
      %v7705 = vpop.f32.mrb[0].mxu0
      %v7706 = vadd.f32 0.0, %v7705
      %7707 = vmatprep.mubr.f32.mxu0 0.0
      %7708 = vmatmul.mubr.f32.gmra.mrb[0].mxu0 %v7635
      %v7709 = vpop.f32.mrb[0].mxu0
      %v7710 = vadd.f32 0.0, %v7709
      %v7711 = vpop.f32.mrb[0].mxu0
      %v7712 = vadd.f32 0.0, %v7711
      %7713 = vdwg.mxu0
      %7714 = vmatprep.subr.mxu0 %v7323
      %7715 = vmatpush1.msra.mxu0 %v7322
      %7716 = vmatprep.subr.mxu0 0.0
      %7717 = vmatpush1.msra.mxu0 0.0
      %7718 = vmatprep.subr.mxu0 0.0
      %7719 = vmatpush1.msra.mxu0 0.0
      %7720 = vmatprep.subr.mxu0 0.0
      %7721 = vmatpush1.msra.mxu0 0.0
      %7722 = vmatprep.subr.mxu0 0.0
      %7723 = vmatpush1.msra.mxu0 0.0
      %7724 = vmatprep.subr.mxu0 0.0
      %7725 = vmatpush1.msra.mxu0 0.0
      %7726 = vmatprep.subr.mxu0 0.0
      %7727 = vmatpush1.msra.mxu0 0.0
      %7728 = vmatprep.subr.mxu0 0.0
      %7729 = vmatpush1.msra.mxu0 0.0
      %7730 = vmatprep.subr.mxu0 0.0
      %7731 = vmatpush1.msra.mxu0 0.0
      %7732 = vmatprep.subr.mxu0 0.0
      %7733 = vmatpush1.msra.mxu0 0.0
      %7734 = vmatprep.subr.mxu0 0.0
      %7735 = vmatpush1.msra.mxu0 0.0
      %7736 = vmatprep.subr.mxu0 0.0
      %7737 = vmatpush1.msra.mxu0 0.0
      %7738 = vmatprep.subr.mxu0 0.0
      %7739 = vmatpush1.msra.mxu0 0.0
      %7740 = vmatprep.subr.mxu0 0.0
      %7741 = vmatpush1.msra.mxu0 0.0
      %7742 = vmatprep.subr.mxu0 0.0
      %7743 = vmatpush1.msra.mxu0 0.0
      %7744 = vmatprep.subr.mxu0 0.0
      %7745 = vmatpush1.msra.mxu0 0.0
      %7746 = vmatprep.subr.mxu0 0.0
      %7747 = vmatpush1.msra.mxu0 0.0
      %7748 = vmatprep.subr.mxu0 0.0
      %7749 = vmatpush1.msra.mxu0 0.0
      %7750 = vmatprep.subr.mxu0 0.0
      %7751 = vmatpush1.msra.mxu0 0.0
      %7752 = vmatprep.subr.mxu0 0.0
      %7753 = vmatpush1.msra.mxu0 0.0
      %7754 = vmatprep.subr.mxu0 0.0
      %7755 = vmatpush1.msra.mxu0 0.0
      %7756 = vmatprep.subr.mxu0 0.0
      %7757 = vmatpush1.msra.mxu0 0.0
      %7758 = vmatprep.subr.mxu0 0.0
      %7759 = vmatpush1.msra.mxu0 0.0
      %7760 = vmatprep.subr.mxu0 0.0
      %7761 = vmatpush1.msra.mxu0 0.0
      %7762 = vmatprep.subr.mxu0 0.0
      %7763 = vmatpush1.msra.mxu0 0.0
      %7764 = vmatprep.subr.mxu0 0.0
      %7765 = vmatpush1.msra.mxu0 0.0
      %7766 = vmatprep.subr.mxu0 0.0
      %7767 = vmatpush1.msra.mxu0 0.0
      %7768 = vmatprep.subr.mxu0 0.0
      %7769 = vmatpush1.msra.mxu0 0.0
      %7770 = vmatprep.subr.mxu0 0.0
      %7771 = vmatpush1.msra.mxu0 0.0
      %7772 = vmatprep.subr.mxu0 0.0
      %7773 = vmatpush1.msra.mxu0 0.0
      %7774 = vmatprep.subr.mxu0 0.0
      %7775 = vmatpush1.msra.mxu0 0.0
      %7776 = vmatprep.subr.mxu0 0.0
      %7777 = vmatpush1.msra.mxu0 0.0
      %7778 = vmatprep.mubr.f32.mxu0 0.0
      %7779 = vmatmul.mubr.f32.gmra.mrb[0].mxu0 %v7632
      %v7780 = vpop.f32.mrb[0].mxu0
      %v7781 = vadd.f32 0.0, %v7780
      %v7782 = vpop.f32.mrb[0].mxu0
      %v7783 = vadd.f32 0.0, %v7782
      %7784 = vmatprep.mubr.f32.mxu0 0.0
      %7785 = vmatmul.mubr.f32.gmra.mrb[0].mxu0 %v7635
      %v7786 = vpop.f32.mrb[0].mxu0
      %v7787 = vadd.f32 0.0, %v7786
      %v7788 = vpop.f32.mrb[0].mxu0
      %v7789 = vadd.f32 0.0, %v7788
      %7790 = vdwg.mxu0
      %v7792 = vsel %vm7630, %v7625, 0
      %v7795 = vsel %vm7630, %v7626, 0
      %7797 = vmatprep.subr.mxu0 %v7020
      %7798 = vmatpush1.msra.mxu0 %v7019
      %7799 = vmatprep.subr.mxu0 0.0
      %7800 = vmatpush1.msra.mxu0 0.0
      %7801 = vmatprep.subr.mxu0 0.0
      %7802 = vmatpush1.msra.mxu0 0.0
      %7803 = vmatprep.subr.mxu0 0.0
      %7804 = vmatpush1.msra.mxu0 0.0
      %7805 = vmatprep.subr.mxu0 0.0
      %7806 = vmatpush1.msra.mxu0 0.0
      %7807 = vmatprep.subr.mxu0 0.0
      %7808 = vmatpush1.msra.mxu0 0.0
      %7809 = vmatprep.subr.mxu0 0.0
      %7810 = vmatpush1.msra.mxu0 0.0
      %7811 = vmatprep.subr.mxu0 0.0
      %7812 = vmatpush1.msra.mxu0 0.0
      %7813 = vmatprep.subr.mxu0 0.0
      %7814 = vmatpush1.msra.mxu0 0.0
      %7815 = vmatprep.subr.mxu0 0.0
      %7816 = vmatpush1.msra.mxu0 0.0
      %7817 = vmatprep.subr.mxu0 0.0
      %7818 = vmatpush1.msra.mxu0 0.0
      %7819 = vmatprep.subr.mxu0 0.0
      %7820 = vmatpush1.msra.mxu0 0.0
      %7821 = vmatprep.subr.mxu0 0.0
      %7822 = vmatpush1.msra.mxu0 0.0
      %7823 = vmatprep.subr.mxu0 0.0
      %7824 = vmatpush1.msra.mxu0 0.0
      %7825 = vmatprep.subr.mxu0 0.0
      %7826 = vmatpush1.msra.mxu0 0.0
      %7827 = vmatprep.subr.mxu0 0.0
      %7828 = vmatpush1.msra.mxu0 0.0
      %7829 = vmatprep.subr.mxu0 0.0
      %7830 = vmatpush1.msra.mxu0 0.0
      %7831 = vmatprep.subr.mxu0 0.0
      %7832 = vmatpush1.msra.mxu0 0.0
      %7833 = vmatprep.subr.mxu0 0.0
      %7834 = vmatpush1.msra.mxu0 0.0
      %7835 = vmatprep.subr.mxu0 0.0
      %7836 = vmatpush1.msra.mxu0 0.0
      %7837 = vmatprep.subr.mxu0 0.0
      %7838 = vmatpush1.msra.mxu0 0.0
      %7839 = vmatprep.subr.mxu0 0.0
      %7840 = vmatpush1.msra.mxu0 0.0
      %7841 = vmatprep.subr.mxu0 0.0
      %7842 = vmatpush1.msra.mxu0 0.0
      %7843 = vmatprep.subr.mxu0 0.0
      %7844 = vmatpush1.msra.mxu0 0.0
      %7845 = vmatprep.subr.mxu0 0.0
      %7846 = vmatpush1.msra.mxu0 0.0
      %7847 = vmatprep.subr.mxu0 0.0
      %7848 = vmatpush1.msra.mxu0 0.0
      %7849 = vmatprep.subr.mxu0 0.0
      %7850 = vmatpush1.msra.mxu0 0.0
      %7851 = vmatprep.subr.mxu0 0.0
      %7852 = vmatpush1.msra.mxu0 0.0
      %7853 = vmatprep.subr.mxu0 0.0
      %7854 = vmatpush1.msra.mxu0 0.0
      %7855 = vmatprep.subr.mxu0 0.0
      %7856 = vmatpush1.msra.mxu0 0.0
      %7857 = vmatprep.subr.mxu0 0.0
      %7858 = vmatpush1.msra.mxu0 0.0
      %7859 = vmatprep.subr.mxu0 0.0
      %7860 = vmatpush1.msra.mxu0 0.0
      %7861 = vmatprep.mubr.f32.mxu0 0.0
      %7862 = vmatmul.mubr.f32.gmra.mrb[0].mxu0 %v7792
      %v7863 = vpop.f32.mrb[0].mxu0
      %v7864 = vadd.f32 %v7704, %v7863
      %v7865 = vpop.f32.mrb[0].mxu0
      %v7866 = vadd.f32 %v7706, %v7865
      %7867 = vmatprep.mubr.f32.mxu0 0.0
      %7868 = vmatmul.mubr.f32.gmra.mrb[0].mxu0 %v7795
      %v7869 = vpop.f32.mrb[0].mxu0
      %v7870 = vadd.f32 %v7710, %v7869
      %v7871 = vpop.f32.mrb[0].mxu0
      %v7872 = vadd.f32 %v7712, %v7871
      %7873 = vdwg.mxu0
      %7874 = vmatprep.subr.mxu0 %v7022
      %7875 = vmatpush1.msra.mxu0 %v7021
      %7876 = vmatprep.subr.mxu0 0.0
      %7877 = vmatpush1.msra.mxu0 0.0
      %7878 = vmatprep.subr.mxu0 0.0
      %7879 = vmatpush1.msra.mxu0 0.0
      %7880 = vmatprep.subr.mxu0 0.0
      %7881 = vmatpush1.msra.mxu0 0.0
      %7882 = vmatprep.subr.mxu0 0.0
      %7883 = vmatpush1.msra.mxu0 0.0
      %7884 = vmatprep.subr.mxu0 0.0
      %7885 = vmatpush1.msra.mxu0 0.0
      %7886 = vmatprep.subr.mxu0 0.0
      %7887 = vmatpush1.msra.mxu0 0.0
      %7888 = vmatprep.subr.mxu0 0.0
      %7889 = vmatpush1.msra.mxu0 0.0
      %7890 = vmatprep.subr.mxu0 0.0
      %7891 = vmatpush1.msra.mxu0 0.0
      %7892 = vmatprep.subr.mxu0 0.0
      %7893 = vmatpush1.msra.mxu0 0.0
      %7894 = vmatprep.subr.mxu0 0.0
      %7895 = vmatpush1.msra.mxu0 0.0
      %7896 = vmatprep.subr.mxu0 0.0
      %7897 = vmatpush1.msra.mxu0 0.0
      %7898 = vmatprep.subr.mxu0 0.0
      %7899 = vmatpush1.msra.mxu0 0.0
      %7900 = vmatprep.subr.mxu0 0.0
      %7901 = vmatpush1.msra.mxu0 0.0
      %7902 = vmatprep.subr.mxu0 0.0
      %7903 = vmatpush1.msra.mxu0 0.0
      %7904 = vmatprep.subr.mxu0 0.0
      %7905 = vmatpush1.msra.mxu0 0.0
      %7906 = vmatprep.subr.mxu0 0.0
      %7907 = vmatpush1.msra.mxu0 0.0
      %7908 = vmatprep.subr.mxu0 0.0
      %7909 = vmatpush1.msra.mxu0 0.0
      %7910 = vmatprep.subr.mxu0 0.0
      %7911 = vmatpush1.msra.mxu0 0.0
      %7912 = vmatprep.subr.mxu0 0.0
      %7913 = vmatpush1.msra.mxu0 0.0
      %7914 = vmatprep.subr.mxu0 0.0
      %7915 = vmatpush1.msra.mxu0 0.0
      %7916 = vmatprep.subr.mxu0 0.0
      %7917 = vmatpush1.msra.mxu0 0.0
      %7918 = vmatprep.subr.mxu0 0.0
      %7919 = vmatpush1.msra.mxu0 0.0
      %7920 = vmatprep.subr.mxu0 0.0
      %7921 = vmatpush1.msra.mxu0 0.0
      %7922 = vmatprep.subr.mxu0 0.0
      %7923 = vmatpush1.msra.mxu0 0.0
      %7924 = vmatprep.subr.mxu0 0.0
      %7925 = vmatpush1.msra.mxu0 0.0
      %7926 = vmatprep.subr.mxu0 0.0
      %7927 = vmatpush1.msra.mxu0 0.0
      %7928 = vmatprep.subr.mxu0 0.0
      %7929 = vmatpush1.msra.mxu0 0.0
      %7930 = vmatprep.subr.mxu0 0.0
      %7931 = vmatpush1.msra.mxu0 0.0
      %7932 = vmatprep.subr.mxu0 0.0
      %7933 = vmatpush1.msra.mxu0 0.0
      %7934 = vmatprep.subr.mxu0 0.0
      %7935 = vmatpush1.msra.mxu0 0.0
      %7936 = vmatprep.subr.mxu0 0.0
      %7937 = vmatpush1.msra.mxu0 0.0
      %7938 = vmatprep.mubr.f32.mxu0 0.0
      %7939 = vmatmul.mubr.f32.gmra.mrb[0].mxu0 %v7792
      %v7940 = vpop.f32.mrb[0].mxu0
      %v7941 = vadd.f32 %v7781, %v7940
      %v7942 = vpop.f32.mrb[0].mxu0
      %v7943 = vadd.f32 %v7783, %v7942
      %7944 = vmatprep.mubr.f32.mxu0 0.0
      %7945 = vmatmul.mubr.f32.gmra.mrb[0].mxu0 %v7795
      %v7946 = vpop.f32.mrb[0].mxu0
      %v7947 = vadd.f32 %v7787, %v7946
      %v7948 = vpop.f32.mrb[0].mxu0
      %v7949 = vadd.f32 %v7789, %v7948
      %7950 = vdwg.mxu0
      %s7951 = scalar_lea.vmem %s6, 32
      %v7952 = vld [vmem:[%s7951] sm:$0xff]
      %v7953 = vld [vmem:[%s7951 + $0x8] sm:$0xff]
      %v7955 = vsel %vm7630, %v7952, 0
      %v7958 = vsel %vm7630, %v7953, 0
      %7960 = vmatprep.subr.mxu0 %v7622
      %7961 = vmatpush1.msra.mxu0 %v7621
      %7962 = vmatprep.subr.mxu0 0.0
      %7963 = vmatpush1.msra.mxu0 0.0
      %7964 = vmatprep.subr.mxu0 0.0
      %7965 = vmatpush1.msra.mxu0 0.0
      %7966 = vmatprep.subr.mxu0 0.0
      %7967 = vmatpush1.msra.mxu0 0.0
      %7968 = vmatprep.subr.mxu0 0.0
      %7969 = vmatpush1.msra.mxu0 0.0
      %7970 = vmatprep.subr.mxu0 0.0
      %7971 = vmatpush1.msra.mxu0 0.0
      %7972 = vmatprep.subr.mxu0 0.0
      %7973 = vmatpush1.msra.mxu0 0.0
      %7974 = vmatprep.subr.mxu0 0.0
      %7975 = vmatpush1.msra.mxu0 0.0
      %7976 = vmatprep.subr.mxu0 0.0
      %7977 = vmatpush1.msra.mxu0 0.0
      %7978 = vmatprep.subr.mxu0 0.0
      %7979 = vmatpush1.msra.mxu0 0.0
      %7980 = vmatprep.subr.mxu0 0.0
      %7981 = vmatpush1.msra.mxu0 0.0
      %7982 = vmatprep.subr.mxu0 0.0
      %7983 = vmatpush1.msra.mxu0 0.0
      %7984 = vmatprep.subr.mxu0 0.0
      %7985 = vmatpush1.msra.mxu0 0.0
      %7986 = vmatprep.subr.mxu0 0.0
      %7987 = vmatpush1.msra.mxu0 0.0
      %7988 = vmatprep.subr.mxu0 0.0
      %7989 = vmatpush1.msra.mxu0 0.0
      %7990 = vmatprep.subr.mxu0 0.0
      %7991 = vmatpush1.msra.mxu0 0.0
      %7992 = vmatprep.subr.mxu0 0.0
      %7993 = vmatpush1.msra.mxu0 0.0
      %7994 = vmatprep.subr.mxu0 0.0
      %7995 = vmatpush1.msra.mxu0 0.0
      %7996 = vmatprep.subr.mxu0 0.0
      %7997 = vmatpush1.msra.mxu0 0.0
      %7998 = vmatprep.subr.mxu0 0.0
      %7999 = vmatpush1.msra.mxu0 0.0
      %8000 = vmatprep.subr.mxu0 0.0
      %8001 = vmatpush1.msra.mxu0 0.0
      %8002 = vmatprep.subr.mxu0 0.0
      %8003 = vmatpush1.msra.mxu0 0.0
      %8004 = vmatprep.subr.mxu0 0.0
      %8005 = vmatpush1.msra.mxu0 0.0
      %8006 = vmatprep.subr.mxu0 0.0
      %8007 = vmatpush1.msra.mxu0 0.0
      %8008 = vmatprep.subr.mxu0 0.0
      %8009 = vmatpush1.msra.mxu0 0.0
      %8010 = vmatprep.subr.mxu0 0.0
      %8011 = vmatpush1.msra.mxu0 0.0
      %8012 = vmatprep.subr.mxu0 0.0
      %8013 = vmatpush1.msra.mxu0 0.0
      %8014 = vmatprep.subr.mxu0 0.0
      %8015 = vmatpush1.msra.mxu0 0.0
      %8016 = vmatprep.subr.mxu0 0.0
      %8017 = vmatpush1.msra.mxu0 0.0
      %8018 = vmatprep.subr.mxu0 0.0
      %8019 = vmatpush1.msra.mxu0 0.0
      %8020 = vmatprep.subr.mxu0 0.0
      %8021 = vmatpush1.msra.mxu0 0.0
      %8022 = vmatprep.subr.mxu0 0.0
      %8023 = vmatpush1.msra.mxu0 0.0
      %8024 = vmatprep.mubr.f32.mxu0 0.0
      %8025 = vmatmul.mubr.f32.gmra.mrb[0].mxu0 %v7955
      %v8026 = vpop.f32.mrb[0].mxu0
      %v8027 = vadd.f32 0.0, %v8026
      %v8028 = vpop.f32.mrb[0].mxu0
      %v8029 = vadd.f32 0.0, %v8028
      %8030 = vmatprep.mubr.f32.mxu0 0.0
      %8031 = vmatmul.mubr.f32.gmra.mrb[0].mxu0 %v7958
      %v8032 = vpop.f32.mrb[0].mxu0
      %v8033 = vadd.f32 0.0, %v8032
      %v8034 = vpop.f32.mrb[0].mxu0
      %v8035 = vadd.f32 0.0, %v8034
      %8036 = vdwg.mxu0
      %8037 = vmatprep.subr.mxu0 %v7624
      %8038 = vmatpush1.msra.mxu0 %v7623
      %8039 = vmatprep.subr.mxu0 0.0
      %8040 = vmatpush1.msra.mxu0 0.0
      %8041 = vmatprep.subr.mxu0 0.0
      %8042 = vmatpush1.msra.mxu0 0.0
      %8043 = vmatprep.subr.mxu0 0.0
      %8044 = vmatpush1.msra.mxu0 0.0
      %8045 = vmatprep.subr.mxu0 0.0
      %8046 = vmatpush1.msra.mxu0 0.0
      %8047 = vmatprep.subr.mxu0 0.0
      %8048 = vmatpush1.msra.mxu0 0.0
      %8049 = vmatprep.subr.mxu0 0.0
      %8050 = vmatpush1.msra.mxu0 0.0
      %8051 = vmatprep.subr.mxu0 0.0
      %8052 = vmatpush1.msra.mxu0 0.0
      %8053 = vmatprep.subr.mxu0 0.0
      %8054 = vmatpush1.msra.mxu0 0.0
      %8055 = vmatprep.subr.mxu0 0.0
      %8056 = vmatpush1.msra.mxu0 0.0
      %8057 = vmatprep.subr.mxu0 0.0
      %8058 = vmatpush1.msra.mxu0 0.0
      %8059 = vmatprep.subr.mxu0 0.0
      %8060 = vmatpush1.msra.mxu0 0.0
      %8061 = vmatprep.subr.mxu0 0.0
      %8062 = vmatpush1.msra.mxu0 0.0
      %8063 = vmatprep.subr.mxu0 0.0
      %8064 = vmatpush1.msra.mxu0 0.0
      %8065 = vmatprep.subr.mxu0 0.0
      %8066 = vmatpush1.msra.mxu0 0.0
      %8067 = vmatprep.subr.mxu0 0.0
      %8068 = vmatpush1.msra.mxu0 0.0
      %8069 = vmatprep.subr.mxu0 0.0
      %8070 = vmatpush1.msra.mxu0 0.0
      %8071 = vmatprep.subr.mxu0 0.0
      %8072 = vmatpush1.msra.mxu0 0.0
      %8073 = vmatprep.subr.mxu0 0.0
      %8074 = vmatpush1.msra.mxu0 0.0
      %8075 = vmatprep.subr.mxu0 0.0
      %8076 = vmatpush1.msra.mxu0 0.0
      %8077 = vmatprep.subr.mxu0 0.0
      %8078 = vmatpush1.msra.mxu0 0.0
      %8079 = vmatprep.subr.mxu0 0.0
      %8080 = vmatpush1.msra.mxu0 0.0
      %8081 = vmatprep.subr.mxu0 0.0
      %8082 = vmatpush1.msra.mxu0 0.0
      %8083 = vmatprep.subr.mxu0 0.0
      %8084 = vmatpush1.msra.mxu0 0.0
      %8085 = vmatprep.subr.mxu0 0.0
      %8086 = vmatpush1.msra.mxu0 0.0
      %8087 = vmatprep.subr.mxu0 0.0
      %8088 = vmatpush1.msra.mxu0 0.0
      %8089 = vmatprep.subr.mxu0 0.0
      %8090 = vmatpush1.msra.mxu0 0.0
      %8091 = vmatprep.subr.mxu0 0.0
      %8092 = vmatpush1.msra.mxu0 0.0
      %8093 = vmatprep.subr.mxu0 0.0
      %8094 = vmatpush1.msra.mxu0 0.0
      %8095 = vmatprep.subr.mxu0 0.0
      %8096 = vmatpush1.msra.mxu0 0.0
      %8097 = vmatprep.subr.mxu0 0.0
      %8098 = vmatpush1.msra.mxu0 0.0
      %8099 = vmatprep.subr.mxu0 0.0
      %8100 = vmatpush1.msra.mxu0 0.0
      %8101 = vmatprep.mubr.f32.mxu0 0.0
      %8102 = vmatmul.mubr.f32.gmra.mrb[0].mxu0 %v7955
      %v8103 = vpop.f32.mrb[0].mxu0
      %v8104 = vadd.f32 0.0, %v8103
      %v8105 = vpop.f32.mrb[0].mxu0
      %v8106 = vadd.f32 0.0, %v8105
      %8107 = vmatprep.mubr.f32.mxu0 0.0
      %8108 = vmatmul.mubr.f32.gmra.mrb[0].mxu0 %v7958
      %v8109 = vpop.f32.mrb[0].mxu0
      %v8110 = vadd.f32 0.0, %v8109
      %v8111 = vpop.f32.mrb[0].mxu0
      %v8112 = vadd.f32 0.0, %v8111
      %8113 = vdwg.mxu0
      %v8114 = vadd.f32 %v7864, %v8027
      %v8115 = vadd.f32 %v7866, %v8029
      %v8116 = vadd.f32 %v7941, %v8104
      %v8117 = vadd.f32 %v7943, %v8106
      %v8118 = vadd.f32 %v7870, %v8033
      %v8119 = vadd.f32 %v7872, %v8035
      %v8120 = vadd.f32 %v7947, %v8110
      %v8121 = vadd.f32 %v7949, %v8112
      %v8122 = vld [vmem:[%s7] sm:$0xff]
      %v8123 = vld [vmem:[%s7 + $0x8] sm:$0xff]
      %8125 = vset.pattern.permute.xlu0 0
      %8126 = vperm.xlu0 %8125, %v8122
      %v8127 = vpop.permute.xlu0 %8126
      %8130 = vset.pattern.permute.xlu0 0
      %8131 = vperm.xlu0 %8130, %v8123
      %v8132 = vpop.permute.xlu0 %8131
      %v8134 = vadd.f32 %v8114, %v8127
      %v8135 = vadd.f32 %v8115, %v8127
      %v8136 = vadd.f32 %v8116, %v8127
      %v8137 = vadd.f32 %v8117, %v8127
      %v8138 = vadd.f32 %v8118, %v8132
      %v8139 = vadd.f32 %v8119, %v8132
      %v8140 = vadd.f32 %v8120, %v8132
      %v8141 = vadd.f32 %v8121, %v8132
      %vm8142 = vcmp.ge.f32.partialorder %v8134, 0.0
      %vm8143 = vcmp.ge.f32.partialorder %v8135, 0.0
      %vm8144 = vcmp.ge.f32.partialorder %v8136, 0.0
      %vm8145 = vcmp.ge.f32.partialorder %v8137, 0.0
      %vm8146 = vcmp.ge.f32.partialorder %v8138, 0.0
      %vm8147 = vcmp.ge.f32.partialorder %v8139, 0.0
      %vm8148 = vcmp.ge.f32.partialorder %v8140, 0.0
      %vm8149 = vcmp.ge.f32.partialorder %v8141, 0.0
      %v8150 = vld [vmem:[%s8] sm:$0xff]
      %v8151 = vld [vmem:[%s8 + $0x8] sm:$0xff]
      %8153 = vset.pattern.permute.xlu0 0
      %8154 = vperm.xlu0 %8153, %v8150
      %v8155 = vpop.permute.xlu0 %8154
      %8158 = vset.pattern.permute.xlu0 0
      %8159 = vperm.xlu0 %8158, %v8151
      %v8160 = vpop.permute.xlu0 %8159
      %v8162 = vmul.f32 %v8155, %v8134
      %v8163 = vmul.f32 %v8155, %v8135
      %v8164 = vmul.f32 %v8155, %v8136
      %v8165 = vmul.f32 %v8155, %v8137
      %v8166 = vmul.f32 %v8160, %v8138
      %v8167 = vmul.f32 %v8160, %v8139
      %v8168 = vmul.f32 %v8160, %v8140
      %v8169 = vmul.f32 %v8160, %v8141
      %v8170 = vsel %vm8142, %v8134, %v8162
      %v8171 = vsel %vm8143, %v8135, %v8163
      %v8172 = vsel %vm8144, %v8136, %v8164
      %v8173 = vsel %vm8145, %v8137, %v8165
      %v8174 = vsel %vm8146, %v8138, %v8166
      %v8175 = vsel %vm8147, %v8139, %v8167
      %v8176 = vsel %vm8148, %v8140, %v8168
      %v8177 = vsel %vm8149, %v8141, %v8169
      %v8178 = vld [vmem:[%s9] sm:$0xf]
      %v8179 = vld [vmem:[%s10] sm:$0xf]
      %8181 = vset.pattern.permute.xlu0 0
      %8182 = vperm.xlu0 %8181, %v8179
      %v8183 = vpop.permute.xlu0 %8182
      %vm8185 = vcmask 130048
      %v8187 = vsel %vm8185, %v8178, 0
      %8189 = vmatprep.subr.mxu0 %v8171
      %8190 = vmatpush1.msra.mxu0 %v8170
      %8191 = vmatprep.subr.mxu0 %v8175
      %8192 = vmatpush1.msra.mxu0 %v8174
      %8193 = vmatprep.subr.mxu0 0.0
      %8194 = vmatpush1.msra.mxu0 0.0
      %8195 = vmatprep.subr.mxu0 0.0
      %8196 = vmatpush1.msra.mxu0 0.0
      %8197 = vmatprep.subr.mxu0 0.0
      %8198 = vmatpush1.msra.mxu0 0.0
      %8199 = vmatprep.subr.mxu0 0.0
      %8200 = vmatpush1.msra.mxu0 0.0
      %8201 = vmatprep.subr.mxu0 0.0
      %8202 = vmatpush1.msra.mxu0 0.0
      %8203 = vmatprep.subr.mxu0 0.0
      %8204 = vmatpush1.msra.mxu0 0.0
      %8205 = vmatprep.subr.mxu0 0.0
      %8206 = vmatpush1.msra.mxu0 0.0
      %8207 = vmatprep.subr.mxu0 0.0
      %8208 = vmatpush1.msra.mxu0 0.0
      %8209 = vmatprep.subr.mxu0 0.0
      %8210 = vmatpush1.msra.mxu0 0.0
      %8211 = vmatprep.subr.mxu0 0.0
      %8212 = vmatpush1.msra.mxu0 0.0
      %8213 = vmatprep.subr.mxu0 0.0
      %8214 = vmatpush1.msra.mxu0 0.0
      %8215 = vmatprep.subr.mxu0 0.0
      %8216 = vmatpush1.msra.mxu0 0.0
      %8217 = vmatprep.subr.mxu0 0.0
      %8218 = vmatpush1.msra.mxu0 0.0
      %8219 = vmatprep.subr.mxu0 0.0
      %8220 = vmatpush1.msra.mxu0 0.0
      %8221 = vmatprep.subr.mxu0 0.0
      %8222 = vmatpush1.msra.mxu0 0.0
      %8223 = vmatprep.subr.mxu0 0.0
      %8224 = vmatpush1.msra.mxu0 0.0
      %8225 = vmatprep.subr.mxu0 0.0
      %8226 = vmatpush1.msra.mxu0 0.0
      %8227 = vmatprep.subr.mxu0 0.0
      %8228 = vmatpush1.msra.mxu0 0.0
      %8229 = vmatprep.subr.mxu0 0.0
      %8230 = vmatpush1.msra.mxu0 0.0
      %8231 = vmatprep.subr.mxu0 0.0
      %8232 = vmatpush1.msra.mxu0 0.0
      %8233 = vmatprep.subr.mxu0 0.0
      %8234 = vmatpush1.msra.mxu0 0.0
      %8235 = vmatprep.subr.mxu0 0.0
      %8236 = vmatpush1.msra.mxu0 0.0
      %8237 = vmatprep.subr.mxu0 0.0
      %8238 = vmatpush1.msra.mxu0 0.0
      %8239 = vmatprep.subr.mxu0 0.0
      %8240 = vmatpush1.msra.mxu0 0.0
      %8241 = vmatprep.subr.mxu0 0.0
      %8242 = vmatpush1.msra.mxu0 0.0
      %8243 = vmatprep.subr.mxu0 0.0
      %8244 = vmatpush1.msra.mxu0 0.0
      %8245 = vmatprep.subr.mxu0 0.0
      %8246 = vmatpush1.msra.mxu0 0.0
      %8247 = vmatprep.subr.mxu0 0.0
      %8248 = vmatpush1.msra.mxu0 0.0
      %8249 = vmatprep.subr.mxu0 0.0
      %8250 = vmatpush1.msra.mxu0 0.0
      %8251 = vmatprep.subr.mxu0 0.0
      %8252 = vmatpush1.msra.mxu0 0.0
      %8253 = vmatprep.mubr.f32.mxu0 0.0
      %8254 = vmatmul.mubr.f32.gmra.mrb[0].mxu0 %v8187
      %v8255 = vpop.f32.mrb[0].mxu0
      %v8256 = vadd.f32 %v8183, %v8255
      %v8257 = vpop.f32.mrb[0].mxu0
      %v8258 = vadd.f32 %v8183, %v8257
      %8259 = vdwg.mxu0
      %8260 = vmatprep.subr.mxu0 %v8173
      %8261 = vmatpush1.msra.mxu0 %v8172
      %8262 = vmatprep.subr.mxu0 %v8177
      %8263 = vmatpush1.msra.mxu0 %v8176
      %8264 = vmatprep.subr.mxu0 0.0
      %8265 = vmatpush1.msra.mxu0 0.0
      %8266 = vmatprep.subr.mxu0 0.0
      %8267 = vmatpush1.msra.mxu0 0.0
      %8268 = vmatprep.subr.mxu0 0.0
      %8269 = vmatpush1.msra.mxu0 0.0
      %8270 = vmatprep.subr.mxu0 0.0
      %8271 = vmatpush1.msra.mxu0 0.0
      %8272 = vmatprep.subr.mxu0 0.0
      %8273 = vmatpush1.msra.mxu0 0.0
      %8274 = vmatprep.subr.mxu0 0.0
      %8275 = vmatpush1.msra.mxu0 0.0
      %8276 = vmatprep.subr.mxu0 0.0
      %8277 = vmatpush1.msra.mxu0 0.0
      %8278 = vmatprep.subr.mxu0 0.0
      %8279 = vmatpush1.msra.mxu0 0.0
      %8280 = vmatprep.subr.mxu0 0.0
      %8281 = vmatpush1.msra.mxu0 0.0
      %8282 = vmatprep.subr.mxu0 0.0
      %8283 = vmatpush1.msra.mxu0 0.0
      %8284 = vmatprep.subr.mxu0 0.0
      %8285 = vmatpush1.msra.mxu0 0.0
      %8286 = vmatprep.subr.mxu0 0.0
      %8287 = vmatpush1.msra.mxu0 0.0
      %8288 = vmatprep.subr.mxu0 0.0
      %8289 = vmatpush1.msra.mxu0 0.0
      %8290 = vmatprep.subr.mxu0 0.0
      %8291 = vmatpush1.msra.mxu0 0.0
      %8292 = vmatprep.subr.mxu0 0.0
      %8293 = vmatpush1.msra.mxu0 0.0
      %8294 = vmatprep.subr.mxu0 0.0
      %8295 = vmatpush1.msra.mxu0 0.0
      %8296 = vmatprep.subr.mxu0 0.0
      %8297 = vmatpush1.msra.mxu0 0.0
      %8298 = vmatprep.subr.mxu0 0.0
      %8299 = vmatpush1.msra.mxu0 0.0
      %8300 = vmatprep.subr.mxu0 0.0
      %8301 = vmatpush1.msra.mxu0 0.0
      %8302 = vmatprep.subr.mxu0 0.0
      %8303 = vmatpush1.msra.mxu0 0.0
      %8304 = vmatprep.subr.mxu0 0.0
      %8305 = vmatpush1.msra.mxu0 0.0
      %8306 = vmatprep.subr.mxu0 0.0
      %8307 = vmatpush1.msra.mxu0 0.0
      %8308 = vmatprep.subr.mxu0 0.0
      %8309 = vmatpush1.msra.mxu0 0.0
      %8310 = vmatprep.subr.mxu0 0.0
      %8311 = vmatpush1.msra.mxu0 0.0
      %8312 = vmatprep.subr.mxu0 0.0
      %8313 = vmatpush1.msra.mxu0 0.0
      %8314 = vmatprep.subr.mxu0 0.0
      %8315 = vmatpush1.msra.mxu0 0.0
      %8316 = vmatprep.subr.mxu0 0.0
      %8317 = vmatpush1.msra.mxu0 0.0
      %8318 = vmatprep.subr.mxu0 0.0
      %8319 = vmatpush1.msra.mxu0 0.0
      %8320 = vmatprep.subr.mxu0 0.0
      %8321 = vmatpush1.msra.mxu0 0.0
      %8322 = vmatprep.subr.mxu0 0.0
      %8323 = vmatpush1.msra.mxu0 0.0
      %8324 = vmatprep.mubr.f32.mxu0 0.0
      %8325 = vmatmul.mubr.f32.gmra.mrb[0].mxu0 %v8187
      %v8326 = vpop.f32.mrb[0].mxu0
      %v8327 = vadd.f32 %v8183, %v8326
      %v8328 = vpop.f32.mrb[0].mxu0
      %v8329 = vadd.f32 %v8183, %v8328
      %8330 = vdwg.mxu0
      %v8335 = vcombine.low %v8256, %v8258
      %v8336 = vcombine.low %v8327, %v8329
      %8339 = vst [vmem:[%s388] sm:$0xff] %v8335
      %8340 = vst [vmem:[%s388 + $0x8] sm:$0xff] %v8336
      %s8341 = smul.u32 4, %s22
      %p8342 = scmp.lt.s32.totalorder %s8341, 7
      %s8343 = scalar_select %p8342, %s8341, 7
      %s8344 = smul.addr %s8343, 4
      %s8345 = scalar_lea.vmem %s11, %s8344
      // Predicated region
      $region65: #{_lambda_.1} parent=63 // pred_check
        %p8346 = pneg %p276
      $region66: #{_lambda_.1} parent=63 // pred_check_branch
        %8348 = sbr.rel (%p8346) target = $region68
      $region67: #{_lambda_.1} parent=63 // pred_region
        %s8349 = smul.u32 4, %s22
      $region68: #{_lambda_.1} parent=63 // pred_fallthru
        _
    $region64: #{_lambda_.1} parent=5 // pred_fallthru
      _
    %p8350 = scmp.le.s32.totalorder 2, %s17
    // Predicated region
    $region69: #{_lambda_.1} parent=5 // pred_check
      %p8351 = pneg %p8350
    $region70: #{_lambda_.1} parent=5 // pred_check_branch
      %8353 = sbr.rel (%p8351) target = $region72
    $region71: #{_lambda_.1} parent=5 // pred_region
      %s8354 = ssub.s32 %s17, 2
      // Predicated region
      $region73: #{_lambda_.1} parent=71 // pred_check
        %p8355 = pneg %p282
      $region74: #{_lambda_.1} parent=71 // pred_check_branch
        %8357 = sbr.rel (%p8355) target = $region76
      $region75: #{_lambda_.1} parent=71 // pred_region
        %s8358 = smul.u32 4, %s23
        %p8359 = scmp.lt.s32.totalorder %s8358, 7
        %s8360 = scalar_select %p8359, %s8358, 7
        %s8361 = smul.addr %s8360, 4
        %s8362 = scalar_lea.vmem %s11, %s8361
      $region76: #{_lambda_.1} parent=71 // pred_fallthru
        _
    $region72: #{_lambda_.1} parent=5 // pred_fallthru
      _
  $region6: #{_lambda_.1} parent=0 // loop_footer
    %s21 = sadd.s32 1, %s17
  $region7: #{_lambda_.1} parent=0 // loop_footer_branch
    %16 = sbr.rel target = $region3
  $region8: #{_lambda_.1} parent=0 // loop_exit
    _

</llo_original>
